<compile_context>
chip_gen: v7x
topology: tpu7x:2x2x1
jax: 0.10.0
libtpu: 0.0.40
codegen_flags: <defaults>
</compile_context>

<pallas_src>
import functools

import jax
import jax.numpy as jnp
from jax.experimental import pallas as pl
from jax.experimental.pallas import tpu as pltpu


# ---------------------------------------------------------------------------
# helpers
# ---------------------------------------------------------------------------

def _pick_tile(dim, target, granule):
    """Largest tile <= target that divides dim and is a multiple of `granule`
    (falls back to the full dim, which is always a legal block size)."""
    if dim <= target:
        return dim
    t = (target // granule) * granule
    while t >= granule:
        if dim % t == 0:
            return t
        t -= granule
    return dim


# ---------------------------------------------------------------------------
# Pallas kernels
# ---------------------------------------------------------------------------

def _matmul_kernel(x_ref, w_ref, o_ref, acc_ref):
    @pl.when(pl.program_id(2) == 0)
    def _():
        acc_ref[...] = jnp.zeros_like(acc_ref)

    acc_ref[...] += jnp.dot(x_ref[...], w_ref[...],
                            preferred_element_type=jnp.float32)

    @pl.when(pl.program_id(2) == pl.num_programs(2) - 1)
    def _():
        o_ref[...] = acc_ref[...].astype(o_ref.dtype)


def _matmul_bias_kernel(x_ref, w_ref, b_ref, o_ref, acc_ref):
    @pl.when(pl.program_id(2) == 0)
    def _():
        acc_ref[...] = jnp.zeros_like(acc_ref)

    acc_ref[...] += jnp.dot(x_ref[...], w_ref[...],
                            preferred_element_type=jnp.float32)

    @pl.when(pl.program_id(2) == pl.num_programs(2) - 1)
    def _():
        o_ref[...] = (acc_ref[...]
                      + b_ref[...].astype(jnp.float32)).astype(o_ref.dtype)


def _silu_mul_matmul_kernel(g_ref, u_ref, w_ref, o_ref, acc_ref):
    # down_proj with SiLU-and-mul fused into the K-tile loads:
    #   act = silu(gate_tile) * up_tile ; acc += act @ w_tile
    @pl.when(pl.program_id(2) == 0)
    def _():
        acc_ref[...] = jnp.zeros_like(acc_ref)

    g = g_ref[...].astype(jnp.float32)
    u = u_ref[...].astype(jnp.float32)
    act = (g * (1.0 / (1.0 + jnp.exp(-g))) * u).astype(w_ref.dtype)
    acc_ref[...] += jnp.dot(act, w_ref[...], preferred_element_type=jnp.float32)

    @pl.when(pl.program_id(2) == pl.num_programs(2) - 1)
    def _():
        o_ref[...] = acc_ref[...].astype(o_ref.dtype)


def _rmsnorm_kernel(x_ref, w_ref, o_ref, *, eps):
    x = x_ref[...].astype(jnp.float32)
    var = jnp.mean(x * x, axis=-1, keepdims=True)
    inv = jax.lax.rsqrt(var + eps)
    o_ref[...] = (x * inv * w_ref[...].astype(jnp.float32)).astype(o_ref.dtype)


def _rmsnorm_residual_kernel(x_ref, r_ref, w_ref, o_ref, nr_ref, *, eps):
    # vLLM-style fused add + RMSNorm: returns (normed(x + r), x + r)
    x = x_ref[...].astype(jnp.float32) + r_ref[...].astype(jnp.float32)
    nr_ref[...] = x.astype(nr_ref.dtype)
    var = jnp.mean(x * x, axis=-1, keepdims=True)
    inv = jax.lax.rsqrt(var + eps)
    o_ref[...] = (x * inv * w_ref[...].astype(jnp.float32)).astype(o_ref.dtype)


def _flash_gqa_rope_kernel(qcos_ref, qsin_ref, kcos_ref, ksin_ref,
                           q_ref, k_ref, v_ref, o_ref,
                           qrot_ref, m_ref, l_ref, acc_ref,
                           *, scale, group, tq, tk):
    qi = pl.program_id(1)
    ki = pl.program_id(2)
    nk = pl.num_programs(2)
    D = q_ref.shape[-1]

    @pl.when(ki == 0)
    def _():
        m_ref[...] = jnp.full_like(m_ref, -jnp.inf)
        l_ref[...] = jnp.zeros_like(l_ref)
        acc_ref[...] = jnp.zeros_like(acc_ref)
        # Fused NeoX RoPE on the query tile (once per q tile).  cos/sin tables
        # are lane-dense over the full head_dim so no sub-128-lane slicing or
        # concat is needed: out = x*cos + roll(x, D/2)*sin_signed.
        # The softmax scale is folded into q so scores need no extra multiply.
        cos = qcos_ref[...]
        sin = qsin_ref[...]
        for g in range(group):                       # static unroll, group is small
            xg = q_ref[g].astype(jnp.float32)        # [tq, D]
            xg = xg * cos + pltpu.roll(xg, D // 2, axis=1) * sin
            qrot_ref[pl.ds(g * tq, tq), :] = (xg * scale).astype(qrot_ref.dtype)

    # Skip kv tiles that lie entirely above the causal diagonal.
    @pl.when(ki * tk < (qi + 1) * tq)
    def _():
        # Fused NeoX RoPE on the key tile.
        k = k_ref[0].astype(jnp.float32)             # [tk, D]
        k = k * kcos_ref[...] + pltpu.roll(k, D // 2, axis=1) * ksin_ref[...]
        k = k.astype(v_ref.dtype)

        # One MXU pass for the whole GQA group: [group*tq, tk] scores.
        s = jnp.dot(qrot_ref[...], k.T, preferred_element_type=jnp.float32)

        q_local = jax.lax.broadcasted_iota(
            jnp.int32, (group, tq, tk), 1).reshape(group * tq, tk)
        k_local = jax.lax.broadcasted_iota(jnp.int32, (group * tq, tk), 1)
        causal = (ki * tk + k_local) <= (qi * tq + q_local)
        s = jnp.where(causal, s, jnp.float32(-1e30))

        m_prev = m_ref[...]
        m_new = jnp.maximum(m_prev, jnp.max(s, axis=-1, keepdims=True))
        alpha = jnp.exp(m_prev - m_new)
        p = jnp.exp(s - m_new)
        l_ref[...] = alpha * l_ref[...] + jnp.sum(p, axis=-1, keepdims=True)
        acc_ref[...] = alpha * acc_ref[...] + jnp.dot(
            p.astype(v_ref.dtype), v_ref[0], preferred_element_type=jnp.float32)
        m_ref[...] = m_new

    @pl.when(ki == nk - 1)
    def _():
        inv_l = pl.reciprocal(l_ref[...], approx=True)
        o_ref[...] = (acc_ref[...] * inv_l).reshape(group, tq, D).astype(o_ref.dtype)


# ---------------------------------------------------------------------------
# pallas_call wrappers
# ---------------------------------------------------------------------------

def linear(x, w, b=None, *, tm=256, tn=256, tk=512):
    """Tiled x @ w (+ b) with an f32 VMEM accumulator and bf16 MXU operands."""
    M, K = x.shape
    _, N = w.shape
    tm = _pick_tile(M, tm, 8)
    tn = _pick_tile(N, tn, 128)
    tk = _pick_tile(K, tk, 128)
    grid = (M // tm, N // tn, K // tk)
    cost = pl.CostEstimate(
        flops=2 * M * N * K, transcendentals=0,
        bytes_accessed=(M * K + K * N + M * N) * x.dtype.itemsize)
    common = dict(
        out_shape=jax.ShapeDtypeStruct((M, N), x.dtype),
        grid=grid,
        out_specs=pl.BlockSpec((tm, tn), lambda i, j, k: (i, j)),
        scratch_shapes=[pltpu.VMEM((tm, tn), jnp.float32)],
        compiler_params=pltpu.CompilerParams(
            dimension_semantics=("parallel", "parallel", "arbitrary")),
        cost_estimate=cost,
    )
    x_spec = pl.BlockSpec((tm, tk), lambda i, j, k: (i, k))
    w_spec = pl.BlockSpec((tk, tn), lambda i, j, k: (k, j))
    if b is None:
        return pl.pallas_call(_matmul_kernel,
                              in_specs=[x_spec, w_spec], **common)(x, w)
    b_spec = pl.BlockSpec((1, tn), lambda i, j, k: (0, j))
    return pl.pallas_call(_matmul_bias_kernel,
                          in_specs=[x_spec, w_spec, b_spec],
                          **common)(x, w, b.reshape(1, N))


def silu_mul_linear(gate_up, w, *, tm=256, tn=256, tk=512):
    """down_proj( silu(gate) * up ) with the activation fused into the K tiles."""
    M, two_i = gate_up.shape
    inter = two_i // 2
    _, N = w.shape
    tm = _pick_tile(M, tm, 8)
    tn = _pick_tile(N, tn, 128)
    tk = _pick_tile(inter, tk, 128)
    k_off = inter // tk            # block offset of the 'up' half inside gate_up
    grid = (M // tm, N // tn, inter // tk)
    cost = pl.CostEstimate(
        flops=2 * M * N * inter + 6 * M * inter, transcendentals=M * inter,
        bytes_accessed=(M * two_i + inter * N + M * N) * gate_up.dtype.itemsize)
    return pl.pallas_call(
        _silu_mul_matmul_kernel,
        out_shape=jax.ShapeDtypeStruct((M, N), gate_up.dtype),
        grid=grid,
        in_specs=[
            pl.BlockSpec((tm, tk), lambda i, j, k: (i, k)),                # gate
            pl.BlockSpec((tm, tk), lambda i, j, k, _o=k_off: (i, k + _o)),  # up
            pl.BlockSpec((tk, tn), lambda i, j, k: (k, j)),                # w_down
        ],
        out_specs=pl.BlockSpec((tm, tn), lambda i, j, k: (i, j)),
        scratch_shapes=[pltpu.VMEM((tm, tn), jnp.float32)],
        compiler_params=pltpu.CompilerParams(
            dimension_semantics=("parallel", "parallel", "arbitrary")),
        cost_estimate=cost,
    )(gate_up, gate_up, w)


def rms_norm(x, weight, eps, residual=None, *, ts=256):
    S, H = x.shape
    ts = _pick_tile(S, ts, 8)
    grid = (S // ts,)
    w2d = weight.reshape(1, H)
    x_spec = pl.BlockSpec((ts, H), lambda i: (i, 0))
    w_spec = pl.BlockSpec((1, H), lambda i: (0, 0))
    params = pltpu.CompilerParams(dimension_semantics=("parallel",))
    if residual is None:
        return pl.pallas_call(
            functools.partial(_rmsnorm_kernel, eps=eps),
            out_shape=jax.ShapeDtypeStruct((S, H), x.dtype),
            grid=grid,
            in_specs=[x_spec, w_spec],
            out_specs=x_spec,
            compiler_params=params,
        )(x, w2d)
    out, new_res = pl.pallas_call(
        functools.partial(_rmsnorm_residual_kernel, eps=eps),
        out_shape=(jax.ShapeDtypeStruct((S, H), x.dtype),
                   jax.ShapeDtypeStruct((S, H), x.dtype)),
        grid=grid,
        in_specs=[x_spec, x_spec, w_spec],
        out_specs=(x_spec, x_spec),
        compiler_params=params,
    )(x, residual, w2d)
    return out, new_res


def flash_gqa_attention(q, k, v, cos, sin, scale, *, tq=256, tk=256):
    """Causal flash attention with GQA group batching and fused NeoX RoPE.

    q: [NH, S, D], k/v: [NKV, S, D], cos/sin: [S, D] f32 lane-dense tables.
    """
    NH, S, D = q.shape
    NKV = k.shape[0]
    group = NH // NKV
    tq = _pick_tile(S, tq, 8)
    tk = _pick_tile(S, tk, 8)
    grid = (NKV, S // tq, S // tk)
    kernel = functools.partial(_flash_gqa_rope_kernel,
                               scale=scale, group=group, tq=tq, tk=tk)
    cost = pl.CostEstimate(
        flops=4 * NH * S * S * D, transcendentals=NH * S * S,
        bytes_accessed=(2 * NH + 2 * NKV) * S * D * q.dtype.itemsize)
    return pl.pallas_call(
        kernel,
        out_shape=jax.ShapeDtypeStruct((NH, S, D), q.dtype),
        grid=grid,
        in_specs=[
            pl.BlockSpec((tq, D), lambda h, qi, ki: (qi, 0)),            # cos (q rows)
            pl.BlockSpec((tq, D), lambda h, qi, ki: (qi, 0)),            # sin (q rows)
            pl.BlockSpec((tk, D), lambda h, qi, ki: (ki, 0)),            # cos (k rows)
            pl.BlockSpec((tk, D), lambda h, qi, ki: (ki, 0)),            # sin (k rows)
            pl.BlockSpec((group, tq, D), lambda h, qi, ki: (h, qi, 0)),  # q (GQA group)
            pl.BlockSpec((1, tk, D), lambda h, qi, ki: (h, ki, 0)),      # k
            pl.BlockSpec((1, tk, D), lambda h, qi, ki: (h, ki, 0)),      # v
        ],
        out_specs=pl.BlockSpec((group, tq, D), lambda h, qi, ki: (h, qi, 0)),
        scratch_shapes=[
            pltpu.VMEM((group * tq, D), q.dtype),       # RoPE'd + scaled q
            pltpu.VMEM((group * tq, 1), jnp.float32),   # running max m
            pltpu.VMEM((group * tq, 1), jnp.float32),   # running sum l
            pltpu.VMEM((group * tq, D), jnp.float32),   # output accumulator
        ],
        compiler_params=pltpu.CompilerParams(
            dimension_semantics=("parallel", "parallel", "arbitrary")),
        cost_estimate=cost,
    )(cos, sin, cos, sin, q, k, v)


# ---------------------------------------------------------------------------
# Qwen2 modules (synthetic weights, tp_size = 1, prefill path)
# ---------------------------------------------------------------------------

class Qwen2AttentionPallas:
    def __init__(self, hidden_size, num_heads, num_kv_heads,
                 rope_theta=10000.0, dtype=jnp.bfloat16, key=None):
        self.hidden_size = hidden_size
        self.num_heads = num_heads
        self.num_kv_heads = num_kv_heads
        self.head_dim = hidden_size // num_heads
        self.q_size = num_heads * self.head_dim
        self.kv_size = num_kv_heads * self.head_dim
        self.scaling = self.head_dim ** -0.5
        self.rope_theta = rope_theta

        k1, k2, k3 = jax.random.split(key, 3)
        qkv_out = self.q_size + 2 * self.kv_size
        self.w_qkv = (jax.random.normal(k1, (hidden_size, qkv_out), dtype)
                      * (hidden_size ** -0.5)).astype(dtype)
        self.b_qkv = (jax.random.normal(k2, (qkv_out,), dtype) * 0.02).astype(dtype)
        self.w_o = (jax.random.normal(k3, (self.q_size, hidden_size), dtype)
                    * (self.q_size ** -0.5)).astype(dtype)

    def _rope_tables(self, positions):
        # NeoX tables laid out lane-dense over the full head_dim so the kernel
        # computes x*cos + roll(x, D/2)*sin_signed (== rotate_half RoPE) with
        # no sub-128-lane slices/concats.  NOTE: positions > 2**24 would lose
        # precision in the f32 cast (irrelevant at these context lengths).
        d2 = self.head_dim // 2
        inv_freq = 1.0 / (self.rope_theta **
                          (jnp.arange(0, d2, dtype=jnp.float32) * 2.0 / self.head_dim))
        freqs = positions.astype(jnp.float32)[:, None] * inv_freq[None, :]   # [S, D/2]
        cos = jnp.cos(freqs)
        sin = jnp.sin(freqs)
        cos_full = jnp.concatenate([cos, cos], axis=-1)                      # [S, D]
        sin_signed = jnp.concatenate([-sin, sin], axis=-1)                   # [S, D]
        return cos_full, sin_signed

    def __call__(self, positions, hidden_states):
        # TODO(synk): kv-cache write-back / paged decode, status in [1, 2]
        # fake-q rotation and cache_fuse_metadata['collect'] are serving-time
        # side paths and are not implemented (pure causal prefill only).
        S, _ = hidden_states.shape
        NH, NKV, D = self.num_heads, self.num_kv_heads, self.head_dim

        qkv = linear(hidden_states, self.w_qkv, self.b_qkv)   # [S, q + 2kv]
        q = qkv[:, :self.q_size]
        k = qkv[:, self.q_size:self.q_size + self.kv_size]
        v = qkv[:, self.q_size + self.kv_size:]

        # TODO(synk): this head-major transpose is XLA glue (one HBM round trip);
        # it could be folded into the qkv matmul epilogue via per-head out_specs.
        q = q.reshape(S, NH, D).transpose(1, 0, 2)            # [NH, S, D]
        k = k.reshape(S, NKV, D).transpose(1, 0, 2)           # [NKV, S, D]
        v = v.reshape(S, NKV, D).transpose(1, 0, 2)

        cos, sin = self._rope_tables(positions)
        attn = flash_gqa_attention(q, k, v, cos, sin, self.scaling)  # [NH, S, D]
        attn = attn.transpose(1, 0, 2).reshape(S, self.q_size)

        return linear(attn, self.w_o)                         # [S, H]


class Qwen2MLPPallas:
    def __init__(self, hidden_size, intermediate_size, dtype=jnp.bfloat16, key=None):
        self.intermediate_size = intermediate_size
        k1, k2 = jax.random.split(key)
        self.w_gate_up = (jax.random.normal(k1, (hidden_size, 2 * intermediate_size),
                                            dtype) * (hidden_size ** -0.5)).astype(dtype)
        self.w_down = (jax.random.normal(k2, (intermediate_size, hidden_size), dtype)
                       * (intermediate_size ** -0.5)).astype(dtype)

    def __call__(self, x):
        gate_up = linear(x, self.w_gate_up)               # [S, 2I]
        return silu_mul_linear(gate_up, self.w_down)      # SiLU-and-mul fused in


class Qwen2DecoderLayerPallas:
    def __init__(self, hidden_size, num_heads, num_kv_heads, intermediate_size,
                 rms_norm_eps, rope_theta, dtype=jnp.bfloat16, key=None):
        k1, k2 = jax.random.split(key)
        self.eps = rms_norm_eps
        self.self_attn = Qwen2AttentionPallas(hidden_size, num_heads, num_kv_heads,
                                              rope_theta=rope_theta, dtype=dtype, key=k1)
        self.mlp = Qwen2MLPPallas(hidden_size, intermediate_size, dtype=dtype, key=k2)
        self.input_ln_w = jnp.ones((hidden_size,), dtype)
        self.post_ln_w = jnp.ones((hidden_size,), dtype)

    def __call__(self, positions, hidden_states, residual):
        if residual is None:
            residual = hidden_states
            hidden_states = rms_norm(hidden_states, self.input_ln_w, self.eps)
        else:
            hidden_states, residual = rms_norm(hidden_states, self.input_ln_w,
                                               self.eps, residual=residual)
        hidden_states = self.self_attn(positions, hidden_states)
        # TODO(synk): status == 1 'imp_indices' residual gather is not implemented.
        hidden_states, residual = rms_norm(hidden_states, self.post_ln_w,
                                           self.eps, residual=residual)
        hidden_states = self.mlp(hidden_states)
        return hidden_states, residual


class Qwen2ModelPallas:
    def __init__(self, vocab_size, hidden_size, num_heads, num_kv_heads,
                 intermediate_size, num_layers, rms_norm_eps=1e-6,
                 rope_theta=10000.0, dtype=jnp.bfloat16, key=None):
        if key is None:
            key = jax.random.PRNGKey(0)
        keys = jax.random.split(key, num_layers + 1)
        self.eps = rms_norm_eps
        self.embed_tokens = jax.random.normal(keys[0], (vocab_size, hidden_size), dtype)
        self.layers = [
            Qwen2DecoderLayerPallas(hidden_size, num_heads, num_kv_heads,
                                    intermediate_size, rms_norm_eps, rope_theta,
                                    dtype=dtype, key=keys[i + 1])
            for i in range(num_layers)
        ]
        self.norm_w = jnp.ones((hidden_size,), dtype)

    def __call__(self, input_ids, positions):
        # TODO(synk): embedding gather left to XLA (a Pallas DMA-gather via
        # scalar prefetch + pl.Element is possible but not a hot path here).
        hidden_states = jnp.take(self.embed_tokens, input_ids, axis=0)
        residual = None
        for layer in self.layers:
            # TODO(synk): cache_fuse_metadata['check'] / status 1,2 branches and
            # kv_caches / attn_metadata plumbing are not implemented.
            hidden_states, residual = layer(positions, hidden_states, residual)
        hidden_states, _ = rms_norm(hidden_states, self.norm_w, self.eps,
                                    residual=residual)
        return hidden_states


# ---------------------------------------------------------------------------
# pure-JAX (f32) reference for a loose numerical check
# ---------------------------------------------------------------------------

def _ref_rms_norm(x, w, eps):
    var = jnp.mean(x * x, axis=-1, keepdims=True)
    return x * jax.lax.rsqrt(var + eps) * w.astype(jnp.float32)


def _ref_rope(x, positions, theta):
    S, H, D = x.shape
    half = D // 2
    inv_freq = 1.0 / (theta ** (jnp.arange(0, half, dtype=jnp.float32) * 2.0 / D))
    freqs = positions.astype(jnp.float32)[:, None] * inv_freq[None, :]
    cos = jnp.cos(freqs)[:, None, :]
    sin = jnp.sin(freqs)[:, None, :]
    x1, x2 = x[..., :half], x[..., half:]
    return jnp.concatenate([x1 * cos - x2 * sin, x2 * cos + x1 * sin], axis=-1)


def _ref_attention(attn, positions, x):
    S = x.shape[0]
    qkv = x @ attn.w_qkv.astype(jnp.float32) + attn.b_qkv.astype(jnp.float32)
    q = qkv[:, :attn.q_size].reshape(S, attn.num_heads, attn.head_dim)
    k = qkv[:, attn.q_size:attn.q_size + attn.kv_size].reshape(
        S, attn.num_kv_heads, attn.head_dim)
    v = qkv[:, attn.q_size + attn.kv_size:].reshape(
        S, attn.num_kv_heads, attn.head_dim)
    q = _ref_rope(q, positions, attn.rope_theta)
    k = _ref_rope(k, positions, attn.rope_theta)
    group = attn.num_heads // attn.num_kv_heads
    k = jnp.repeat(k, group, axis=1)
    v = jnp.repeat(v, group, axis=1)
    s = jnp.einsum("qhd,khd->hqk", q, k) * attn.scaling
    mask = jnp.tril(jnp.ones((S, S), dtype=bool))
    s = jnp.where(mask[None], s, -jnp.inf)
    p = jax.nn.softmax(s, axis=-1)
    o = jnp.einsum("hqk,khd->qhd", p, v).reshape(S, attn.q_size)
    return o @ attn.w_o.astype(jnp.float32)


def _ref_mlp(mlp, x):
    gu = x @ mlp.w_gate_up.astype(jnp.float32)
    i = mlp.intermediate_size
    g, u = gu[:, :i], gu[:, i:]
    return (jax.nn.silu(g) * u) @ mlp.w_down.astype(jnp.float32)


def _reference_forward(model, input_ids, positions):
    h = jnp.take(model.embed_tokens, input_ids, axis=0).astype(jnp.float32)
    residual = None
    for layer in model.layers:
        if residual is None:
            residual = h
            normed = _ref_rms_norm(h, layer.input_ln_w, model.eps)
        else:
            residual = h + residual
            normed = _ref_rms_norm(residual, layer.input_ln_w, model.eps)
        a = _ref_attention(layer.self_attn, positions, normed)
        residual = a + residual
        normed = _ref_rms_norm(residual, layer.post_ln_w, model.eps)
        h = _ref_mlp(layer.mlp, normed)
    return _ref_rms_norm(h + residual, model.norm_w, model.eps)


# ---------------------------------------------------------------------------
# main
# ---------------------------------------------------------------------------

if __name__ == "__main__":
    vocab_size = 128
    hidden_size = 512          # 4 heads x head_dim 128 (lane-dense head_dim)
    num_heads = 4
    num_kv_heads = 2
    intermediate_size = 1024
    num_layers = 2
    seq_len = 16

    key = jax.random.PRNGKey(0)
    k_model, k_ids = jax.random.split(key)

    model = Qwen2ModelPallas(vocab_size, hidden_size, num_heads, num_kv_heads,
                             intermediate_size, num_layers, rms_norm_eps=1e-6,
                             rope_theta=10000.0, dtype=jnp.bfloat16, key=k_model)

    input_ids = jax.random.randint(k_ids, (seq_len,), 0, vocab_size, dtype=jnp.int32)
    positions = jnp.arange(seq_len, dtype=jnp.int32)

    fwd = jax.jit(model.__call__)
    out = jax.block_until_ready(fwd(input_ids, positions))
    assert out.shape == (seq_len, hidden_size)

    out_f32 = out.astype(jnp.float32)
    assert bool(jnp.all(jnp.isfinite(out_f32)))

    ref = _reference_forward(model, input_ids, positions)
    diff = jnp.abs(out_f32 - ref)
    max_err = float(jnp.max(diff))
    mean_err = float(jnp.mean(diff))
    assert max_err < 0.4, f"max abs error vs reference too large: {max_err}"
    assert mean_err < 0.06, f"mean abs error vs reference too large: {mean_err}"

    print("KERNEL_OK")
</pallas_src>

<mosaic_0001>
module attributes {stable_mosaic.version = 11 : i64} {
  func.func @_rmsnorm_kernel(%arg0: i32, %arg1: memref<16x512xbf16, #tpu.memory_space<vmem>>, %arg2: memref<1x512xbf16, #tpu.memory_space<vmem>>, %arg3: memref<16x512xbf16, #tpu.memory_space<vmem>>) attributes {dimension_semantics = [#tpu.dimension_semantics<parallel>], iteration_bounds = array<i64: 1>, scalar_prefetch = 0 : i64, scratch_operands = 0 : i64, tpu.core_type = #tpu.core_type<tc>, window_params = [{transform_indices = @transform_0, window_bounds = array<i64: 16, 512>}, {pipeline_mode = #tpu.pipeline_mode<synchronous>, transform_indices = @transform_1, window_bounds = array<i64: 1, 512>}, {transform_indices = @transform_2, window_bounds = array<i64: 16, 512>}]} {
    %c0 = arith.constant 0 : index
    %c0_0 = arith.constant 0 : index
    %0 = vector.load %arg1[%c0, %c0_0] : memref<16x512xbf16, #tpu.memory_space<vmem>>, vector<16x512xbf16>
    %1 = arith.extf %0 : vector<16x512xbf16> to vector<16x512xf32>
    %2 = arith.mulf %1, %1 : vector<16x512xf32>
    %cst = arith.constant dense<0.000000e+00> : vector<16xf32>
    %3 = vector.multi_reduction <add>, %2, %cst [1] : vector<16x512xf32> to vector<16xf32>
    %4 = vector.shape_cast %3 : vector<16xf32> to vector<16x1xf32>
    %cst_1 = arith.constant 5.120000e+02 : f32
    %5 = vector.broadcast %cst_1 : f32 to vector<16x1xf32>
    %6 = arith.divf %4, %5 : vector<16x1xf32>
    %cst_2 = arith.constant 9.99999997E-7 : f32
    %7 = vector.broadcast %cst_2 : f32 to vector<16x1xf32>
    %8 = arith.addf %6, %7 : vector<16x1xf32>
    %9 = math.rsqrt %8 : vector<16x1xf32>
    %10 = vector.broadcast %9 : vector<16x1xf32> to vector<16x512xf32>
    %11 = arith.mulf %1, %10 : vector<16x512xf32>
    %c0_3 = arith.constant 0 : index
    %c0_4 = arith.constant 0 : index
    %12 = vector.load %arg2[%c0_3, %c0_4] : memref<1x512xbf16, #tpu.memory_space<vmem>>, vector<1x512xbf16>
    %13 = arith.extf %12 : vector<1x512xbf16> to vector<1x512xf32>
    %14 = vector.broadcast %13 : vector<1x512xf32> to vector<16x512xf32>
    %15 = arith.mulf %11, %14 : vector<16x512xf32>
    %16 = arith.truncf %15 : vector<16x512xf32> to vector<16x512xbf16>
    %c0_5 = arith.constant 0 : index
    %c0_6 = arith.constant 0 : index
    %17 = vector.load %arg3[%c0_5, %c0_6] : memref<16x512xbf16, #tpu.memory_space<vmem>>, vector<16x512xbf16>
    tpu.vector_store %arg3[%c0_5, %c0_6], %16 {strides = array<i32>} : memref<16x512xbf16, #tpu.memory_space<vmem>>, vector<16x512xbf16>,
    return
  }
  func.func @transform_0(%arg0: i32) -> (i32, i32) {
    %c0_i32 = arith.constant 0 : i32
    %c0_i32_0 = arith.constant 0 : i32
    return %arg0, %c0_i32 : i32, i32
  }
  func.func @transform_1(%arg0: i32) -> (i32, i32) {
    %c0_i32 = arith.constant 0 : i32
    %c0_i32_0 = arith.constant 0 : i32
    %c0_i32_1 = arith.constant 0 : i32
    return %c0_i32, %c0_i32_0 : i32, i32
  }
  func.func @transform_2(%arg0: i32) -> (i32, i32) {
    %c0_i32 = arith.constant 0 : i32
    %c0_i32_0 = arith.constant 0 : i32
    return %arg0, %c0_i32 : i32, i32
  }
}

module attributes {stable_mosaic.version = 11 : i64} {
  func.func @_matmul_bias_kernel(%arg0: i32, %arg1: i32, %arg2: i32, %arg3: memref<16x512xbf16, #tpu.memory_space<vmem>>, %arg4: memref<512x256xbf16, #tpu.memory_space<vmem>>, %arg5: memref<1x256xbf16, #tpu.memory_space<vmem>>, %arg6: memref<16x256xbf16, #tpu.memory_space<vmem>>, %arg7: memref<16x256xf32, #tpu.memory_space<vmem>>) attributes {dimension_semantics = [#tpu.dimension_semantics<parallel>, #tpu.dimension_semantics<parallel>, #tpu.dimension_semantics<arbitrary>], iteration_bounds = array<i64: 1, 4, 1>, scalar_prefetch = 0 : i64, scratch_operands = 1 : i64, tpu.core_type = #tpu.core_type<tc>, window_params = [{transform_indices = @transform_0, window_bounds = array<i64: 16, 512>}, {transform_indices = @transform_1, window_bounds = array<i64: 512, 256>}, {transform_indices = @transform_2, window_bounds = array<i64: 1, 256>}, {transform_indices = @transform_3, window_bounds = array<i64: 16, 256>}]} {
    %c0_i32 = arith.constant 0 : i32
    %0 = arith.cmpi eq, %arg2, %c0_i32 : i32
    %1 = arith.extui %0 : i1 to i32
    %c0_i32_0 = arith.constant 0 : i32
    %2 = arith.cmpi ne, %1, %c0_i32_0 : i32
    scf.if %2 {
      %cst_10 = arith.constant 0.000000e+00 : f32
      %12 = vector.broadcast %cst_10 : f32 to vector<16x256xf32>
      %c0_11 = arith.constant 0 : index
      %c0_12 = arith.constant 0 : index
      %13 = vector.load %arg7[%c0_11, %c0_12] : memref<16x256xf32, #tpu.memory_space<vmem>>, vector<16x256xf32>
      tpu.vector_store %arg7[%c0_11, %c0_12], %12 {strides = array<i32>} : memref<16x256xf32, #tpu.memory_space<vmem>>, vector<16x256xf32>,
    } else {
    }
    %c0 = arith.constant 0 : index
    %c0_1 = arith.constant 0 : index
    %3 = vector.load %arg7[%c0, %c0_1] : memref<16x256xf32, #tpu.memory_space<vmem>>, vector<16x256xf32>
    %c0_2 = arith.constant 0 : index
    %c0_3 = arith.constant 0 : index
    %4 = vector.load %arg3[%c0_2, %c0_3] : memref<16x512xbf16, #tpu.memory_space<vmem>>, vector<16x512xbf16>
    %c0_4 = arith.constant 0 : index
    %c0_5 = arith.constant 0 : index
    %5 = vector.load %arg4[%c0_4, %c0_5] : memref<512x256xbf16, #tpu.memory_space<vmem>>, vector<512x256xbf16>
    %cst = arith.constant dense<0.000000e+00> : vector<16x256xf32>
    %6 = tpu.matmul %4, %5, %cst {dimension_numbers = #tpu.dot_dimension_numbers<[1], [0], [0], [1], [0, 0, 1, 1], [], []>} : vector<16x512xbf16>, vector<512x256xbf16>, vector<16x256xf32> -> vector<16x256xf32>
    %7 = arith.addf %3, %6 : vector<16x256xf32>
    %c0_6 = arith.constant 0 : index
    %c0_7 = arith.constant 0 : index
    %8 = vector.load %arg7[%c0_6, %c0_7] : memref<16x256xf32, #tpu.memory_space<vmem>>, vector<16x256xf32>
    tpu.vector_store %arg7[%c0_6, %c0_7], %7 {strides = array<i32>} : memref<16x256xf32, #tpu.memory_space<vmem>>, vector<16x256xf32>,
    %c0_i32_8 = arith.constant 0 : i32
    %9 = arith.cmpi eq, %arg2, %c0_i32_8 : i32
    %10 = arith.extui %9 : i1 to i32
    %c0_i32_9 = arith.constant 0 : i32
    %11 = arith.cmpi ne, %10, %c0_i32_9 : i32
    scf.if %11 {
      %c0_10 = arith.constant 0 : index
      %c0_11 = arith.constant 0 : index
      %12 = vector.load %arg7[%c0_10, %c0_11] : memref<16x256xf32, #tpu.memory_space<vmem>>, vector<16x256xf32>
      %c0_12 = arith.constant 0 : index
      %c0_13 = arith.constant 0 : index
      %13 = vector.load %arg5[%c0_12, %c0_13] : memref<1x256xbf16, #tpu.memory_space<vmem>>, vector<1x256xbf16>
      %14 = arith.extf %13 : vector<1x256xbf16> to vector<1x256xf32>
      %15 = vector.broadcast %14 : vector<1x256xf32> to vector<16x256xf32>
      %16 = arith.addf %12, %15 : vector<16x256xf32>
      %17 = arith.truncf %16 : vector<16x256xf32> to vector<16x256xbf16>
      %c0_14 = arith.constant 0 : index
      %c0_15 = arith.constant 0 : index
      %18 = vector.load %arg6[%c0_14, %c0_15] : memref<16x256xbf16, #tpu.memory_space<vmem>>, vector<16x256xbf16>
      tpu.vector_store %arg6[%c0_14, %c0_15], %17 {strides = array<i32>} : memref<16x256xbf16, #tpu.memory_space<vmem>>, vector<16x256xbf16>,
    } else {
    }
    return
  }
  func.func @transform_0(%arg0: i32, %arg1: i32, %arg2: i32) -> (i32, i32) {
    %c0_i32 = arith.constant 0 : i32
    return %arg0, %arg2 : i32, i32
  }
  func.func @transform_1(%arg0: i32, %arg1: i32, %arg2: i32) -> (i32, i32) {
    %c0_i32 = arith.constant 0 : i32
    return %arg2, %arg1 : i32, i32
  }
  func.func @transform_2(%arg0: i32, %arg1: i32, %arg2: i32) -> (i32, i32) {
    %c0_i32 = arith.constant 0 : i32
    %c0_i32_0 = arith.constant 0 : i32
    return %c0_i32, %arg1 : i32, i32
  }
  func.func @transform_3(%arg0: i32, %arg1: i32, %arg2: i32) -> (i32, i32) {
    %c0_i32 = arith.constant 0 : i32
    return %arg0, %arg1 : i32, i32
  }
}

module attributes {stable_mosaic.version = 11 : i64} {
  func.func @_flash_gqa_rope_kernel(%arg0: i32, %arg1: i32, %arg2: i32, %arg3: memref<16x128xf32, #tpu.memory_space<vmem>>, %arg4: memref<16x128xf32, #tpu.memory_space<vmem>>, %arg5: memref<16x128xf32, #tpu.memory_space<vmem>>, %arg6: memref<16x128xf32, #tpu.memory_space<vmem>>, %arg7: memref<2x16x128xbf16, #tpu.memory_space<vmem>>, %arg8: memref<1x16x128xbf16, #tpu.memory_space<vmem>>, %arg9: memref<1x16x128xbf16, #tpu.memory_space<vmem>>, %arg10: memref<2x16x128xbf16, #tpu.memory_space<vmem>>, %arg11: memref<32x128xbf16, #tpu.memory_space<vmem>>, %arg12: memref<32x1xf32, #tpu.memory_space<vmem>>, %arg13: memref<32x1xf32, #tpu.memory_space<vmem>>, %arg14: memref<32x128xf32, #tpu.memory_space<vmem>>) attributes {dimension_semantics = [#tpu.dimension_semantics<parallel>, #tpu.dimension_semantics<parallel>, #tpu.dimension_semantics<arbitrary>], iteration_bounds = array<i64: 2, 1, 1>, scalar_prefetch = 0 : i64, scratch_operands = 4 : i64, tpu.core_type = #tpu.core_type<tc>, window_params = [{transform_indices = @transform_0, window_bounds = array<i64: 16, 128>}, {transform_indices = @transform_1, window_bounds = array<i64: 16, 128>}, {transform_indices = @transform_2, window_bounds = array<i64: 16, 128>}, {transform_indices = @transform_3, window_bounds = array<i64: 16, 128>}, {transform_indices = @transform_4, window_bounds = array<i64: 2, 16, 128>}, {transform_indices = @transform_5, window_bounds = array<i64: 1, 16, 128>}, {transform_indices = @transform_6, window_bounds = array<i64: 1, 16, 128>}, {transform_indices = @transform_7, window_bounds = array<i64: 2, 16, 128>}]} {
    %c0_i32 = arith.constant 0 : i32
    %0 = arith.cmpi eq, %arg2, %c0_i32 : i32
    %1 = arith.extui %0 : i1 to i32
    %c0_i32_0 = arith.constant 0 : i32
    %2 = arith.cmpi ne, %1, %c0_i32_0 : i32
    scf.if %2 {
      %cst = arith.constant 0xFF800000 : f32
      %12 = vector.broadcast %cst : f32 to vector<32x1xf32>
      %c0 = arith.constant 0 : index
      %c0_5 = arith.constant 0 : index
      %13 = vector.load %arg12[%c0, %c0_5] : memref<32x1xf32, #tpu.memory_space<vmem>>, vector<32x1xf32>
      tpu.vector_store %arg12[%c0, %c0_5], %12 {strides = array<i32>} : memref<32x1xf32, #tpu.memory_space<vmem>>, vector<32x1xf32>,
      %cst_6 = arith.constant 0.000000e+00 : f32
      %14 = vector.broadcast %cst_6 : f32 to vector<32x1xf32>
      %c0_7 = arith.constant 0 : index
      %c0_8 = arith.constant 0 : index
      %15 = vector.load %arg13[%c0_7, %c0_8] : memref<32x1xf32, #tpu.memory_space<vmem>>, vector<32x1xf32>
      tpu.vector_store %arg13[%c0_7, %c0_8], %14 {strides = array<i32>} : memref<32x1xf32, #tpu.memory_space<vmem>>, vector<32x1xf32>,
      %cst_9 = arith.constant 0.000000e+00 : f32
      %16 = vector.broadcast %cst_9 : f32 to vector<32x128xf32>
      %c0_10 = arith.constant 0 : index
      %c0_11 = arith.constant 0 : index
      %17 = vector.load %arg14[%c0_10, %c0_11] : memref<32x128xf32, #tpu.memory_space<vmem>>, vector<32x128xf32>
      tpu.vector_store %arg14[%c0_10, %c0_11], %16 {strides = array<i32>} : memref<32x128xf32, #tpu.memory_space<vmem>>, vector<32x128xf32>,
      %c0_12 = arith.constant 0 : index
      %c0_13 = arith.constant 0 : index
      %18 = vector.load %arg3[%c0_12, %c0_13] : memref<16x128xf32, #tpu.memory_space<vmem>>, vector<16x128xf32>
      %c0_14 = arith.constant 0 : index
      %c0_15 = arith.constant 0 : index
      %19 = vector.load %arg4[%c0_14, %c0_15] : memref<16x128xf32, #tpu.memory_space<vmem>>, vector<16x128xf32>
      %c0_16 = arith.constant 0 : index
      %c0_17 = arith.constant 0 : index
      %c0_18 = arith.constant 0 : index
      %20 = vector.load %arg7[%c0_16, %c0_17, %c0_18] : memref<2x16x128xbf16, #tpu.memory_space<vmem>>, vector<1x16x128xbf16>
      %21 = vector.shape_cast %20 : vector<1x16x128xbf16> to vector<16x128xbf16>
      %22 = arith.extf %21 : vector<16x128xbf16> to vector<16x128xf32>
      %23 = arith.mulf %22, %18 : vector<16x128xf32>
      %c64_i32 = arith.constant 64 : i32
      %24 = tpu.dynamic_rotate %22 by %c64_i32 dim 1 : vector<16x128xf32>, i32 -> vector<16x128xf32>
      %25 = arith.mulf %24, %19 : vector<16x128xf32>
      %26 = arith.addf %23, %25 : vector<16x128xf32>
      %cst_19 = arith.constant 0.0883883461 : f32
      %27 = vector.broadcast %cst_19 : f32 to vector<16x128xf32>
      %28 = arith.mulf %26, %27 : vector<16x128xf32>
      %29 = arith.truncf %28 : vector<16x128xf32> to vector<16x128xbf16>
      %c0_20 = arith.constant 0 : index
      %c0_21 = arith.constant 0 : index
      %30 = vector.load %arg11[%c0_20, %c0_21] : memref<32x128xbf16, #tpu.memory_space<vmem>>, vector<16x128xbf16>
      tpu.vector_store %arg11[%c0_20, %c0_21], %29 {strides = array<i32>} : memref<32x128xbf16, #tpu.memory_space<vmem>>, vector<16x128xbf16>,
      %c1 = arith.constant 1 : index
      %c0_22 = arith.constant 0 : index
      %c0_23 = arith.constant 0 : index
      %31 = vector.load %arg7[%c1, %c0_22, %c0_23] : memref<2x16x128xbf16, #tpu.memory_space<vmem>>, vector<1x16x128xbf16>
      %32 = vector.shape_cast %31 : vector<1x16x128xbf16> to vector<16x128xbf16>
      %33 = arith.extf %32 : vector<16x128xbf16> to vector<16x128xf32>
      %34 = arith.mulf %33, %18 : vector<16x128xf32>
      %c64_i32_24 = arith.constant 64 : i32
      %35 = tpu.dynamic_rotate %33 by %c64_i32_24 dim 1 : vector<16x128xf32>, i32 -> vector<16x128xf32>
      %36 = arith.mulf %35, %19 : vector<16x128xf32>
      %37 = arith.addf %34, %36 : vector<16x128xf32>
      %cst_25 = arith.constant 0.0883883461 : f32
      %38 = vector.broadcast %cst_25 : f32 to vector<16x128xf32>
      %39 = arith.mulf %37, %38 : vector<16x128xf32>
      %40 = arith.truncf %39 : vector<16x128xf32> to vector<16x128xbf16>
      %c16 = arith.constant 16 : index
      %c0_26 = arith.constant 0 : index
      %41 = vector.load %arg11[%c16, %c0_26] : memref<32x128xbf16, #tpu.memory_space<vmem>>, vector<16x128xbf16>
      tpu.vector_store %arg11[%c16, %c0_26], %40 {strides = array<i32>} : memref<32x128xbf16, #tpu.memory_space<vmem>>, vector<16x128xbf16>,
    } else {
    }
    %c16_i32 = arith.constant 16 : i32
    %3 = arith.muli %arg2, %c16_i32 : i32
    %c1_i32 = arith.constant 1 : i32
    %4 = arith.addi %arg1, %c1_i32 : i32
    %c16_i32_1 = arith.constant 16 : i32
    %5 = arith.muli %4, %c16_i32_1 : i32
    %6 = arith.cmpi slt, %3, %5 : i32
    %7 = arith.extui %6 : i1 to i32
    %c0_i32_2 = arith.constant 0 : i32
    %8 = arith.cmpi ne, %7, %c0_i32_2 : i32
    scf.if %8 {
      %c0 = arith.constant 0 : index
      %c0_5 = arith.constant 0 : index
      %c0_6 = arith.constant 0 : index
      %12 = vector.load %arg8[%c0, %c0_5, %c0_6] : memref<1x16x128xbf16, #tpu.memory_space<vmem>>, vector<1x16x128xbf16>
      %13 = vector.shape_cast %12 : vector<1x16x128xbf16> to vector<16x128xbf16>
      %14 = arith.extf %13 : vector<16x128xbf16> to vector<16x128xf32>
      %c0_7 = arith.constant 0 : index
      %c0_8 = arith.constant 0 : index
      %15 = vector.load %arg5[%c0_7, %c0_8] : memref<16x128xf32, #tpu.memory_space<vmem>>, vector<16x128xf32>
      %16 = arith.mulf %14, %15 : vector<16x128xf32>
      %c64_i32 = arith.constant 64 : i32
      %17 = tpu.dynamic_rotate %14 by %c64_i32 dim 1 : vector<16x128xf32>, i32 -> vector<16x128xf32>
      %c0_9 = arith.constant 0 : index
      %c0_10 = arith.constant 0 : index
      %18 = vector.load %arg6[%c0_9, %c0_10] : memref<16x128xf32, #tpu.memory_space<vmem>>, vector<16x128xf32>
      %19 = arith.mulf %17, %18 : vector<16x128xf32>
      %20 = arith.addf %16, %19 : vector<16x128xf32>
      %21 = arith.truncf %20 : vector<16x128xf32> to vector<16x128xbf16>
      %c0_11 = arith.constant 0 : index
      %c0_12 = arith.constant 0 : index
      %22 = vector.load %arg11[%c0_11, %c0_12] : memref<32x128xbf16, #tpu.memory_space<vmem>>, vector<32x128xbf16>
      %23 = tpu.transpose %21, [1, 0] : vector<16x128xbf16> -> vector<128x16xbf16>
      %cst = arith.constant dense<0.000000e+00> : vector<32x16xf32>
      %24 = tpu.matmul %22, %23, %cst {dimension_numbers = #tpu.dot_dimension_numbers<[1], [0], [0], [1], [0, 0, 1, 1], [], []>} : vector<32x128xbf16>, vector<128x16xbf16>, vector<32x16xf32> -> vector<32x16xf32>
      %25 = tpu.iota {dimensions = array<i32: 1>} : vector<2x16x16xi32>
      %26 = vector.shape_cast %25 : vector<2x16x16xi32> to vector<32x16xi32>
      %27 = tpu.iota {dimensions = array<i32: 1>} : vector<32x16xi32>
      %c16_i32_13 = arith.constant 16 : i32
      %28 = arith.muli %arg2, %c16_i32_13 : i32
      %29 = vector.broadcast %28 : i32 to vector<32x16xi32>
      %30 = arith.addi %29, %27 : vector<32x16xi32>
      %c16_i32_14 = arith.constant 16 : i32
      %31 = arith.muli %arg1, %c16_i32_14 : i32
      %32 = vector.broadcast %31 : i32 to vector<32x16xi32>
      %33 = arith.addi %32, %26 : vector<32x16xi32>
      %34 = arith.cmpi sle, %30, %33 : vector<32x16xi32>
      %cst_15 = arith.constant -1.000000e+30 : f32
      %35 = vector.broadcast %cst_15 : f32 to vector<32x16xf32>
      %36 = arith.select %34, %24, %35 : vector<32x16xi1>, vector<32x16xf32>
      %c0_16 = arith.constant 0 : index
      %c0_17 = arith.constant 0 : index
      %37 = vector.load %arg12[%c0_16, %c0_17] : memref<32x1xf32, #tpu.memory_space<vmem>>, vector<32x1xf32>
      %cst_18 = arith.constant dense<0xFF800000> : vector<32xf32>
      %38 = vector.multi_reduction <maximumf>, %36, %cst_18 [1] : vector<32x16xf32> to vector<32xf32>
      %39 = vector.shape_cast %38 : vector<32xf32> to vector<32x1xf32>
      %40 = arith.maximumf %37, %39 : vector<32x1xf32>
      %41 = arith.subf %37, %40 : vector<32x1xf32>
      %42 = math.exp %41 : vector<32x1xf32>
      %43 = vector.broadcast %40 : vector<32x1xf32> to vector<32x16xf32>
      %44 = arith.subf %36, %43 : vector<32x16xf32>
      %45 = math.exp %44 : vector<32x16xf32>
      %c0_19 = arith.constant 0 : index
      %c0_20 = arith.constant 0 : index
      %46 = vector.load %arg13[%c0_19, %c0_20] : memref<32x1xf32, #tpu.memory_space<vmem>>, vector<32x1xf32>
      %47 = arith.mulf %42, %46 : vector<32x1xf32>
      %cst_21 = arith.constant dense<0.000000e+00> : vector<32xf32>
      %48 = vector.multi_reduction <add>, %45, %cst_21 [1] : vector<32x16xf32> to vector<32xf32>
      %49 = vector.shape_cast %48 : vector<32xf32> to vector<32x1xf32>
      %50 = arith.addf %47, %49 : vector<32x1xf32>
      %c0_22 = arith.constant 0 : index
      %c0_23 = arith.constant 0 : index
      %51 = vector.load %arg13[%c0_22, %c0_23] : memref<32x1xf32, #tpu.memory_space<vmem>>, vector<32x1xf32>
      tpu.vector_store %arg13[%c0_22, %c0_23], %50 {strides = array<i32>} : memref<32x1xf32, #tpu.memory_space<vmem>>, vector<32x1xf32>,
      %c0_24 = arith.constant 0 : index
      %c0_25 = arith.constant 0 : index
      %52 = vector.load %arg14[%c0_24, %c0_25] : memref<32x128xf32, #tpu.memory_space<vmem>>, vector<32x128xf32>
      %53 = vector.broadcast %42 : vector<32x1xf32> to vector<32x128xf32>
      %54 = arith.mulf %53, %52 : vector<32x128xf32>
      %55 = arith.truncf %45 : vector<32x16xf32> to vector<32x16xbf16>
      %c0_26 = arith.constant 0 : index
      %c0_27 = arith.constant 0 : index
      %c0_28 = arith.constant 0 : index
      %56 = vector.load %arg9[%c0_26, %c0_27, %c0_28] : memref<1x16x128xbf16, #tpu.memory_space<vmem>>, vector<1x16x128xbf16>
      %57 = vector.shape_cast %56 : vector<1x16x128xbf16> to vector<16x128xbf16>
      %cst_29 = arith.constant dense<0.000000e+00> : vector<32x128xf32>
      %58 = tpu.matmul %55, %57, %cst_29 {dimension_numbers = #tpu.dot_dimension_numbers<[1], [0], [0], [1], [0, 0, 1, 1], [], []>} : vector<32x16xbf16>, vector<16x128xbf16>, vector<32x128xf32> -> vector<32x128xf32>
      %59 = arith.addf %54, %58 : vector<32x128xf32>
      %c0_30 = arith.constant 0 : index
      %c0_31 = arith.constant 0 : index
      %60 = vector.load %arg14[%c0_30, %c0_31] : memref<32x128xf32, #tpu.memory_space<vmem>>, vector<32x128xf32>
      tpu.vector_store %arg14[%c0_30, %c0_31], %59 {strides = array<i32>} : memref<32x128xf32, #tpu.memory_space<vmem>>, vector<32x128xf32>,
      %c0_32 = arith.constant 0 : index
      %c0_33 = arith.constant 0 : index
      %61 = vector.load %arg12[%c0_32, %c0_33] : memref<32x1xf32, #tpu.memory_space<vmem>>, vector<32x1xf32>
      tpu.vector_store %arg12[%c0_32, %c0_33], %40 {strides = array<i32>} : memref<32x1xf32, #tpu.memory_space<vmem>>, vector<32x1xf32>,
    } else {
    }
    %c0_i32_3 = arith.constant 0 : i32
    %9 = arith.cmpi eq, %arg2, %c0_i32_3 : i32
    %10 = arith.extui %9 : i1 to i32
    %c0_i32_4 = arith.constant 0 : i32
    %11 = arith.cmpi ne, %10, %c0_i32_4 : i32
    scf.if %11 {
      %c0 = arith.constant 0 : index
      %c0_5 = arith.constant 0 : index
      %12 = vector.load %arg13[%c0, %c0_5] : memref<32x1xf32, #tpu.memory_space<vmem>>, vector<32x1xf32>
      %13 = tpu.reciprocal %12 {approx = true} : vector<32x1xf32> -> vector<32x1xf32>
      %c0_6 = arith.constant 0 : index
      %c0_7 = arith.constant 0 : index
      %14 = vector.load %arg14[%c0_6, %c0_7] : memref<32x128xf32, #tpu.memory_space<vmem>>, vector<32x128xf32>
      %15 = vector.broadcast %13 : vector<32x1xf32> to vector<32x128xf32>
      %16 = arith.mulf %14, %15 : vector<32x128xf32>
      %17 = vector.shape_cast %16 : vector<32x128xf32> to vector<2x16x128xf32>
      %18 = arith.truncf %17 : vector<2x16x128xf32> to vector<2x16x128xbf16>
      %c0_8 = arith.constant 0 : index
      %c0_9 = arith.constant 0 : index
      %c0_10 = arith.constant 0 : index
      %19 = vector.load %arg10[%c0_8, %c0_9, %c0_10] : memref<2x16x128xbf16, #tpu.memory_space<vmem>>, vector<2x16x128xbf16>
      tpu.vector_store %arg10[%c0_8, %c0_9, %c0_10], %18 {strides = array<i32>} : memref<2x16x128xbf16, #tpu.memory_space<vmem>>, vector<2x16x128xbf16>,
    } else {
    }
    return
  }
  func.func @transform_0(%arg0: i32, %arg1: i32, %arg2: i32) -> (i32, i32) {
    %c0_i32 = arith.constant 0 : i32
    %c0_i32_0 = arith.constant 0 : i32
    return %arg1, %c0_i32 : i32, i32
  }
  func.func @transform_1(%arg0: i32, %arg1: i32, %arg2: i32) -> (i32, i32) {
    %c0_i32 = arith.constant 0 : i32
    %c0_i32_0 = arith.constant 0 : i32
    return %arg1, %c0_i32 : i32, i32
  }
  func.func @transform_2(%arg0: i32, %arg1: i32, %arg2: i32) -> (i32, i32) {
    %c0_i32 = arith.constant 0 : i32
    %c0_i32_0 = arith.constant 0 : i32
    return %arg2, %c0_i32 : i32, i32
  }
  func.func @transform_3(%arg0: i32, %arg1: i32, %arg2: i32) -> (i32, i32) {
    %c0_i32 = arith.constant 0 : i32
    %c0_i32_0 = arith.constant 0 : i32
    return %arg2, %c0_i32 : i32, i32
  }
  func.func @transform_4(%arg0: i32, %arg1: i32, %arg2: i32) -> (i32, i32, i32) {
    %c0_i32 = arith.constant 0 : i32
    %c0_i32_0 = arith.constant 0 : i32
    return %arg0, %arg1, %c0_i32 : i32, i32, i32
  }
  func.func @transform_5(%arg0: i32, %arg1: i32, %arg2: i32) -> (i32, i32, i32) {
    %c0_i32 = arith.constant 0 : i32
    %c0_i32_0 = arith.constant 0 : i32
    return %arg0, %arg2, %c0_i32 : i32, i32, i32
  }
  func.func @transform_6(%arg0: i32, %arg1: i32, %arg2: i32) -> (i32, i32, i32) {
    %c0_i32 = arith.constant 0 : i32
    %c0_i32_0 = arith.constant 0 : i32
    return %arg0, %arg2, %c0_i32 : i32, i32, i32
  }
  func.func @transform_7(%arg0: i32, %arg1: i32, %arg2: i32) -> (i32, i32, i32) {
    %c0_i32 = arith.constant 0 : i32
    %c0_i32_0 = arith.constant 0 : i32
    return %arg0, %arg1, %c0_i32 : i32, i32, i32
  }
}

module attributes {stable_mosaic.version = 11 : i64} {
  func.func @_matmul_kernel(%arg0: i32, %arg1: i32, %arg2: i32, %arg3: memref<16x512xbf16, #tpu.memory_space<vmem>>, %arg4: memref<512x256xbf16, #tpu.memory_space<vmem>>, %arg5: memref<16x256xbf16, #tpu.memory_space<vmem>>, %arg6: memref<16x256xf32, #tpu.memory_space<vmem>>) attributes {dimension_semantics = [#tpu.dimension_semantics<parallel>, #tpu.dimension_semantics<parallel>, #tpu.dimension_semantics<arbitrary>], iteration_bounds = array<i64: 1, 2, 1>, scalar_prefetch = 0 : i64, scratch_operands = 1 : i64, tpu.core_type = #tpu.core_type<tc>, window_params = [{transform_indices = @transform_0, window_bounds = array<i64: 16, 512>}, {transform_indices = @transform_1, window_bounds = array<i64: 512, 256>}, {transform_indices = @transform_2, window_bounds = array<i64: 16, 256>}]} {
    %c0_i32 = arith.constant 0 : i32
    %0 = arith.cmpi eq, %arg2, %c0_i32 : i32
    %1 = arith.extui %0 : i1 to i32
    %c0_i32_0 = arith.constant 0 : i32
    %2 = arith.cmpi ne, %1, %c0_i32_0 : i32
    scf.if %2 {
      %cst_10 = arith.constant 0.000000e+00 : f32
      %12 = vector.broadcast %cst_10 : f32 to vector<16x256xf32>
      %c0_11 = arith.constant 0 : index
      %c0_12 = arith.constant 0 : index
      %13 = vector.load %arg6[%c0_11, %c0_12] : memref<16x256xf32, #tpu.memory_space<vmem>>, vector<16x256xf32>
      tpu.vector_store %arg6[%c0_11, %c0_12], %12 {strides = array<i32>} : memref<16x256xf32, #tpu.memory_space<vmem>>, vector<16x256xf32>,
    } else {
    }
    %c0 = arith.constant 0 : index
    %c0_1 = arith.constant 0 : index
    %3 = vector.load %arg6[%c0, %c0_1] : memref<16x256xf32, #tpu.memory_space<vmem>>, vector<16x256xf32>
    %c0_2 = arith.constant 0 : index
    %c0_3 = arith.constant 0 : index
    %4 = vector.load %arg3[%c0_2, %c0_3] : memref<16x512xbf16, #tpu.memory_space<vmem>>, vector<16x512xbf16>
    %c0_4 = arith.constant 0 : index
    %c0_5 = arith.constant 0 : index
    %5 = vector.load %arg4[%c0_4, %c0_5] : memref<512x256xbf16, #tpu.memory_space<vmem>>, vector<512x256xbf16>
    %cst = arith.constant dense<0.000000e+00> : vector<16x256xf32>
    %6 = tpu.matmul %4, %5, %cst {dimension_numbers = #tpu.dot_dimension_numbers<[1], [0], [0], [1], [0, 0, 1, 1], [], []>} : vector<16x512xbf16>, vector<512x256xbf16>, vector<16x256xf32> -> vector<16x256xf32>
    %7 = arith.addf %3, %6 : vector<16x256xf32>
    %c0_6 = arith.constant 0 : index
    %c0_7 = arith.constant 0 : index
    %8 = vector.load %arg6[%c0_6, %c0_7] : memref<16x256xf32, #tpu.memory_space<vmem>>, vector<16x256xf32>
    tpu.vector_store %arg6[%c0_6, %c0_7], %7 {strides = array<i32>} : memref<16x256xf32, #tpu.memory_space<vmem>>, vector<16x256xf32>,
    %c0_i32_8 = arith.constant 0 : i32
    %9 = arith.cmpi eq, %arg2, %c0_i32_8 : i32
    %10 = arith.extui %9 : i1 to i32
    %c0_i32_9 = arith.constant 0 : i32
    %11 = arith.cmpi ne, %10, %c0_i32_9 : i32
    scf.if %11 {
      %c0_10 = arith.constant 0 : index
      %c0_11 = arith.constant 0 : index
      %12 = vector.load %arg6[%c0_10, %c0_11] : memref<16x256xf32, #tpu.memory_space<vmem>>, vector<16x256xf32>
      %13 = arith.truncf %12 : vector<16x256xf32> to vector<16x256xbf16>
      %c0_12 = arith.constant 0 : index
      %c0_13 = arith.constant 0 : index
      %14 = vector.load %arg5[%c0_12, %c0_13] : memref<16x256xbf16, #tpu.memory_space<vmem>>, vector<16x256xbf16>
      tpu.vector_store %arg5[%c0_12, %c0_13], %13 {strides = array<i32>} : memref<16x256xbf16, #tpu.memory_space<vmem>>, vector<16x256xbf16>,
    } else {
    }
    return
  }
  func.func @transform_0(%arg0: i32, %arg1: i32, %arg2: i32) -> (i32, i32) {
    %c0_i32 = arith.constant 0 : i32
    return %arg0, %arg2 : i32, i32
  }
  func.func @transform_1(%arg0: i32, %arg1: i32, %arg2: i32) -> (i32, i32) {
    %c0_i32 = arith.constant 0 : i32
    return %arg2, %arg1 : i32, i32
  }
  func.func @transform_2(%arg0: i32, %arg1: i32, %arg2: i32) -> (i32, i32) {
    %c0_i32 = arith.constant 0 : i32
    return %arg0, %arg1 : i32, i32
  }
}

module attributes {stable_mosaic.version = 11 : i64} {
  func.func @_rmsnorm_residual_kernel(%arg0: i32, %arg1: memref<16x512xbf16, #tpu.memory_space<vmem>>, %arg2: memref<16x512xbf16, #tpu.memory_space<vmem>>, %arg3: memref<1x512xbf16, #tpu.memory_space<vmem>>, %arg4: memref<16x512xbf16, #tpu.memory_space<vmem>>, %arg5: memref<16x512xbf16, #tpu.memory_space<vmem>>) attributes {dimension_semantics = [#tpu.dimension_semantics<parallel>], iteration_bounds = array<i64: 1>, scalar_prefetch = 0 : i64, scratch_operands = 0 : i64, tpu.core_type = #tpu.core_type<tc>, window_params = [{transform_indices = @transform_0, window_bounds = array<i64: 16, 512>}, {transform_indices = @transform_1, window_bounds = array<i64: 16, 512>}, {pipeline_mode = #tpu.pipeline_mode<synchronous>, transform_indices = @transform_2, window_bounds = array<i64: 1, 512>}, {transform_indices = @transform_3, window_bounds = array<i64: 16, 512>}, {transform_indices = @transform_4, window_bounds = array<i64: 16, 512>}]} {
    %c0 = arith.constant 0 : index
    %c0_0 = arith.constant 0 : index
    %0 = vector.load %arg1[%c0, %c0_0] : memref<16x512xbf16, #tpu.memory_space<vmem>>, vector<16x512xbf16>
    %1 = arith.extf %0 : vector<16x512xbf16> to vector<16x512xf32>
    %c0_1 = arith.constant 0 : index
    %c0_2 = arith.constant 0 : index
    %2 = vector.load %arg2[%c0_1, %c0_2] : memref<16x512xbf16, #tpu.memory_space<vmem>>, vector<16x512xbf16>
    %3 = arith.extf %2 : vector<16x512xbf16> to vector<16x512xf32>
    %4 = arith.addf %1, %3 : vector<16x512xf32>
    %5 = arith.truncf %4 : vector<16x512xf32> to vector<16x512xbf16>
    %c0_3 = arith.constant 0 : index
    %c0_4 = arith.constant 0 : index
    %6 = vector.load %arg5[%c0_3, %c0_4] : memref<16x512xbf16, #tpu.memory_space<vmem>>, vector<16x512xbf16>
    tpu.vector_store %arg5[%c0_3, %c0_4], %5 {strides = array<i32>} : memref<16x512xbf16, #tpu.memory_space<vmem>>, vector<16x512xbf16>,
    %7 = arith.mulf %4, %4 : vector<16x512xf32>
    %cst = arith.constant dense<0.000000e+00> : vector<16xf32>
    %8 = vector.multi_reduction <add>, %7, %cst [1] : vector<16x512xf32> to vector<16xf32>
    %9 = vector.shape_cast %8 : vector<16xf32> to vector<16x1xf32>
    %cst_5 = arith.constant 5.120000e+02 : f32
    %10 = vector.broadcast %cst_5 : f32 to vector<16x1xf32>
    %11 = arith.divf %9, %10 : vector<16x1xf32>
    %cst_6 = arith.constant 9.99999997E-7 : f32
    %12 = vector.broadcast %cst_6 : f32 to vector<16x1xf32>
    %13 = arith.addf %11, %12 : vector<16x1xf32>
    %14 = math.rsqrt %13 : vector<16x1xf32>
    %15 = vector.broadcast %14 : vector<16x1xf32> to vector<16x512xf32>
    %16 = arith.mulf %4, %15 : vector<16x512xf32>
    %c0_7 = arith.constant 0 : index
    %c0_8 = arith.constant 0 : index
    %17 = vector.load %arg3[%c0_7, %c0_8] : memref<1x512xbf16, #tpu.memory_space<vmem>>, vector<1x512xbf16>
    %18 = arith.extf %17 : vector<1x512xbf16> to vector<1x512xf32>
    %19 = vector.broadcast %18 : vector<1x512xf32> to vector<16x512xf32>
    %20 = arith.mulf %16, %19 : vector<16x512xf32>
    %21 = arith.truncf %20 : vector<16x512xf32> to vector<16x512xbf16>
    %c0_9 = arith.constant 0 : index
    %c0_10 = arith.constant 0 : index
    %22 = vector.load %arg4[%c0_9, %c0_10] : memref<16x512xbf16, #tpu.memory_space<vmem>>, vector<16x512xbf16>
    tpu.vector_store %arg4[%c0_9, %c0_10], %21 {strides = array<i32>} : memref<16x512xbf16, #tpu.memory_space<vmem>>, vector<16x512xbf16>,
    return
  }
  func.func @transform_0(%arg0: i32) -> (i32, i32) {
    %c0_i32 = arith.constant 0 : i32
    %c0_i32_0 = arith.constant 0 : i32
    return %arg0, %c0_i32 : i32, i32
  }
  func.func @transform_1(%arg0: i32) -> (i32, i32) {
    %c0_i32 = arith.constant 0 : i32
    %c0_i32_0 = arith.constant 0 : i32
    return %arg0, %c0_i32 : i32, i32
  }
  func.func @transform_2(%arg0: i32) -> (i32, i32) {
    %c0_i32 = arith.constant 0 : i32
    %c0_i32_0 = arith.constant 0 : i32
    %c0_i32_1 = arith.constant 0 : i32
    return %c0_i32, %c0_i32_0 : i32, i32
  }
  func.func @transform_3(%arg0: i32) -> (i32, i32) {
    %c0_i32 = arith.constant 0 : i32
    %c0_i32_0 = arith.constant 0 : i32
    return %arg0, %c0_i32 : i32, i32
  }
  func.func @transform_4(%arg0: i32) -> (i32, i32) {
    %c0_i32 = arith.constant 0 : i32
    %c0_i32_0 = arith.constant 0 : i32
    return %arg0, %c0_i32 : i32, i32
  }
}

module attributes {stable_mosaic.version = 11 : i64} {
  func.func @_matmul_kernel(%arg0: i32, %arg1: i32, %arg2: i32, %arg3: memref<16x512xbf16, #tpu.memory_space<vmem>>, %arg4: memref<512x256xbf16, #tpu.memory_space<vmem>>, %arg5: memref<16x256xbf16, #tpu.memory_space<vmem>>, %arg6: memref<16x256xf32, #tpu.memory_space<vmem>>) attributes {dimension_semantics = [#tpu.dimension_semantics<parallel>, #tpu.dimension_semantics<parallel>, #tpu.dimension_semantics<arbitrary>], iteration_bounds = array<i64: 1, 8, 1>, scalar_prefetch = 0 : i64, scratch_operands = 1 : i64, tpu.core_type = #tpu.core_type<tc>, window_params = [{transform_indices = @transform_0, window_bounds = array<i64: 16, 512>}, {transform_indices = @transform_1, window_bounds = array<i64: 512, 256>}, {transform_indices = @transform_2, window_bounds = array<i64: 16, 256>}]} {
    %c0_i32 = arith.constant 0 : i32
    %0 = arith.cmpi eq, %arg2, %c0_i32 : i32
    %1 = arith.extui %0 : i1 to i32
    %c0_i32_0 = arith.constant 0 : i32
    %2 = arith.cmpi ne, %1, %c0_i32_0 : i32
    scf.if %2 {
      %cst_10 = arith.constant 0.000000e+00 : f32
      %12 = vector.broadcast %cst_10 : f32 to vector<16x256xf32>
      %c0_11 = arith.constant 0 : index
      %c0_12 = arith.constant 0 : index
      %13 = vector.load %arg6[%c0_11, %c0_12] : memref<16x256xf32, #tpu.memory_space<vmem>>, vector<16x256xf32>
      tpu.vector_store %arg6[%c0_11, %c0_12], %12 {strides = array<i32>} : memref<16x256xf32, #tpu.memory_space<vmem>>, vector<16x256xf32>,
    } else {
    }
    %c0 = arith.constant 0 : index
    %c0_1 = arith.constant 0 : index
    %3 = vector.load %arg6[%c0, %c0_1] : memref<16x256xf32, #tpu.memory_space<vmem>>, vector<16x256xf32>
    %c0_2 = arith.constant 0 : index
    %c0_3 = arith.constant 0 : index
    %4 = vector.load %arg3[%c0_2, %c0_3] : memref<16x512xbf16, #tpu.memory_space<vmem>>, vector<16x512xbf16>
    %c0_4 = arith.constant 0 : index
    %c0_5 = arith.constant 0 : index
    %5 = vector.load %arg4[%c0_4, %c0_5] : memref<512x256xbf16, #tpu.memory_space<vmem>>, vector<512x256xbf16>
    %cst = arith.constant dense<0.000000e+00> : vector<16x256xf32>
    %6 = tpu.matmul %4, %5, %cst {dimension_numbers = #tpu.dot_dimension_numbers<[1], [0], [0], [1], [0, 0, 1, 1], [], []>} : vector<16x512xbf16>, vector<512x256xbf16>, vector<16x256xf32> -> vector<16x256xf32>
    %7 = arith.addf %3, %6 : vector<16x256xf32>
    %c0_6 = arith.constant 0 : index
    %c0_7 = arith.constant 0 : index
    %8 = vector.load %arg6[%c0_6, %c0_7] : memref<16x256xf32, #tpu.memory_space<vmem>>, vector<16x256xf32>
    tpu.vector_store %arg6[%c0_6, %c0_7], %7 {strides = array<i32>} : memref<16x256xf32, #tpu.memory_space<vmem>>, vector<16x256xf32>,
    %c0_i32_8 = arith.constant 0 : i32
    %9 = arith.cmpi eq, %arg2, %c0_i32_8 : i32
    %10 = arith.extui %9 : i1 to i32
    %c0_i32_9 = arith.constant 0 : i32
    %11 = arith.cmpi ne, %10, %c0_i32_9 : i32
    scf.if %11 {
      %c0_10 = arith.constant 0 : index
      %c0_11 = arith.constant 0 : index
      %12 = vector.load %arg6[%c0_10, %c0_11] : memref<16x256xf32, #tpu.memory_space<vmem>>, vector<16x256xf32>
      %13 = arith.truncf %12 : vector<16x256xf32> to vector<16x256xbf16>
      %c0_12 = arith.constant 0 : index
      %c0_13 = arith.constant 0 : index
      %14 = vector.load %arg5[%c0_12, %c0_13] : memref<16x256xbf16, #tpu.memory_space<vmem>>, vector<16x256xbf16>
      tpu.vector_store %arg5[%c0_12, %c0_13], %13 {strides = array<i32>} : memref<16x256xbf16, #tpu.memory_space<vmem>>, vector<16x256xbf16>,
    } else {
    }
    return
  }
  func.func @transform_0(%arg0: i32, %arg1: i32, %arg2: i32) -> (i32, i32) {
    %c0_i32 = arith.constant 0 : i32
    return %arg0, %arg2 : i32, i32
  }
  func.func @transform_1(%arg0: i32, %arg1: i32, %arg2: i32) -> (i32, i32) {
    %c0_i32 = arith.constant 0 : i32
    return %arg2, %arg1 : i32, i32
  }
  func.func @transform_2(%arg0: i32, %arg1: i32, %arg2: i32) -> (i32, i32) {
    %c0_i32 = arith.constant 0 : i32
    return %arg0, %arg1 : i32, i32
  }
}

module attributes {stable_mosaic.version = 11 : i64} {
  func.func @_silu_mul_matmul_kernel(%arg0: i32, %arg1: i32, %arg2: i32, %arg3: memref<16x512xbf16, #tpu.memory_space<vmem>>, %arg4: memref<16x512xbf16, #tpu.memory_space<vmem>>, %arg5: memref<512x256xbf16, #tpu.memory_space<vmem>>, %arg6: memref<16x256xbf16, #tpu.memory_space<vmem>>, %arg7: memref<16x256xf32, #tpu.memory_space<vmem>>) attributes {dimension_semantics = [#tpu.dimension_semantics<parallel>, #tpu.dimension_semantics<parallel>, #tpu.dimension_semantics<arbitrary>], iteration_bounds = array<i64: 1, 2, 2>, scalar_prefetch = 0 : i64, scratch_operands = 1 : i64, tpu.core_type = #tpu.core_type<tc>, window_params = [{transform_indices = @transform_0, window_bounds = array<i64: 16, 512>}, {transform_indices = @transform_1, window_bounds = array<i64: 16, 512>}, {transform_indices = @transform_2, window_bounds = array<i64: 512, 256>}, {transform_indices = @transform_3, window_bounds = array<i64: 16, 256>}]} {
    %c0_i32 = arith.constant 0 : i32
    %0 = arith.cmpi eq, %arg2, %c0_i32 : i32
    %1 = arith.extui %0 : i1 to i32
    %c0_i32_0 = arith.constant 0 : i32
    %2 = arith.cmpi ne, %1, %c0_i32_0 : i32
    scf.if %2 {
      %cst_14 = arith.constant 0.000000e+00 : f32
      %25 = vector.broadcast %cst_14 : f32 to vector<16x256xf32>
      %c0_15 = arith.constant 0 : index
      %c0_16 = arith.constant 0 : index
      %26 = vector.load %arg7[%c0_15, %c0_16] : memref<16x256xf32, #tpu.memory_space<vmem>>, vector<16x256xf32>
      tpu.vector_store %arg7[%c0_15, %c0_16], %25 {strides = array<i32>} : memref<16x256xf32, #tpu.memory_space<vmem>>, vector<16x256xf32>,
    } else {
    }
    %c0 = arith.constant 0 : index
    %c0_1 = arith.constant 0 : index
    %3 = vector.load %arg3[%c0, %c0_1] : memref<16x512xbf16, #tpu.memory_space<vmem>>, vector<16x512xbf16>
    %4 = arith.extf %3 : vector<16x512xbf16> to vector<16x512xf32>
    %c0_2 = arith.constant 0 : index
    %c0_3 = arith.constant 0 : index
    %5 = vector.load %arg4[%c0_2, %c0_3] : memref<16x512xbf16, #tpu.memory_space<vmem>>, vector<16x512xbf16>
    %6 = arith.extf %5 : vector<16x512xbf16> to vector<16x512xf32>
    %cst = arith.constant 0.000000e+00 : f32
    %7 = vector.broadcast %cst : f32 to vector<16x512xf32>
    %8 = arith.subf %7, %4 : vector<16x512xf32>
    %9 = math.exp %8 : vector<16x512xf32>
    %cst_4 = arith.constant 1.000000e+00 : f32
    %10 = vector.broadcast %cst_4 : f32 to vector<16x512xf32>
    %11 = arith.addf %10, %9 : vector<16x512xf32>
    %cst_5 = arith.constant 1.000000e+00 : f32
    %12 = vector.broadcast %cst_5 : f32 to vector<16x512xf32>
    %13 = arith.divf %12, %11 : vector<16x512xf32>
    %14 = arith.mulf %4, %13 : vector<16x512xf32>
    %15 = arith.mulf %14, %6 : vector<16x512xf32>
    %16 = arith.truncf %15 : vector<16x512xf32> to vector<16x512xbf16>
    %c0_6 = arith.constant 0 : index
    %c0_7 = arith.constant 0 : index
    %17 = vector.load %arg7[%c0_6, %c0_7] : memref<16x256xf32, #tpu.memory_space<vmem>>, vector<16x256xf32>
    %c0_8 = arith.constant 0 : index
    %c0_9 = arith.constant 0 : index
    %18 = vector.load %arg5[%c0_8, %c0_9] : memref<512x256xbf16, #tpu.memory_space<vmem>>, vector<512x256xbf16>
    %cst_10 = arith.constant dense<0.000000e+00> : vector<16x256xf32>
    %19 = tpu.matmul %16, %18, %cst_10 {dimension_numbers = #tpu.dot_dimension_numbers<[1], [0], [0], [1], [0, 0, 1, 1], [], []>} : vector<16x512xbf16>, vector<512x256xbf16>, vector<16x256xf32> -> vector<16x256xf32>
    %20 = arith.addf %17, %19 : vector<16x256xf32>
    %c0_11 = arith.constant 0 : index
    %c0_12 = arith.constant 0 : index
    %21 = vector.load %arg7[%c0_11, %c0_12] : memref<16x256xf32, #tpu.memory_space<vmem>>, vector<16x256xf32>
    tpu.vector_store %arg7[%c0_11, %c0_12], %20 {strides = array<i32>} : memref<16x256xf32, #tpu.memory_space<vmem>>, vector<16x256xf32>,
    %c1_i32 = arith.constant 1 : i32
    %22 = arith.cmpi eq, %arg2, %c1_i32 : i32
    %23 = arith.extui %22 : i1 to i32
    %c0_i32_13 = arith.constant 0 : i32
    %24 = arith.cmpi ne, %23, %c0_i32_13 : i32
    scf.if %24 {
      %c0_14 = arith.constant 0 : index
      %c0_15 = arith.constant 0 : index
      %25 = vector.load %arg7[%c0_14, %c0_15] : memref<16x256xf32, #tpu.memory_space<vmem>>, vector<16x256xf32>
      %26 = arith.truncf %25 : vector<16x256xf32> to vector<16x256xbf16>
      %c0_16 = arith.constant 0 : index
      %c0_17 = arith.constant 0 : index
      %27 = vector.load %arg6[%c0_16, %c0_17] : memref<16x256xbf16, #tpu.memory_space<vmem>>, vector<16x256xbf16>
      tpu.vector_store %arg6[%c0_16, %c0_17], %26 {strides = array<i32>} : memref<16x256xbf16, #tpu.memory_space<vmem>>, vector<16x256xbf16>,
    } else {
    }
    return
  }
  func.func @transform_0(%arg0: i32, %arg1: i32, %arg2: i32) -> (i32, i32) {
    %c0_i32 = arith.constant 0 : i32
    return %arg0, %arg2 : i32, i32
  }
  func.func @transform_1(%arg0: i32, %arg1: i32, %arg2: i32) -> (i32, i32) {
    %c2_i32 = arith.constant 2 : i32
    %0 = arith.addi %arg2, %c2_i32 : i32
    %c0_i32 = arith.constant 0 : i32
    return %arg0, %0 : i32, i32
  }
  func.func @transform_2(%arg0: i32, %arg1: i32, %arg2: i32) -> (i32, i32) {
    %c0_i32 = arith.constant 0 : i32
    return %arg2, %arg1 : i32, i32
  }
  func.func @transform_3(%arg0: i32, %arg1: i32, %arg2: i32) -> (i32, i32) {
    %c0_i32 = arith.constant 0 : i32
    return %arg0, %arg1 : i32, i32
  }
}

module attributes {stable_mosaic.version = 11 : i64} {
  func.func @_rmsnorm_residual_kernel(%arg0: i32, %arg1: memref<16x512xbf16, #tpu.memory_space<vmem>>, %arg2: memref<16x512xbf16, #tpu.memory_space<vmem>>, %arg3: memref<1x512xbf16, #tpu.memory_space<vmem>>, %arg4: memref<16x512xbf16, #tpu.memory_space<vmem>>, %arg5: memref<16x512xbf16, #tpu.memory_space<vmem>>) attributes {dimension_semantics = [#tpu.dimension_semantics<parallel>], iteration_bounds = array<i64: 1>, scalar_prefetch = 0 : i64, scratch_operands = 0 : i64, tpu.core_type = #tpu.core_type<tc>, window_params = [{transform_indices = @transform_0, window_bounds = array<i64: 16, 512>}, {transform_indices = @transform_1, window_bounds = array<i64: 16, 512>}, {pipeline_mode = #tpu.pipeline_mode<synchronous>, transform_indices = @transform_2, window_bounds = array<i64: 1, 512>}, {transform_indices = @transform_3, window_bounds = array<i64: 16, 512>}, {transform_indices = @transform_4, window_bounds = array<i64: 16, 512>}]} {
    %c0 = arith.constant 0 : index
    %c0_0 = arith.constant 0 : index
    %0 = vector.load %arg1[%c0, %c0_0] : memref<16x512xbf16, #tpu.memory_space<vmem>>, vector<16x512xbf16>
    %1 = arith.extf %0 : vector<16x512xbf16> to vector<16x512xf32>
    %c0_1 = arith.constant 0 : index
    %c0_2 = arith.constant 0 : index
    %2 = vector.load %arg2[%c0_1, %c0_2] : memref<16x512xbf16, #tpu.memory_space<vmem>>, vector<16x512xbf16>
    %3 = arith.extf %2 : vector<16x512xbf16> to vector<16x512xf32>
    %4 = arith.addf %1, %3 : vector<16x512xf32>
    %5 = arith.truncf %4 : vector<16x512xf32> to vector<16x512xbf16>
    %c0_3 = arith.constant 0 : index
    %c0_4 = arith.constant 0 : index
    %6 = vector.load %arg5[%c0_3, %c0_4] : memref<16x512xbf16, #tpu.memory_space<vmem>>, vector<16x512xbf16>
    tpu.vector_store %arg5[%c0_3, %c0_4], %5 {strides = array<i32>} : memref<16x512xbf16, #tpu.memory_space<vmem>>, vector<16x512xbf16>,
    %7 = arith.mulf %4, %4 : vector<16x512xf32>
    %cst = arith.constant dense<0.000000e+00> : vector<16xf32>
    %8 = vector.multi_reduction <add>, %7, %cst [1] : vector<16x512xf32> to vector<16xf32>
    %9 = vector.shape_cast %8 : vector<16xf32> to vector<16x1xf32>
    %cst_5 = arith.constant 5.120000e+02 : f32
    %10 = vector.broadcast %cst_5 : f32 to vector<16x1xf32>
    %11 = arith.divf %9, %10 : vector<16x1xf32>
    %cst_6 = arith.constant 9.99999997E-7 : f32
    %12 = vector.broadcast %cst_6 : f32 to vector<16x1xf32>
    %13 = arith.addf %11, %12 : vector<16x1xf32>
    %14 = math.rsqrt %13 : vector<16x1xf32>
    %15 = vector.broadcast %14 : vector<16x1xf32> to vector<16x512xf32>
    %16 = arith.mulf %4, %15 : vector<16x512xf32>
    %c0_7 = arith.constant 0 : index
    %c0_8 = arith.constant 0 : index
    %17 = vector.load %arg3[%c0_7, %c0_8] : memref<1x512xbf16, #tpu.memory_space<vmem>>, vector<1x512xbf16>
    %18 = arith.extf %17 : vector<1x512xbf16> to vector<1x512xf32>
    %19 = vector.broadcast %18 : vector<1x512xf32> to vector<16x512xf32>
    %20 = arith.mulf %16, %19 : vector<16x512xf32>
    %21 = arith.truncf %20 : vector<16x512xf32> to vector<16x512xbf16>
    %c0_9 = arith.constant 0 : index
    %c0_10 = arith.constant 0 : index
    %22 = vector.load %arg4[%c0_9, %c0_10] : memref<16x512xbf16, #tpu.memory_space<vmem>>, vector<16x512xbf16>
    tpu.vector_store %arg4[%c0_9, %c0_10], %21 {strides = array<i32>} : memref<16x512xbf16, #tpu.memory_space<vmem>>, vector<16x512xbf16>,
    return
  }
  func.func @transform_0(%arg0: i32) -> (i32, i32) {
    %c0_i32 = arith.constant 0 : i32
    %c0_i32_0 = arith.constant 0 : i32
    return %arg0, %c0_i32 : i32, i32
  }
  func.func @transform_1(%arg0: i32) -> (i32, i32) {
    %c0_i32 = arith.constant 0 : i32
    %c0_i32_0 = arith.constant 0 : i32
    return %arg0, %c0_i32 : i32, i32
  }
  func.func @transform_2(%arg0: i32) -> (i32, i32) {
    %c0_i32 = arith.constant 0 : i32
    %c0_i32_0 = arith.constant 0 : i32
    %c0_i32_1 = arith.constant 0 : i32
    return %c0_i32, %c0_i32_0 : i32, i32
  }
  func.func @transform_3(%arg0: i32) -> (i32, i32) {
    %c0_i32 = arith.constant 0 : i32
    %c0_i32_0 = arith.constant 0 : i32
    return %arg0, %c0_i32 : i32, i32
  }
  func.func @transform_4(%arg0: i32) -> (i32, i32) {
    %c0_i32 = arith.constant 0 : i32
    %c0_i32_0 = arith.constant 0 : i32
    return %arg0, %c0_i32 : i32, i32
  }
}

</mosaic_0001>

<llo_original>
// kernel: a_call__.15
$region0: #{a_call__.15}
  #allocation0 [shape = 'u32[]', space=smem, size = 0x4, offset = 0x4, fixed_abs, tag = 'smem constant byte address 0x4 - core index']
  #allocation1 [shape = 'u32[144,128]{1,0:T(1,128)}', space=vmem, size = 0x12000, scoped, tag = 'internal scratch']
  %s0 = inlined_call_operand.vmem [shape: bf16[16,512], index: 0, kind: input, shape index: {}]
  %s1 = inlined_call_operand.vmem [shape: bf16[1,512], index: 1, kind: input, shape index: {}]
  %s2 = inlined_call_operand.vmem [shape: bf16[16,512], index: 2, kind: output, shape index: {}]
  %s3 = sld [smem:[#allocation0]]
  $region18: #{a_call__.15} parent=0
    _
  %s5 = ssub.s32 1, %s3
  %s6 = scalar_select 0, %s5, %s3
  // Predicated region
  $region2: #{a_call__.15} parent=0 // pred_check
    _
  $region3: #{a_call__.15} parent=0 // pred_check_branch
    %8 = sbr.rel (0) target = $region5
  $region4: #{a_call__.15} parent=0 // pred_region
    _
  $region5: #{a_call__.15} parent=0 // pred_fallthru
    _
  // Predicated region
  $region6: #{a_call__.15} parent=0 // pred_check
    _
  $region7: #{a_call__.15} parent=0 // pred_check_branch
    %10 = sbr.rel (0) target = $region9
  $region8: #{a_call__.15} parent=0 // pred_region
    _
  $region9: #{a_call__.15} parent=0 // pred_fallthru
    _
  %v11 = vld [vmem:[%s0] sm:$0xff]
  %v12 = vld [vmem:[%s0 + $0x8] sm:$0xff]
  %v13 = vld [vmem:[%s0 + $0x10] sm:$0xff]
  %v14 = vld [vmem:[%s0 + $0x18] sm:$0xff]
  %v15 = vunpack.c.l.bf16 %v11
  %v16 = vunpack.c.h.bf16 %v11
  %v17 = vunpack.c.l.bf16 %v12
  %v18 = vunpack.c.h.bf16 %v12
  %v19 = vunpack.c.l.bf16 %v13
  %v20 = vunpack.c.h.bf16 %v13
  %v21 = vunpack.c.l.bf16 %v14
  %v22 = vunpack.c.h.bf16 %v14
  %v23 = vmul.f32 %v15, %v15
  %v24 = vmul.f32 %v16, %v16
  %v25 = vmul.f32 %v17, %v17
  %v26 = vmul.f32 %v18, %v18
  %v27 = vmul.f32 %v19, %v19
  %v28 = vmul.f32 %v20, %v20
  %v29 = vmul.f32 %v21, %v21
  %v30 = vmul.f32 %v22, %v22
  %v31 = vadd.f32 %v23, %v24
  %v32 = vadd.f32 %v31, %v25
  %v33 = vadd.f32 %v32, %v26
  %34 = vadd.xlane.f32.xlu0 %v33
  %v35 = vpop.xlane.xlu0 %34
  %v36 = vadd.f32 %v27, %v28
  %v37 = vadd.f32 %v36, %v29
  %v38 = vadd.f32 %v37, %v30
  %39 = vadd.xlane.f32.xlu0 %v38
  %v40 = vpop.xlane.xlu0 %39
  %v41 = vrcp.pop 512.0
  %v42 = vmul.f32 %v35, %v41
  %v43 = vmul.f32 %v40, %v41
  %v44 = vadd.f32 %v42, 1e-06
  %v45 = vadd.f32 %v43, 1e-06
  %v46 = vrsqrt.pop %v44
  %v47 = vrsqrt.pop %v45
  %v48 = vmul.f32 %v15, %v46
  %v49 = vmul.f32 %v16, %v46
  %v50 = vmul.f32 %v17, %v46
  %v51 = vmul.f32 %v18, %v46
  %v52 = vmul.f32 %v19, %v47
  %v53 = vmul.f32 %v20, %v47
  %v54 = vmul.f32 %v21, %v47
  %v55 = vmul.f32 %v22, %v47
  %v56 = vld [vmem:[%s1] sm:$0xf]
  %v57 = vunpack.c.l.bf16 %v56
  %v59 = vlaneseq
  %v60 = vshrl.u32 %v59, 7
  %v61 = vsub.s32 0, %v60
  %v62 = vrot.slane %v57, %v61
  %v63 = vlaneseq
  %v64 = vshrl.u32 %v63, 7
  %v65 = vsub.s32 2, %v64
  %v66 = vrot.slane %v57, %v65
  %v67 = vlaneseq
  %v68 = vshrl.u32 %v67, 7
  %v69 = vsub.s32 4, %v68
  %v70 = vrot.slane %v57, %v69
  %v71 = vlaneseq
  %v72 = vshrl.u32 %v71, 7
  %v73 = vsub.s32 6, %v72
  %v74 = vrot.slane %v57, %v73
  %v79 = vlaneseq
  %v80 = vshrl.u32 %v79, 7
  %v81 = vsub.s32 0, %v80
  %v82 = vrot.slane %v62, %v81
  %v83 = vlaneseq
  %v84 = vshrl.u32 %v83, 7
  %v85 = vsub.s32 0, %v84
  %v86 = vrot.slane %v66, %v85
  %v87 = vlaneseq
  %v88 = vshrl.u32 %v87, 7
  %v89 = vsub.s32 0, %v88
  %v90 = vrot.slane %v70, %v89
  %v91 = vlaneseq
  %v92 = vshrl.u32 %v91, 7
  %v93 = vsub.s32 0, %v92
  %v94 = vrot.slane %v74, %v93
  %v95 = vmul.f32 %v48, %v82
  %v96 = vmul.f32 %v49, %v86
  %v97 = vmul.f32 %v50, %v90
  %v98 = vmul.f32 %v51, %v94
  %v99 = vmul.f32 %v52, %v82
  %v100 = vmul.f32 %v53, %v86
  %v101 = vmul.f32 %v54, %v90
  %v102 = vmul.f32 %v55, %v94
  %v103 = vpack.c.bf16 %v99, %v95
  %v104 = vpack.c.bf16 %v100, %v96
  %v105 = vpack.c.bf16 %v101, %v97
  %v106 = vpack.c.bf16 %v102, %v98
  %v111 = vunpack.c.l.b16 %v103
  %v112 = vunpack.c.l.b16 %v104
  %v113 = vunpack.c.l.b16 %v105
  %v114 = vunpack.c.l.b16 %v106
  %v115 = vunpack.c.h.b16 %v103
  %v116 = vunpack.c.h.b16 %v104
  %v117 = vunpack.c.h.b16 %v105
  %v118 = vunpack.c.h.b16 %v106
  %v119 = vpack.c.b16 %v112, %v111
  %v120 = vpack.c.b16 %v114, %v113
  %v121 = vpack.c.b16 %v116, %v115
  %v122 = vpack.c.b16 %v118, %v117
  %127 = vst [vmem:[%s2] sm:$0xff] %v119
  %128 = vst [vmem:[%s2 + $0x8] sm:$0xff] %v120
  %129 = vst [vmem:[%s2 + $0x10] sm:$0xff] %v121
  %130 = vst [vmem:[%s2 + $0x18] sm:$0xff] %v122
  // Predicated region
  $region10: #{a_call__.15} parent=0 // pred_check
    _
  $region11: #{a_call__.15} parent=0 // pred_check_branch
    %132 = sbr.rel (0) target = $region13
  $region12: #{a_call__.15} parent=0 // pred_region
    _
  $region13: #{a_call__.15} parent=0 // pred_fallthru
    _
  // Predicated region
  $region14: #{a_call__.15} parent=0 // pred_check
    _
  $region15: #{a_call__.15} parent=0 // pred_check_branch
    %134 = sbr.rel (0) target = $region17
  $region16: #{a_call__.15} parent=0 // pred_region
    _
  $region17: #{a_call__.15} parent=0 // pred_fallthru
    _

// kernel: a_call__.16
$region0: #{a_call__.16}
  #allocation0 [shape = 'u32[]', space=smem, size = 0x4, offset = 0x4, fixed_abs, tag = 'smem constant byte address 0x4 - core index']
  #allocation1 [shape = 'u32[144,128]{1,0:T(1,128)}', space=vmem, size = 0x12000, scoped, tag = 'internal scratch']
  #allocation2 [shape = 'f32[16,256]{1,0:T(8,128)}', space=vmem, size = 0x4000, scoped, tag = 'scratch operand']
  %s0 = inlined_call_operand.vmem [shape: bf16[16,512], index: 0, kind: input, shape index: {}]
  %s1 = inlined_call_operand.vmem [shape: bf16[512,1024], index: 1, kind: input, shape index: {}]
  %s2 = inlined_call_operand.vmem [shape: bf16[1,1024], index: 2, kind: input, shape index: {}]
  %s3 = inlined_call_operand.vmem [shape: bf16[16,1024], index: 3, kind: output, shape index: {}]
  %s4 = sld [smem:[#allocation0]]
  $region125: #{a_call__.16} parent=0
    _
  %s6 = ssub.s32 1, %s4
  %s7 = scalar_select 0, %s6, %s4
  $region1: #{a_call__.16} parent=0
    #allocation3 [shape = 'u8[524288]{0}', space=vmem, size = 0x80000, scoped, tag = 'input window, operand 1']
    #allocation4 [shape = 'u8[16384]{0}', space=vmem, size = 0x4000, scoped, tag = 'output window, operand 0']
    loop: start=0, step=1, limit=6
    $region2: #{a_call__.16} parent=1 // loop_pre_header
      _
    $region3: #{a_call__.16} parent=1 // loop_header
      %s9 = sphi 0, %s13
      %p10 = scmp.ge.s32.totalorder %s9, 6
      %s16 = sphi 0, %s35
      %s17 = sphi 0, %s31
      %s18 = sphi 0, %s27
      %s19 = sphi 0, %s16
      %s20 = sphi 0, %s17
      %s21 = sphi 0, %s18
      %s22 = sphi 0, %s19
      %s23 = sphi 0, %s20
      %s24 = sphi 0, %s21
      %s40 = sphi 0, %s42
      %s43 = sphi 0, %s40
      %s44 = sphi 0, %s43
      %s60 = sphi 0, %s44
      %s68 = sphi 0, %s70
      %s71 = sphi 0, %s68
      %s72 = sphi 0, %s71
      %s88 = sphi 0, %s72
      %s94 = sphi 0, %s96
      %s97 = sphi 0, %s94
      %s98 = sphi 0, %s97
      %s114 = sphi 0, %s98
      %s122 = sphi 0, %s124
      %s125 = sphi 0, %s122
      %s126 = sphi 0, %s125
      %s142 = sphi 0, %s126
    $region4: #{a_call__.16} parent=1 // loop_header_branch
      %12 = sbr.rel (%p10) target = $region8
    $region5: #{a_call__.16} parent=1 // loop_body
      %s14 = ssub.s32 %s9, 1
      %s15 = ssub.s32 %s9, 2
      %s25 = sadd.s32 1, %s18
      %p26 = scmp.ge.s32.totalorder %s25, 1
      %s27 = scalar_select %p26, 0, %s25
      %s28 = sadd.s32 1, %s17
      %s29 = scalar_select %p26, %s28, %s17
      %p30 = scmp.ge.s32.totalorder %s29, 4
      %s31 = scalar_select %p30, 0, %s29
      %s32 = sadd.s32 1, %s16
      %s33 = scalar_select %p30, %s32, %s16
      %p34 = scmp.ge.s32.totalorder %s33, 1
      %s35 = scalar_select %p34, 0, %s33
      %s36 = ssub.s32 %s16, %s35
      %s37 = ssub.s32 %s18, %s27
      %s38 = sor.u32 %s36, %s37
      %p39 = scmp.eq.s32.totalorder %s38, 0
      %s41 = sadd.s32 %s40, 1
      %s42 = scalar_select %p39, %s40, %s41
      %p45 = pneg %p39
      %p46 = scmp.eq.s32.totalorder %s9, 3
      %p47 = por %p45, %p46
      %p48 = scmp.ne.s32.totalorder %s40, %s43
      %p49 = scmp.eq.s32.totalorder %s9, 0
      %p50 = por %p48, %p49
      %p51 = scmp.ne.s32.totalorder %s40, %s43
      %p52 = scmp.eq.s32.totalorder %s14, 3
      %p53 = por %p51, %p52
      %p54 = scmp.ne.s32.totalorder %s43, %s44
      %p55 = scmp.eq.s32.totalorder %s14, 0
      %p56 = por %p54, %p55
      %p57 = scmp.ne.s32.totalorder %s43, %s44
      %p58 = scmp.eq.s32.totalorder %s15, 3
      %p59 = por %p57, %p58
      %p61 = scmp.ne.s32.totalorder %s44, %s60
      %p62 = scmp.eq.s32.totalorder %s15, 0
      %p63 = por %p61, %p62
      %s64 = ssub.s32 %s18, %s27
      %s65 = ssub.s32 %s17, %s31
      %s66 = sor.u32 %s64, %s65
      %p67 = scmp.eq.s32.totalorder %s66, 0
      %s69 = sadd.s32 %s68, 1
      %s70 = scalar_select %p67, %s68, %s69
      %p73 = pneg %p67
      %p74 = scmp.eq.s32.totalorder %s9, 3
      %p75 = por %p73, %p74
      %p76 = scmp.ne.s32.totalorder %s68, %s71
      %p77 = scmp.eq.s32.totalorder %s9, 0
      %p78 = por %p76, %p77
      %p79 = scmp.ne.s32.totalorder %s68, %s71
      %p80 = scmp.eq.s32.totalorder %s14, 3
      %p81 = por %p79, %p80
      %p82 = scmp.ne.s32.totalorder %s71, %s72
      %p83 = scmp.eq.s32.totalorder %s14, 0
      %p84 = por %p82, %p83
      %p85 = scmp.ne.s32.totalorder %s71, %s72
      %p86 = scmp.eq.s32.totalorder %s15, 3
      %p87 = por %p85, %p86
      %p89 = scmp.ne.s32.totalorder %s72, %s88
      %p90 = scmp.eq.s32.totalorder %s15, 0
      %p91 = por %p89, %p90
      %s92 = ssub.s32 %s17, %s31
      %p93 = scmp.eq.s32.totalorder %s92, 0
      %s95 = sadd.s32 %s94, 1
      %s96 = scalar_select %p93, %s94, %s95
      %p99 = pneg %p93
      %p100 = scmp.eq.s32.totalorder %s9, 3
      %p101 = por %p99, %p100
      %p102 = scmp.ne.s32.totalorder %s94, %s97
      %p103 = scmp.eq.s32.totalorder %s9, 0
      %p104 = por %p102, %p103
      %p105 = scmp.ne.s32.totalorder %s94, %s97
      %p106 = scmp.eq.s32.totalorder %s14, 3
      %p107 = por %p105, %p106
      %p108 = scmp.ne.s32.totalorder %s97, %s98
      %p109 = scmp.eq.s32.totalorder %s14, 0
      %p110 = por %p108, %p109
      %p111 = scmp.ne.s32.totalorder %s97, %s98
      %p112 = scmp.eq.s32.totalorder %s15, 3
      %p113 = por %p111, %p112
      %p115 = scmp.ne.s32.totalorder %s98, %s114
      %p116 = scmp.eq.s32.totalorder %s15, 0
      %p117 = por %p115, %p116
      %s118 = ssub.s32 %s16, %s35
      %s119 = ssub.s32 %s17, %s31
      %s120 = sor.u32 %s118, %s119
      %p121 = scmp.eq.s32.totalorder %s120, 0
      %s123 = sadd.s32 %s122, 1
      %s124 = scalar_select %p121, %s122, %s123
      %p127 = pneg %p121
      %p128 = scmp.eq.s32.totalorder %s9, 3
      %p129 = por %p127, %p128
      %p130 = scmp.ne.s32.totalorder %s122, %s125
      %p131 = scmp.eq.s32.totalorder %s9, 0
      %p132 = por %p130, %p131
      %p133 = scmp.ne.s32.totalorder %s122, %s125
      %p134 = scmp.eq.s32.totalorder %s14, 3
      %p135 = por %p133, %p134
      %p136 = scmp.ne.s32.totalorder %s125, %s126
      %p137 = scmp.eq.s32.totalorder %s14, 0
      %p138 = por %p136, %p137
      %p139 = scmp.ne.s32.totalorder %s125, %s126
      %p140 = scmp.eq.s32.totalorder %s15, 3
      %p141 = por %p139, %p140
      %p143 = scmp.ne.s32.totalorder %s126, %s142
      %p144 = scmp.eq.s32.totalorder %s15, 0
      %p145 = por %p143, %p144
      %p146 = scmp.le.s32.totalorder 1, %s9
      %p147 = scmp.lt.s32.totalorder %s9, 5
      %p148 = pnand %p146, %p147
      %p149 = pneg %p148
      // Predicated region
      $region9: #{a_call__.16} parent=5 // pred_check
        _
      $region10: #{a_call__.16} parent=5 // pred_check_branch
        %151 = sbr.rel (%p148) target = $region12
      $region11: #{a_call__.16} parent=5 // pred_region
        %s152 = ssub.s32 %s9, 1
        // Predicated region
        $region13: #{a_call__.16} parent=11 // pred_check
          %p153 = pneg %p56
        $region14: #{a_call__.16} parent=11 // pred_check_branch
          %155 = sbr.rel (%p153) target = $region16
        $region15: #{a_call__.16} parent=11 // pred_region
          %s156 = smul.u32 2, %s19
          %s157 = smul.u32 4, %s21
          %p158 = scmp.lt.s32.totalorder %s156, 1
          %s159 = scalar_select %p158, %s156, 1
          %p160 = scmp.lt.s32.totalorder %s157, 3
          %s161 = scalar_select %p160, %s157, 3
          %s162 = smul.addr %s159, 4
          %s163 = sadd.s32 %s161, %s162
          %s164 = smul.addr %s163, 4
          %s165 = scalar_lea.vmem %s0, %s164
          %s166 = smul.u32 2, %s19
          %s167 = smul.u32 4, %s21
        $region16: #{a_call__.16} parent=11 // pred_fallthru
          _
      $region12: #{a_call__.16} parent=5 // pred_fallthru
        _
      %p168 = scmp.lt.s32.totalorder %s9, 4
      // Predicated region
      $region17: #{a_call__.16} parent=5 // pred_check
        %p169 = pneg %p168
      $region18: #{a_call__.16} parent=5 // pred_check_branch
        %171 = sbr.rel (%p169) target = $region20
      $region19: #{a_call__.16} parent=5 // pred_region
        // Predicated region
        $region21: #{a_call__.16} parent=19 // pred_check
          %p172 = pneg %p78
        $region22: #{a_call__.16} parent=19 // pred_check_branch
          %174 = sbr.rel (%p172) target = $region24
        $region23: #{a_call__.16} parent=19 // pred_region
          %s175 = sand.u32 %s68, 1
          %s176 = sand.u32 %s68, 1
          %s177 = smul.addr %s176, 512
          %s178 = scalar_lea.vmem [#allocation3], %s177
          %s179 = smul.u32 64, %s18
          %s180 = smul.u32 2, %s17
          %s181 = smul.addr %s179, 8
          %s182 = sadd.s32 %s180, %s181
          %s183 = smul.addr %s182, 4
          %s184 = scalar_lea.vmem %s1, %s183
          // Predicated region
          $region25: #{a_call__.16} parent=23 // pred_check
            _
          $region26: #{a_call__.16} parent=23 // pred_check_branch
            %186 = sbr.rel (0) target = $region28
          $region27: #{a_call__.16} parent=23 // pred_region
            // Predicated region
            $region29: #{a_call__.16} parent=27 // pred_check
              _
            $region30: #{a_call__.16} parent=27 // pred_check_branch
              %188 = sbr.rel (0) target = $region32
            $region31: #{a_call__.16} parent=27 // pred_region
              // Predicated region
              $region44: #{a_call__.16} parent=31 // pred_check
                _
              $region45: #{a_call__.16} parent=31 // pred_check_branch
                %329 = sbr.rel (0) target = $region47
              $region46: #{a_call__.16} parent=31 // pred_region
                loop: start=0, step=1, limit=1
                $region48: #{a_call__.16} parent=46 // loop_pre_header
                  _
                $region49: #{a_call__.16} parent=46 // loop_header
                  %s331 = sphi 0, %s335
                  %p332 = scmp.ge.s32.totalorder %s331, 1
                  %s336 = sphi %s184, %s184
                  %s337 = sphi %s178, %s178
                $region50: #{a_call__.16} parent=46 // loop_header_branch
                  %334 = sbr.rel (%p332) target = $region54
                $region51: #{a_call__.16} parent=46 // loop_body
                  %v338 = vld [vmem:[%s336] sm:$0xff]
                  %339 = vst [vmem:[%s337] sm:$0xff] %v338
                  %v340 = vld [vmem:[%s336 + $0x20] sm:$0xff]
                  %341 = vst [vmem:[%s337 + $0x8] sm:$0xff] %v340
                  %v342 = vld [vmem:[%s336 + $0x40] sm:$0xff]
                  %343 = vst [vmem:[%s337 + $0x10] sm:$0xff] %v342
                  %v344 = vld [vmem:[%s336 + $0x60] sm:$0xff]
                  %345 = vst [vmem:[%s337 + $0x18] sm:$0xff] %v344
                  %v346 = vld [vmem:[%s336 + $0x80] sm:$0xff]
                  %347 = vst [vmem:[%s337 + $0x20] sm:$0xff] %v346
                  %v348 = vld [vmem:[%s336 + $0xa0] sm:$0xff]
                  %349 = vst [vmem:[%s337 + $0x28] sm:$0xff] %v348
                  %v350 = vld [vmem:[%s336 + $0xc0] sm:$0xff]
                  %351 = vst [vmem:[%s337 + $0x30] sm:$0xff] %v350
                  %v352 = vld [vmem:[%s336 + $0xe0] sm:$0xff]
                  %353 = vst [vmem:[%s337 + $0x38] sm:$0xff] %v352
                  %v354 = vld [vmem:[%s336 + $0x100] sm:$0xff]
                  %355 = vst [vmem:[%s337 + $0x40] sm:$0xff] %v354
                  %v356 = vld [vmem:[%s336 + $0x120] sm:$0xff]
                  %357 = vst [vmem:[%s337 + $0x48] sm:$0xff] %v356
                  %v358 = vld [vmem:[%s336 + $0x140] sm:$0xff]
                  %359 = vst [vmem:[%s337 + $0x50] sm:$0xff] %v358
                  %v360 = vld [vmem:[%s336 + $0x160] sm:$0xff]
                  %361 = vst [vmem:[%s337 + $0x58] sm:$0xff] %v360
                  %v362 = vld [vmem:[%s336 + $0x180] sm:$0xff]
                  %363 = vst [vmem:[%s337 + $0x60] sm:$0xff] %v362
                  %v364 = vld [vmem:[%s336 + $0x1a0] sm:$0xff]
                  %365 = vst [vmem:[%s337 + $0x68] sm:$0xff] %v364
                  %v366 = vld [vmem:[%s336 + $0x1c0] sm:$0xff]
                  %367 = vst [vmem:[%s337 + $0x70] sm:$0xff] %v366
                  %v368 = vld [vmem:[%s336 + $0x1e0] sm:$0xff]
                  %369 = vst [vmem:[%s337 + $0x78] sm:$0xff] %v368
                  %v370 = vld [vmem:[%s336 + $0x200] sm:$0xff]
                  %371 = vst [vmem:[%s337 + $0x80] sm:$0xff] %v370
                  %v372 = vld [vmem:[%s336 + $0x220] sm:$0xff]
                  %373 = vst [vmem:[%s337 + $0x88] sm:$0xff] %v372
                  %v374 = vld [vmem:[%s336 + $0x240] sm:$0xff]
                  %375 = vst [vmem:[%s337 + $0x90] sm:$0xff] %v374
                  %v376 = vld [vmem:[%s336 + $0x260] sm:$0xff]
                  %377 = vst [vmem:[%s337 + $0x98] sm:$0xff] %v376
                  %v378 = vld [vmem:[%s336 + $0x280] sm:$0xff]
                  %379 = vst [vmem:[%s337 + $0xa0] sm:$0xff] %v378
                  %v380 = vld [vmem:[%s336 + $0x2a0] sm:$0xff]
                  %381 = vst [vmem:[%s337 + $0xa8] sm:$0xff] %v380
                  %v382 = vld [vmem:[%s336 + $0x2c0] sm:$0xff]
                  %383 = vst [vmem:[%s337 + $0xb0] sm:$0xff] %v382
                  %v384 = vld [vmem:[%s336 + $0x2e0] sm:$0xff]
                  %385 = vst [vmem:[%s337 + $0xb8] sm:$0xff] %v384
                  %v386 = vld [vmem:[%s336 + $0x300] sm:$0xff]
                  %387 = vst [vmem:[%s337 + $0xc0] sm:$0xff] %v386
                  %v388 = vld [vmem:[%s336 + $0x320] sm:$0xff]
                  %389 = vst [vmem:[%s337 + $0xc8] sm:$0xff] %v388
                  %v390 = vld [vmem:[%s336 + $0x340] sm:$0xff]
                  %391 = vst [vmem:[%s337 + $0xd0] sm:$0xff] %v390
                  %v392 = vld [vmem:[%s336 + $0x360] sm:$0xff]
                  %393 = vst [vmem:[%s337 + $0xd8] sm:$0xff] %v392
                  %v394 = vld [vmem:[%s336 + $0x380] sm:$0xff]
                  %395 = vst [vmem:[%s337 + $0xe0] sm:$0xff] %v394
                  %v396 = vld [vmem:[%s336 + $0x3a0] sm:$0xff]
                  %397 = vst [vmem:[%s337 + $0xe8] sm:$0xff] %v396
                  %v398 = vld [vmem:[%s336 + $0x3c0] sm:$0xff]
                  %399 = vst [vmem:[%s337 + $0xf0] sm:$0xff] %v398
                  %v400 = vld [vmem:[%s336 + $0x3e0] sm:$0xff]
                  %401 = vst [vmem:[%s337 + $0xf8] sm:$0xff] %v400
                  %v402 = vld [vmem:[%s336 + $0x400] sm:$0xff]
                  %403 = vst [vmem:[%s337 + $0x100] sm:$0xff] %v402
                  %v404 = vld [vmem:[%s336 + $0x420] sm:$0xff]
                  %405 = vst [vmem:[%s337 + $0x108] sm:$0xff] %v404
                  %v406 = vld [vmem:[%s336 + $0x440] sm:$0xff]
                  %407 = vst [vmem:[%s337 + $0x110] sm:$0xff] %v406
                  %v408 = vld [vmem:[%s336 + $0x460] sm:$0xff]
                  %409 = vst [vmem:[%s337 + $0x118] sm:$0xff] %v408
                  %v410 = vld [vmem:[%s336 + $0x480] sm:$0xff]
                  %411 = vst [vmem:[%s337 + $0x120] sm:$0xff] %v410
                  %v412 = vld [vmem:[%s336 + $0x4a0] sm:$0xff]
                  %413 = vst [vmem:[%s337 + $0x128] sm:$0xff] %v412
                  %v414 = vld [vmem:[%s336 + $0x4c0] sm:$0xff]
                  %415 = vst [vmem:[%s337 + $0x130] sm:$0xff] %v414
                  %v416 = vld [vmem:[%s336 + $0x4e0] sm:$0xff]
                  %417 = vst [vmem:[%s337 + $0x138] sm:$0xff] %v416
                  %v418 = vld [vmem:[%s336 + $0x500] sm:$0xff]
                  %419 = vst [vmem:[%s337 + $0x140] sm:$0xff] %v418
                  %v420 = vld [vmem:[%s336 + $0x520] sm:$0xff]
                  %421 = vst [vmem:[%s337 + $0x148] sm:$0xff] %v420
                  %v422 = vld [vmem:[%s336 + $0x540] sm:$0xff]
                  %423 = vst [vmem:[%s337 + $0x150] sm:$0xff] %v422
                  %v424 = vld [vmem:[%s336 + $0x560] sm:$0xff]
                  %425 = vst [vmem:[%s337 + $0x158] sm:$0xff] %v424
                  %v426 = vld [vmem:[%s336 + $0x580] sm:$0xff]
                  %427 = vst [vmem:[%s337 + $0x160] sm:$0xff] %v426
                  %v428 = vld [vmem:[%s336 + $0x5a0] sm:$0xff]
                  %429 = vst [vmem:[%s337 + $0x168] sm:$0xff] %v428
                  %v430 = vld [vmem:[%s336 + $0x5c0] sm:$0xff]
                  %431 = vst [vmem:[%s337 + $0x170] sm:$0xff] %v430
                  %v432 = vld [vmem:[%s336 + $0x5e0] sm:$0xff]
                  %433 = vst [vmem:[%s337 + $0x178] sm:$0xff] %v432
                  %v434 = vld [vmem:[%s336 + $0x600] sm:$0xff]
                  %435 = vst [vmem:[%s337 + $0x180] sm:$0xff] %v434
                  %v436 = vld [vmem:[%s336 + $0x620] sm:$0xff]
                  %437 = vst [vmem:[%s337 + $0x188] sm:$0xff] %v436
                  %v438 = vld [vmem:[%s336 + $0x640] sm:$0xff]
                  %439 = vst [vmem:[%s337 + $0x190] sm:$0xff] %v438
                  %v440 = vld [vmem:[%s336 + $0x660] sm:$0xff]
                  %441 = vst [vmem:[%s337 + $0x198] sm:$0xff] %v440
                  %v442 = vld [vmem:[%s336 + $0x680] sm:$0xff]
                  %443 = vst [vmem:[%s337 + $0x1a0] sm:$0xff] %v442
                  %v444 = vld [vmem:[%s336 + $0x6a0] sm:$0xff]
                  %445 = vst [vmem:[%s337 + $0x1a8] sm:$0xff] %v444
                  %v446 = vld [vmem:[%s336 + $0x6c0] sm:$0xff]
                  %447 = vst [vmem:[%s337 + $0x1b0] sm:$0xff] %v446
                  %v448 = vld [vmem:[%s336 + $0x6e0] sm:$0xff]
                  %449 = vst [vmem:[%s337 + $0x1b8] sm:$0xff] %v448
                  %v450 = vld [vmem:[%s336 + $0x700] sm:$0xff]
                  %451 = vst [vmem:[%s337 + $0x1c0] sm:$0xff] %v450
                  %v452 = vld [vmem:[%s336 + $0x720] sm:$0xff]
                  %453 = vst [vmem:[%s337 + $0x1c8] sm:$0xff] %v452
                  %v454 = vld [vmem:[%s336 + $0x740] sm:$0xff]
                  %455 = vst [vmem:[%s337 + $0x1d0] sm:$0xff] %v454
                  %v456 = vld [vmem:[%s336 + $0x760] sm:$0xff]
                  %457 = vst [vmem:[%s337 + $0x1d8] sm:$0xff] %v456
                  %v458 = vld [vmem:[%s336 + $0x780] sm:$0xff]
                  %459 = vst [vmem:[%s337 + $0x1e0] sm:$0xff] %v458
                  %v460 = vld [vmem:[%s336 + $0x7a0] sm:$0xff]
                  %461 = vst [vmem:[%s337 + $0x1e8] sm:$0xff] %v460
                  %v462 = vld [vmem:[%s336 + $0x7c0] sm:$0xff]
                  %463 = vst [vmem:[%s337 + $0x1f0] sm:$0xff] %v462
                  %v464 = vld [vmem:[%s336 + $0x7e0] sm:$0xff]
                  %465 = vst [vmem:[%s337 + $0x1f8] sm:$0xff] %v464
                $region52: #{a_call__.16} parent=46 // loop_footer
                  %s335 = sadd.s32 1, %s331
                $region53: #{a_call__.16} parent=46 // loop_footer_branch
                  %330 = sbr.rel target = $region49
                $region54: #{a_call__.16} parent=46 // loop_exit
                  _
              $region47: #{a_call__.16} parent=31 // pred_fallthru
                _
              // Predicated region
              $region55: #{a_call__.16} parent=31 // pred_check
                _
              $region56: #{a_call__.16} parent=31 // pred_check_branch
                %467 = sbr.rel target = $region58
              $region57: #{a_call__.16} parent=31 // pred_region
                _
              $region58: #{a_call__.16} parent=31 // pred_fallthru
                _
            $region32: #{a_call__.16} parent=27 // pred_fallthru
              _
            // Predicated region
            $region33: #{a_call__.16} parent=27 // pred_check
              _
            $region34: #{a_call__.16} parent=27 // pred_check_branch
              %190 = sbr.rel target = $region36
            $region35: #{a_call__.16} parent=27 // pred_region
              loop: start=0, step=1, limit=1
              $region37: #{a_call__.16} parent=35 // loop_pre_header
                _
              $region38: #{a_call__.16} parent=35 // loop_header
                %s193 = sphi 0, %s197
                %p194 = scmp.ge.s32.totalorder %s193, 1
                %s198 = sphi %s184, %s184
                %s199 = sphi %s178, %s178
              $region39: #{a_call__.16} parent=35 // loop_header_branch
                %196 = sbr.rel (%p194) target = $region43
              $region40: #{a_call__.16} parent=35 // loop_body
                %v200 = vld [vmem:[%s198] sm:$0xff]
                %201 = vst [vmem:[%s199] sm:$0xff] %v200
                %v202 = vld [vmem:[%s198 + $0x20] sm:$0xff]
                %203 = vst [vmem:[%s199 + $0x8] sm:$0xff] %v202
                %v204 = vld [vmem:[%s198 + $0x40] sm:$0xff]
                %205 = vst [vmem:[%s199 + $0x10] sm:$0xff] %v204
                %v206 = vld [vmem:[%s198 + $0x60] sm:$0xff]
                %207 = vst [vmem:[%s199 + $0x18] sm:$0xff] %v206
                %v208 = vld [vmem:[%s198 + $0x80] sm:$0xff]
                %209 = vst [vmem:[%s199 + $0x20] sm:$0xff] %v208
                %v210 = vld [vmem:[%s198 + $0xa0] sm:$0xff]
                %211 = vst [vmem:[%s199 + $0x28] sm:$0xff] %v210
                %v212 = vld [vmem:[%s198 + $0xc0] sm:$0xff]
                %213 = vst [vmem:[%s199 + $0x30] sm:$0xff] %v212
                %v214 = vld [vmem:[%s198 + $0xe0] sm:$0xff]
                %215 = vst [vmem:[%s199 + $0x38] sm:$0xff] %v214
                %v216 = vld [vmem:[%s198 + $0x100] sm:$0xff]
                %217 = vst [vmem:[%s199 + $0x40] sm:$0xff] %v216
                %v218 = vld [vmem:[%s198 + $0x120] sm:$0xff]
                %219 = vst [vmem:[%s199 + $0x48] sm:$0xff] %v218
                %v220 = vld [vmem:[%s198 + $0x140] sm:$0xff]
                %221 = vst [vmem:[%s199 + $0x50] sm:$0xff] %v220
                %v222 = vld [vmem:[%s198 + $0x160] sm:$0xff]
                %223 = vst [vmem:[%s199 + $0x58] sm:$0xff] %v222
                %v224 = vld [vmem:[%s198 + $0x180] sm:$0xff]
                %225 = vst [vmem:[%s199 + $0x60] sm:$0xff] %v224
                %v226 = vld [vmem:[%s198 + $0x1a0] sm:$0xff]
                %227 = vst [vmem:[%s199 + $0x68] sm:$0xff] %v226
                %v228 = vld [vmem:[%s198 + $0x1c0] sm:$0xff]
                %229 = vst [vmem:[%s199 + $0x70] sm:$0xff] %v228
                %v230 = vld [vmem:[%s198 + $0x1e0] sm:$0xff]
                %231 = vst [vmem:[%s199 + $0x78] sm:$0xff] %v230
                %v232 = vld [vmem:[%s198 + $0x200] sm:$0xff]
                %233 = vst [vmem:[%s199 + $0x80] sm:$0xff] %v232
                %v234 = vld [vmem:[%s198 + $0x220] sm:$0xff]
                %235 = vst [vmem:[%s199 + $0x88] sm:$0xff] %v234
                %v236 = vld [vmem:[%s198 + $0x240] sm:$0xff]
                %237 = vst [vmem:[%s199 + $0x90] sm:$0xff] %v236
                %v238 = vld [vmem:[%s198 + $0x260] sm:$0xff]
                %239 = vst [vmem:[%s199 + $0x98] sm:$0xff] %v238
                %v240 = vld [vmem:[%s198 + $0x280] sm:$0xff]
                %241 = vst [vmem:[%s199 + $0xa0] sm:$0xff] %v240
                %v242 = vld [vmem:[%s198 + $0x2a0] sm:$0xff]
                %243 = vst [vmem:[%s199 + $0xa8] sm:$0xff] %v242
                %v244 = vld [vmem:[%s198 + $0x2c0] sm:$0xff]
                %245 = vst [vmem:[%s199 + $0xb0] sm:$0xff] %v244
                %v246 = vld [vmem:[%s198 + $0x2e0] sm:$0xff]
                %247 = vst [vmem:[%s199 + $0xb8] sm:$0xff] %v246
                %v248 = vld [vmem:[%s198 + $0x300] sm:$0xff]
                %249 = vst [vmem:[%s199 + $0xc0] sm:$0xff] %v248
                %v250 = vld [vmem:[%s198 + $0x320] sm:$0xff]
                %251 = vst [vmem:[%s199 + $0xc8] sm:$0xff] %v250
                %v252 = vld [vmem:[%s198 + $0x340] sm:$0xff]
                %253 = vst [vmem:[%s199 + $0xd0] sm:$0xff] %v252
                %v254 = vld [vmem:[%s198 + $0x360] sm:$0xff]
                %255 = vst [vmem:[%s199 + $0xd8] sm:$0xff] %v254
                %v256 = vld [vmem:[%s198 + $0x380] sm:$0xff]
                %257 = vst [vmem:[%s199 + $0xe0] sm:$0xff] %v256
                %v258 = vld [vmem:[%s198 + $0x3a0] sm:$0xff]
                %259 = vst [vmem:[%s199 + $0xe8] sm:$0xff] %v258
                %v260 = vld [vmem:[%s198 + $0x3c0] sm:$0xff]
                %261 = vst [vmem:[%s199 + $0xf0] sm:$0xff] %v260
                %v262 = vld [vmem:[%s198 + $0x3e0] sm:$0xff]
                %263 = vst [vmem:[%s199 + $0xf8] sm:$0xff] %v262
                %v264 = vld [vmem:[%s198 + $0x400] sm:$0xff]
                %265 = vst [vmem:[%s199 + $0x100] sm:$0xff] %v264
                %v266 = vld [vmem:[%s198 + $0x420] sm:$0xff]
                %267 = vst [vmem:[%s199 + $0x108] sm:$0xff] %v266
                %v268 = vld [vmem:[%s198 + $0x440] sm:$0xff]
                %269 = vst [vmem:[%s199 + $0x110] sm:$0xff] %v268
                %v270 = vld [vmem:[%s198 + $0x460] sm:$0xff]
                %271 = vst [vmem:[%s199 + $0x118] sm:$0xff] %v270
                %v272 = vld [vmem:[%s198 + $0x480] sm:$0xff]
                %273 = vst [vmem:[%s199 + $0x120] sm:$0xff] %v272
                %v274 = vld [vmem:[%s198 + $0x4a0] sm:$0xff]
                %275 = vst [vmem:[%s199 + $0x128] sm:$0xff] %v274
                %v276 = vld [vmem:[%s198 + $0x4c0] sm:$0xff]
                %277 = vst [vmem:[%s199 + $0x130] sm:$0xff] %v276
                %v278 = vld [vmem:[%s198 + $0x4e0] sm:$0xff]
                %279 = vst [vmem:[%s199 + $0x138] sm:$0xff] %v278
                %v280 = vld [vmem:[%s198 + $0x500] sm:$0xff]
                %281 = vst [vmem:[%s199 + $0x140] sm:$0xff] %v280
                %v282 = vld [vmem:[%s198 + $0x520] sm:$0xff]
                %283 = vst [vmem:[%s199 + $0x148] sm:$0xff] %v282
                %v284 = vld [vmem:[%s198 + $0x540] sm:$0xff]
                %285 = vst [vmem:[%s199 + $0x150] sm:$0xff] %v284
                %v286 = vld [vmem:[%s198 + $0x560] sm:$0xff]
                %287 = vst [vmem:[%s199 + $0x158] sm:$0xff] %v286
                %v288 = vld [vmem:[%s198 + $0x580] sm:$0xff]
                %289 = vst [vmem:[%s199 + $0x160] sm:$0xff] %v288
                %v290 = vld [vmem:[%s198 + $0x5a0] sm:$0xff]
                %291 = vst [vmem:[%s199 + $0x168] sm:$0xff] %v290
                %v292 = vld [vmem:[%s198 + $0x5c0] sm:$0xff]
                %293 = vst [vmem:[%s199 + $0x170] sm:$0xff] %v292
                %v294 = vld [vmem:[%s198 + $0x5e0] sm:$0xff]
                %295 = vst [vmem:[%s199 + $0x178] sm:$0xff] %v294
                %v296 = vld [vmem:[%s198 + $0x600] sm:$0xff]
                %297 = vst [vmem:[%s199 + $0x180] sm:$0xff] %v296
                %v298 = vld [vmem:[%s198 + $0x620] sm:$0xff]
                %299 = vst [vmem:[%s199 + $0x188] sm:$0xff] %v298
                %v300 = vld [vmem:[%s198 + $0x640] sm:$0xff]
                %301 = vst [vmem:[%s199 + $0x190] sm:$0xff] %v300
                %v302 = vld [vmem:[%s198 + $0x660] sm:$0xff]
                %303 = vst [vmem:[%s199 + $0x198] sm:$0xff] %v302
                %v304 = vld [vmem:[%s198 + $0x680] sm:$0xff]
                %305 = vst [vmem:[%s199 + $0x1a0] sm:$0xff] %v304
                %v306 = vld [vmem:[%s198 + $0x6a0] sm:$0xff]
                %307 = vst [vmem:[%s199 + $0x1a8] sm:$0xff] %v306
                %v308 = vld [vmem:[%s198 + $0x6c0] sm:$0xff]
                %309 = vst [vmem:[%s199 + $0x1b0] sm:$0xff] %v308
                %v310 = vld [vmem:[%s198 + $0x6e0] sm:$0xff]
                %311 = vst [vmem:[%s199 + $0x1b8] sm:$0xff] %v310
                %v312 = vld [vmem:[%s198 + $0x700] sm:$0xff]
                %313 = vst [vmem:[%s199 + $0x1c0] sm:$0xff] %v312
                %v314 = vld [vmem:[%s198 + $0x720] sm:$0xff]
                %315 = vst [vmem:[%s199 + $0x1c8] sm:$0xff] %v314
                %v316 = vld [vmem:[%s198 + $0x740] sm:$0xff]
                %317 = vst [vmem:[%s199 + $0x1d0] sm:$0xff] %v316
                %v318 = vld [vmem:[%s198 + $0x760] sm:$0xff]
                %319 = vst [vmem:[%s199 + $0x1d8] sm:$0xff] %v318
                %v320 = vld [vmem:[%s198 + $0x780] sm:$0xff]
                %321 = vst [vmem:[%s199 + $0x1e0] sm:$0xff] %v320
                %v322 = vld [vmem:[%s198 + $0x7a0] sm:$0xff]
                %323 = vst [vmem:[%s199 + $0x1e8] sm:$0xff] %v322
                %v324 = vld [vmem:[%s198 + $0x7c0] sm:$0xff]
                %325 = vst [vmem:[%s199 + $0x1f0] sm:$0xff] %v324
                %v326 = vld [vmem:[%s198 + $0x7e0] sm:$0xff]
                %327 = vst [vmem:[%s199 + $0x1f8] sm:$0xff] %v326
              $region41: #{a_call__.16} parent=35 // loop_footer
                %s197 = sadd.s32 1, %s193
              $region42: #{a_call__.16} parent=35 // loop_footer_branch
                %192 = sbr.rel target = $region38
              $region43: #{a_call__.16} parent=35 // loop_exit
                _
            $region36: #{a_call__.16} parent=27 // pred_fallthru
              _
          $region28: #{a_call__.16} parent=23 // pred_fallthru
            _
          %468 = vnop
        $region24: #{a_call__.16} parent=19 // pred_fallthru
          _
        // Predicated region
        $region59: #{a_call__.16} parent=19 // pred_check
          %p469 = pneg %p104
        $region60: #{a_call__.16} parent=19 // pred_check_branch
          %471 = sbr.rel (%p469) target = $region62
        $region61: #{a_call__.16} parent=19 // pred_region
          %s472 = smul.u32 2, %s17
          %p473 = scmp.lt.s32.totalorder %s472, 7
          %s474 = scalar_select %p473, %s472, 7
          %s475 = scalar_lea.vmem %s2, %s474
          %s476 = smul.u32 2, %s17
        $region62: #{a_call__.16} parent=19 // pred_fallthru
          _
      $region20: #{a_call__.16} parent=5 // pred_fallthru
        _
      %p477 = scmp.le.s32.totalorder 1, %s9
      %p478 = scmp.lt.s32.totalorder %s9, 5
      %p479 = pnand %p477, %p478
      %p480 = pneg %p479
      // Predicated region
      $region63: #{a_call__.16} parent=5 // pred_check
        _
      $region64: #{a_call__.16} parent=5 // pred_check_branch
        %482 = sbr.rel (%p479) target = $region66
      $region65: #{a_call__.16} parent=5 // pred_region
        %s483 = ssub.s32 %s9, 1
        %s484 = sand.u32 %s71, 1
        %s485 = sand.u32 %s71, 1
        %s486 = smul.addr %s485, 512
        %s487 = scalar_lea.vmem [#allocation3], %s486
        // Predicated region
        $region67: #{a_call__.16} parent=65 // pred_check
          %p488 = pneg %p84
        $region68: #{a_call__.16} parent=65 // pred_check_branch
          %490 = sbr.rel (%p488) target = $region70
        $region69: #{a_call__.16} parent=65 // pred_region
          _
        $region70: #{a_call__.16} parent=65 // pred_fallthru
          _
        %s491 = smul.u32 2, %s19
        %s492 = smul.u32 4, %s21
        %p493 = scmp.lt.s32.totalorder %s491, 1
        %s494 = scalar_select %p493, %s491, 1
        %p495 = scmp.lt.s32.totalorder %s492, 3
        %s496 = scalar_select %p495, %s492, 3
        %s497 = smul.addr %s494, 4
        %s498 = sadd.s32 %s496, %s497
        %s499 = smul.addr %s498, 4
        %s500 = scalar_lea.vmem %s0, %s499
        %p501 = pneg %p56
        %p502 = pneg %p53
        %s503 = sand.u32 %s71, 1
        %s504 = sand.u32 %s71, 1
        %s505 = smul.addr %s504, 512
        %s506 = scalar_lea.vmem [#allocation3], %s505
        %p507 = pneg %p84
        %p508 = pneg %p81
        %s509 = smul.u32 2, %s20
        %p510 = scmp.lt.s32.totalorder %s509, 7
        %s511 = scalar_select %p510, %s509, 7
        %s512 = scalar_lea.vmem %s2, %s511
        %p513 = pneg %p110
        %p514 = pneg %p107
        %p515 = pneg %p138
        %p516 = pneg %p135
        %s517 = sand.u32 %s125, 1
        %s518 = sand.u32 %s125, 1
        %s519 = smul.addr %s518, 16
        %s520 = scalar_lea.vmem [#allocation4], %s519
        %s521 = smul.u32 2, %s19
        %s522 = smul.u32 4, %s21
        %p523 = scmp.lt.s32.totalorder %s521, 1
        %s524 = scalar_select %p523, %s521, 1
        %p525 = scmp.lt.s32.totalorder %s522, 3
        %s526 = scalar_select %p525, %s522, 3
        %s527 = smul.addr %s524, 4
        %s528 = sadd.s32 %s526, %s527
        %s529 = smul.addr %s528, 4
        %s530 = scalar_lea.vmem %s0, %s529
        %s531 = smul.u32 2, %s19
        %s532 = smul.u32 4, %s21
        %s533 = smul.u32 64, %s21
        %s534 = smul.u32 2, %s20
        %s535 = smul.u32 2, %s20
        %p536 = scmp.lt.s32.totalorder %s535, 7
        %s537 = scalar_select %p536, %s535, 7
        %s538 = scalar_lea.vmem %s2, %s537
        %s539 = smul.u32 2, %s20
        %s540 = smul.u32 2, %s19
        %s541 = smul.u32 2, %s20
        %p542 = scmp.eq.s32.totalorder %s21, 0
        // Predicated region
        $region71: #{a_call__.16} parent=65 // pred_check
          %p543 = pneg %p542
        $region72: #{a_call__.16} parent=65 // pred_check_branch
          %545 = sbr.rel (%p543) target = $region74
        $region73: #{a_call__.16} parent=65 // pred_region
          %546 = vst [vmem:[#allocation2] sm:$0xff] 0.0
          %547 = vst [vmem:[#allocation2 + $0x8] sm:$0xff] 0.0
          %548 = vst [vmem:[#allocation2 + $0x10] sm:$0xff] 0.0
          %549 = vst [vmem:[#allocation2 + $0x18] sm:$0xff] 0.0
        $region74: #{a_call__.16} parent=65 // pred_fallthru
          _
        %v550 = vld [vmem:[#allocation2] sm:$0xff]
        %v551 = vld [vmem:[#allocation2 + $0x8] sm:$0xff]
        %v552 = vld [vmem:[#allocation2 + $0x10] sm:$0xff]
        %v553 = vld [vmem:[#allocation2 + $0x18] sm:$0xff]
        %v554 = vld [vmem:[%s530] sm:$0xff]
        %v555 = vld [vmem:[%s530 + $0x8] sm:$0xff]
        %v556 = vld [vmem:[%s530 + $0x10] sm:$0xff]
        %v557 = vld [vmem:[%s530 + $0x18] sm:$0xff]
        %v558 = vld [vmem:[%s487] sm:$0xff]
        %v559 = vld [vmem:[%s487 + $0x8] sm:$0xff]
        %v560 = vld [vmem:[%s487 + $0x10] sm:$0xff]
        %v561 = vld [vmem:[%s487 + $0x18] sm:$0xff]
        %v562 = vld [vmem:[%s487 + $0x20] sm:$0xff]
        %v563 = vld [vmem:[%s487 + $0x28] sm:$0xff]
        %v564 = vld [vmem:[%s487 + $0x30] sm:$0xff]
        %v565 = vld [vmem:[%s487 + $0x38] sm:$0xff]
        %v566 = vld [vmem:[%s487 + $0x40] sm:$0xff]
        %v567 = vld [vmem:[%s487 + $0x48] sm:$0xff]
        %v568 = vld [vmem:[%s487 + $0x50] sm:$0xff]
        %v569 = vld [vmem:[%s487 + $0x58] sm:$0xff]
        %v570 = vld [vmem:[%s487 + $0x60] sm:$0xff]
        %v571 = vld [vmem:[%s487 + $0x68] sm:$0xff]
        %v572 = vld [vmem:[%s487 + $0x70] sm:$0xff]
        %v573 = vld [vmem:[%s487 + $0x78] sm:$0xff]
        %v574 = vld [vmem:[%s487 + $0x80] sm:$0xff]
        %v575 = vld [vmem:[%s487 + $0x88] sm:$0xff]
        %v576 = vld [vmem:[%s487 + $0x90] sm:$0xff]
        %v577 = vld [vmem:[%s487 + $0x98] sm:$0xff]
        %v578 = vld [vmem:[%s487 + $0xa0] sm:$0xff]
        %v579 = vld [vmem:[%s487 + $0xa8] sm:$0xff]
        %v580 = vld [vmem:[%s487 + $0xb0] sm:$0xff]
        %v581 = vld [vmem:[%s487 + $0xb8] sm:$0xff]
        %v582 = vld [vmem:[%s487 + $0xc0] sm:$0xff]
        %v583 = vld [vmem:[%s487 + $0xc8] sm:$0xff]
        %v584 = vld [vmem:[%s487 + $0xd0] sm:$0xff]
        %v585 = vld [vmem:[%s487 + $0xd8] sm:$0xff]
        %v586 = vld [vmem:[%s487 + $0xe0] sm:$0xff]
        %v587 = vld [vmem:[%s487 + $0xe8] sm:$0xff]
        %v588 = vld [vmem:[%s487 + $0xf0] sm:$0xff]
        %v589 = vld [vmem:[%s487 + $0xf8] sm:$0xff]
        %v590 = vld [vmem:[%s487 + $0x100] sm:$0xff]
        %v591 = vld [vmem:[%s487 + $0x108] sm:$0xff]
        %v592 = vld [vmem:[%s487 + $0x110] sm:$0xff]
        %v593 = vld [vmem:[%s487 + $0x118] sm:$0xff]
        %v594 = vld [vmem:[%s487 + $0x120] sm:$0xff]
        %v595 = vld [vmem:[%s487 + $0x128] sm:$0xff]
        %v596 = vld [vmem:[%s487 + $0x130] sm:$0xff]
        %v597 = vld [vmem:[%s487 + $0x138] sm:$0xff]
        %v598 = vld [vmem:[%s487 + $0x140] sm:$0xff]
        %v599 = vld [vmem:[%s487 + $0x148] sm:$0xff]
        %v600 = vld [vmem:[%s487 + $0x150] sm:$0xff]
        %v601 = vld [vmem:[%s487 + $0x158] sm:$0xff]
        %v602 = vld [vmem:[%s487 + $0x160] sm:$0xff]
        %v603 = vld [vmem:[%s487 + $0x168] sm:$0xff]
        %v604 = vld [vmem:[%s487 + $0x170] sm:$0xff]
        %v605 = vld [vmem:[%s487 + $0x178] sm:$0xff]
        %v606 = vld [vmem:[%s487 + $0x180] sm:$0xff]
        %v607 = vld [vmem:[%s487 + $0x188] sm:$0xff]
        %v608 = vld [vmem:[%s487 + $0x190] sm:$0xff]
        %v609 = vld [vmem:[%s487 + $0x198] sm:$0xff]
        %v610 = vld [vmem:[%s487 + $0x1a0] sm:$0xff]
        %v611 = vld [vmem:[%s487 + $0x1a8] sm:$0xff]
        %v612 = vld [vmem:[%s487 + $0x1b0] sm:$0xff]
        %v613 = vld [vmem:[%s487 + $0x1b8] sm:$0xff]
        %v614 = vld [vmem:[%s487 + $0x1c0] sm:$0xff]
        %v615 = vld [vmem:[%s487 + $0x1c8] sm:$0xff]
        %v616 = vld [vmem:[%s487 + $0x1d0] sm:$0xff]
        %v617 = vld [vmem:[%s487 + $0x1d8] sm:$0xff]
        %v618 = vld [vmem:[%s487 + $0x1e0] sm:$0xff]
        %v619 = vld [vmem:[%s487 + $0x1e8] sm:$0xff]
        %v620 = vld [vmem:[%s487 + $0x1f0] sm:$0xff]
        %v621 = vld [vmem:[%s487 + $0x1f8] sm:$0xff]
        %v626 = vunpack.c.l.b16 %v554
        %v627 = vunpack.c.h.b16 %v554
        %v628 = vunpack.c.l.b16 %v555
        %v629 = vunpack.c.h.b16 %v555
        %v630 = vunpack.c.l.b16 %v556
        %v631 = vunpack.c.h.b16 %v556
        %v632 = vunpack.c.l.b16 %v557
        %v633 = vunpack.c.h.b16 %v557
        %v634 = vpack.c.b16 %v630, %v626
        %v635 = vpack.c.b16 %v631, %v627
        %v636 = vpack.c.b16 %v632, %v628
        %v637 = vpack.c.b16 %v633, %v629
        %v706 = vunpack.c.l.b16 %v558
        %v707 = vunpack.c.h.b16 %v558
        %v708 = vunpack.c.l.b16 %v559
        %v709 = vunpack.c.h.b16 %v559
        %v710 = vunpack.c.l.b16 %v560
        %v711 = vunpack.c.h.b16 %v560
        %v712 = vunpack.c.l.b16 %v561
        %v713 = vunpack.c.h.b16 %v561
        %v714 = vunpack.c.l.b16 %v562
        %v715 = vunpack.c.h.b16 %v562
        %v716 = vunpack.c.l.b16 %v563
        %v717 = vunpack.c.h.b16 %v563
        %v718 = vunpack.c.l.b16 %v564
        %v719 = vunpack.c.h.b16 %v564
        %v720 = vunpack.c.l.b16 %v565
        %v721 = vunpack.c.h.b16 %v565
        %v722 = vunpack.c.l.b16 %v566
        %v723 = vunpack.c.h.b16 %v566
        %v724 = vunpack.c.l.b16 %v567
        %v725 = vunpack.c.h.b16 %v567
        %v726 = vunpack.c.l.b16 %v568
        %v727 = vunpack.c.h.b16 %v568
        %v728 = vunpack.c.l.b16 %v569
        %v729 = vunpack.c.h.b16 %v569
        %v730 = vunpack.c.l.b16 %v570
        %v731 = vunpack.c.h.b16 %v570
        %v732 = vunpack.c.l.b16 %v571
        %v733 = vunpack.c.h.b16 %v571
        %v734 = vunpack.c.l.b16 %v572
        %v735 = vunpack.c.h.b16 %v572
        %v736 = vunpack.c.l.b16 %v573
        %v737 = vunpack.c.h.b16 %v573
        %v738 = vunpack.c.l.b16 %v574
        %v739 = vunpack.c.h.b16 %v574
        %v740 = vunpack.c.l.b16 %v575
        %v741 = vunpack.c.h.b16 %v575
        %v742 = vunpack.c.l.b16 %v576
        %v743 = vunpack.c.h.b16 %v576
        %v744 = vunpack.c.l.b16 %v577
        %v745 = vunpack.c.h.b16 %v577
        %v746 = vunpack.c.l.b16 %v578
        %v747 = vunpack.c.h.b16 %v578
        %v748 = vunpack.c.l.b16 %v579
        %v749 = vunpack.c.h.b16 %v579
        %v750 = vunpack.c.l.b16 %v580
        %v751 = vunpack.c.h.b16 %v580
        %v752 = vunpack.c.l.b16 %v581
        %v753 = vunpack.c.h.b16 %v581
        %v754 = vunpack.c.l.b16 %v582
        %v755 = vunpack.c.h.b16 %v582
        %v756 = vunpack.c.l.b16 %v583
        %v757 = vunpack.c.h.b16 %v583
        %v758 = vunpack.c.l.b16 %v584
        %v759 = vunpack.c.h.b16 %v584
        %v760 = vunpack.c.l.b16 %v585
        %v761 = vunpack.c.h.b16 %v585
        %v762 = vunpack.c.l.b16 %v586
        %v763 = vunpack.c.h.b16 %v586
        %v764 = vunpack.c.l.b16 %v587
        %v765 = vunpack.c.h.b16 %v587
        %v766 = vunpack.c.l.b16 %v588
        %v767 = vunpack.c.h.b16 %v588
        %v768 = vunpack.c.l.b16 %v589
        %v769 = vunpack.c.h.b16 %v589
        %v770 = vunpack.c.l.b16 %v590
        %v771 = vunpack.c.h.b16 %v590
        %v772 = vunpack.c.l.b16 %v591
        %v773 = vunpack.c.h.b16 %v591
        %v774 = vunpack.c.l.b16 %v592
        %v775 = vunpack.c.h.b16 %v592
        %v776 = vunpack.c.l.b16 %v593
        %v777 = vunpack.c.h.b16 %v593
        %v778 = vunpack.c.l.b16 %v594
        %v779 = vunpack.c.h.b16 %v594
        %v780 = vunpack.c.l.b16 %v595
        %v781 = vunpack.c.h.b16 %v595
        %v782 = vunpack.c.l.b16 %v596
        %v783 = vunpack.c.h.b16 %v596
        %v784 = vunpack.c.l.b16 %v597
        %v785 = vunpack.c.h.b16 %v597
        %v786 = vunpack.c.l.b16 %v598
        %v787 = vunpack.c.h.b16 %v598
        %v788 = vunpack.c.l.b16 %v599
        %v789 = vunpack.c.h.b16 %v599
        %v790 = vunpack.c.l.b16 %v600
        %v791 = vunpack.c.h.b16 %v600
        %v792 = vunpack.c.l.b16 %v601
        %v793 = vunpack.c.h.b16 %v601
        %v794 = vunpack.c.l.b16 %v602
        %v795 = vunpack.c.h.b16 %v602
        %v796 = vunpack.c.l.b16 %v603
        %v797 = vunpack.c.h.b16 %v603
        %v798 = vunpack.c.l.b16 %v604
        %v799 = vunpack.c.h.b16 %v604
        %v800 = vunpack.c.l.b16 %v605
        %v801 = vunpack.c.h.b16 %v605
        %v802 = vunpack.c.l.b16 %v606
        %v803 = vunpack.c.h.b16 %v606
        %v804 = vunpack.c.l.b16 %v607
        %v805 = vunpack.c.h.b16 %v607
        %v806 = vunpack.c.l.b16 %v608
        %v807 = vunpack.c.h.b16 %v608
        %v808 = vunpack.c.l.b16 %v609
        %v809 = vunpack.c.h.b16 %v609
        %v810 = vunpack.c.l.b16 %v610
        %v811 = vunpack.c.h.b16 %v610
        %v812 = vunpack.c.l.b16 %v611
        %v813 = vunpack.c.h.b16 %v611
        %v814 = vunpack.c.l.b16 %v612
        %v815 = vunpack.c.h.b16 %v612
        %v816 = vunpack.c.l.b16 %v613
        %v817 = vunpack.c.h.b16 %v613
        %v818 = vunpack.c.l.b16 %v614
        %v819 = vunpack.c.h.b16 %v614
        %v820 = vunpack.c.l.b16 %v615
        %v821 = vunpack.c.h.b16 %v615
        %v822 = vunpack.c.l.b16 %v616
        %v823 = vunpack.c.h.b16 %v616
        %v824 = vunpack.c.l.b16 %v617
        %v825 = vunpack.c.h.b16 %v617
        %v826 = vunpack.c.l.b16 %v618
        %v827 = vunpack.c.h.b16 %v618
        %v828 = vunpack.c.l.b16 %v619
        %v829 = vunpack.c.h.b16 %v619
        %v830 = vunpack.c.l.b16 %v620
        %v831 = vunpack.c.h.b16 %v620
        %v832 = vunpack.c.l.b16 %v621
        %v833 = vunpack.c.h.b16 %v621
        %v834 = vpack.c.b16 %v708, %v706
        %v835 = vpack.c.b16 %v709, %v707
        %v836 = vpack.c.b16 %v712, %v710
        %v837 = vpack.c.b16 %v713, %v711
        %v838 = vpack.c.b16 %v716, %v714
        %v839 = vpack.c.b16 %v717, %v715
        %v840 = vpack.c.b16 %v720, %v718
        %v841 = vpack.c.b16 %v721, %v719
        %v842 = vpack.c.b16 %v724, %v722
        %v843 = vpack.c.b16 %v725, %v723
        %v844 = vpack.c.b16 %v728, %v726
        %v845 = vpack.c.b16 %v729, %v727
        %v846 = vpack.c.b16 %v732, %v730
        %v847 = vpack.c.b16 %v733, %v731
        %v848 = vpack.c.b16 %v736, %v734
        %v849 = vpack.c.b16 %v737, %v735
        %v850 = vpack.c.b16 %v740, %v738
        %v851 = vpack.c.b16 %v741, %v739
        %v852 = vpack.c.b16 %v744, %v742
        %v853 = vpack.c.b16 %v745, %v743
        %v854 = vpack.c.b16 %v748, %v746
        %v855 = vpack.c.b16 %v749, %v747
        %v856 = vpack.c.b16 %v752, %v750
        %v857 = vpack.c.b16 %v753, %v751
        %v858 = vpack.c.b16 %v756, %v754
        %v859 = vpack.c.b16 %v757, %v755
        %v860 = vpack.c.b16 %v760, %v758
        %v861 = vpack.c.b16 %v761, %v759
        %v862 = vpack.c.b16 %v764, %v762
        %v863 = vpack.c.b16 %v765, %v763
        %v864 = vpack.c.b16 %v768, %v766
        %v865 = vpack.c.b16 %v769, %v767
        %v866 = vpack.c.b16 %v772, %v770
        %v867 = vpack.c.b16 %v773, %v771
        %v868 = vpack.c.b16 %v776, %v774
        %v869 = vpack.c.b16 %v777, %v775
        %v870 = vpack.c.b16 %v780, %v778
        %v871 = vpack.c.b16 %v781, %v779
        %v872 = vpack.c.b16 %v784, %v782
        %v873 = vpack.c.b16 %v785, %v783
        %v874 = vpack.c.b16 %v788, %v786
        %v875 = vpack.c.b16 %v789, %v787
        %v876 = vpack.c.b16 %v792, %v790
        %v877 = vpack.c.b16 %v793, %v791
        %v878 = vpack.c.b16 %v796, %v794
        %v879 = vpack.c.b16 %v797, %v795
        %v880 = vpack.c.b16 %v800, %v798
        %v881 = vpack.c.b16 %v801, %v799
        %v882 = vpack.c.b16 %v804, %v802
        %v883 = vpack.c.b16 %v805, %v803
        %v884 = vpack.c.b16 %v808, %v806
        %v885 = vpack.c.b16 %v809, %v807
        %v886 = vpack.c.b16 %v812, %v810
        %v887 = vpack.c.b16 %v813, %v811
        %v888 = vpack.c.b16 %v816, %v814
        %v889 = vpack.c.b16 %v817, %v815
        %v890 = vpack.c.b16 %v820, %v818
        %v891 = vpack.c.b16 %v821, %v819
        %v892 = vpack.c.b16 %v824, %v822
        %v893 = vpack.c.b16 %v825, %v823
        %v894 = vpack.c.b16 %v828, %v826
        %v895 = vpack.c.b16 %v829, %v827
        %v896 = vpack.c.b16 %v832, %v830
        %v897 = vpack.c.b16 %v833, %v831
        %962 = vmatprep.subr.bf16.mxu0 %v835
        %963 = vmatpush1.bf16.msra.mxu0 %v834
        %964 = vmatprep.subr.bf16.mxu0 %v837
        %965 = vmatpush1.bf16.msra.mxu0 %v836
        %966 = vmatprep.subr.bf16.mxu0 %v839
        %967 = vmatpush1.bf16.msra.mxu0 %v838
        %968 = vmatprep.subr.bf16.mxu0 %v841
        %969 = vmatpush1.bf16.msra.mxu0 %v840
        %970 = vmatprep.subr.bf16.mxu0 %v843
        %971 = vmatpush1.bf16.msra.mxu0 %v842
        %972 = vmatprep.subr.bf16.mxu0 %v845
        %973 = vmatpush1.bf16.msra.mxu0 %v844
        %974 = vmatprep.subr.bf16.mxu0 %v847
        %975 = vmatpush1.bf16.msra.mxu0 %v846
        %976 = vmatprep.subr.bf16.mxu0 %v849
        %977 = vmatpush1.bf16.msra.mxu0 %v848
        %978 = vmatprep.subr.bf16.mxu0 %v851
        %979 = vmatpush1.bf16.msra.mxu0 %v850
        %980 = vmatprep.subr.bf16.mxu0 %v853
        %981 = vmatpush1.bf16.msra.mxu0 %v852
        %982 = vmatprep.subr.bf16.mxu0 %v855
        %983 = vmatpush1.bf16.msra.mxu0 %v854
        %984 = vmatprep.subr.bf16.mxu0 %v857
        %985 = vmatpush1.bf16.msra.mxu0 %v856
        %986 = vmatprep.subr.bf16.mxu0 %v859
        %987 = vmatpush1.bf16.msra.mxu0 %v858
        %988 = vmatprep.subr.bf16.mxu0 %v861
        %989 = vmatpush1.bf16.msra.mxu0 %v860
        %990 = vmatprep.subr.bf16.mxu0 %v863
        %991 = vmatpush1.bf16.msra.mxu0 %v862
        %992 = vmatprep.subr.bf16.mxu0 %v865
        %993 = vmatpush1.bf16.msra.mxu0 %v864
        %994 = vmatprep.mubr.bf16.mxu0 %v635
        %995 = vmatmul.mubr.bf16.gmra.mrb[0].mxu0 %v634
        %v996 = vpop.f32.mrb[0].mxu0
        %v997 = vadd.f32 0.0, %v996
        %v998 = vpop.f32.mrb[0].mxu0
        %v999 = vadd.f32 0.0, %v998
        %v1000 = vpop.f32.mrb[0].mxu0
        %v1001 = vadd.f32 0.0, %v1000
        %v1002 = vpop.f32.mrb[0].mxu0
        %v1003 = vadd.f32 0.0, %v1002
        %1004 = vdwg.mxu0
        %1005 = vmatprep.subr.bf16.mxu0 %v867
        %1006 = vmatpush1.bf16.msra.mxu0 %v866
        %1007 = vmatprep.subr.bf16.mxu0 %v869
        %1008 = vmatpush1.bf16.msra.mxu0 %v868
        %1009 = vmatprep.subr.bf16.mxu0 %v871
        %1010 = vmatpush1.bf16.msra.mxu0 %v870
        %1011 = vmatprep.subr.bf16.mxu0 %v873
        %1012 = vmatpush1.bf16.msra.mxu0 %v872
        %1013 = vmatprep.subr.bf16.mxu0 %v875
        %1014 = vmatpush1.bf16.msra.mxu0 %v874
        %1015 = vmatprep.subr.bf16.mxu0 %v877
        %1016 = vmatpush1.bf16.msra.mxu0 %v876
        %1017 = vmatprep.subr.bf16.mxu0 %v879
        %1018 = vmatpush1.bf16.msra.mxu0 %v878
        %1019 = vmatprep.subr.bf16.mxu0 %v881
        %1020 = vmatpush1.bf16.msra.mxu0 %v880
        %1021 = vmatprep.subr.bf16.mxu0 %v883
        %1022 = vmatpush1.bf16.msra.mxu0 %v882
        %1023 = vmatprep.subr.bf16.mxu0 %v885
        %1024 = vmatpush1.bf16.msra.mxu0 %v884
        %1025 = vmatprep.subr.bf16.mxu0 %v887
        %1026 = vmatpush1.bf16.msra.mxu0 %v886
        %1027 = vmatprep.subr.bf16.mxu0 %v889
        %1028 = vmatpush1.bf16.msra.mxu0 %v888
        %1029 = vmatprep.subr.bf16.mxu0 %v891
        %1030 = vmatpush1.bf16.msra.mxu0 %v890
        %1031 = vmatprep.subr.bf16.mxu0 %v893
        %1032 = vmatpush1.bf16.msra.mxu0 %v892
        %1033 = vmatprep.subr.bf16.mxu0 %v895
        %1034 = vmatpush1.bf16.msra.mxu0 %v894
        %1035 = vmatprep.subr.bf16.mxu0 %v897
        %1036 = vmatpush1.bf16.msra.mxu0 %v896
        %1037 = vmatprep.mubr.bf16.mxu0 %v637
        %1038 = vmatmul.mubr.bf16.gmra.mrb[0].mxu0 %v636
        %v1039 = vpop.f32.mrb[0].mxu0
        %v1040 = vadd.f32 %v997, %v1039
        %v1041 = vpop.f32.mrb[0].mxu0
        %v1042 = vadd.f32 %v999, %v1041
        %v1043 = vpop.f32.mrb[0].mxu0
        %v1044 = vadd.f32 %v1001, %v1043
        %v1045 = vpop.f32.mrb[0].mxu0
        %v1046 = vadd.f32 %v1003, %v1045
        %1047 = vdwg.mxu0
        %v1048 = vadd.f32 %v550, %v1040
        %v1049 = vadd.f32 %v551, %v1042
        %v1050 = vadd.f32 %v552, %v1044
        %v1051 = vadd.f32 %v553, %v1046
        %1052 = vst [vmem:[#allocation2] sm:$0xff] %v1048
        %1053 = vst [vmem:[#allocation2 + $0x8] sm:$0xff] %v1049
        %1054 = vst [vmem:[#allocation2 + $0x10] sm:$0xff] %v1050
        %1055 = vst [vmem:[#allocation2 + $0x18] sm:$0xff] %v1051
        // Predicated region
        $region75: #{a_call__.16} parent=65 // pred_check
          %p1056 = pneg %p542
        $region76: #{a_call__.16} parent=65 // pred_check_branch
          %1058 = sbr.rel (%p1056) target = $region78
        $region77: #{a_call__.16} parent=65 // pred_region
          %v1059 = vld [vmem:[#allocation2] sm:$0xff]
          %v1060 = vld [vmem:[#allocation2 + $0x8] sm:$0xff]
          %v1061 = vld [vmem:[#allocation2 + $0x10] sm:$0xff]
          %v1062 = vld [vmem:[#allocation2 + $0x18] sm:$0xff]
          %v1063 = vld [vmem:[%s538] sm:$0x3]
          %v1064 = vunpack.c.l.bf16 %v1063
          %v1066 = vlaneseq
          %v1067 = vshrl.u32 %v1066, 7
          %v1068 = vsub.s32 0, %v1067
          %v1069 = vrot.slane %v1064, %v1068
          %v1070 = vlaneseq
          %v1071 = vshrl.u32 %v1070, 7
          %v1072 = vsub.s32 2, %v1071
          %v1073 = vrot.slane %v1064, %v1072
          %v1076 = vlaneseq
          %v1077 = vshrl.u32 %v1076, 7
          %v1078 = vsub.s32 0, %v1077
          %v1079 = vrot.slane %v1069, %v1078
          %v1080 = vlaneseq
          %v1081 = vshrl.u32 %v1080, 7
          %v1082 = vsub.s32 0, %v1081
          %v1083 = vrot.slane %v1073, %v1082
          %v1084 = vadd.f32 %v1059, %v1079
          %v1085 = vadd.f32 %v1060, %v1083
          %v1086 = vadd.f32 %v1061, %v1079
          %v1087 = vadd.f32 %v1062, %v1083
          %v1088 = vpack.c.bf16 %v1086, %v1084
          %v1089 = vpack.c.bf16 %v1087, %v1085
          %v1092 = vunpack.c.l.b16 %v1088
          %v1093 = vunpack.c.l.b16 %v1089
          %v1094 = vunpack.c.h.b16 %v1088
          %v1095 = vunpack.c.h.b16 %v1089
          %v1096 = vpack.c.b16 %v1093, %v1092
          %v1097 = vpack.c.b16 %v1095, %v1094
          %1100 = vst [vmem:[%s520] sm:$0xff] %v1096
          %1101 = vst [vmem:[%s520 + $0x8] sm:$0xff] %v1097
        $region78: #{a_call__.16} parent=65 // pred_fallthru
          _
        %s1102 = sand.u32 %s125, 1
        %s1103 = sand.u32 %s125, 1
        %s1104 = smul.addr %s1103, 16
        %s1105 = scalar_lea.vmem [#allocation4], %s1104
        // Predicated region
        $region79: #{a_call__.16} parent=65 // pred_check
          %p1106 = pneg %p135
        $region80: #{a_call__.16} parent=65 // pred_check_branch
          %1108 = sbr.rel (%p1106) target = $region82
        $region81: #{a_call__.16} parent=65 // pred_region
          %s1109 = smul.u32 2, %s19
          %s1110 = smul.u32 2, %s20
          %s1111 = smul.addr %s1109, 8
          %s1112 = sadd.s32 %s1110, %s1111
          %s1113 = smul.addr %s1112, 4
          %s1114 = scalar_lea.vmem %s3, %s1113
          // Predicated region
          $region83: #{a_call__.16} parent=81 // pred_check
            _
          $region84: #{a_call__.16} parent=81 // pred_check_branch
            %1116 = sbr.rel (0) target = $region86
          $region85: #{a_call__.16} parent=81 // pred_region
            // Predicated region
            $region87: #{a_call__.16} parent=85 // pred_check
              _
            $region88: #{a_call__.16} parent=85 // pred_check_branch
              %1118 = sbr.rel (0) target = $region90
            $region89: #{a_call__.16} parent=85 // pred_region
              // Predicated region
              $region102: #{a_call__.16} parent=89 // pred_check
                _
              $region103: #{a_call__.16} parent=89 // pred_check_branch
                %1135 = sbr.rel (0) target = $region105
              $region104: #{a_call__.16} parent=89 // pred_region
                loop: start=0, step=1, limit=1
                $region106: #{a_call__.16} parent=104 // loop_pre_header
                  _
                $region107: #{a_call__.16} parent=104 // loop_header
                  %s1137 = sphi 0, %s1141
                  %p1138 = scmp.ge.s32.totalorder %s1137, 1
                  %s1142 = sphi %s1105, %s1105
                  %s1143 = sphi %s1114, %s1114
                $region108: #{a_call__.16} parent=104 // loop_header_branch
                  %1140 = sbr.rel (%p1138) target = $region112
                $region109: #{a_call__.16} parent=104 // loop_body
                  %v1144 = vld [vmem:[%s1142] sm:$0xff]
                  %1145 = vst [vmem:[%s1143] sm:$0xff] %v1144
                  %v1146 = vld [vmem:[%s1142 + $0x8] sm:$0xff]
                  %1147 = vst [vmem:[%s1143 + $0x20] sm:$0xff] %v1146
                $region110: #{a_call__.16} parent=104 // loop_footer
                  %s1141 = sadd.s32 1, %s1137
                $region111: #{a_call__.16} parent=104 // loop_footer_branch
                  %1136 = sbr.rel target = $region107
                $region112: #{a_call__.16} parent=104 // loop_exit
                  _
              $region105: #{a_call__.16} parent=89 // pred_fallthru
                _
              // Predicated region
              $region113: #{a_call__.16} parent=89 // pred_check
                _
              $region114: #{a_call__.16} parent=89 // pred_check_branch
                %1149 = sbr.rel target = $region116
              $region115: #{a_call__.16} parent=89 // pred_region
                _
              $region116: #{a_call__.16} parent=89 // pred_fallthru
                _
            $region90: #{a_call__.16} parent=85 // pred_fallthru
              _
            // Predicated region
            $region91: #{a_call__.16} parent=85 // pred_check
              _
            $region92: #{a_call__.16} parent=85 // pred_check_branch
              %1120 = sbr.rel target = $region94
            $region93: #{a_call__.16} parent=85 // pred_region
              loop: start=0, step=1, limit=1
              $region95: #{a_call__.16} parent=93 // loop_pre_header
                _
              $region96: #{a_call__.16} parent=93 // loop_header
                %s1123 = sphi 0, %s1127
                %p1124 = scmp.ge.s32.totalorder %s1123, 1
                %s1128 = sphi %s1105, %s1105
                %s1129 = sphi %s1114, %s1114
              $region97: #{a_call__.16} parent=93 // loop_header_branch
                %1126 = sbr.rel (%p1124) target = $region101
              $region98: #{a_call__.16} parent=93 // loop_body
                %v1130 = vld [vmem:[%s1128] sm:$0xff]
                %1131 = vst [vmem:[%s1129] sm:$0xff] %v1130
                %v1132 = vld [vmem:[%s1128 + $0x8] sm:$0xff]
                %1133 = vst [vmem:[%s1129 + $0x20] sm:$0xff] %v1132
              $region99: #{a_call__.16} parent=93 // loop_footer
                %s1127 = sadd.s32 1, %s1123
              $region100: #{a_call__.16} parent=93 // loop_footer_branch
                %1122 = sbr.rel target = $region96
              $region101: #{a_call__.16} parent=93 // loop_exit
                _
            $region94: #{a_call__.16} parent=85 // pred_fallthru
              _
          $region86: #{a_call__.16} parent=81 // pred_fallthru
            _
          %1150 = vnop
        $region82: #{a_call__.16} parent=65 // pred_fallthru
          _
      $region66: #{a_call__.16} parent=5 // pred_fallthru
        _
      %p1151 = scmp.le.s32.totalorder 2, %s9
      // Predicated region
      $region117: #{a_call__.16} parent=5 // pred_check
        %p1152 = pneg %p1151
      $region118: #{a_call__.16} parent=5 // pred_check_branch
        %1154 = sbr.rel (%p1152) target = $region120
      $region119: #{a_call__.16} parent=5 // pred_region
        %s1155 = ssub.s32 %s9, 2
        // Predicated region
        $region121: #{a_call__.16} parent=119 // pred_check
          %p1156 = pneg %p141
        $region122: #{a_call__.16} parent=119 // pred_check_branch
          %1158 = sbr.rel (%p1156) target = $region124
        $region123: #{a_call__.16} parent=119 // pred_region
          %s1159 = sand.u32 %s126, 1
          %s1160 = sand.u32 %s126, 1
          %s1161 = smul.addr %s1160, 16
          %s1162 = scalar_lea.vmem [#allocation4], %s1161
        $region124: #{a_call__.16} parent=119 // pred_fallthru
          _
      $region120: #{a_call__.16} parent=5 // pred_fallthru
        _
    $region6: #{a_call__.16} parent=1 // loop_footer
      %s13 = sadd.s32 1, %s9
    $region7: #{a_call__.16} parent=1 // loop_footer_branch
      %8 = sbr.rel target = $region3
    $region8: #{a_call__.16} parent=1 // loop_exit
      _

// kernel: a_call__.17
$region0: #{a_call__.17}
  #allocation0 [shape = 'u32[]', space=smem, size = 0x4, offset = 0x4, fixed_abs, tag = 'smem constant byte address 0x4 - core index']
  #allocation1 [shape = 'u32[144,128]{1,0:T(1,128)}', space=vmem, size = 0x12000, scoped, tag = 'internal scratch']
  #allocation2 [shape = 'bf16[32,128]{1,0:T(16,128)(2,1)}', space=vmem, size = 0x2000, scoped, tag = 'scratch operand']
  #allocation3 [shape = 'f32[32,1]{1,0:T(8,128)}', space=vmem, size = 0x4000, scoped, tag = 'scratch operand']
  #allocation4 [shape = 'f32[32,1]{1,0:T(8,128)}', space=vmem, size = 0x4000, scoped, tag = 'scratch operand']
  #allocation5 [shape = 'f32[32,128]{1,0:T(8,128)}', space=vmem, size = 0x4000, scoped, tag = 'scratch operand']
  %s0 = inlined_call_operand.vmem [shape: f32[16,128], index: 0, kind: input, shape index: {}, may-alias: {0,2}]
  %s1 = inlined_call_operand.vmem [shape: f32[16,128], index: 1, kind: input, shape index: {}, may-alias: {1,3}]
  %s2 = inlined_call_operand.vmem [shape: f32[16,128], index: 2, kind: input, shape index: {}, may-alias: {0,2}]
  %s3 = inlined_call_operand.vmem [shape: f32[16,128], index: 3, kind: input, shape index: {}, may-alias: {1,3}]
  %s4 = inlined_call_operand.vmem [shape: bf16[4,16,128], index: 4, kind: input, shape index: {}]
  %s5 = inlined_call_operand.vmem [shape: bf16[2,16,128], index: 5, kind: input, shape index: {}]
  %s6 = inlined_call_operand.vmem [shape: bf16[2,16,128], index: 6, kind: input, shape index: {}]
  %s7 = inlined_call_operand.vmem [shape: bf16[4,16,128], index: 7, kind: output, shape index: {}]
  %s8 = sld [smem:[#allocation0]]
  $region73: #{a_call__.17} parent=0
    _
  %s10 = ssub.s32 1, %s8
  %s11 = scalar_select 0, %s10, %s8
  loop: start=0, step=1, limit=4
  $region2: #{a_call__.17} parent=0 // loop_pre_header
    _
  $region3: #{a_call__.17} parent=0 // loop_header
    %s13 = sphi 0, %s17
    %p14 = scmp.ge.s32.totalorder %s13, 4
    %s20 = sphi 0, %s39
    %s21 = sphi 0, %s35
    %s22 = sphi 0, %s31
    %s23 = sphi 0, %s20
    %s24 = sphi 0, %s21
    %s25 = sphi 0, %s22
    %s26 = sphi 0, %s23
    %s27 = sphi 0, %s24
    %s28 = sphi 0, %s25
    %s42 = sphi 0, %s44
    %s45 = sphi 0, %s42
    %s46 = sphi 0, %s45
    %s62 = sphi 0, %s46
    %s68 = sphi 0, %s70
    %s71 = sphi 0, %s68
    %s72 = sphi 0, %s71
    %s88 = sphi 0, %s72
    %s94 = sphi 0, %s96
    %s97 = sphi 0, %s94
    %s98 = sphi 0, %s97
    %s114 = sphi 0, %s98
    %s120 = sphi 0, %s122
    %s123 = sphi 0, %s120
    %s124 = sphi 0, %s123
    %s140 = sphi 0, %s124
    %s148 = sphi 0, %s150
    %s151 = sphi 0, %s148
    %s152 = sphi 0, %s151
    %s168 = sphi 0, %s152
    %s176 = sphi 0, %s178
    %s179 = sphi 0, %s176
    %s180 = sphi 0, %s179
    %s196 = sphi 0, %s180
    %s204 = sphi 0, %s206
    %s207 = sphi 0, %s204
    %s208 = sphi 0, %s207
    %s224 = sphi 0, %s208
    %s232 = sphi 0, %s234
    %s235 = sphi 0, %s232
    %s236 = sphi 0, %s235
    %s252 = sphi 0, %s236
  $region4: #{a_call__.17} parent=0 // loop_header_branch
    %16 = sbr.rel (%p14) target = $region8
  $region5: #{a_call__.17} parent=0 // loop_body
    %s18 = ssub.s32 %s13, 1
    %s19 = ssub.s32 %s13, 2
    %s29 = sadd.s32 1, %s22
    %p30 = scmp.ge.s32.totalorder %s29, 1
    %s31 = scalar_select %p30, 0, %s29
    %s32 = sadd.s32 1, %s21
    %s33 = scalar_select %p30, %s32, %s21
    %p34 = scmp.ge.s32.totalorder %s33, 1
    %s35 = scalar_select %p34, 0, %s33
    %s36 = sadd.s32 1, %s20
    %s37 = scalar_select %p34, %s36, %s20
    %p38 = scmp.ge.s32.totalorder %s37, 2
    %s39 = scalar_select %p38, 0, %s37
    %s40 = ssub.s32 %s21, %s35
    %p41 = scmp.eq.s32.totalorder %s40, 0
    %s43 = sadd.s32 %s42, 1
    %s44 = scalar_select %p41, %s42, %s43
    %p47 = pneg %p41
    %p48 = scmp.eq.s32.totalorder %s13, 1
    %p49 = por %p47, %p48
    %p50 = scmp.ne.s32.totalorder %s42, %s45
    %p51 = scmp.eq.s32.totalorder %s13, 0
    %p52 = por %p50, %p51
    %p53 = scmp.ne.s32.totalorder %s42, %s45
    %p54 = scmp.eq.s32.totalorder %s18, 1
    %p55 = por %p53, %p54
    %p56 = scmp.ne.s32.totalorder %s45, %s46
    %p57 = scmp.eq.s32.totalorder %s18, 0
    %p58 = por %p56, %p57
    %p59 = scmp.ne.s32.totalorder %s45, %s46
    %p60 = scmp.eq.s32.totalorder %s19, 1
    %p61 = por %p59, %p60
    %p63 = scmp.ne.s32.totalorder %s46, %s62
    %p64 = scmp.eq.s32.totalorder %s19, 0
    %p65 = por %p63, %p64
    %s66 = ssub.s32 %s21, %s35
    %p67 = scmp.eq.s32.totalorder %s66, 0
    %s69 = sadd.s32 %s68, 1
    %s70 = scalar_select %p67, %s68, %s69
    %p73 = pneg %p67
    %p74 = scmp.eq.s32.totalorder %s13, 1
    %p75 = por %p73, %p74
    %p76 = scmp.ne.s32.totalorder %s68, %s71
    %p77 = scmp.eq.s32.totalorder %s13, 0
    %p78 = por %p76, %p77
    %p79 = scmp.ne.s32.totalorder %s68, %s71
    %p80 = scmp.eq.s32.totalorder %s18, 1
    %p81 = por %p79, %p80
    %p82 = scmp.ne.s32.totalorder %s71, %s72
    %p83 = scmp.eq.s32.totalorder %s18, 0
    %p84 = por %p82, %p83
    %p85 = scmp.ne.s32.totalorder %s71, %s72
    %p86 = scmp.eq.s32.totalorder %s19, 1
    %p87 = por %p85, %p86
    %p89 = scmp.ne.s32.totalorder %s72, %s88
    %p90 = scmp.eq.s32.totalorder %s19, 0
    %p91 = por %p89, %p90
    %s92 = ssub.s32 %s22, %s31
    %p93 = scmp.eq.s32.totalorder %s92, 0
    %s95 = sadd.s32 %s94, 1
    %s96 = scalar_select %p93, %s94, %s95
    %p99 = pneg %p93
    %p100 = scmp.eq.s32.totalorder %s13, 1
    %p101 = por %p99, %p100
    %p102 = scmp.ne.s32.totalorder %s94, %s97
    %p103 = scmp.eq.s32.totalorder %s13, 0
    %p104 = por %p102, %p103
    %p105 = scmp.ne.s32.totalorder %s94, %s97
    %p106 = scmp.eq.s32.totalorder %s18, 1
    %p107 = por %p105, %p106
    %p108 = scmp.ne.s32.totalorder %s97, %s98
    %p109 = scmp.eq.s32.totalorder %s18, 0
    %p110 = por %p108, %p109
    %p111 = scmp.ne.s32.totalorder %s97, %s98
    %p112 = scmp.eq.s32.totalorder %s19, 1
    %p113 = por %p111, %p112
    %p115 = scmp.ne.s32.totalorder %s98, %s114
    %p116 = scmp.eq.s32.totalorder %s19, 0
    %p117 = por %p115, %p116
    %s118 = ssub.s32 %s22, %s31
    %p119 = scmp.eq.s32.totalorder %s118, 0
    %s121 = sadd.s32 %s120, 1
    %s122 = scalar_select %p119, %s120, %s121
    %p125 = pneg %p119
    %p126 = scmp.eq.s32.totalorder %s13, 1
    %p127 = por %p125, %p126
    %p128 = scmp.ne.s32.totalorder %s120, %s123
    %p129 = scmp.eq.s32.totalorder %s13, 0
    %p130 = por %p128, %p129
    %p131 = scmp.ne.s32.totalorder %s120, %s123
    %p132 = scmp.eq.s32.totalorder %s18, 1
    %p133 = por %p131, %p132
    %p134 = scmp.ne.s32.totalorder %s123, %s124
    %p135 = scmp.eq.s32.totalorder %s18, 0
    %p136 = por %p134, %p135
    %p137 = scmp.ne.s32.totalorder %s123, %s124
    %p138 = scmp.eq.s32.totalorder %s19, 1
    %p139 = por %p137, %p138
    %p141 = scmp.ne.s32.totalorder %s124, %s140
    %p142 = scmp.eq.s32.totalorder %s19, 0
    %p143 = por %p141, %p142
    %s144 = ssub.s32 %s20, %s39
    %s145 = ssub.s32 %s21, %s35
    %s146 = sor.u32 %s144, %s145
    %p147 = scmp.eq.s32.totalorder %s146, 0
    %s149 = sadd.s32 %s148, 1
    %s150 = scalar_select %p147, %s148, %s149
    %p153 = pneg %p147
    %p154 = scmp.eq.s32.totalorder %s13, 1
    %p155 = por %p153, %p154
    %p156 = scmp.ne.s32.totalorder %s148, %s151
    %p157 = scmp.eq.s32.totalorder %s13, 0
    %p158 = por %p156, %p157
    %p159 = scmp.ne.s32.totalorder %s148, %s151
    %p160 = scmp.eq.s32.totalorder %s18, 1
    %p161 = por %p159, %p160
    %p162 = scmp.ne.s32.totalorder %s151, %s152
    %p163 = scmp.eq.s32.totalorder %s18, 0
    %p164 = por %p162, %p163
    %p165 = scmp.ne.s32.totalorder %s151, %s152
    %p166 = scmp.eq.s32.totalorder %s19, 1
    %p167 = por %p165, %p166
    %p169 = scmp.ne.s32.totalorder %s152, %s168
    %p170 = scmp.eq.s32.totalorder %s19, 0
    %p171 = por %p169, %p170
    %s172 = ssub.s32 %s20, %s39
    %s173 = ssub.s32 %s22, %s31
    %s174 = sor.u32 %s172, %s173
    %p175 = scmp.eq.s32.totalorder %s174, 0
    %s177 = sadd.s32 %s176, 1
    %s178 = scalar_select %p175, %s176, %s177
    %p181 = pneg %p175
    %p182 = scmp.eq.s32.totalorder %s13, 1
    %p183 = por %p181, %p182
    %p184 = scmp.ne.s32.totalorder %s176, %s179
    %p185 = scmp.eq.s32.totalorder %s13, 0
    %p186 = por %p184, %p185
    %p187 = scmp.ne.s32.totalorder %s176, %s179
    %p188 = scmp.eq.s32.totalorder %s18, 1
    %p189 = por %p187, %p188
    %p190 = scmp.ne.s32.totalorder %s179, %s180
    %p191 = scmp.eq.s32.totalorder %s18, 0
    %p192 = por %p190, %p191
    %p193 = scmp.ne.s32.totalorder %s179, %s180
    %p194 = scmp.eq.s32.totalorder %s19, 1
    %p195 = por %p193, %p194
    %p197 = scmp.ne.s32.totalorder %s180, %s196
    %p198 = scmp.eq.s32.totalorder %s19, 0
    %p199 = por %p197, %p198
    %s200 = ssub.s32 %s20, %s39
    %s201 = ssub.s32 %s22, %s31
    %s202 = sor.u32 %s200, %s201
    %p203 = scmp.eq.s32.totalorder %s202, 0
    %s205 = sadd.s32 %s204, 1
    %s206 = scalar_select %p203, %s204, %s205
    %p209 = pneg %p203
    %p210 = scmp.eq.s32.totalorder %s13, 1
    %p211 = por %p209, %p210
    %p212 = scmp.ne.s32.totalorder %s204, %s207
    %p213 = scmp.eq.s32.totalorder %s13, 0
    %p214 = por %p212, %p213
    %p215 = scmp.ne.s32.totalorder %s204, %s207
    %p216 = scmp.eq.s32.totalorder %s18, 1
    %p217 = por %p215, %p216
    %p218 = scmp.ne.s32.totalorder %s207, %s208
    %p219 = scmp.eq.s32.totalorder %s18, 0
    %p220 = por %p218, %p219
    %p221 = scmp.ne.s32.totalorder %s207, %s208
    %p222 = scmp.eq.s32.totalorder %s19, 1
    %p223 = por %p221, %p222
    %p225 = scmp.ne.s32.totalorder %s208, %s224
    %p226 = scmp.eq.s32.totalorder %s19, 0
    %p227 = por %p225, %p226
    %s228 = ssub.s32 %s20, %s39
    %s229 = ssub.s32 %s21, %s35
    %s230 = sor.u32 %s228, %s229
    %p231 = scmp.eq.s32.totalorder %s230, 0
    %s233 = sadd.s32 %s232, 1
    %s234 = scalar_select %p231, %s232, %s233
    %p237 = pneg %p231
    %p238 = scmp.eq.s32.totalorder %s13, 1
    %p239 = por %p237, %p238
    %p240 = scmp.ne.s32.totalorder %s232, %s235
    %p241 = scmp.eq.s32.totalorder %s13, 0
    %p242 = por %p240, %p241
    %p243 = scmp.ne.s32.totalorder %s232, %s235
    %p244 = scmp.eq.s32.totalorder %s18, 1
    %p245 = por %p243, %p244
    %p246 = scmp.ne.s32.totalorder %s235, %s236
    %p247 = scmp.eq.s32.totalorder %s18, 0
    %p248 = por %p246, %p247
    %p249 = scmp.ne.s32.totalorder %s235, %s236
    %p250 = scmp.eq.s32.totalorder %s19, 1
    %p251 = por %p249, %p250
    %p253 = scmp.ne.s32.totalorder %s236, %s252
    %p254 = scmp.eq.s32.totalorder %s19, 0
    %p255 = por %p253, %p254
    %p256 = scmp.le.s32.totalorder 1, %s13
    %p257 = scmp.lt.s32.totalorder %s13, 3
    %p258 = pnand %p256, %p257
    %p259 = pneg %p258
    // Predicated region
    $region9: #{a_call__.17} parent=5 // pred_check
      _
    $region10: #{a_call__.17} parent=5 // pred_check_branch
      %261 = sbr.rel (%p258) target = $region12
    $region11: #{a_call__.17} parent=5 // pred_region
      %s262 = ssub.s32 %s13, 1
      // Predicated region
      $region13: #{a_call__.17} parent=11 // pred_check
        %p263 = pneg %p58
      $region14: #{a_call__.17} parent=11 // pred_check_branch
        %265 = sbr.rel (%p263) target = $region16
      $region15: #{a_call__.17} parent=11 // pred_region
        %s266 = smul.u32 2, %s24
        %p267 = scmp.lt.s32.totalorder %s266, 1
        %s268 = scalar_select %p267, %s266, 1
        %s269 = smul.addr %s268, 8
        %s270 = scalar_lea.vmem %s0, %s269
        %s271 = smul.u32 2, %s24
      $region16: #{a_call__.17} parent=11 // pred_fallthru
        _
      // Predicated region
      $region17: #{a_call__.17} parent=11 // pred_check
        %p272 = pneg %p84
      $region18: #{a_call__.17} parent=11 // pred_check_branch
        %274 = sbr.rel (%p272) target = $region20
      $region19: #{a_call__.17} parent=11 // pred_region
        %s275 = smul.u32 2, %s24
        %p276 = scmp.lt.s32.totalorder %s275, 1
        %s277 = scalar_select %p276, %s275, 1
        %s278 = smul.addr %s277, 8
        %s279 = scalar_lea.vmem %s1, %s278
        %s280 = smul.u32 2, %s24
      $region20: #{a_call__.17} parent=11 // pred_fallthru
        _
      // Predicated region
      $region21: #{a_call__.17} parent=11 // pred_check
        %p281 = pneg %p110
      $region22: #{a_call__.17} parent=11 // pred_check_branch
        %283 = sbr.rel (%p281) target = $region24
      $region23: #{a_call__.17} parent=11 // pred_region
        %s284 = smul.u32 2, %s25
        %p285 = scmp.lt.s32.totalorder %s284, 1
        %s286 = scalar_select %p285, %s284, 1
        %s287 = smul.addr %s286, 8
        %s288 = scalar_lea.vmem %s2, %s287
        %s289 = smul.u32 2, %s25
      $region24: #{a_call__.17} parent=11 // pred_fallthru
        _
      // Predicated region
      $region25: #{a_call__.17} parent=11 // pred_check
        %p290 = pneg %p136
      $region26: #{a_call__.17} parent=11 // pred_check_branch
        %292 = sbr.rel (%p290) target = $region28
      $region27: #{a_call__.17} parent=11 // pred_region
        %s293 = smul.u32 2, %s25
        %p294 = scmp.lt.s32.totalorder %s293, 1
        %s295 = scalar_select %p294, %s293, 1
        %s296 = smul.addr %s295, 8
        %s297 = scalar_lea.vmem %s3, %s296
        %s298 = smul.u32 2, %s25
      $region28: #{a_call__.17} parent=11 // pred_fallthru
        _
    $region12: #{a_call__.17} parent=5 // pred_fallthru
      _
    %p299 = scmp.lt.s32.totalorder %s13, 2
    // Predicated region
    $region29: #{a_call__.17} parent=5 // pred_check
      %p300 = pneg %p299
    $region30: #{a_call__.17} parent=5 // pred_check_branch
      %302 = sbr.rel (%p300) target = $region32
    $region31: #{a_call__.17} parent=5 // pred_region
      // Predicated region
      $region33: #{a_call__.17} parent=31 // pred_check
        %p303 = pneg %p158
      $region34: #{a_call__.17} parent=31 // pred_check_branch
        %305 = sbr.rel (%p303) target = $region36
      $region35: #{a_call__.17} parent=31 // pred_region
        %s306 = smul.u32 2, %s20
        %s307 = smul.u32 2, %s21
        %p308 = scmp.lt.s32.totalorder %s306, 3
        %s309 = scalar_select %p308, %s306, 3
        %p310 = scmp.lt.s32.totalorder %s307, 1
        %s311 = scalar_select %p310, %s307, 1
        %s312 = smul.addr %s309, 2
        %s313 = sadd.s32 %s311, %s312
        %s314 = smul.addr %s313, 4
        %s315 = scalar_lea.vmem %s4, %s314
        %s316 = smul.u32 2, %s20
        %s317 = smul.u32 2, %s21
      $region36: #{a_call__.17} parent=31 // pred_fallthru
        _
      // Predicated region
      $region37: #{a_call__.17} parent=31 // pred_check
        %p318 = pneg %p186
      $region38: #{a_call__.17} parent=31 // pred_check_branch
        %320 = sbr.rel (%p318) target = $region40
      $region39: #{a_call__.17} parent=31 // pred_region
        %s321 = smul.u32 2, %s22
        %p322 = scmp.lt.s32.totalorder %s20, 1
        %s323 = scalar_select %p322, %s20, 1
        %p324 = scmp.lt.s32.totalorder %s321, 1
        %s325 = scalar_select %p324, %s321, 1
        %s326 = smul.addr %s323, 2
        %s327 = sadd.s32 %s325, %s326
        %s328 = smul.addr %s327, 4
        %s329 = scalar_lea.vmem %s5, %s328
        %s330 = smul.u32 2, %s22
      $region40: #{a_call__.17} parent=31 // pred_fallthru
        _
      // Predicated region
      $region41: #{a_call__.17} parent=31 // pred_check
        %p331 = pneg %p214
      $region42: #{a_call__.17} parent=31 // pred_check_branch
        %333 = sbr.rel (%p331) target = $region44
      $region43: #{a_call__.17} parent=31 // pred_region
        %s334 = smul.u32 2, %s22
        %p335 = scmp.lt.s32.totalorder %s20, 1
        %s336 = scalar_select %p335, %s20, 1
        %p337 = scmp.lt.s32.totalorder %s334, 1
        %s338 = scalar_select %p337, %s334, 1
        %s339 = smul.addr %s336, 2
        %s340 = sadd.s32 %s338, %s339
        %s341 = smul.addr %s340, 4
        %s342 = scalar_lea.vmem %s6, %s341
        %s343 = smul.u32 2, %s22
      $region44: #{a_call__.17} parent=31 // pred_fallthru
        _
    $region32: #{a_call__.17} parent=5 // pred_fallthru
      _
    %p344 = scmp.le.s32.totalorder 1, %s13
    %p345 = scmp.lt.s32.totalorder %s13, 3
    %p346 = pnand %p344, %p345
    %p347 = pneg %p346
    // Predicated region
    $region45: #{a_call__.17} parent=5 // pred_check
      _
    $region46: #{a_call__.17} parent=5 // pred_check_branch
      %349 = sbr.rel (%p346) target = $region48
    $region47: #{a_call__.17} parent=5 // pred_region
      %s350 = ssub.s32 %s13, 1
      %s351 = smul.u32 2, %s24
      %p352 = scmp.lt.s32.totalorder %s351, 1
      %s353 = scalar_select %p352, %s351, 1
      %s354 = smul.addr %s353, 8
      %s355 = scalar_lea.vmem %s0, %s354
      %p356 = pneg %p58
      %p357 = pneg %p55
      %s358 = smul.u32 2, %s24
      %p359 = scmp.lt.s32.totalorder %s358, 1
      %s360 = scalar_select %p359, %s358, 1
      %s361 = smul.addr %s360, 8
      %s362 = scalar_lea.vmem %s1, %s361
      %p363 = pneg %p84
      %p364 = pneg %p81
      %s365 = smul.u32 2, %s25
      %p366 = scmp.lt.s32.totalorder %s365, 1
      %s367 = scalar_select %p366, %s365, 1
      %s368 = smul.addr %s367, 8
      %s369 = scalar_lea.vmem %s2, %s368
      %p370 = pneg %p110
      %p371 = pneg %p107
      %s372 = smul.u32 2, %s25
      %p373 = scmp.lt.s32.totalorder %s372, 1
      %s374 = scalar_select %p373, %s372, 1
      %s375 = smul.addr %s374, 8
      %s376 = scalar_lea.vmem %s3, %s375
      %p377 = pneg %p136
      %p378 = pneg %p133
      %s379 = smul.u32 2, %s23
      %s380 = smul.u32 2, %s24
      %p381 = scmp.lt.s32.totalorder %s379, 3
      %s382 = scalar_select %p381, %s379, 3
      %p383 = scmp.lt.s32.totalorder %s380, 1
      %s384 = scalar_select %p383, %s380, 1
      %s385 = smul.addr %s382, 2
      %s386 = sadd.s32 %s384, %s385
      %s387 = smul.addr %s386, 4
      %s388 = scalar_lea.vmem %s4, %s387
      %p389 = pneg %p164
      %p390 = pneg %p161
      %s391 = smul.u32 2, %s25
      %p392 = scmp.lt.s32.totalorder %s23, 1
      %s393 = scalar_select %p392, %s23, 1
      %p394 = scmp.lt.s32.totalorder %s391, 1
      %s395 = scalar_select %p394, %s391, 1
      %s396 = smul.addr %s393, 2
      %s397 = sadd.s32 %s395, %s396
      %s398 = smul.addr %s397, 4
      %s399 = scalar_lea.vmem %s5, %s398
      %p400 = pneg %p192
      %p401 = pneg %p189
      %s402 = smul.u32 2, %s25
      %p403 = scmp.lt.s32.totalorder %s23, 1
      %s404 = scalar_select %p403, %s23, 1
      %p405 = scmp.lt.s32.totalorder %s402, 1
      %s406 = scalar_select %p405, %s402, 1
      %s407 = smul.addr %s404, 2
      %s408 = sadd.s32 %s406, %s407
      %s409 = smul.addr %s408, 4
      %s410 = scalar_lea.vmem %s6, %s409
      %p411 = pneg %p220
      %p412 = pneg %p217
      %p413 = pneg %p248
      %p414 = pneg %p245
      %s415 = smul.u32 2, %s23
      %s416 = smul.u32 2, %s24
      %p417 = scmp.lt.s32.totalorder %s415, 3
      %s418 = scalar_select %p417, %s415, 3
      %p419 = scmp.lt.s32.totalorder %s416, 1
      %s420 = scalar_select %p419, %s416, 1
      %s421 = smul.addr %s418, 2
      %s422 = sadd.s32 %s420, %s421
      %s423 = smul.addr %s422, 4
      %s424 = scalar_lea.vmem %s7, %s423
      %s425 = smul.u32 2, %s24
      %p426 = scmp.lt.s32.totalorder %s425, 1
      %s427 = scalar_select %p426, %s425, 1
      %s428 = smul.addr %s427, 8
      %s429 = scalar_lea.vmem %s0, %s428
      %s430 = smul.u32 2, %s24
      %s431 = smul.u32 2, %s24
      %p432 = scmp.lt.s32.totalorder %s431, 1
      %s433 = scalar_select %p432, %s431, 1
      %s434 = smul.addr %s433, 8
      %s435 = scalar_lea.vmem %s1, %s434
      %s436 = smul.u32 2, %s24
      %s437 = smul.u32 2, %s25
      %p438 = scmp.lt.s32.totalorder %s437, 1
      %s439 = scalar_select %p438, %s437, 1
      %s440 = smul.addr %s439, 8
      %s441 = scalar_lea.vmem %s2, %s440
      %s442 = smul.u32 2, %s25
      %s443 = smul.u32 2, %s25
      %p444 = scmp.lt.s32.totalorder %s443, 1
      %s445 = scalar_select %p444, %s443, 1
      %s446 = smul.addr %s445, 8
      %s447 = scalar_lea.vmem %s3, %s446
      %s448 = smul.u32 2, %s25
      %s449 = smul.u32 2, %s23
      %s450 = smul.u32 2, %s24
      %p451 = scmp.lt.s32.totalorder %s449, 3
      %s452 = scalar_select %p451, %s449, 3
      %p453 = scmp.lt.s32.totalorder %s450, 1
      %s454 = scalar_select %p453, %s450, 1
      %s455 = smul.addr %s452, 2
      %s456 = sadd.s32 %s454, %s455
      %s457 = smul.addr %s456, 4
      %s458 = scalar_lea.vmem %s4, %s457
      %s459 = smul.u32 2, %s23
      %s460 = smul.u32 2, %s24
      %s461 = smul.u32 2, %s25
      %p462 = scmp.lt.s32.totalorder %s23, 1
      %s463 = scalar_select %p462, %s23, 1
      %p464 = scmp.lt.s32.totalorder %s461, 1
      %s465 = scalar_select %p464, %s461, 1
      %s466 = smul.addr %s463, 2
      %s467 = sadd.s32 %s465, %s466
      %s468 = smul.addr %s467, 4
      %s469 = scalar_lea.vmem %s5, %s468
      %s470 = smul.u32 2, %s25
      %s471 = smul.u32 2, %s25
      %p472 = scmp.lt.s32.totalorder %s23, 1
      %s473 = scalar_select %p472, %s23, 1
      %p474 = scmp.lt.s32.totalorder %s471, 1
      %s475 = scalar_select %p474, %s471, 1
      %s476 = smul.addr %s473, 2
      %s477 = sadd.s32 %s475, %s476
      %s478 = smul.addr %s477, 4
      %s479 = scalar_lea.vmem %s6, %s478
      %s480 = smul.u32 2, %s25
      %s481 = smul.u32 2, %s23
      %s482 = smul.u32 2, %s24
      %p483 = scmp.lt.s32.totalorder %s481, 3
      %s484 = scalar_select %p483, %s481, 3
      %p485 = scmp.lt.s32.totalorder %s482, 1
      %s486 = scalar_select %p485, %s482, 1
      %s487 = smul.addr %s484, 2
      %s488 = sadd.s32 %s486, %s487
      %s489 = smul.addr %s488, 4
      %s490 = scalar_lea.vmem %s7, %s489
      %s491 = smul.u32 2, %s23
      %s492 = smul.u32 2, %s24
      %p494 = scmp.eq.s32.totalorder %s25, 0
      // Predicated region
      $region49: #{a_call__.17} parent=47 // pred_check
        %p495 = pneg %p494
      $region50: #{a_call__.17} parent=47 // pred_check_branch
        %497 = sbr.rel (%p495) target = $region52
      $region51: #{a_call__.17} parent=47 // pred_region
        %vm498 = vcmask 7168
        %499 = vst.msk [vmem:[#allocation3] sm:$0xff] %vm498, -inf
        %500 = vst.msk [vmem:[#allocation3 + $0x8] sm:$0xff] %vm498, -inf
        %501 = vst.msk [vmem:[#allocation3 + $0x10] sm:$0xff] %vm498, -inf
        %502 = vst.msk [vmem:[#allocation3 + $0x18] sm:$0xff] %vm498, -inf
        %503 = vst.msk [vmem:[#allocation4] sm:$0xff] %vm498, 0.0
        %504 = vst.msk [vmem:[#allocation4 + $0x8] sm:$0xff] %vm498, 0.0
        %505 = vst.msk [vmem:[#allocation4 + $0x10] sm:$0xff] %vm498, 0.0
        %506 = vst.msk [vmem:[#allocation4 + $0x18] sm:$0xff] %vm498, 0.0
        %507 = vst [vmem:[#allocation5] sm:$0xff] 0.0
        %508 = vst [vmem:[#allocation5 + $0x8] sm:$0xff] 0.0
        %509 = vst [vmem:[#allocation5 + $0x10] sm:$0xff] 0.0
        %510 = vst [vmem:[#allocation5 + $0x18] sm:$0xff] 0.0
        %v511 = vld [vmem:[%s429] sm:$0xff]
        %v512 = vld [vmem:[%s429 + $0x8] sm:$0xff]
        %v513 = vld [vmem:[%s435] sm:$0xff]
        %v514 = vld [vmem:[%s435 + $0x8] sm:$0xff]
        %v515 = vld [vmem:[%s458] sm:$0xf]
        %v516 = vld [vmem:[%s458 + $0x4] sm:$0xf]
        %v517 = vunpack.c.l.bf16 %v515
        %v518 = vunpack.c.l.bf16 %v516
        %v519 = vmul.f32 %v517, %v511
        %v520 = vmul.f32 %v518, %v512
        %521 = vrot.lane.b32.xlu0 %v517, 64
        %v522 = vpop.permute.xlu0 %521
        %523 = vrot.lane.b32.xlu0 %v518, 64
        %v524 = vpop.permute.xlu0 %523
        %v525 = vmul.f32 %v522, %v513
        %v526 = vmul.f32 %v524, %v514
        %v527 = vadd.f32 %v519, %v525
        %v528 = vadd.f32 %v520, %v526
        %v529 = vmul.f32 %v527, 0.088388346
        %v530 = vmul.f32 %v528, 0.088388346
        %v531 = vpack.c.bf16 %v530, %v529
        %532 = vst [vmem:[#allocation2] sm:$0xff] %v531
        %s533 = scalar_lea.vmem %s458, 8
        %v534 = vld [vmem:[%s533] sm:$0xf]
        %v535 = vld [vmem:[%s533 + $0x4] sm:$0xf]
        %v536 = vunpack.c.l.bf16 %v534
        %v537 = vunpack.c.l.bf16 %v535
        %v538 = vmul.f32 %v536, %v511
        %v539 = vmul.f32 %v537, %v512
        %540 = vrot.lane.b32.xlu0 %v536, 64
        %v541 = vpop.permute.xlu0 %540
        %542 = vrot.lane.b32.xlu0 %v537, 64
        %v543 = vpop.permute.xlu0 %542
        %v544 = vmul.f32 %v541, %v513
        %v545 = vmul.f32 %v543, %v514
        %v546 = vadd.f32 %v538, %v544
        %v547 = vadd.f32 %v539, %v545
        %v548 = vmul.f32 %v546, 0.088388346
        %v549 = vmul.f32 %v547, 0.088388346
        %v550 = vpack.c.bf16 %v549, %v548
        %551 = vst [vmem:[#allocation2 + $0x8] sm:$0xff] %v550
      $region52: #{a_call__.17} parent=47 // pred_fallthru
        _
      %s552 = smul.u32 %s25, 16
      %s553 = sadd.s32 %s24, 1
      %s554 = smul.u32 %s553, 16
      %p555 = scmp.lt.s32.totalorder %s552, %s554
      // Predicated region
      $region53: #{a_call__.17} parent=47 // pred_check
        %p556 = pneg %p555
      $region54: #{a_call__.17} parent=47 // pred_check_branch
        %558 = sbr.rel (%p556) target = $region56
      $region55: #{a_call__.17} parent=47 // pred_region
        %v559 = vld [vmem:[%s469] sm:$0xf]
        %v560 = vld [vmem:[%s469 + $0x4] sm:$0xf]
        %v561 = vunpack.c.l.bf16 %v559
        %v562 = vunpack.c.l.bf16 %v560
        %v563 = vld [vmem:[%s441] sm:$0xff]
        %v564 = vld [vmem:[%s441 + $0x8] sm:$0xff]
        %v565 = vmul.f32 %v561, %v563
        %v566 = vmul.f32 %v562, %v564
        %567 = vrot.lane.b32.xlu0 %v561, 64
        %v568 = vpop.permute.xlu0 %567
        %569 = vrot.lane.b32.xlu0 %v562, 64
        %v570 = vpop.permute.xlu0 %569
        %v571 = vld [vmem:[%s447] sm:$0xff]
        %v572 = vld [vmem:[%s447 + $0x8] sm:$0xff]
        %v573 = vmul.f32 %v568, %v571
        %v574 = vmul.f32 %v570, %v572
        %v575 = vadd.f32 %v565, %v573
        %v576 = vadd.f32 %v566, %v574
        %v577 = vpack.c.bf16 %v576, %v575
        %v578 = vld [vmem:[#allocation2] sm:$0xff]
        %v579 = vld [vmem:[#allocation2 + $0x8] sm:$0xff]
        %580 = vmatprep.subr.bf16.mxu0 0
        %581 = vmatpush1.bf16.xpose.msra.mxu0 %v577
        %582 = vmatprep.subr.bf16.mxu0 0
        %583 = vmatpush1.bf16.xpose.msra.mxu0 0
        %584 = vmatprep.subr.bf16.mxu0 0
        %585 = vmatpush1.bf16.xpose.msra.mxu0 0
        %586 = vmatprep.subr.bf16.mxu0 0
        %587 = vmatpush1.bf16.xpose.msra.mxu0 0
        %588 = vmatprep.subr.bf16.mxu0 0
        %589 = vmatpush1.bf16.xpose.msra.mxu0 0
        %590 = vmatprep.subr.bf16.mxu0 0
        %591 = vmatpush1.bf16.xpose.msra.mxu0 0
        %592 = vmatprep.subr.bf16.mxu0 0
        %593 = vmatpush1.bf16.xpose.msra.mxu0 0
        %594 = vmatprep.subr.bf16.mxu0 0
        %595 = vmatpush1.bf16.xpose.msra.mxu0 0
        %596 = vmatprep.subr.bf16.mxu0 0
        %597 = vmatpush1.bf16.xpose.msra.mxu0 0
        %598 = vmatprep.subr.bf16.mxu0 0
        %599 = vmatpush1.bf16.xpose.msra.mxu0 0
        %600 = vmatprep.subr.bf16.mxu0 0
        %601 = vmatpush1.bf16.xpose.msra.mxu0 0
        %602 = vmatprep.subr.bf16.mxu0 0
        %603 = vmatpush1.bf16.xpose.msra.mxu0 0
        %604 = vmatprep.subr.bf16.mxu0 0
        %605 = vmatpush1.bf16.xpose.msra.mxu0 0
        %606 = vmatprep.subr.bf16.mxu0 0
        %607 = vmatpush1.bf16.xpose.msra.mxu0 0
        %608 = vmatprep.subr.bf16.mxu0 0
        %609 = vmatpush1.bf16.xpose.msra.mxu0 0
        %610 = vmatprep.subr.bf16.mxu0 0
        %611 = vmatpush1.bf16.xpose.msra.mxu0 0
        %612 = vmatprep.mubr.bf16.mxu0 0
        %613 = vmatmul.mubr.bf16.gmra.mrb[0].mxu0 %v578
        %v614 = vpop.f32.mrb[0].mxu0
        %v615 = vadd.f32 0.0, %v614
        %v616 = vpop.f32.mrb[0].mxu0
        %v617 = vpop.f32.mrb[0].mxu0
        %v618 = vadd.f32 0.0, %v617
        %v619 = vpop.f32.mrb[0].mxu0
        %620 = vmatprep.mubr.bf16.mxu0 0
        %621 = vmatmul.mubr.bf16.gmra.mrb[0].mxu0 %v579
        %v622 = vpop.f32.mrb[0].mxu0
        %v623 = vadd.f32 0.0, %v622
        %v624 = vpop.f32.mrb[0].mxu0
        %v625 = vpop.f32.mrb[0].mxu0
        %v626 = vadd.f32 0.0, %v625
        %v627 = vpop.f32.mrb[0].mxu0
        %628 = vdwg.mxu0
        %v629 = vlaneseq
        %v630 = vshrl.u32 %v629, 7
        %v631 = vadd.s32 %v630, 8
        %v632 = vlaneseq
        %v633 = vand.u32 %v632, 127
        %v634 = vstv %s552
        %v635 = vadd.s32 %v634, %v633
        %s636 = smul.u32 %s24, 16
        %v637 = vstv %s636
        %v638 = vadd.s32 %v637, %v630
        %v639 = vadd.s32 %v637, %v631
        %vm640 = vcmp.le.s32.totalorder %v635, %v638
        %vm641 = vcmp.le.s32.totalorder %v635, %v639
        %v642 = vsel %vm640, %v615, -1e+30
        %v643 = vsel %vm641, %v618, -1e+30
        %v644 = vsel %vm640, %v623, -1e+30
        %v645 = vsel %vm641, %v626, -1e+30
        %v646 = vld [vmem:[#allocation3] sm:$0xff]
        %v647 = vld [vmem:[#allocation3 + $0x8] sm:$0xff]
        %v648 = vld [vmem:[#allocation3 + $0x10] sm:$0xff]
        %v649 = vld [vmem:[#allocation3 + $0x18] sm:$0xff]
        %vm650 = vcmask 130048
        %v651 = vsel %vm650, %v642, -inf
        %652 = vmax.xlane.f32.xlu0 %v651
        %v653 = vpop.xlane.xlu0 %652
        %v654 = vsel %vm650, %v643, -inf
        %655 = vmax.xlane.f32.xlu0 %v654
        %v656 = vpop.xlane.xlu0 %655
        %v657 = vsel %vm650, %v644, -inf
        %658 = vmax.xlane.f32.xlu0 %v657
        %v659 = vpop.xlane.xlu0 %658
        %v660 = vsel %vm650, %v645, -inf
        %661 = vmax.xlane.f32.xlu0 %v660
        %v662 = vpop.xlane.xlu0 %661
        %v663 = vmax.f32 %v646, %v653
        %v664 = vmax.f32 %v647, %v656
        %v665 = vmax.f32 %v648, %v659
        %v666 = vmax.f32 %v649, %v662
        %v667 = vsub.f32 %v646, %v663
        %v668 = vsub.f32 %v647, %v664
        %v669 = vsub.f32 %v648, %v665
        %v670 = vsub.f32 %v649, %v666
        %v671 = vmul.f32 %v667, 1.442695
        %v672 = vpow.pop %v671
        %v673 = vmul.f32 %v668, 1.442695
        %v674 = vpow.pop %v673
        %v675 = vmul.f32 %v669, 1.442695
        %v676 = vpow.pop %v675
        %v677 = vmul.f32 %v670, 1.442695
        %v678 = vpow.pop %v677
        %680 = vset.pattern.permute.xlu0 0
        %681 = vperm.xlu0 %680, %v663
        %v682 = vpop.permute.xlu0 %681
        %685 = vset.pattern.permute.xlu0 0
        %686 = vperm.xlu0 %685, %v664
        %v687 = vpop.permute.xlu0 %686
        %690 = vset.pattern.permute.xlu0 0
        %691 = vperm.xlu0 %690, %v665
        %v692 = vpop.permute.xlu0 %691
        %695 = vset.pattern.permute.xlu0 0
        %696 = vperm.xlu0 %695, %v666
        %v697 = vpop.permute.xlu0 %696
        %v699 = vsub.f32 %v642, %v682
        %v700 = vsub.f32 %v643, %v687
        %v701 = vsub.f32 %v644, %v692
        %v702 = vsub.f32 %v645, %v697
        %v703 = vmul.f32 %v699, 1.442695
        %v704 = vpow.pop %v703
        %v705 = vmul.f32 %v700, 1.442695
        %v706 = vpow.pop %v705
        %v707 = vmul.f32 %v701, 1.442695
        %v708 = vpow.pop %v707
        %v709 = vmul.f32 %v702, 1.442695
        %v710 = vpow.pop %v709
        %v711 = vld [vmem:[#allocation4] sm:$0xff]
        %v712 = vld [vmem:[#allocation4 + $0x8] sm:$0xff]
        %v713 = vld [vmem:[#allocation4 + $0x10] sm:$0xff]
        %v714 = vld [vmem:[#allocation4 + $0x18] sm:$0xff]
        %v715 = vmul.f32 %v672, %v711
        %v716 = vmul.f32 %v674, %v712
        %v717 = vmul.f32 %v676, %v713
        %v718 = vmul.f32 %v678, %v714
        %v719 = vsel %vm650, %v704, 0.0
        %720 = vadd.xlane.f32.xlu0 %v719
        %v721 = vpop.xlane.xlu0 %720
        %v722 = vsel %vm650, %v706, 0.0
        %723 = vadd.xlane.f32.xlu0 %v722
        %v724 = vpop.xlane.xlu0 %723
        %v725 = vsel %vm650, %v708, 0.0
        %726 = vadd.xlane.f32.xlu0 %v725
        %v727 = vpop.xlane.xlu0 %726
        %v728 = vsel %vm650, %v710, 0.0
        %729 = vadd.xlane.f32.xlu0 %v728
        %v730 = vpop.xlane.xlu0 %729
        %v731 = vadd.f32 %v715, %v721
        %v732 = vadd.f32 %v716, %v724
        %v733 = vadd.f32 %v717, %v727
        %v734 = vadd.f32 %v718, %v730
        %vm735 = vcmask 7168
        %736 = vst.msk [vmem:[#allocation4] sm:$0xff] %vm735, %v731
        %737 = vst.msk [vmem:[#allocation4 + $0x8] sm:$0xff] %vm735, %v732
        %738 = vst.msk [vmem:[#allocation4 + $0x10] sm:$0xff] %vm735, %v733
        %739 = vst.msk [vmem:[#allocation4 + $0x18] sm:$0xff] %vm735, %v734
        %v740 = vld [vmem:[#allocation5] sm:$0xff]
        %v741 = vld [vmem:[#allocation5 + $0x8] sm:$0xff]
        %v742 = vld [vmem:[#allocation5 + $0x10] sm:$0xff]
        %v743 = vld [vmem:[#allocation5 + $0x18] sm:$0xff]
        %745 = vset.pattern.permute.xlu0 0
        %746 = vperm.xlu0 %745, %v672
        %v747 = vpop.permute.xlu0 %746
        %750 = vset.pattern.permute.xlu0 0
        %751 = vperm.xlu0 %750, %v674
        %v752 = vpop.permute.xlu0 %751
        %755 = vset.pattern.permute.xlu0 0
        %756 = vperm.xlu0 %755, %v676
        %v757 = vpop.permute.xlu0 %756
        %760 = vset.pattern.permute.xlu0 0
        %761 = vperm.xlu0 %760, %v678
        %v762 = vpop.permute.xlu0 %761
        %v764 = vmul.f32 %v747, %v740
        %v765 = vmul.f32 %v752, %v741
        %v766 = vmul.f32 %v757, %v742
        %v767 = vmul.f32 %v762, %v743
        %v768 = vpack.c.bf16 %v706, %v704
        %v769 = vpack.c.bf16 %v710, %v708
        %v770 = vld [vmem:[%s479] sm:$0xf]
        %v771 = vld [vmem:[%s479 + $0x4] sm:$0xf]
        %v774 = vunpack.c.l.b16 %v770
        %v775 = vunpack.c.l.b16 %v771
        %v776 = vpack.c.b16 %v775, %v774
        %v779 = vsel %vm650, %v768, 0
        %v782 = vsel %vm650, %v769, 0
        %784 = vmatprep.subr.bf16.mxu0 0
        %785 = vmatpush1.bf16.msra.mxu0 %v776
        %786 = vmatprep.subr.bf16.mxu0 0
        %787 = vmatpush1.bf16.msra.mxu0 0
        %788 = vmatprep.subr.bf16.mxu0 0
        %789 = vmatpush1.bf16.msra.mxu0 0
        %790 = vmatprep.subr.bf16.mxu0 0
        %791 = vmatpush1.bf16.msra.mxu0 0
        %792 = vmatprep.subr.bf16.mxu0 0
        %793 = vmatpush1.bf16.msra.mxu0 0
        %794 = vmatprep.subr.bf16.mxu0 0
        %795 = vmatpush1.bf16.msra.mxu0 0
        %796 = vmatprep.subr.bf16.mxu0 0
        %797 = vmatpush1.bf16.msra.mxu0 0
        %798 = vmatprep.subr.bf16.mxu0 0
        %799 = vmatpush1.bf16.msra.mxu0 0
        %800 = vmatprep.subr.bf16.mxu0 0
        %801 = vmatpush1.bf16.msra.mxu0 0
        %802 = vmatprep.subr.bf16.mxu0 0
        %803 = vmatpush1.bf16.msra.mxu0 0
        %804 = vmatprep.subr.bf16.mxu0 0
        %805 = vmatpush1.bf16.msra.mxu0 0
        %806 = vmatprep.subr.bf16.mxu0 0
        %807 = vmatpush1.bf16.msra.mxu0 0
        %808 = vmatprep.subr.bf16.mxu0 0
        %809 = vmatpush1.bf16.msra.mxu0 0
        %810 = vmatprep.subr.bf16.mxu0 0
        %811 = vmatpush1.bf16.msra.mxu0 0
        %812 = vmatprep.subr.bf16.mxu0 0
        %813 = vmatpush1.bf16.msra.mxu0 0
        %814 = vmatprep.subr.bf16.mxu0 0
        %815 = vmatpush1.bf16.msra.mxu0 0
        %816 = vmatprep.mubr.bf16.mxu0 0
        %817 = vmatmul.mubr.bf16.gmra.mrb[0].mxu0 %v779
        %v818 = vpop.f32.mrb[0].mxu0
        %v819 = vadd.f32 0.0, %v818
        %v820 = vpop.f32.mrb[0].mxu0
        %v821 = vpop.f32.mrb[0].mxu0
        %v822 = vadd.f32 0.0, %v821
        %v823 = vpop.f32.mrb[0].mxu0
        %824 = vmatprep.mubr.bf16.mxu0 0
        %825 = vmatmul.mubr.bf16.gmra.mrb[0].mxu0 %v782
        %v826 = vpop.f32.mrb[0].mxu0
        %v827 = vadd.f32 0.0, %v826
        %v828 = vpop.f32.mrb[0].mxu0
        %v829 = vpop.f32.mrb[0].mxu0
        %v830 = vadd.f32 0.0, %v829
        %v831 = vpop.f32.mrb[0].mxu0
        %832 = vdwg.mxu0
        %v833 = vadd.f32 %v764, %v819
        %v834 = vadd.f32 %v765, %v822
        %v835 = vadd.f32 %v766, %v827
        %v836 = vadd.f32 %v767, %v830
        %837 = vst [vmem:[#allocation5] sm:$0xff] %v833
        %838 = vst [vmem:[#allocation5 + $0x8] sm:$0xff] %v834
        %839 = vst [vmem:[#allocation5 + $0x10] sm:$0xff] %v835
        %840 = vst [vmem:[#allocation5 + $0x18] sm:$0xff] %v836
        %841 = vst.msk [vmem:[#allocation3] sm:$0xff] %vm735, %v663
        %842 = vst.msk [vmem:[#allocation3 + $0x8] sm:$0xff] %vm735, %v664
        %843 = vst.msk [vmem:[#allocation3 + $0x10] sm:$0xff] %vm735, %v665
        %844 = vst.msk [vmem:[#allocation3 + $0x18] sm:$0xff] %vm735, %v666
      $region56: #{a_call__.17} parent=47 // pred_fallthru
        _
      // Predicated region
      $region57: #{a_call__.17} parent=47 // pred_check
        %p845 = pneg %p494
      $region58: #{a_call__.17} parent=47 // pred_check_branch
        %847 = sbr.rel (%p845) target = $region60
      $region59: #{a_call__.17} parent=47 // pred_region
        %v848 = vld [vmem:[#allocation4] sm:$0xff]
        %v849 = vld [vmem:[#allocation4 + $0x8] sm:$0xff]
        %v850 = vld [vmem:[#allocation4 + $0x10] sm:$0xff]
        %v851 = vld [vmem:[#allocation4 + $0x18] sm:$0xff]
        %v852 = vrcp.pop %v848
        %v853 = vrcp.pop %v849
        %v854 = vrcp.pop %v850
        %v855 = vrcp.pop %v851
        %v856 = vld [vmem:[#allocation5] sm:$0xff]
        %v857 = vld [vmem:[#allocation5 + $0x8] sm:$0xff]
        %v858 = vld [vmem:[#allocation5 + $0x10] sm:$0xff]
        %v859 = vld [vmem:[#allocation5 + $0x18] sm:$0xff]
        %861 = vset.pattern.permute.xlu0 0
        %862 = vperm.xlu0 %861, %v852
        %v863 = vpop.permute.xlu0 %862
        %866 = vset.pattern.permute.xlu0 0
        %867 = vperm.xlu0 %866, %v853
        %v868 = vpop.permute.xlu0 %867
        %871 = vset.pattern.permute.xlu0 0
        %872 = vperm.xlu0 %871, %v854
        %v873 = vpop.permute.xlu0 %872
        %876 = vset.pattern.permute.xlu0 0
        %877 = vperm.xlu0 %876, %v855
        %v878 = vpop.permute.xlu0 %877
        %v880 = vmul.f32 %v856, %v863
        %v881 = vmul.f32 %v857, %v868
        %v882 = vmul.f32 %v858, %v873
        %v883 = vmul.f32 %v859, %v878
        %v884 = vpack.c.bf16 %v881, %v880
        %v885 = vpack.c.bf16 %v883, %v882
        %v888 = vunpack.c.l.b16 %v884
        %v889 = vunpack.c.h.b16 %v884
        %v890 = vunpack.c.l.b16 %v885
        %v891 = vunpack.c.h.b16 %v885
        %v892 = vpack.c.b16 %v888, %v888
        %v893 = vpack.c.b16 %v889, %v889
        %v894 = vpack.c.b16 %v890, %v890
        %v895 = vpack.c.b16 %v891, %v891
        %900 = vst [vmem:[%s490] sm:$0xf] %v892
        %901 = vst [vmem:[%s490 + $0x4] sm:$0xf] %v893
        %902 = vst [vmem:[%s490 + $0x8] sm:$0xf] %v894
        %903 = vst [vmem:[%s490 + $0xc] sm:$0xf] %v895
      $region60: #{a_call__.17} parent=47 // pred_fallthru
        _
      %s904 = smul.u32 2, %s23
      %s905 = smul.u32 2, %s24
      %p906 = scmp.lt.s32.totalorder %s904, 3
      %s907 = scalar_select %p906, %s904, 3
      %p908 = scmp.lt.s32.totalorder %s905, 1
      %s909 = scalar_select %p908, %s905, 1
      %s910 = smul.addr %s907, 2
      %s911 = sadd.s32 %s909, %s910
      %s912 = smul.addr %s911, 4
      %s913 = scalar_lea.vmem %s7, %s912
      // Predicated region
      $region61: #{a_call__.17} parent=47 // pred_check
        %p914 = pneg %p245
      $region62: #{a_call__.17} parent=47 // pred_check_branch
        %916 = sbr.rel (%p914) target = $region64
      $region63: #{a_call__.17} parent=47 // pred_region
        %s917 = smul.u32 2, %s23
        %s918 = smul.u32 2, %s24
      $region64: #{a_call__.17} parent=47 // pred_fallthru
        _
    $region48: #{a_call__.17} parent=5 // pred_fallthru
      _
    %p919 = scmp.le.s32.totalorder 2, %s13
    // Predicated region
    $region65: #{a_call__.17} parent=5 // pred_check
      %p920 = pneg %p919
    $region66: #{a_call__.17} parent=5 // pred_check_branch
      %922 = sbr.rel (%p920) target = $region68
    $region67: #{a_call__.17} parent=5 // pred_region
      %s923 = ssub.s32 %s13, 2
      // Predicated region
      $region69: #{a_call__.17} parent=67 // pred_check
        %p924 = pneg %p251
      $region70: #{a_call__.17} parent=67 // pred_check_branch
        %926 = sbr.rel (%p924) target = $region72
      $region71: #{a_call__.17} parent=67 // pred_region
        %s927 = smul.u32 2, %s26
        %s928 = smul.u32 2, %s27
        %p929 = scmp.lt.s32.totalorder %s927, 3
        %s930 = scalar_select %p929, %s927, 3
        %p931 = scmp.lt.s32.totalorder %s928, 1
        %s932 = scalar_select %p931, %s928, 1
        %s933 = smul.addr %s930, 2
        %s934 = sadd.s32 %s932, %s933
        %s935 = smul.addr %s934, 4
        %s936 = scalar_lea.vmem %s7, %s935
      $region72: #{a_call__.17} parent=67 // pred_fallthru
        _
    $region68: #{a_call__.17} parent=5 // pred_fallthru
      _
  $region6: #{a_call__.17} parent=0 // loop_footer
    %s17 = sadd.s32 1, %s13
  $region7: #{a_call__.17} parent=0 // loop_footer_branch
    %12 = sbr.rel target = $region3
  $region8: #{a_call__.17} parent=0 // loop_exit
    _

// kernel: a_call__.18
$region0: #{a_call__.18}
  #allocation0 [shape = 'u32[]', space=smem, size = 0x4, offset = 0x4, fixed_abs, tag = 'smem constant byte address 0x4 - core index']
  #allocation1 [shape = 'u32[144,128]{1,0:T(1,128)}', space=vmem, size = 0x12000, scoped, tag = 'internal scratch']
  #allocation2 [shape = 'f32[16,256]{1,0:T(8,128)}', space=vmem, size = 0x4000, scoped, tag = 'scratch operand']
  %s0 = inlined_call_operand.vmem [shape: bf16[16,512], index: 0, kind: input, shape index: {}]
  %s1 = inlined_call_operand.vmem [shape: bf16[512,512], index: 1, kind: input, shape index: {}]
  %s2 = inlined_call_operand.vmem [shape: bf16[16,512], index: 2, kind: output, shape index: {}]
  %s3 = sld [smem:[#allocation0]]
  $region121: #{a_call__.18} parent=0
    _
  %s5 = ssub.s32 1, %s3
  %s6 = scalar_select 0, %s5, %s3
  $region1: #{a_call__.18} parent=0
    #allocation3 [shape = 'u8[524288]{0}', space=vmem, size = 0x80000, scoped, tag = 'input window, operand 1']
    #allocation4 [shape = 'u8[16384]{0}', space=vmem, size = 0x4000, scoped, tag = 'output window, operand 0']
    loop: start=0, step=1, limit=4
    $region2: #{a_call__.18} parent=1 // loop_pre_header
      _
    $region3: #{a_call__.18} parent=1 // loop_header
      %s8 = sphi 0, %s12
      %p9 = scmp.ge.s32.totalorder %s8, 4
      %s15 = sphi 0, %s34
      %s16 = sphi 0, %s30
      %s17 = sphi 0, %s26
      %s18 = sphi 0, %s15
      %s19 = sphi 0, %s16
      %s20 = sphi 0, %s17
      %s21 = sphi 0, %s18
      %s22 = sphi 0, %s19
      %s23 = sphi 0, %s20
      %s39 = sphi 0, %s41
      %s42 = sphi 0, %s39
      %s43 = sphi 0, %s42
      %s59 = sphi 0, %s43
      %s67 = sphi 0, %s69
      %s70 = sphi 0, %s67
      %s71 = sphi 0, %s70
      %s87 = sphi 0, %s71
      %s95 = sphi 0, %s97
      %s98 = sphi 0, %s95
      %s99 = sphi 0, %s98
      %s115 = sphi 0, %s99
    $region4: #{a_call__.18} parent=1 // loop_header_branch
      %11 = sbr.rel (%p9) target = $region8
    $region5: #{a_call__.18} parent=1 // loop_body
      %s13 = ssub.s32 %s8, 1
      %s14 = ssub.s32 %s8, 2
      %s24 = sadd.s32 1, %s17
      %p25 = scmp.ge.s32.totalorder %s24, 1
      %s26 = scalar_select %p25, 0, %s24
      %s27 = sadd.s32 1, %s16
      %s28 = scalar_select %p25, %s27, %s16
      %p29 = scmp.ge.s32.totalorder %s28, 2
      %s30 = scalar_select %p29, 0, %s28
      %s31 = sadd.s32 1, %s15
      %s32 = scalar_select %p29, %s31, %s15
      %p33 = scmp.ge.s32.totalorder %s32, 1
      %s34 = scalar_select %p33, 0, %s32
      %s35 = ssub.s32 %s15, %s34
      %s36 = ssub.s32 %s17, %s26
      %s37 = sor.u32 %s35, %s36
      %p38 = scmp.eq.s32.totalorder %s37, 0
      %s40 = sadd.s32 %s39, 1
      %s41 = scalar_select %p38, %s39, %s40
      %p44 = pneg %p38
      %p45 = scmp.eq.s32.totalorder %s8, 1
      %p46 = por %p44, %p45
      %p47 = scmp.ne.s32.totalorder %s39, %s42
      %p48 = scmp.eq.s32.totalorder %s8, 0
      %p49 = por %p47, %p48
      %p50 = scmp.ne.s32.totalorder %s39, %s42
      %p51 = scmp.eq.s32.totalorder %s13, 1
      %p52 = por %p50, %p51
      %p53 = scmp.ne.s32.totalorder %s42, %s43
      %p54 = scmp.eq.s32.totalorder %s13, 0
      %p55 = por %p53, %p54
      %p56 = scmp.ne.s32.totalorder %s42, %s43
      %p57 = scmp.eq.s32.totalorder %s14, 1
      %p58 = por %p56, %p57
      %p60 = scmp.ne.s32.totalorder %s43, %s59
      %p61 = scmp.eq.s32.totalorder %s14, 0
      %p62 = por %p60, %p61
      %s63 = ssub.s32 %s17, %s26
      %s64 = ssub.s32 %s16, %s30
      %s65 = sor.u32 %s63, %s64
      %p66 = scmp.eq.s32.totalorder %s65, 0
      %s68 = sadd.s32 %s67, 1
      %s69 = scalar_select %p66, %s67, %s68
      %p72 = pneg %p66
      %p73 = scmp.eq.s32.totalorder %s8, 1
      %p74 = por %p72, %p73
      %p75 = scmp.ne.s32.totalorder %s67, %s70
      %p76 = scmp.eq.s32.totalorder %s8, 0
      %p77 = por %p75, %p76
      %p78 = scmp.ne.s32.totalorder %s67, %s70
      %p79 = scmp.eq.s32.totalorder %s13, 1
      %p80 = por %p78, %p79
      %p81 = scmp.ne.s32.totalorder %s70, %s71
      %p82 = scmp.eq.s32.totalorder %s13, 0
      %p83 = por %p81, %p82
      %p84 = scmp.ne.s32.totalorder %s70, %s71
      %p85 = scmp.eq.s32.totalorder %s14, 1
      %p86 = por %p84, %p85
      %p88 = scmp.ne.s32.totalorder %s71, %s87
      %p89 = scmp.eq.s32.totalorder %s14, 0
      %p90 = por %p88, %p89
      %s91 = ssub.s32 %s15, %s34
      %s92 = ssub.s32 %s16, %s30
      %s93 = sor.u32 %s91, %s92
      %p94 = scmp.eq.s32.totalorder %s93, 0
      %s96 = sadd.s32 %s95, 1
      %s97 = scalar_select %p94, %s95, %s96
      %p100 = pneg %p94
      %p101 = scmp.eq.s32.totalorder %s8, 1
      %p102 = por %p100, %p101
      %p103 = scmp.ne.s32.totalorder %s95, %s98
      %p104 = scmp.eq.s32.totalorder %s8, 0
      %p105 = por %p103, %p104
      %p106 = scmp.ne.s32.totalorder %s95, %s98
      %p107 = scmp.eq.s32.totalorder %s13, 1
      %p108 = por %p106, %p107
      %p109 = scmp.ne.s32.totalorder %s98, %s99
      %p110 = scmp.eq.s32.totalorder %s13, 0
      %p111 = por %p109, %p110
      %p112 = scmp.ne.s32.totalorder %s98, %s99
      %p113 = scmp.eq.s32.totalorder %s14, 1
      %p114 = por %p112, %p113
      %p116 = scmp.ne.s32.totalorder %s99, %s115
      %p117 = scmp.eq.s32.totalorder %s14, 0
      %p118 = por %p116, %p117
      %p119 = scmp.le.s32.totalorder 1, %s8
      %p120 = scmp.lt.s32.totalorder %s8, 3
      %p121 = pnand %p119, %p120
      %p122 = pneg %p121
      // Predicated region
      $region9: #{a_call__.18} parent=5 // pred_check
        _
      $region10: #{a_call__.18} parent=5 // pred_check_branch
        %124 = sbr.rel (%p121) target = $region12
      $region11: #{a_call__.18} parent=5 // pred_region
        %s125 = ssub.s32 %s8, 1
        // Predicated region
        $region13: #{a_call__.18} parent=11 // pred_check
          %p126 = pneg %p55
        $region14: #{a_call__.18} parent=11 // pred_check_branch
          %128 = sbr.rel (%p126) target = $region16
        $region15: #{a_call__.18} parent=11 // pred_region
          %s129 = smul.u32 2, %s18
          %s130 = smul.u32 4, %s20
          %p131 = scmp.lt.s32.totalorder %s129, 1
          %s132 = scalar_select %p131, %s129, 1
          %p133 = scmp.lt.s32.totalorder %s130, 3
          %s134 = scalar_select %p133, %s130, 3
          %s135 = smul.addr %s132, 4
          %s136 = sadd.s32 %s134, %s135
          %s137 = smul.addr %s136, 4
          %s138 = scalar_lea.vmem %s0, %s137
          %s139 = smul.u32 2, %s18
          %s140 = smul.u32 4, %s20
        $region16: #{a_call__.18} parent=11 // pred_fallthru
          _
      $region12: #{a_call__.18} parent=5 // pred_fallthru
        _
      %p141 = scmp.lt.s32.totalorder %s8, 2
      // Predicated region
      $region17: #{a_call__.18} parent=5 // pred_check
        %p142 = pneg %p141
      $region18: #{a_call__.18} parent=5 // pred_check_branch
        %144 = sbr.rel (%p142) target = $region20
      $region19: #{a_call__.18} parent=5 // pred_region
        // Predicated region
        $region21: #{a_call__.18} parent=19 // pred_check
          %p145 = pneg %p77
        $region22: #{a_call__.18} parent=19 // pred_check_branch
          %147 = sbr.rel (%p145) target = $region24
        $region23: #{a_call__.18} parent=19 // pred_region
          %s148 = sand.u32 %s67, 1
          %s149 = sand.u32 %s67, 1
          %s150 = smul.addr %s149, 512
          %s151 = scalar_lea.vmem [#allocation3], %s150
          %s152 = smul.u32 64, %s17
          %s153 = smul.u32 2, %s16
          %s154 = smul.addr %s152, 4
          %s155 = sadd.s32 %s153, %s154
          %s156 = smul.addr %s155, 4
          %s157 = scalar_lea.vmem %s1, %s156
          // Predicated region
          $region25: #{a_call__.18} parent=23 // pred_check
            _
          $region26: #{a_call__.18} parent=23 // pred_check_branch
            %159 = sbr.rel (0) target = $region28
          $region27: #{a_call__.18} parent=23 // pred_region
            // Predicated region
            $region29: #{a_call__.18} parent=27 // pred_check
              _
            $region30: #{a_call__.18} parent=27 // pred_check_branch
              %161 = sbr.rel (0) target = $region32
            $region31: #{a_call__.18} parent=27 // pred_region
              // Predicated region
              $region44: #{a_call__.18} parent=31 // pred_check
                _
              $region45: #{a_call__.18} parent=31 // pred_check_branch
                %302 = sbr.rel (0) target = $region47
              $region46: #{a_call__.18} parent=31 // pred_region
                loop: start=0, step=1, limit=1
                $region48: #{a_call__.18} parent=46 // loop_pre_header
                  _
                $region49: #{a_call__.18} parent=46 // loop_header
                  %s304 = sphi 0, %s308
                  %p305 = scmp.ge.s32.totalorder %s304, 1
                  %s309 = sphi %s157, %s157
                  %s310 = sphi %s151, %s151
                $region50: #{a_call__.18} parent=46 // loop_header_branch
                  %307 = sbr.rel (%p305) target = $region54
                $region51: #{a_call__.18} parent=46 // loop_body
                  %v311 = vld [vmem:[%s309] sm:$0xff]
                  %312 = vst [vmem:[%s310] sm:$0xff] %v311
                  %v313 = vld [vmem:[%s309 + $0x10] sm:$0xff]
                  %314 = vst [vmem:[%s310 + $0x8] sm:$0xff] %v313
                  %v315 = vld [vmem:[%s309 + $0x20] sm:$0xff]
                  %316 = vst [vmem:[%s310 + $0x10] sm:$0xff] %v315
                  %v317 = vld [vmem:[%s309 + $0x30] sm:$0xff]
                  %318 = vst [vmem:[%s310 + $0x18] sm:$0xff] %v317
                  %v319 = vld [vmem:[%s309 + $0x40] sm:$0xff]
                  %320 = vst [vmem:[%s310 + $0x20] sm:$0xff] %v319
                  %v321 = vld [vmem:[%s309 + $0x50] sm:$0xff]
                  %322 = vst [vmem:[%s310 + $0x28] sm:$0xff] %v321
                  %v323 = vld [vmem:[%s309 + $0x60] sm:$0xff]
                  %324 = vst [vmem:[%s310 + $0x30] sm:$0xff] %v323
                  %v325 = vld [vmem:[%s309 + $0x70] sm:$0xff]
                  %326 = vst [vmem:[%s310 + $0x38] sm:$0xff] %v325
                  %v327 = vld [vmem:[%s309 + $0x80] sm:$0xff]
                  %328 = vst [vmem:[%s310 + $0x40] sm:$0xff] %v327
                  %v329 = vld [vmem:[%s309 + $0x90] sm:$0xff]
                  %330 = vst [vmem:[%s310 + $0x48] sm:$0xff] %v329
                  %v331 = vld [vmem:[%s309 + $0xa0] sm:$0xff]
                  %332 = vst [vmem:[%s310 + $0x50] sm:$0xff] %v331
                  %v333 = vld [vmem:[%s309 + $0xb0] sm:$0xff]
                  %334 = vst [vmem:[%s310 + $0x58] sm:$0xff] %v333
                  %v335 = vld [vmem:[%s309 + $0xc0] sm:$0xff]
                  %336 = vst [vmem:[%s310 + $0x60] sm:$0xff] %v335
                  %v337 = vld [vmem:[%s309 + $0xd0] sm:$0xff]
                  %338 = vst [vmem:[%s310 + $0x68] sm:$0xff] %v337
                  %v339 = vld [vmem:[%s309 + $0xe0] sm:$0xff]
                  %340 = vst [vmem:[%s310 + $0x70] sm:$0xff] %v339
                  %v341 = vld [vmem:[%s309 + $0xf0] sm:$0xff]
                  %342 = vst [vmem:[%s310 + $0x78] sm:$0xff] %v341
                  %v343 = vld [vmem:[%s309 + $0x100] sm:$0xff]
                  %344 = vst [vmem:[%s310 + $0x80] sm:$0xff] %v343
                  %v345 = vld [vmem:[%s309 + $0x110] sm:$0xff]
                  %346 = vst [vmem:[%s310 + $0x88] sm:$0xff] %v345
                  %v347 = vld [vmem:[%s309 + $0x120] sm:$0xff]
                  %348 = vst [vmem:[%s310 + $0x90] sm:$0xff] %v347
                  %v349 = vld [vmem:[%s309 + $0x130] sm:$0xff]
                  %350 = vst [vmem:[%s310 + $0x98] sm:$0xff] %v349
                  %v351 = vld [vmem:[%s309 + $0x140] sm:$0xff]
                  %352 = vst [vmem:[%s310 + $0xa0] sm:$0xff] %v351
                  %v353 = vld [vmem:[%s309 + $0x150] sm:$0xff]
                  %354 = vst [vmem:[%s310 + $0xa8] sm:$0xff] %v353
                  %v355 = vld [vmem:[%s309 + $0x160] sm:$0xff]
                  %356 = vst [vmem:[%s310 + $0xb0] sm:$0xff] %v355
                  %v357 = vld [vmem:[%s309 + $0x170] sm:$0xff]
                  %358 = vst [vmem:[%s310 + $0xb8] sm:$0xff] %v357
                  %v359 = vld [vmem:[%s309 + $0x180] sm:$0xff]
                  %360 = vst [vmem:[%s310 + $0xc0] sm:$0xff] %v359
                  %v361 = vld [vmem:[%s309 + $0x190] sm:$0xff]
                  %362 = vst [vmem:[%s310 + $0xc8] sm:$0xff] %v361
                  %v363 = vld [vmem:[%s309 + $0x1a0] sm:$0xff]
                  %364 = vst [vmem:[%s310 + $0xd0] sm:$0xff] %v363
                  %v365 = vld [vmem:[%s309 + $0x1b0] sm:$0xff]
                  %366 = vst [vmem:[%s310 + $0xd8] sm:$0xff] %v365
                  %v367 = vld [vmem:[%s309 + $0x1c0] sm:$0xff]
                  %368 = vst [vmem:[%s310 + $0xe0] sm:$0xff] %v367
                  %v369 = vld [vmem:[%s309 + $0x1d0] sm:$0xff]
                  %370 = vst [vmem:[%s310 + $0xe8] sm:$0xff] %v369
                  %v371 = vld [vmem:[%s309 + $0x1e0] sm:$0xff]
                  %372 = vst [vmem:[%s310 + $0xf0] sm:$0xff] %v371
                  %v373 = vld [vmem:[%s309 + $0x1f0] sm:$0xff]
                  %374 = vst [vmem:[%s310 + $0xf8] sm:$0xff] %v373
                  %v375 = vld [vmem:[%s309 + $0x200] sm:$0xff]
                  %376 = vst [vmem:[%s310 + $0x100] sm:$0xff] %v375
                  %v377 = vld [vmem:[%s309 + $0x210] sm:$0xff]
                  %378 = vst [vmem:[%s310 + $0x108] sm:$0xff] %v377
                  %v379 = vld [vmem:[%s309 + $0x220] sm:$0xff]
                  %380 = vst [vmem:[%s310 + $0x110] sm:$0xff] %v379
                  %v381 = vld [vmem:[%s309 + $0x230] sm:$0xff]
                  %382 = vst [vmem:[%s310 + $0x118] sm:$0xff] %v381
                  %v383 = vld [vmem:[%s309 + $0x240] sm:$0xff]
                  %384 = vst [vmem:[%s310 + $0x120] sm:$0xff] %v383
                  %v385 = vld [vmem:[%s309 + $0x250] sm:$0xff]
                  %386 = vst [vmem:[%s310 + $0x128] sm:$0xff] %v385
                  %v387 = vld [vmem:[%s309 + $0x260] sm:$0xff]
                  %388 = vst [vmem:[%s310 + $0x130] sm:$0xff] %v387
                  %v389 = vld [vmem:[%s309 + $0x270] sm:$0xff]
                  %390 = vst [vmem:[%s310 + $0x138] sm:$0xff] %v389
                  %v391 = vld [vmem:[%s309 + $0x280] sm:$0xff]
                  %392 = vst [vmem:[%s310 + $0x140] sm:$0xff] %v391
                  %v393 = vld [vmem:[%s309 + $0x290] sm:$0xff]
                  %394 = vst [vmem:[%s310 + $0x148] sm:$0xff] %v393
                  %v395 = vld [vmem:[%s309 + $0x2a0] sm:$0xff]
                  %396 = vst [vmem:[%s310 + $0x150] sm:$0xff] %v395
                  %v397 = vld [vmem:[%s309 + $0x2b0] sm:$0xff]
                  %398 = vst [vmem:[%s310 + $0x158] sm:$0xff] %v397
                  %v399 = vld [vmem:[%s309 + $0x2c0] sm:$0xff]
                  %400 = vst [vmem:[%s310 + $0x160] sm:$0xff] %v399
                  %v401 = vld [vmem:[%s309 + $0x2d0] sm:$0xff]
                  %402 = vst [vmem:[%s310 + $0x168] sm:$0xff] %v401
                  %v403 = vld [vmem:[%s309 + $0x2e0] sm:$0xff]
                  %404 = vst [vmem:[%s310 + $0x170] sm:$0xff] %v403
                  %v405 = vld [vmem:[%s309 + $0x2f0] sm:$0xff]
                  %406 = vst [vmem:[%s310 + $0x178] sm:$0xff] %v405
                  %v407 = vld [vmem:[%s309 + $0x300] sm:$0xff]
                  %408 = vst [vmem:[%s310 + $0x180] sm:$0xff] %v407
                  %v409 = vld [vmem:[%s309 + $0x310] sm:$0xff]
                  %410 = vst [vmem:[%s310 + $0x188] sm:$0xff] %v409
                  %v411 = vld [vmem:[%s309 + $0x320] sm:$0xff]
                  %412 = vst [vmem:[%s310 + $0x190] sm:$0xff] %v411
                  %v413 = vld [vmem:[%s309 + $0x330] sm:$0xff]
                  %414 = vst [vmem:[%s310 + $0x198] sm:$0xff] %v413
                  %v415 = vld [vmem:[%s309 + $0x340] sm:$0xff]
                  %416 = vst [vmem:[%s310 + $0x1a0] sm:$0xff] %v415
                  %v417 = vld [vmem:[%s309 + $0x350] sm:$0xff]
                  %418 = vst [vmem:[%s310 + $0x1a8] sm:$0xff] %v417
                  %v419 = vld [vmem:[%s309 + $0x360] sm:$0xff]
                  %420 = vst [vmem:[%s310 + $0x1b0] sm:$0xff] %v419
                  %v421 = vld [vmem:[%s309 + $0x370] sm:$0xff]
                  %422 = vst [vmem:[%s310 + $0x1b8] sm:$0xff] %v421
                  %v423 = vld [vmem:[%s309 + $0x380] sm:$0xff]
                  %424 = vst [vmem:[%s310 + $0x1c0] sm:$0xff] %v423
                  %v425 = vld [vmem:[%s309 + $0x390] sm:$0xff]
                  %426 = vst [vmem:[%s310 + $0x1c8] sm:$0xff] %v425
                  %v427 = vld [vmem:[%s309 + $0x3a0] sm:$0xff]
                  %428 = vst [vmem:[%s310 + $0x1d0] sm:$0xff] %v427
                  %v429 = vld [vmem:[%s309 + $0x3b0] sm:$0xff]
                  %430 = vst [vmem:[%s310 + $0x1d8] sm:$0xff] %v429
                  %v431 = vld [vmem:[%s309 + $0x3c0] sm:$0xff]
                  %432 = vst [vmem:[%s310 + $0x1e0] sm:$0xff] %v431
                  %v433 = vld [vmem:[%s309 + $0x3d0] sm:$0xff]
                  %434 = vst [vmem:[%s310 + $0x1e8] sm:$0xff] %v433
                  %v435 = vld [vmem:[%s309 + $0x3e0] sm:$0xff]
                  %436 = vst [vmem:[%s310 + $0x1f0] sm:$0xff] %v435
                  %v437 = vld [vmem:[%s309 + $0x3f0] sm:$0xff]
                  %438 = vst [vmem:[%s310 + $0x1f8] sm:$0xff] %v437
                $region52: #{a_call__.18} parent=46 // loop_footer
                  %s308 = sadd.s32 1, %s304
                $region53: #{a_call__.18} parent=46 // loop_footer_branch
                  %303 = sbr.rel target = $region49
                $region54: #{a_call__.18} parent=46 // loop_exit
                  _
              $region47: #{a_call__.18} parent=31 // pred_fallthru
                _
              // Predicated region
              $region55: #{a_call__.18} parent=31 // pred_check
                _
              $region56: #{a_call__.18} parent=31 // pred_check_branch
                %440 = sbr.rel target = $region58
              $region57: #{a_call__.18} parent=31 // pred_region
                _
              $region58: #{a_call__.18} parent=31 // pred_fallthru
                _
            $region32: #{a_call__.18} parent=27 // pred_fallthru
              _
            // Predicated region
            $region33: #{a_call__.18} parent=27 // pred_check
              _
            $region34: #{a_call__.18} parent=27 // pred_check_branch
              %163 = sbr.rel target = $region36
            $region35: #{a_call__.18} parent=27 // pred_region
              loop: start=0, step=1, limit=1
              $region37: #{a_call__.18} parent=35 // loop_pre_header
                _
              $region38: #{a_call__.18} parent=35 // loop_header
                %s166 = sphi 0, %s170
                %p167 = scmp.ge.s32.totalorder %s166, 1
                %s171 = sphi %s157, %s157
                %s172 = sphi %s151, %s151
              $region39: #{a_call__.18} parent=35 // loop_header_branch
                %169 = sbr.rel (%p167) target = $region43
              $region40: #{a_call__.18} parent=35 // loop_body
                %v173 = vld [vmem:[%s171] sm:$0xff]
                %174 = vst [vmem:[%s172] sm:$0xff] %v173
                %v175 = vld [vmem:[%s171 + $0x10] sm:$0xff]
                %176 = vst [vmem:[%s172 + $0x8] sm:$0xff] %v175
                %v177 = vld [vmem:[%s171 + $0x20] sm:$0xff]
                %178 = vst [vmem:[%s172 + $0x10] sm:$0xff] %v177
                %v179 = vld [vmem:[%s171 + $0x30] sm:$0xff]
                %180 = vst [vmem:[%s172 + $0x18] sm:$0xff] %v179
                %v181 = vld [vmem:[%s171 + $0x40] sm:$0xff]
                %182 = vst [vmem:[%s172 + $0x20] sm:$0xff] %v181
                %v183 = vld [vmem:[%s171 + $0x50] sm:$0xff]
                %184 = vst [vmem:[%s172 + $0x28] sm:$0xff] %v183
                %v185 = vld [vmem:[%s171 + $0x60] sm:$0xff]
                %186 = vst [vmem:[%s172 + $0x30] sm:$0xff] %v185
                %v187 = vld [vmem:[%s171 + $0x70] sm:$0xff]
                %188 = vst [vmem:[%s172 + $0x38] sm:$0xff] %v187
                %v189 = vld [vmem:[%s171 + $0x80] sm:$0xff]
                %190 = vst [vmem:[%s172 + $0x40] sm:$0xff] %v189
                %v191 = vld [vmem:[%s171 + $0x90] sm:$0xff]
                %192 = vst [vmem:[%s172 + $0x48] sm:$0xff] %v191
                %v193 = vld [vmem:[%s171 + $0xa0] sm:$0xff]
                %194 = vst [vmem:[%s172 + $0x50] sm:$0xff] %v193
                %v195 = vld [vmem:[%s171 + $0xb0] sm:$0xff]
                %196 = vst [vmem:[%s172 + $0x58] sm:$0xff] %v195
                %v197 = vld [vmem:[%s171 + $0xc0] sm:$0xff]
                %198 = vst [vmem:[%s172 + $0x60] sm:$0xff] %v197
                %v199 = vld [vmem:[%s171 + $0xd0] sm:$0xff]
                %200 = vst [vmem:[%s172 + $0x68] sm:$0xff] %v199
                %v201 = vld [vmem:[%s171 + $0xe0] sm:$0xff]
                %202 = vst [vmem:[%s172 + $0x70] sm:$0xff] %v201
                %v203 = vld [vmem:[%s171 + $0xf0] sm:$0xff]
                %204 = vst [vmem:[%s172 + $0x78] sm:$0xff] %v203
                %v205 = vld [vmem:[%s171 + $0x100] sm:$0xff]
                %206 = vst [vmem:[%s172 + $0x80] sm:$0xff] %v205
                %v207 = vld [vmem:[%s171 + $0x110] sm:$0xff]
                %208 = vst [vmem:[%s172 + $0x88] sm:$0xff] %v207
                %v209 = vld [vmem:[%s171 + $0x120] sm:$0xff]
                %210 = vst [vmem:[%s172 + $0x90] sm:$0xff] %v209
                %v211 = vld [vmem:[%s171 + $0x130] sm:$0xff]
                %212 = vst [vmem:[%s172 + $0x98] sm:$0xff] %v211
                %v213 = vld [vmem:[%s171 + $0x140] sm:$0xff]
                %214 = vst [vmem:[%s172 + $0xa0] sm:$0xff] %v213
                %v215 = vld [vmem:[%s171 + $0x150] sm:$0xff]
                %216 = vst [vmem:[%s172 + $0xa8] sm:$0xff] %v215
                %v217 = vld [vmem:[%s171 + $0x160] sm:$0xff]
                %218 = vst [vmem:[%s172 + $0xb0] sm:$0xff] %v217
                %v219 = vld [vmem:[%s171 + $0x170] sm:$0xff]
                %220 = vst [vmem:[%s172 + $0xb8] sm:$0xff] %v219
                %v221 = vld [vmem:[%s171 + $0x180] sm:$0xff]
                %222 = vst [vmem:[%s172 + $0xc0] sm:$0xff] %v221
                %v223 = vld [vmem:[%s171 + $0x190] sm:$0xff]
                %224 = vst [vmem:[%s172 + $0xc8] sm:$0xff] %v223
                %v225 = vld [vmem:[%s171 + $0x1a0] sm:$0xff]
                %226 = vst [vmem:[%s172 + $0xd0] sm:$0xff] %v225
                %v227 = vld [vmem:[%s171 + $0x1b0] sm:$0xff]
                %228 = vst [vmem:[%s172 + $0xd8] sm:$0xff] %v227
                %v229 = vld [vmem:[%s171 + $0x1c0] sm:$0xff]
                %230 = vst [vmem:[%s172 + $0xe0] sm:$0xff] %v229
                %v231 = vld [vmem:[%s171 + $0x1d0] sm:$0xff]
                %232 = vst [vmem:[%s172 + $0xe8] sm:$0xff] %v231
                %v233 = vld [vmem:[%s171 + $0x1e0] sm:$0xff]
                %234 = vst [vmem:[%s172 + $0xf0] sm:$0xff] %v233
                %v235 = vld [vmem:[%s171 + $0x1f0] sm:$0xff]
                %236 = vst [vmem:[%s172 + $0xf8] sm:$0xff] %v235
                %v237 = vld [vmem:[%s171 + $0x200] sm:$0xff]
                %238 = vst [vmem:[%s172 + $0x100] sm:$0xff] %v237
                %v239 = vld [vmem:[%s171 + $0x210] sm:$0xff]
                %240 = vst [vmem:[%s172 + $0x108] sm:$0xff] %v239
                %v241 = vld [vmem:[%s171 + $0x220] sm:$0xff]
                %242 = vst [vmem:[%s172 + $0x110] sm:$0xff] %v241
                %v243 = vld [vmem:[%s171 + $0x230] sm:$0xff]
                %244 = vst [vmem:[%s172 + $0x118] sm:$0xff] %v243
                %v245 = vld [vmem:[%s171 + $0x240] sm:$0xff]
                %246 = vst [vmem:[%s172 + $0x120] sm:$0xff] %v245
                %v247 = vld [vmem:[%s171 + $0x250] sm:$0xff]
                %248 = vst [vmem:[%s172 + $0x128] sm:$0xff] %v247
                %v249 = vld [vmem:[%s171 + $0x260] sm:$0xff]
                %250 = vst [vmem:[%s172 + $0x130] sm:$0xff] %v249
                %v251 = vld [vmem:[%s171 + $0x270] sm:$0xff]
                %252 = vst [vmem:[%s172 + $0x138] sm:$0xff] %v251
                %v253 = vld [vmem:[%s171 + $0x280] sm:$0xff]
                %254 = vst [vmem:[%s172 + $0x140] sm:$0xff] %v253
                %v255 = vld [vmem:[%s171 + $0x290] sm:$0xff]
                %256 = vst [vmem:[%s172 + $0x148] sm:$0xff] %v255
                %v257 = vld [vmem:[%s171 + $0x2a0] sm:$0xff]
                %258 = vst [vmem:[%s172 + $0x150] sm:$0xff] %v257
                %v259 = vld [vmem:[%s171 + $0x2b0] sm:$0xff]
                %260 = vst [vmem:[%s172 + $0x158] sm:$0xff] %v259
                %v261 = vld [vmem:[%s171 + $0x2c0] sm:$0xff]
                %262 = vst [vmem:[%s172 + $0x160] sm:$0xff] %v261
                %v263 = vld [vmem:[%s171 + $0x2d0] sm:$0xff]
                %264 = vst [vmem:[%s172 + $0x168] sm:$0xff] %v263
                %v265 = vld [vmem:[%s171 + $0x2e0] sm:$0xff]
                %266 = vst [vmem:[%s172 + $0x170] sm:$0xff] %v265
                %v267 = vld [vmem:[%s171 + $0x2f0] sm:$0xff]
                %268 = vst [vmem:[%s172 + $0x178] sm:$0xff] %v267
                %v269 = vld [vmem:[%s171 + $0x300] sm:$0xff]
                %270 = vst [vmem:[%s172 + $0x180] sm:$0xff] %v269
                %v271 = vld [vmem:[%s171 + $0x310] sm:$0xff]
                %272 = vst [vmem:[%s172 + $0x188] sm:$0xff] %v271
                %v273 = vld [vmem:[%s171 + $0x320] sm:$0xff]
                %274 = vst [vmem:[%s172 + $0x190] sm:$0xff] %v273
                %v275 = vld [vmem:[%s171 + $0x330] sm:$0xff]
                %276 = vst [vmem:[%s172 + $0x198] sm:$0xff] %v275
                %v277 = vld [vmem:[%s171 + $0x340] sm:$0xff]
                %278 = vst [vmem:[%s172 + $0x1a0] sm:$0xff] %v277
                %v279 = vld [vmem:[%s171 + $0x350] sm:$0xff]
                %280 = vst [vmem:[%s172 + $0x1a8] sm:$0xff] %v279
                %v281 = vld [vmem:[%s171 + $0x360] sm:$0xff]
                %282 = vst [vmem:[%s172 + $0x1b0] sm:$0xff] %v281
                %v283 = vld [vmem:[%s171 + $0x370] sm:$0xff]
                %284 = vst [vmem:[%s172 + $0x1b8] sm:$0xff] %v283
                %v285 = vld [vmem:[%s171 + $0x380] sm:$0xff]
                %286 = vst [vmem:[%s172 + $0x1c0] sm:$0xff] %v285
                %v287 = vld [vmem:[%s171 + $0x390] sm:$0xff]
                %288 = vst [vmem:[%s172 + $0x1c8] sm:$0xff] %v287
                %v289 = vld [vmem:[%s171 + $0x3a0] sm:$0xff]
                %290 = vst [vmem:[%s172 + $0x1d0] sm:$0xff] %v289
                %v291 = vld [vmem:[%s171 + $0x3b0] sm:$0xff]
                %292 = vst [vmem:[%s172 + $0x1d8] sm:$0xff] %v291
                %v293 = vld [vmem:[%s171 + $0x3c0] sm:$0xff]
                %294 = vst [vmem:[%s172 + $0x1e0] sm:$0xff] %v293
                %v295 = vld [vmem:[%s171 + $0x3d0] sm:$0xff]
                %296 = vst [vmem:[%s172 + $0x1e8] sm:$0xff] %v295
                %v297 = vld [vmem:[%s171 + $0x3e0] sm:$0xff]
                %298 = vst [vmem:[%s172 + $0x1f0] sm:$0xff] %v297
                %v299 = vld [vmem:[%s171 + $0x3f0] sm:$0xff]
                %300 = vst [vmem:[%s172 + $0x1f8] sm:$0xff] %v299
              $region41: #{a_call__.18} parent=35 // loop_footer
                %s170 = sadd.s32 1, %s166
              $region42: #{a_call__.18} parent=35 // loop_footer_branch
                %165 = sbr.rel target = $region38
              $region43: #{a_call__.18} parent=35 // loop_exit
                _
            $region36: #{a_call__.18} parent=27 // pred_fallthru
              _
          $region28: #{a_call__.18} parent=23 // pred_fallthru
            _
          %441 = vnop
        $region24: #{a_call__.18} parent=19 // pred_fallthru
          _
      $region20: #{a_call__.18} parent=5 // pred_fallthru
        _
      %p442 = scmp.le.s32.totalorder 1, %s8
      %p443 = scmp.lt.s32.totalorder %s8, 3
      %p444 = pnand %p442, %p443
      %p445 = pneg %p444
      // Predicated region
      $region59: #{a_call__.18} parent=5 // pred_check
        _
      $region60: #{a_call__.18} parent=5 // pred_check_branch
        %447 = sbr.rel (%p444) target = $region62
      $region61: #{a_call__.18} parent=5 // pred_region
        %s448 = ssub.s32 %s8, 1
        %s449 = sand.u32 %s70, 1
        %s450 = sand.u32 %s70, 1
        %s451 = smul.addr %s450, 512
        %s452 = scalar_lea.vmem [#allocation3], %s451
        // Predicated region
        $region63: #{a_call__.18} parent=61 // pred_check
          %p453 = pneg %p83
        $region64: #{a_call__.18} parent=61 // pred_check_branch
          %455 = sbr.rel (%p453) target = $region66
        $region65: #{a_call__.18} parent=61 // pred_region
          _
        $region66: #{a_call__.18} parent=61 // pred_fallthru
          _
        %s456 = smul.u32 2, %s18
        %s457 = smul.u32 4, %s20
        %p458 = scmp.lt.s32.totalorder %s456, 1
        %s459 = scalar_select %p458, %s456, 1
        %p460 = scmp.lt.s32.totalorder %s457, 3
        %s461 = scalar_select %p460, %s457, 3
        %s462 = smul.addr %s459, 4
        %s463 = sadd.s32 %s461, %s462
        %s464 = smul.addr %s463, 4
        %s465 = scalar_lea.vmem %s0, %s464
        %p466 = pneg %p55
        %p467 = pneg %p52
        %s468 = sand.u32 %s70, 1
        %s469 = sand.u32 %s70, 1
        %s470 = smul.addr %s469, 512
        %s471 = scalar_lea.vmem [#allocation3], %s470
        %p472 = pneg %p83
        %p473 = pneg %p80
        %p474 = pneg %p111
        %p475 = pneg %p108
        %s476 = sand.u32 %s98, 1
        %s477 = sand.u32 %s98, 1
        %s478 = smul.addr %s477, 16
        %s479 = scalar_lea.vmem [#allocation4], %s478
        %s480 = smul.u32 2, %s18
        %s481 = smul.u32 4, %s20
        %p482 = scmp.lt.s32.totalorder %s480, 1
        %s483 = scalar_select %p482, %s480, 1
        %p484 = scmp.lt.s32.totalorder %s481, 3
        %s485 = scalar_select %p484, %s481, 3
        %s486 = smul.addr %s483, 4
        %s487 = sadd.s32 %s485, %s486
        %s488 = smul.addr %s487, 4
        %s489 = scalar_lea.vmem %s0, %s488
        %s490 = smul.u32 2, %s18
        %s491 = smul.u32 4, %s20
        %s492 = smul.u32 64, %s20
        %s493 = smul.u32 2, %s19
        %s494 = smul.u32 2, %s18
        %s495 = smul.u32 2, %s19
        %p496 = scmp.eq.s32.totalorder %s20, 0
        // Predicated region
        $region67: #{a_call__.18} parent=61 // pred_check
          %p497 = pneg %p496
        $region68: #{a_call__.18} parent=61 // pred_check_branch
          %499 = sbr.rel (%p497) target = $region70
        $region69: #{a_call__.18} parent=61 // pred_region
          %500 = vst [vmem:[#allocation2] sm:$0xff] 0.0
          %501 = vst [vmem:[#allocation2 + $0x8] sm:$0xff] 0.0
          %502 = vst [vmem:[#allocation2 + $0x10] sm:$0xff] 0.0
          %503 = vst [vmem:[#allocation2 + $0x18] sm:$0xff] 0.0
        $region70: #{a_call__.18} parent=61 // pred_fallthru
          _
        %v504 = vld [vmem:[#allocation2] sm:$0xff]
        %v505 = vld [vmem:[#allocation2 + $0x8] sm:$0xff]
        %v506 = vld [vmem:[#allocation2 + $0x10] sm:$0xff]
        %v507 = vld [vmem:[#allocation2 + $0x18] sm:$0xff]
        %v508 = vld [vmem:[%s489] sm:$0xff]
        %v509 = vld [vmem:[%s489 + $0x8] sm:$0xff]
        %v510 = vld [vmem:[%s489 + $0x10] sm:$0xff]
        %v511 = vld [vmem:[%s489 + $0x18] sm:$0xff]
        %v512 = vld [vmem:[%s452] sm:$0xff]
        %v513 = vld [vmem:[%s452 + $0x8] sm:$0xff]
        %v514 = vld [vmem:[%s452 + $0x10] sm:$0xff]
        %v515 = vld [vmem:[%s452 + $0x18] sm:$0xff]
        %v516 = vld [vmem:[%s452 + $0x20] sm:$0xff]
        %v517 = vld [vmem:[%s452 + $0x28] sm:$0xff]
        %v518 = vld [vmem:[%s452 + $0x30] sm:$0xff]
        %v519 = vld [vmem:[%s452 + $0x38] sm:$0xff]
        %v520 = vld [vmem:[%s452 + $0x40] sm:$0xff]
        %v521 = vld [vmem:[%s452 + $0x48] sm:$0xff]
        %v522 = vld [vmem:[%s452 + $0x50] sm:$0xff]
        %v523 = vld [vmem:[%s452 + $0x58] sm:$0xff]
        %v524 = vld [vmem:[%s452 + $0x60] sm:$0xff]
        %v525 = vld [vmem:[%s452 + $0x68] sm:$0xff]
        %v526 = vld [vmem:[%s452 + $0x70] sm:$0xff]
        %v527 = vld [vmem:[%s452 + $0x78] sm:$0xff]
        %v528 = vld [vmem:[%s452 + $0x80] sm:$0xff]
        %v529 = vld [vmem:[%s452 + $0x88] sm:$0xff]
        %v530 = vld [vmem:[%s452 + $0x90] sm:$0xff]
        %v531 = vld [vmem:[%s452 + $0x98] sm:$0xff]
        %v532 = vld [vmem:[%s452 + $0xa0] sm:$0xff]
        %v533 = vld [vmem:[%s452 + $0xa8] sm:$0xff]
        %v534 = vld [vmem:[%s452 + $0xb0] sm:$0xff]
        %v535 = vld [vmem:[%s452 + $0xb8] sm:$0xff]
        %v536 = vld [vmem:[%s452 + $0xc0] sm:$0xff]
        %v537 = vld [vmem:[%s452 + $0xc8] sm:$0xff]
        %v538 = vld [vmem:[%s452 + $0xd0] sm:$0xff]
        %v539 = vld [vmem:[%s452 + $0xd8] sm:$0xff]
        %v540 = vld [vmem:[%s452 + $0xe0] sm:$0xff]
        %v541 = vld [vmem:[%s452 + $0xe8] sm:$0xff]
        %v542 = vld [vmem:[%s452 + $0xf0] sm:$0xff]
        %v543 = vld [vmem:[%s452 + $0xf8] sm:$0xff]
        %v544 = vld [vmem:[%s452 + $0x100] sm:$0xff]
        %v545 = vld [vmem:[%s452 + $0x108] sm:$0xff]
        %v546 = vld [vmem:[%s452 + $0x110] sm:$0xff]
        %v547 = vld [vmem:[%s452 + $0x118] sm:$0xff]
        %v548 = vld [vmem:[%s452 + $0x120] sm:$0xff]
        %v549 = vld [vmem:[%s452 + $0x128] sm:$0xff]
        %v550 = vld [vmem:[%s452 + $0x130] sm:$0xff]
        %v551 = vld [vmem:[%s452 + $0x138] sm:$0xff]
        %v552 = vld [vmem:[%s452 + $0x140] sm:$0xff]
        %v553 = vld [vmem:[%s452 + $0x148] sm:$0xff]
        %v554 = vld [vmem:[%s452 + $0x150] sm:$0xff]
        %v555 = vld [vmem:[%s452 + $0x158] sm:$0xff]
        %v556 = vld [vmem:[%s452 + $0x160] sm:$0xff]
        %v557 = vld [vmem:[%s452 + $0x168] sm:$0xff]
        %v558 = vld [vmem:[%s452 + $0x170] sm:$0xff]
        %v559 = vld [vmem:[%s452 + $0x178] sm:$0xff]
        %v560 = vld [vmem:[%s452 + $0x180] sm:$0xff]
        %v561 = vld [vmem:[%s452 + $0x188] sm:$0xff]
        %v562 = vld [vmem:[%s452 + $0x190] sm:$0xff]
        %v563 = vld [vmem:[%s452 + $0x198] sm:$0xff]
        %v564 = vld [vmem:[%s452 + $0x1a0] sm:$0xff]
        %v565 = vld [vmem:[%s452 + $0x1a8] sm:$0xff]
        %v566 = vld [vmem:[%s452 + $0x1b0] sm:$0xff]
        %v567 = vld [vmem:[%s452 + $0x1b8] sm:$0xff]
        %v568 = vld [vmem:[%s452 + $0x1c0] sm:$0xff]
        %v569 = vld [vmem:[%s452 + $0x1c8] sm:$0xff]
        %v570 = vld [vmem:[%s452 + $0x1d0] sm:$0xff]
        %v571 = vld [vmem:[%s452 + $0x1d8] sm:$0xff]
        %v572 = vld [vmem:[%s452 + $0x1e0] sm:$0xff]
        %v573 = vld [vmem:[%s452 + $0x1e8] sm:$0xff]
        %v574 = vld [vmem:[%s452 + $0x1f0] sm:$0xff]
        %v575 = vld [vmem:[%s452 + $0x1f8] sm:$0xff]
        %v580 = vunpack.c.l.b16 %v508
        %v581 = vunpack.c.h.b16 %v508
        %v582 = vunpack.c.l.b16 %v509
        %v583 = vunpack.c.h.b16 %v509
        %v584 = vunpack.c.l.b16 %v510
        %v585 = vunpack.c.h.b16 %v510
        %v586 = vunpack.c.l.b16 %v511
        %v587 = vunpack.c.h.b16 %v511
        %v588 = vpack.c.b16 %v584, %v580
        %v589 = vpack.c.b16 %v585, %v581
        %v590 = vpack.c.b16 %v586, %v582
        %v591 = vpack.c.b16 %v587, %v583
        %v660 = vunpack.c.l.b16 %v512
        %v661 = vunpack.c.h.b16 %v512
        %v662 = vunpack.c.l.b16 %v513
        %v663 = vunpack.c.h.b16 %v513
        %v664 = vunpack.c.l.b16 %v514
        %v665 = vunpack.c.h.b16 %v514
        %v666 = vunpack.c.l.b16 %v515
        %v667 = vunpack.c.h.b16 %v515
        %v668 = vunpack.c.l.b16 %v516
        %v669 = vunpack.c.h.b16 %v516
        %v670 = vunpack.c.l.b16 %v517
        %v671 = vunpack.c.h.b16 %v517
        %v672 = vunpack.c.l.b16 %v518
        %v673 = vunpack.c.h.b16 %v518
        %v674 = vunpack.c.l.b16 %v519
        %v675 = vunpack.c.h.b16 %v519
        %v676 = vunpack.c.l.b16 %v520
        %v677 = vunpack.c.h.b16 %v520
        %v678 = vunpack.c.l.b16 %v521
        %v679 = vunpack.c.h.b16 %v521
        %v680 = vunpack.c.l.b16 %v522
        %v681 = vunpack.c.h.b16 %v522
        %v682 = vunpack.c.l.b16 %v523
        %v683 = vunpack.c.h.b16 %v523
        %v684 = vunpack.c.l.b16 %v524
        %v685 = vunpack.c.h.b16 %v524
        %v686 = vunpack.c.l.b16 %v525
        %v687 = vunpack.c.h.b16 %v525
        %v688 = vunpack.c.l.b16 %v526
        %v689 = vunpack.c.h.b16 %v526
        %v690 = vunpack.c.l.b16 %v527
        %v691 = vunpack.c.h.b16 %v527
        %v692 = vunpack.c.l.b16 %v528
        %v693 = vunpack.c.h.b16 %v528
        %v694 = vunpack.c.l.b16 %v529
        %v695 = vunpack.c.h.b16 %v529
        %v696 = vunpack.c.l.b16 %v530
        %v697 = vunpack.c.h.b16 %v530
        %v698 = vunpack.c.l.b16 %v531
        %v699 = vunpack.c.h.b16 %v531
        %v700 = vunpack.c.l.b16 %v532
        %v701 = vunpack.c.h.b16 %v532
        %v702 = vunpack.c.l.b16 %v533
        %v703 = vunpack.c.h.b16 %v533
        %v704 = vunpack.c.l.b16 %v534
        %v705 = vunpack.c.h.b16 %v534
        %v706 = vunpack.c.l.b16 %v535
        %v707 = vunpack.c.h.b16 %v535
        %v708 = vunpack.c.l.b16 %v536
        %v709 = vunpack.c.h.b16 %v536
        %v710 = vunpack.c.l.b16 %v537
        %v711 = vunpack.c.h.b16 %v537
        %v712 = vunpack.c.l.b16 %v538
        %v713 = vunpack.c.h.b16 %v538
        %v714 = vunpack.c.l.b16 %v539
        %v715 = vunpack.c.h.b16 %v539
        %v716 = vunpack.c.l.b16 %v540
        %v717 = vunpack.c.h.b16 %v540
        %v718 = vunpack.c.l.b16 %v541
        %v719 = vunpack.c.h.b16 %v541
        %v720 = vunpack.c.l.b16 %v542
        %v721 = vunpack.c.h.b16 %v542
        %v722 = vunpack.c.l.b16 %v543
        %v723 = vunpack.c.h.b16 %v543
        %v724 = vunpack.c.l.b16 %v544
        %v725 = vunpack.c.h.b16 %v544
        %v726 = vunpack.c.l.b16 %v545
        %v727 = vunpack.c.h.b16 %v545
        %v728 = vunpack.c.l.b16 %v546
        %v729 = vunpack.c.h.b16 %v546
        %v730 = vunpack.c.l.b16 %v547
        %v731 = vunpack.c.h.b16 %v547
        %v732 = vunpack.c.l.b16 %v548
        %v733 = vunpack.c.h.b16 %v548
        %v734 = vunpack.c.l.b16 %v549
        %v735 = vunpack.c.h.b16 %v549
        %v736 = vunpack.c.l.b16 %v550
        %v737 = vunpack.c.h.b16 %v550
        %v738 = vunpack.c.l.b16 %v551
        %v739 = vunpack.c.h.b16 %v551
        %v740 = vunpack.c.l.b16 %v552
        %v741 = vunpack.c.h.b16 %v552
        %v742 = vunpack.c.l.b16 %v553
        %v743 = vunpack.c.h.b16 %v553
        %v744 = vunpack.c.l.b16 %v554
        %v745 = vunpack.c.h.b16 %v554
        %v746 = vunpack.c.l.b16 %v555
        %v747 = vunpack.c.h.b16 %v555
        %v748 = vunpack.c.l.b16 %v556
        %v749 = vunpack.c.h.b16 %v556
        %v750 = vunpack.c.l.b16 %v557
        %v751 = vunpack.c.h.b16 %v557
        %v752 = vunpack.c.l.b16 %v558
        %v753 = vunpack.c.h.b16 %v558
        %v754 = vunpack.c.l.b16 %v559
        %v755 = vunpack.c.h.b16 %v559
        %v756 = vunpack.c.l.b16 %v560
        %v757 = vunpack.c.h.b16 %v560
        %v758 = vunpack.c.l.b16 %v561
        %v759 = vunpack.c.h.b16 %v561
        %v760 = vunpack.c.l.b16 %v562
        %v761 = vunpack.c.h.b16 %v562
        %v762 = vunpack.c.l.b16 %v563
        %v763 = vunpack.c.h.b16 %v563
        %v764 = vunpack.c.l.b16 %v564
        %v765 = vunpack.c.h.b16 %v564
        %v766 = vunpack.c.l.b16 %v565
        %v767 = vunpack.c.h.b16 %v565
        %v768 = vunpack.c.l.b16 %v566
        %v769 = vunpack.c.h.b16 %v566
        %v770 = vunpack.c.l.b16 %v567
        %v771 = vunpack.c.h.b16 %v567
        %v772 = vunpack.c.l.b16 %v568
        %v773 = vunpack.c.h.b16 %v568
        %v774 = vunpack.c.l.b16 %v569
        %v775 = vunpack.c.h.b16 %v569
        %v776 = vunpack.c.l.b16 %v570
        %v777 = vunpack.c.h.b16 %v570
        %v778 = vunpack.c.l.b16 %v571
        %v779 = vunpack.c.h.b16 %v571
        %v780 = vunpack.c.l.b16 %v572
        %v781 = vunpack.c.h.b16 %v572
        %v782 = vunpack.c.l.b16 %v573
        %v783 = vunpack.c.h.b16 %v573
        %v784 = vunpack.c.l.b16 %v574
        %v785 = vunpack.c.h.b16 %v574
        %v786 = vunpack.c.l.b16 %v575
        %v787 = vunpack.c.h.b16 %v575
        %v788 = vpack.c.b16 %v662, %v660
        %v789 = vpack.c.b16 %v663, %v661
        %v790 = vpack.c.b16 %v666, %v664
        %v791 = vpack.c.b16 %v667, %v665
        %v792 = vpack.c.b16 %v670, %v668
        %v793 = vpack.c.b16 %v671, %v669
        %v794 = vpack.c.b16 %v674, %v672
        %v795 = vpack.c.b16 %v675, %v673
        %v796 = vpack.c.b16 %v678, %v676
        %v797 = vpack.c.b16 %v679, %v677
        %v798 = vpack.c.b16 %v682, %v680
        %v799 = vpack.c.b16 %v683, %v681
        %v800 = vpack.c.b16 %v686, %v684
        %v801 = vpack.c.b16 %v687, %v685
        %v802 = vpack.c.b16 %v690, %v688
        %v803 = vpack.c.b16 %v691, %v689
        %v804 = vpack.c.b16 %v694, %v692
        %v805 = vpack.c.b16 %v695, %v693
        %v806 = vpack.c.b16 %v698, %v696
        %v807 = vpack.c.b16 %v699, %v697
        %v808 = vpack.c.b16 %v702, %v700
        %v809 = vpack.c.b16 %v703, %v701
        %v810 = vpack.c.b16 %v706, %v704
        %v811 = vpack.c.b16 %v707, %v705
        %v812 = vpack.c.b16 %v710, %v708
        %v813 = vpack.c.b16 %v711, %v709
        %v814 = vpack.c.b16 %v714, %v712
        %v815 = vpack.c.b16 %v715, %v713
        %v816 = vpack.c.b16 %v718, %v716
        %v817 = vpack.c.b16 %v719, %v717
        %v818 = vpack.c.b16 %v722, %v720
        %v819 = vpack.c.b16 %v723, %v721
        %v820 = vpack.c.b16 %v726, %v724
        %v821 = vpack.c.b16 %v727, %v725
        %v822 = vpack.c.b16 %v730, %v728
        %v823 = vpack.c.b16 %v731, %v729
        %v824 = vpack.c.b16 %v734, %v732
        %v825 = vpack.c.b16 %v735, %v733
        %v826 = vpack.c.b16 %v738, %v736
        %v827 = vpack.c.b16 %v739, %v737
        %v828 = vpack.c.b16 %v742, %v740
        %v829 = vpack.c.b16 %v743, %v741
        %v830 = vpack.c.b16 %v746, %v744
        %v831 = vpack.c.b16 %v747, %v745
        %v832 = vpack.c.b16 %v750, %v748
        %v833 = vpack.c.b16 %v751, %v749
        %v834 = vpack.c.b16 %v754, %v752
        %v835 = vpack.c.b16 %v755, %v753
        %v836 = vpack.c.b16 %v758, %v756
        %v837 = vpack.c.b16 %v759, %v757
        %v838 = vpack.c.b16 %v762, %v760
        %v839 = vpack.c.b16 %v763, %v761
        %v840 = vpack.c.b16 %v766, %v764
        %v841 = vpack.c.b16 %v767, %v765
        %v842 = vpack.c.b16 %v770, %v768
        %v843 = vpack.c.b16 %v771, %v769
        %v844 = vpack.c.b16 %v774, %v772
        %v845 = vpack.c.b16 %v775, %v773
        %v846 = vpack.c.b16 %v778, %v776
        %v847 = vpack.c.b16 %v779, %v777
        %v848 = vpack.c.b16 %v782, %v780
        %v849 = vpack.c.b16 %v783, %v781
        %v850 = vpack.c.b16 %v786, %v784
        %v851 = vpack.c.b16 %v787, %v785
        %916 = vmatprep.subr.bf16.mxu0 %v789
        %917 = vmatpush1.bf16.msra.mxu0 %v788
        %918 = vmatprep.subr.bf16.mxu0 %v791
        %919 = vmatpush1.bf16.msra.mxu0 %v790
        %920 = vmatprep.subr.bf16.mxu0 %v793
        %921 = vmatpush1.bf16.msra.mxu0 %v792
        %922 = vmatprep.subr.bf16.mxu0 %v795
        %923 = vmatpush1.bf16.msra.mxu0 %v794
        %924 = vmatprep.subr.bf16.mxu0 %v797
        %925 = vmatpush1.bf16.msra.mxu0 %v796
        %926 = vmatprep.subr.bf16.mxu0 %v799
        %927 = vmatpush1.bf16.msra.mxu0 %v798
        %928 = vmatprep.subr.bf16.mxu0 %v801
        %929 = vmatpush1.bf16.msra.mxu0 %v800
        %930 = vmatprep.subr.bf16.mxu0 %v803
        %931 = vmatpush1.bf16.msra.mxu0 %v802
        %932 = vmatprep.subr.bf16.mxu0 %v805
        %933 = vmatpush1.bf16.msra.mxu0 %v804
        %934 = vmatprep.subr.bf16.mxu0 %v807
        %935 = vmatpush1.bf16.msra.mxu0 %v806
        %936 = vmatprep.subr.bf16.mxu0 %v809
        %937 = vmatpush1.bf16.msra.mxu0 %v808
        %938 = vmatprep.subr.bf16.mxu0 %v811
        %939 = vmatpush1.bf16.msra.mxu0 %v810
        %940 = vmatprep.subr.bf16.mxu0 %v813
        %941 = vmatpush1.bf16.msra.mxu0 %v812
        %942 = vmatprep.subr.bf16.mxu0 %v815
        %943 = vmatpush1.bf16.msra.mxu0 %v814
        %944 = vmatprep.subr.bf16.mxu0 %v817
        %945 = vmatpush1.bf16.msra.mxu0 %v816
        %946 = vmatprep.subr.bf16.mxu0 %v819
        %947 = vmatpush1.bf16.msra.mxu0 %v818
        %948 = vmatprep.mubr.bf16.mxu0 %v589
        %949 = vmatmul.mubr.bf16.gmra.mrb[0].mxu0 %v588
        %v950 = vpop.f32.mrb[0].mxu0
        %v951 = vadd.f32 0.0, %v950
        %v952 = vpop.f32.mrb[0].mxu0
        %v953 = vadd.f32 0.0, %v952
        %v954 = vpop.f32.mrb[0].mxu0
        %v955 = vadd.f32 0.0, %v954
        %v956 = vpop.f32.mrb[0].mxu0
        %v957 = vadd.f32 0.0, %v956
        %958 = vdwg.mxu0
        %959 = vmatprep.subr.bf16.mxu0 %v821
        %960 = vmatpush1.bf16.msra.mxu0 %v820
        %961 = vmatprep.subr.bf16.mxu0 %v823
        %962 = vmatpush1.bf16.msra.mxu0 %v822
        %963 = vmatprep.subr.bf16.mxu0 %v825
        %964 = vmatpush1.bf16.msra.mxu0 %v824
        %965 = vmatprep.subr.bf16.mxu0 %v827
        %966 = vmatpush1.bf16.msra.mxu0 %v826
        %967 = vmatprep.subr.bf16.mxu0 %v829
        %968 = vmatpush1.bf16.msra.mxu0 %v828
        %969 = vmatprep.subr.bf16.mxu0 %v831
        %970 = vmatpush1.bf16.msra.mxu0 %v830
        %971 = vmatprep.subr.bf16.mxu0 %v833
        %972 = vmatpush1.bf16.msra.mxu0 %v832
        %973 = vmatprep.subr.bf16.mxu0 %v835
        %974 = vmatpush1.bf16.msra.mxu0 %v834
        %975 = vmatprep.subr.bf16.mxu0 %v837
        %976 = vmatpush1.bf16.msra.mxu0 %v836
        %977 = vmatprep.subr.bf16.mxu0 %v839
        %978 = vmatpush1.bf16.msra.mxu0 %v838
        %979 = vmatprep.subr.bf16.mxu0 %v841
        %980 = vmatpush1.bf16.msra.mxu0 %v840
        %981 = vmatprep.subr.bf16.mxu0 %v843
        %982 = vmatpush1.bf16.msra.mxu0 %v842
        %983 = vmatprep.subr.bf16.mxu0 %v845
        %984 = vmatpush1.bf16.msra.mxu0 %v844
        %985 = vmatprep.subr.bf16.mxu0 %v847
        %986 = vmatpush1.bf16.msra.mxu0 %v846
        %987 = vmatprep.subr.bf16.mxu0 %v849
        %988 = vmatpush1.bf16.msra.mxu0 %v848
        %989 = vmatprep.subr.bf16.mxu0 %v851
        %990 = vmatpush1.bf16.msra.mxu0 %v850
        %991 = vmatprep.mubr.bf16.mxu0 %v591
        %992 = vmatmul.mubr.bf16.gmra.mrb[0].mxu0 %v590
        %v993 = vpop.f32.mrb[0].mxu0
        %v994 = vadd.f32 %v951, %v993
        %v995 = vpop.f32.mrb[0].mxu0
        %v996 = vadd.f32 %v953, %v995
        %v997 = vpop.f32.mrb[0].mxu0
        %v998 = vadd.f32 %v955, %v997
        %v999 = vpop.f32.mrb[0].mxu0
        %v1000 = vadd.f32 %v957, %v999
        %1001 = vdwg.mxu0
        %v1002 = vadd.f32 %v504, %v994
        %v1003 = vadd.f32 %v505, %v996
        %v1004 = vadd.f32 %v506, %v998
        %v1005 = vadd.f32 %v507, %v1000
        %1006 = vst [vmem:[#allocation2] sm:$0xff] %v1002
        %1007 = vst [vmem:[#allocation2 + $0x8] sm:$0xff] %v1003
        %1008 = vst [vmem:[#allocation2 + $0x10] sm:$0xff] %v1004
        %1009 = vst [vmem:[#allocation2 + $0x18] sm:$0xff] %v1005
        // Predicated region
        $region71: #{a_call__.18} parent=61 // pred_check
          %p1010 = pneg %p496
        $region72: #{a_call__.18} parent=61 // pred_check_branch
          %1012 = sbr.rel (%p1010) target = $region74
        $region73: #{a_call__.18} parent=61 // pred_region
          %v1013 = vld [vmem:[#allocation2] sm:$0xff]
          %v1014 = vld [vmem:[#allocation2 + $0x8] sm:$0xff]
          %v1015 = vld [vmem:[#allocation2 + $0x10] sm:$0xff]
          %v1016 = vld [vmem:[#allocation2 + $0x18] sm:$0xff]
          %v1017 = vpack.c.bf16 %v1015, %v1013
          %v1018 = vpack.c.bf16 %v1016, %v1014
          %v1021 = vunpack.c.l.b16 %v1017
          %v1022 = vunpack.c.l.b16 %v1018
          %v1023 = vunpack.c.h.b16 %v1017
          %v1024 = vunpack.c.h.b16 %v1018
          %v1025 = vpack.c.b16 %v1022, %v1021
          %v1026 = vpack.c.b16 %v1024, %v1023
          %1029 = vst [vmem:[%s479] sm:$0xff] %v1025
          %1030 = vst [vmem:[%s479 + $0x8] sm:$0xff] %v1026
        $region74: #{a_call__.18} parent=61 // pred_fallthru
          _
        %s1031 = sand.u32 %s98, 1
        %s1032 = sand.u32 %s98, 1
        %s1033 = smul.addr %s1032, 16
        %s1034 = scalar_lea.vmem [#allocation4], %s1033
        // Predicated region
        $region75: #{a_call__.18} parent=61 // pred_check
          %p1035 = pneg %p108
        $region76: #{a_call__.18} parent=61 // pred_check_branch
          %1037 = sbr.rel (%p1035) target = $region78
        $region77: #{a_call__.18} parent=61 // pred_region
          %s1038 = smul.u32 2, %s18
          %s1039 = smul.u32 2, %s19
          %s1040 = smul.addr %s1038, 4
          %s1041 = sadd.s32 %s1039, %s1040
          %s1042 = smul.addr %s1041, 4
          %s1043 = scalar_lea.vmem %s2, %s1042
          // Predicated region
          $region79: #{a_call__.18} parent=77 // pred_check
            _
          $region80: #{a_call__.18} parent=77 // pred_check_branch
            %1045 = sbr.rel (0) target = $region82
          $region81: #{a_call__.18} parent=77 // pred_region
            // Predicated region
            $region83: #{a_call__.18} parent=81 // pred_check
              _
            $region84: #{a_call__.18} parent=81 // pred_check_branch
              %1047 = sbr.rel (0) target = $region86
            $region85: #{a_call__.18} parent=81 // pred_region
              // Predicated region
              $region98: #{a_call__.18} parent=85 // pred_check
                _
              $region99: #{a_call__.18} parent=85 // pred_check_branch
                %1064 = sbr.rel (0) target = $region101
              $region100: #{a_call__.18} parent=85 // pred_region
                loop: start=0, step=1, limit=1
                $region102: #{a_call__.18} parent=100 // loop_pre_header
                  _
                $region103: #{a_call__.18} parent=100 // loop_header
                  %s1066 = sphi 0, %s1070
                  %p1067 = scmp.ge.s32.totalorder %s1066, 1
                  %s1071 = sphi %s1034, %s1034
                  %s1072 = sphi %s1043, %s1043
                $region104: #{a_call__.18} parent=100 // loop_header_branch
                  %1069 = sbr.rel (%p1067) target = $region108
                $region105: #{a_call__.18} parent=100 // loop_body
                  %v1073 = vld [vmem:[%s1071] sm:$0xff]
                  %1074 = vst [vmem:[%s1072] sm:$0xff] %v1073
                  %v1075 = vld [vmem:[%s1071 + $0x8] sm:$0xff]
                  %1076 = vst [vmem:[%s1072 + $0x10] sm:$0xff] %v1075
                $region106: #{a_call__.18} parent=100 // loop_footer
                  %s1070 = sadd.s32 1, %s1066
                $region107: #{a_call__.18} parent=100 // loop_footer_branch
                  %1065 = sbr.rel target = $region103
                $region108: #{a_call__.18} parent=100 // loop_exit
                  _
              $region101: #{a_call__.18} parent=85 // pred_fallthru
                _
              // Predicated region
              $region109: #{a_call__.18} parent=85 // pred_check
                _
              $region110: #{a_call__.18} parent=85 // pred_check_branch
                %1078 = sbr.rel target = $region112
              $region111: #{a_call__.18} parent=85 // pred_region
                _
              $region112: #{a_call__.18} parent=85 // pred_fallthru
                _
            $region86: #{a_call__.18} parent=81 // pred_fallthru
              _
            // Predicated region
            $region87: #{a_call__.18} parent=81 // pred_check
              _
            $region88: #{a_call__.18} parent=81 // pred_check_branch
              %1049 = sbr.rel target = $region90
            $region89: #{a_call__.18} parent=81 // pred_region
              loop: start=0, step=1, limit=1
              $region91: #{a_call__.18} parent=89 // loop_pre_header
                _
              $region92: #{a_call__.18} parent=89 // loop_header
                %s1052 = sphi 0, %s1056
                %p1053 = scmp.ge.s32.totalorder %s1052, 1
                %s1057 = sphi %s1034, %s1034
                %s1058 = sphi %s1043, %s1043
              $region93: #{a_call__.18} parent=89 // loop_header_branch
                %1055 = sbr.rel (%p1053) target = $region97
              $region94: #{a_call__.18} parent=89 // loop_body
                %v1059 = vld [vmem:[%s1057] sm:$0xff]
                %1060 = vst [vmem:[%s1058] sm:$0xff] %v1059
                %v1061 = vld [vmem:[%s1057 + $0x8] sm:$0xff]
                %1062 = vst [vmem:[%s1058 + $0x10] sm:$0xff] %v1061
              $region95: #{a_call__.18} parent=89 // loop_footer
                %s1056 = sadd.s32 1, %s1052
              $region96: #{a_call__.18} parent=89 // loop_footer_branch
                %1051 = sbr.rel target = $region92
              $region97: #{a_call__.18} parent=89 // loop_exit
                _
            $region90: #{a_call__.18} parent=81 // pred_fallthru
              _
          $region82: #{a_call__.18} parent=77 // pred_fallthru
            _
          %1079 = vnop
        $region78: #{a_call__.18} parent=61 // pred_fallthru
          _
      $region62: #{a_call__.18} parent=5 // pred_fallthru
        _
      %p1080 = scmp.le.s32.totalorder 2, %s8
      // Predicated region
      $region113: #{a_call__.18} parent=5 // pred_check
        %p1081 = pneg %p1080
      $region114: #{a_call__.18} parent=5 // pred_check_branch
        %1083 = sbr.rel (%p1081) target = $region116
      $region115: #{a_call__.18} parent=5 // pred_region
        %s1084 = ssub.s32 %s8, 2
        // Predicated region
        $region117: #{a_call__.18} parent=115 // pred_check
          %p1085 = pneg %p114
        $region118: #{a_call__.18} parent=115 // pred_check_branch
          %1087 = sbr.rel (%p1085) target = $region120
        $region119: #{a_call__.18} parent=115 // pred_region
          %s1088 = sand.u32 %s99, 1
          %s1089 = sand.u32 %s99, 1
          %s1090 = smul.addr %s1089, 16
          %s1091 = scalar_lea.vmem [#allocation4], %s1090
        $region120: #{a_call__.18} parent=115 // pred_fallthru
          _
      $region116: #{a_call__.18} parent=5 // pred_fallthru
        _
    $region6: #{a_call__.18} parent=1 // loop_footer
      %s12 = sadd.s32 1, %s8
    $region7: #{a_call__.18} parent=1 // loop_footer_branch
      %7 = sbr.rel target = $region3
    $region8: #{a_call__.18} parent=1 // loop_exit
      _

// kernel: a_call__.19
$region0: #{a_call__.19}
  #allocation0 [shape = 'u32[]', space=smem, size = 0x4, offset = 0x4, fixed_abs, tag = 'smem constant byte address 0x4 - core index']
  #allocation1 [shape = 'u32[144,128]{1,0:T(1,128)}', space=vmem, size = 0x12000, scoped, tag = 'internal scratch']
  %s0 = inlined_call_operand.vmem [shape: bf16[16,512], index: 0, kind: input, shape index: {}]
  %s1 = inlined_call_operand.vmem [shape: bf16[16,512], index: 1, kind: input, shape index: {}]
  %s2 = inlined_call_operand.vmem [shape: bf16[1,512], index: 2, kind: input, shape index: {}]
  %s3 = inlined_call_operand.vmem [shape: bf16[16,512], index: 3, kind: output, shape index: {0}]
  %s4 = inlined_call_operand.vmem [shape: bf16[16,512], index: 4, kind: output, shape index: {1}]
  %5 = xla_tuple %s3, %s4
  %s6 = sld [smem:[#allocation0]]
  $region30: #{a_call__.19} parent=0
    _
  %s8 = ssub.s32 1, %s6
  %s9 = scalar_select 0, %s8, %s6
  // Predicated region
  $region2: #{a_call__.19} parent=0 // pred_check
    _
  $region3: #{a_call__.19} parent=0 // pred_check_branch
    %11 = sbr.rel (0) target = $region5
  $region4: #{a_call__.19} parent=0 // pred_region
    _
  $region5: #{a_call__.19} parent=0 // pred_fallthru
    _
  // Predicated region
  $region6: #{a_call__.19} parent=0 // pred_check
    _
  $region7: #{a_call__.19} parent=0 // pred_check_branch
    %13 = sbr.rel (0) target = $region9
  $region8: #{a_call__.19} parent=0 // pred_region
    _
  $region9: #{a_call__.19} parent=0 // pred_fallthru
    _
  // Predicated region
  $region10: #{a_call__.19} parent=0 // pred_check
    _
  $region11: #{a_call__.19} parent=0 // pred_check_branch
    %15 = sbr.rel (0) target = $region13
  $region12: #{a_call__.19} parent=0 // pred_region
    _
  $region13: #{a_call__.19} parent=0 // pred_fallthru
    _
  %v16 = vld [vmem:[%s0] sm:$0xff]
  %v17 = vld [vmem:[%s0 + $0x8] sm:$0xff]
  %v18 = vld [vmem:[%s0 + $0x10] sm:$0xff]
  %v19 = vld [vmem:[%s0 + $0x18] sm:$0xff]
  %v20 = vunpack.c.l.bf16 %v16
  %v21 = vunpack.c.h.bf16 %v16
  %v22 = vunpack.c.l.bf16 %v17
  %v23 = vunpack.c.h.bf16 %v17
  %v24 = vunpack.c.l.bf16 %v18
  %v25 = vunpack.c.h.bf16 %v18
  %v26 = vunpack.c.l.bf16 %v19
  %v27 = vunpack.c.h.bf16 %v19
  %v28 = vld [vmem:[%s1] sm:$0xff]
  %v29 = vld [vmem:[%s1 + $0x8] sm:$0xff]
  %v30 = vld [vmem:[%s1 + $0x10] sm:$0xff]
  %v31 = vld [vmem:[%s1 + $0x18] sm:$0xff]
  %v32 = vunpack.c.l.bf16 %v28
  %v33 = vunpack.c.h.bf16 %v28
  %v34 = vunpack.c.l.bf16 %v29
  %v35 = vunpack.c.h.bf16 %v29
  %v36 = vunpack.c.l.bf16 %v30
  %v37 = vunpack.c.h.bf16 %v30
  %v38 = vunpack.c.l.bf16 %v31
  %v39 = vunpack.c.h.bf16 %v31
  %v40 = vadd.f32 %v20, %v32
  %v41 = vadd.f32 %v21, %v33
  %v42 = vadd.f32 %v22, %v34
  %v43 = vadd.f32 %v23, %v35
  %v44 = vadd.f32 %v24, %v36
  %v45 = vadd.f32 %v25, %v37
  %v46 = vadd.f32 %v26, %v38
  %v47 = vadd.f32 %v27, %v39
  %v48 = vpack.c.bf16 %v44, %v40
  %v49 = vpack.c.bf16 %v45, %v41
  %v50 = vpack.c.bf16 %v46, %v42
  %v51 = vpack.c.bf16 %v47, %v43
  %v56 = vunpack.c.l.b16 %v48
  %v57 = vunpack.c.l.b16 %v49
  %v58 = vunpack.c.l.b16 %v50
  %v59 = vunpack.c.l.b16 %v51
  %v60 = vunpack.c.h.b16 %v48
  %v61 = vunpack.c.h.b16 %v49
  %v62 = vunpack.c.h.b16 %v50
  %v63 = vunpack.c.h.b16 %v51
  %v64 = vpack.c.b16 %v57, %v56
  %v65 = vpack.c.b16 %v59, %v58
  %v66 = vpack.c.b16 %v61, %v60
  %v67 = vpack.c.b16 %v63, %v62
  %72 = vst [vmem:[%s4] sm:$0xff] %v64
  %73 = vst [vmem:[%s4 + $0x8] sm:$0xff] %v65
  %74 = vst [vmem:[%s4 + $0x10] sm:$0xff] %v66
  %75 = vst [vmem:[%s4 + $0x18] sm:$0xff] %v67
  %v76 = vmul.f32 %v40, %v40
  %v77 = vmul.f32 %v41, %v41
  %v78 = vmul.f32 %v42, %v42
  %v79 = vmul.f32 %v43, %v43
  %v80 = vmul.f32 %v44, %v44
  %v81 = vmul.f32 %v45, %v45
  %v82 = vmul.f32 %v46, %v46
  %v83 = vmul.f32 %v47, %v47
  %v84 = vadd.f32 %v76, %v77
  %v85 = vadd.f32 %v84, %v78
  %v86 = vadd.f32 %v85, %v79
  %87 = vadd.xlane.f32.xlu0 %v86
  %v88 = vpop.xlane.xlu0 %87
  %v89 = vadd.f32 %v80, %v81
  %v90 = vadd.f32 %v89, %v82
  %v91 = vadd.f32 %v90, %v83
  %92 = vadd.xlane.f32.xlu0 %v91
  %v93 = vpop.xlane.xlu0 %92
  %v94 = vrcp.pop 512.0
  %v95 = vmul.f32 %v88, %v94
  %v96 = vmul.f32 %v93, %v94
  %v97 = vadd.f32 %v95, 1e-06
  %v98 = vadd.f32 %v96, 1e-06
  %v99 = vrsqrt.pop %v97
  %v100 = vrsqrt.pop %v98
  %v101 = vmul.f32 %v40, %v99
  %v102 = vmul.f32 %v41, %v99
  %v103 = vmul.f32 %v42, %v99
  %v104 = vmul.f32 %v43, %v99
  %v105 = vmul.f32 %v44, %v100
  %v106 = vmul.f32 %v45, %v100
  %v107 = vmul.f32 %v46, %v100
  %v108 = vmul.f32 %v47, %v100
  %v109 = vld [vmem:[%s2] sm:$0xf]
  %v110 = vunpack.c.l.bf16 %v109
  %v112 = vlaneseq
  %v113 = vshrl.u32 %v112, 7
  %v114 = vsub.s32 0, %v113
  %v115 = vrot.slane %v110, %v114
  %v116 = vlaneseq
  %v117 = vshrl.u32 %v116, 7
  %v118 = vsub.s32 2, %v117
  %v119 = vrot.slane %v110, %v118
  %v120 = vlaneseq
  %v121 = vshrl.u32 %v120, 7
  %v122 = vsub.s32 4, %v121
  %v123 = vrot.slane %v110, %v122
  %v124 = vlaneseq
  %v125 = vshrl.u32 %v124, 7
  %v126 = vsub.s32 6, %v125
  %v127 = vrot.slane %v110, %v126
  %v132 = vlaneseq
  %v133 = vshrl.u32 %v132, 7
  %v134 = vsub.s32 0, %v133
  %v135 = vrot.slane %v115, %v134
  %v136 = vlaneseq
  %v137 = vshrl.u32 %v136, 7
  %v138 = vsub.s32 0, %v137
  %v139 = vrot.slane %v119, %v138
  %v140 = vlaneseq
  %v141 = vshrl.u32 %v140, 7
  %v142 = vsub.s32 0, %v141
  %v143 = vrot.slane %v123, %v142
  %v144 = vlaneseq
  %v145 = vshrl.u32 %v144, 7
  %v146 = vsub.s32 0, %v145
  %v147 = vrot.slane %v127, %v146
  %v148 = vmul.f32 %v101, %v135
  %v149 = vmul.f32 %v102, %v139
  %v150 = vmul.f32 %v103, %v143
  %v151 = vmul.f32 %v104, %v147
  %v152 = vmul.f32 %v105, %v135
  %v153 = vmul.f32 %v106, %v139
  %v154 = vmul.f32 %v107, %v143
  %v155 = vmul.f32 %v108, %v147
  %v156 = vpack.c.bf16 %v152, %v148
  %v157 = vpack.c.bf16 %v153, %v149
  %v158 = vpack.c.bf16 %v154, %v150
  %v159 = vpack.c.bf16 %v155, %v151
  %v164 = vunpack.c.l.b16 %v156
  %v165 = vunpack.c.l.b16 %v157
  %v166 = vunpack.c.l.b16 %v158
  %v167 = vunpack.c.l.b16 %v159
  %v168 = vunpack.c.h.b16 %v156
  %v169 = vunpack.c.h.b16 %v157
  %v170 = vunpack.c.h.b16 %v158
  %v171 = vunpack.c.h.b16 %v159
  %v172 = vpack.c.b16 %v165, %v164
  %v173 = vpack.c.b16 %v167, %v166
  %v174 = vpack.c.b16 %v169, %v168
  %v175 = vpack.c.b16 %v171, %v170
  %180 = vst [vmem:[%s3] sm:$0xff] %v172
  %181 = vst [vmem:[%s3 + $0x8] sm:$0xff] %v173
  %182 = vst [vmem:[%s3 + $0x10] sm:$0xff] %v174
  %183 = vst [vmem:[%s3 + $0x18] sm:$0xff] %v175
  // Predicated region
  $region14: #{a_call__.19} parent=0 // pred_check
    _
  $region15: #{a_call__.19} parent=0 // pred_check_branch
    %185 = sbr.rel (0) target = $region17
  $region16: #{a_call__.19} parent=0 // pred_region
    _
  $region17: #{a_call__.19} parent=0 // pred_fallthru
    _
  // Predicated region
  $region18: #{a_call__.19} parent=0 // pred_check
    _
  $region19: #{a_call__.19} parent=0 // pred_check_branch
    %187 = sbr.rel (0) target = $region21
  $region20: #{a_call__.19} parent=0 // pred_region
    _
  $region21: #{a_call__.19} parent=0 // pred_fallthru
    _
  // Predicated region
  $region22: #{a_call__.19} parent=0 // pred_check
    _
  $region23: #{a_call__.19} parent=0 // pred_check_branch
    %189 = sbr.rel (0) target = $region25
  $region24: #{a_call__.19} parent=0 // pred_region
    _
  $region25: #{a_call__.19} parent=0 // pred_fallthru
    _
  // Predicated region
  $region26: #{a_call__.19} parent=0 // pred_check
    _
  $region27: #{a_call__.19} parent=0 // pred_check_branch
    %191 = sbr.rel (0) target = $region29
  $region28: #{a_call__.19} parent=0 // pred_region
    _
  $region29: #{a_call__.19} parent=0 // pred_fallthru
    _

// kernel: a_call__.20
$region0: #{a_call__.20}
  #allocation0 [shape = 'u32[]', space=smem, size = 0x4, offset = 0x4, fixed_abs, tag = 'smem constant byte address 0x4 - core index']
  #allocation1 [shape = 'u32[144,128]{1,0:T(1,128)}', space=vmem, size = 0x12000, scoped, tag = 'internal scratch']
  #allocation2 [shape = 'f32[16,256]{1,0:T(8,128)}', space=vmem, size = 0x4000, scoped, tag = 'scratch operand']
  %s0 = inlined_call_operand.vmem [shape: bf16[16,512], index: 0, kind: input, shape index: {}]
  %s1 = inlined_call_operand.vmem [shape: bf16[512,2048], index: 1, kind: input, shape index: {}]
  %s2 = inlined_call_operand.vmem [shape: bf16[16,2048], index: 2, kind: output, shape index: {}]
  %s3 = sld [smem:[#allocation0]]
  $region121: #{a_call__.20} parent=0
    _
  %s5 = ssub.s32 1, %s3
  %s6 = scalar_select 0, %s5, %s3
  $region1: #{a_call__.20} parent=0
    #allocation3 [shape = 'u8[524288]{0}', space=vmem, size = 0x80000, scoped, tag = 'input window, operand 1']
    #allocation4 [shape = 'u8[16384]{0}', space=vmem, size = 0x4000, scoped, tag = 'output window, operand 0']
    loop: start=0, step=1, limit=10
    $region2: #{a_call__.20} parent=1 // loop_pre_header
      _
    $region3: #{a_call__.20} parent=1 // loop_header
      %s8 = sphi 0, %s12
      %p9 = scmp.ge.s32.totalorder %s8, 10
      %s15 = sphi 0, %s34
      %s16 = sphi 0, %s30
      %s17 = sphi 0, %s26
      %s18 = sphi 0, %s15
      %s19 = sphi 0, %s16
      %s20 = sphi 0, %s17
      %s21 = sphi 0, %s18
      %s22 = sphi 0, %s19
      %s23 = sphi 0, %s20
      %s39 = sphi 0, %s41
      %s42 = sphi 0, %s39
      %s43 = sphi 0, %s42
      %s59 = sphi 0, %s43
      %s67 = sphi 0, %s69
      %s70 = sphi 0, %s67
      %s71 = sphi 0, %s70
      %s87 = sphi 0, %s71
      %s95 = sphi 0, %s97
      %s98 = sphi 0, %s95
      %s99 = sphi 0, %s98
      %s115 = sphi 0, %s99
    $region4: #{a_call__.20} parent=1 // loop_header_branch
      %11 = sbr.rel (%p9) target = $region8
    $region5: #{a_call__.20} parent=1 // loop_body
      %s13 = ssub.s32 %s8, 1
      %s14 = ssub.s32 %s8, 2
      %s24 = sadd.s32 1, %s17
      %p25 = scmp.ge.s32.totalorder %s24, 1
      %s26 = scalar_select %p25, 0, %s24
      %s27 = sadd.s32 1, %s16
      %s28 = scalar_select %p25, %s27, %s16
      %p29 = scmp.ge.s32.totalorder %s28, 8
      %s30 = scalar_select %p29, 0, %s28
      %s31 = sadd.s32 1, %s15
      %s32 = scalar_select %p29, %s31, %s15
      %p33 = scmp.ge.s32.totalorder %s32, 1
      %s34 = scalar_select %p33, 0, %s32
      %s35 = ssub.s32 %s15, %s34
      %s36 = ssub.s32 %s17, %s26
      %s37 = sor.u32 %s35, %s36
      %p38 = scmp.eq.s32.totalorder %s37, 0
      %s40 = sadd.s32 %s39, 1
      %s41 = scalar_select %p38, %s39, %s40
      %p44 = pneg %p38
      %p45 = scmp.eq.s32.totalorder %s8, 7
      %p46 = por %p44, %p45
      %p47 = scmp.ne.s32.totalorder %s39, %s42
      %p48 = scmp.eq.s32.totalorder %s8, 0
      %p49 = por %p47, %p48
      %p50 = scmp.ne.s32.totalorder %s39, %s42
      %p51 = scmp.eq.s32.totalorder %s13, 7
      %p52 = por %p50, %p51
      %p53 = scmp.ne.s32.totalorder %s42, %s43
      %p54 = scmp.eq.s32.totalorder %s13, 0
      %p55 = por %p53, %p54
      %p56 = scmp.ne.s32.totalorder %s42, %s43
      %p57 = scmp.eq.s32.totalorder %s14, 7
      %p58 = por %p56, %p57
      %p60 = scmp.ne.s32.totalorder %s43, %s59
      %p61 = scmp.eq.s32.totalorder %s14, 0
      %p62 = por %p60, %p61
      %s63 = ssub.s32 %s17, %s26
      %s64 = ssub.s32 %s16, %s30
      %s65 = sor.u32 %s63, %s64
      %p66 = scmp.eq.s32.totalorder %s65, 0
      %s68 = sadd.s32 %s67, 1
      %s69 = scalar_select %p66, %s67, %s68
      %p72 = pneg %p66
      %p73 = scmp.eq.s32.totalorder %s8, 7
      %p74 = por %p72, %p73
      %p75 = scmp.ne.s32.totalorder %s67, %s70
      %p76 = scmp.eq.s32.totalorder %s8, 0
      %p77 = por %p75, %p76
      %p78 = scmp.ne.s32.totalorder %s67, %s70
      %p79 = scmp.eq.s32.totalorder %s13, 7
      %p80 = por %p78, %p79
      %p81 = scmp.ne.s32.totalorder %s70, %s71
      %p82 = scmp.eq.s32.totalorder %s13, 0
      %p83 = por %p81, %p82
      %p84 = scmp.ne.s32.totalorder %s70, %s71
      %p85 = scmp.eq.s32.totalorder %s14, 7
      %p86 = por %p84, %p85
      %p88 = scmp.ne.s32.totalorder %s71, %s87
      %p89 = scmp.eq.s32.totalorder %s14, 0
      %p90 = por %p88, %p89
      %s91 = ssub.s32 %s15, %s34
      %s92 = ssub.s32 %s16, %s30
      %s93 = sor.u32 %s91, %s92
      %p94 = scmp.eq.s32.totalorder %s93, 0
      %s96 = sadd.s32 %s95, 1
      %s97 = scalar_select %p94, %s95, %s96
      %p100 = pneg %p94
      %p101 = scmp.eq.s32.totalorder %s8, 7
      %p102 = por %p100, %p101
      %p103 = scmp.ne.s32.totalorder %s95, %s98
      %p104 = scmp.eq.s32.totalorder %s8, 0
      %p105 = por %p103, %p104
      %p106 = scmp.ne.s32.totalorder %s95, %s98
      %p107 = scmp.eq.s32.totalorder %s13, 7
      %p108 = por %p106, %p107
      %p109 = scmp.ne.s32.totalorder %s98, %s99
      %p110 = scmp.eq.s32.totalorder %s13, 0
      %p111 = por %p109, %p110
      %p112 = scmp.ne.s32.totalorder %s98, %s99
      %p113 = scmp.eq.s32.totalorder %s14, 7
      %p114 = por %p112, %p113
      %p116 = scmp.ne.s32.totalorder %s99, %s115
      %p117 = scmp.eq.s32.totalorder %s14, 0
      %p118 = por %p116, %p117
      %p119 = scmp.le.s32.totalorder 1, %s8
      %p120 = scmp.lt.s32.totalorder %s8, 9
      %p121 = pnand %p119, %p120
      %p122 = pneg %p121
      // Predicated region
      $region9: #{a_call__.20} parent=5 // pred_check
        _
      $region10: #{a_call__.20} parent=5 // pred_check_branch
        %124 = sbr.rel (%p121) target = $region12
      $region11: #{a_call__.20} parent=5 // pred_region
        %s125 = ssub.s32 %s8, 1
        // Predicated region
        $region13: #{a_call__.20} parent=11 // pred_check
          %p126 = pneg %p55
        $region14: #{a_call__.20} parent=11 // pred_check_branch
          %128 = sbr.rel (%p126) target = $region16
        $region15: #{a_call__.20} parent=11 // pred_region
          %s129 = smul.u32 2, %s18
          %s130 = smul.u32 4, %s20
          %p131 = scmp.lt.s32.totalorder %s129, 1
          %s132 = scalar_select %p131, %s129, 1
          %p133 = scmp.lt.s32.totalorder %s130, 3
          %s134 = scalar_select %p133, %s130, 3
          %s135 = smul.addr %s132, 4
          %s136 = sadd.s32 %s134, %s135
          %s137 = smul.addr %s136, 4
          %s138 = scalar_lea.vmem %s0, %s137
          %s139 = smul.u32 2, %s18
          %s140 = smul.u32 4, %s20
        $region16: #{a_call__.20} parent=11 // pred_fallthru
          _
      $region12: #{a_call__.20} parent=5 // pred_fallthru
        _
      %p141 = scmp.lt.s32.totalorder %s8, 8
      // Predicated region
      $region17: #{a_call__.20} parent=5 // pred_check
        %p142 = pneg %p141
      $region18: #{a_call__.20} parent=5 // pred_check_branch
        %144 = sbr.rel (%p142) target = $region20
      $region19: #{a_call__.20} parent=5 // pred_region
        // Predicated region
        $region21: #{a_call__.20} parent=19 // pred_check
          %p145 = pneg %p77
        $region22: #{a_call__.20} parent=19 // pred_check_branch
          %147 = sbr.rel (%p145) target = $region24
        $region23: #{a_call__.20} parent=19 // pred_region
          %s148 = sand.u32 %s67, 1
          %s149 = sand.u32 %s67, 1
          %s150 = smul.addr %s149, 512
          %s151 = scalar_lea.vmem [#allocation3], %s150
          %s152 = smul.u32 64, %s17
          %s153 = smul.u32 2, %s16
          %s154 = smul.addr %s152, 16
          %s155 = sadd.s32 %s153, %s154
          %s156 = smul.addr %s155, 4
          %s157 = scalar_lea.vmem %s1, %s156
          // Predicated region
          $region25: #{a_call__.20} parent=23 // pred_check
            _
          $region26: #{a_call__.20} parent=23 // pred_check_branch
            %159 = sbr.rel (0) target = $region28
          $region27: #{a_call__.20} parent=23 // pred_region
            // Predicated region
            $region29: #{a_call__.20} parent=27 // pred_check
              _
            $region30: #{a_call__.20} parent=27 // pred_check_branch
              %161 = sbr.rel (0) target = $region32
            $region31: #{a_call__.20} parent=27 // pred_region
              // Predicated region
              $region44: #{a_call__.20} parent=31 // pred_check
                _
              $region45: #{a_call__.20} parent=31 // pred_check_branch
                %302 = sbr.rel (0) target = $region47
              $region46: #{a_call__.20} parent=31 // pred_region
                loop: start=0, step=1, limit=1
                $region48: #{a_call__.20} parent=46 // loop_pre_header
                  _
                $region49: #{a_call__.20} parent=46 // loop_header
                  %s304 = sphi 0, %s308
                  %p305 = scmp.ge.s32.totalorder %s304, 1
                  %s309 = sphi %s157, %s157
                  %s310 = sphi %s151, %s151
                $region50: #{a_call__.20} parent=46 // loop_header_branch
                  %307 = sbr.rel (%p305) target = $region54
                $region51: #{a_call__.20} parent=46 // loop_body
                  %v311 = vld [vmem:[%s309] sm:$0xff]
                  %312 = vst [vmem:[%s310] sm:$0xff] %v311
                  %v313 = vld [vmem:[%s309 + $0x40] sm:$0xff]
                  %314 = vst [vmem:[%s310 + $0x8] sm:$0xff] %v313
                  %v315 = vld [vmem:[%s309 + $0x80] sm:$0xff]
                  %316 = vst [vmem:[%s310 + $0x10] sm:$0xff] %v315
                  %v317 = vld [vmem:[%s309 + $0xc0] sm:$0xff]
                  %318 = vst [vmem:[%s310 + $0x18] sm:$0xff] %v317
                  %v319 = vld [vmem:[%s309 + $0x100] sm:$0xff]
                  %320 = vst [vmem:[%s310 + $0x20] sm:$0xff] %v319
                  %v321 = vld [vmem:[%s309 + $0x140] sm:$0xff]
                  %322 = vst [vmem:[%s310 + $0x28] sm:$0xff] %v321
                  %v323 = vld [vmem:[%s309 + $0x180] sm:$0xff]
                  %324 = vst [vmem:[%s310 + $0x30] sm:$0xff] %v323
                  %v325 = vld [vmem:[%s309 + $0x1c0] sm:$0xff]
                  %326 = vst [vmem:[%s310 + $0x38] sm:$0xff] %v325
                  %v327 = vld [vmem:[%s309 + $0x200] sm:$0xff]
                  %328 = vst [vmem:[%s310 + $0x40] sm:$0xff] %v327
                  %v329 = vld [vmem:[%s309 + $0x240] sm:$0xff]
                  %330 = vst [vmem:[%s310 + $0x48] sm:$0xff] %v329
                  %v331 = vld [vmem:[%s309 + $0x280] sm:$0xff]
                  %332 = vst [vmem:[%s310 + $0x50] sm:$0xff] %v331
                  %v333 = vld [vmem:[%s309 + $0x2c0] sm:$0xff]
                  %334 = vst [vmem:[%s310 + $0x58] sm:$0xff] %v333
                  %v335 = vld [vmem:[%s309 + $0x300] sm:$0xff]
                  %336 = vst [vmem:[%s310 + $0x60] sm:$0xff] %v335
                  %v337 = vld [vmem:[%s309 + $0x340] sm:$0xff]
                  %338 = vst [vmem:[%s310 + $0x68] sm:$0xff] %v337
                  %v339 = vld [vmem:[%s309 + $0x380] sm:$0xff]
                  %340 = vst [vmem:[%s310 + $0x70] sm:$0xff] %v339
                  %v341 = vld [vmem:[%s309 + $0x3c0] sm:$0xff]
                  %342 = vst [vmem:[%s310 + $0x78] sm:$0xff] %v341
                  %v343 = vld [vmem:[%s309 + $0x400] sm:$0xff]
                  %344 = vst [vmem:[%s310 + $0x80] sm:$0xff] %v343
                  %v345 = vld [vmem:[%s309 + $0x440] sm:$0xff]
                  %346 = vst [vmem:[%s310 + $0x88] sm:$0xff] %v345
                  %v347 = vld [vmem:[%s309 + $0x480] sm:$0xff]
                  %348 = vst [vmem:[%s310 + $0x90] sm:$0xff] %v347
                  %v349 = vld [vmem:[%s309 + $0x4c0] sm:$0xff]
                  %350 = vst [vmem:[%s310 + $0x98] sm:$0xff] %v349
                  %v351 = vld [vmem:[%s309 + $0x500] sm:$0xff]
                  %352 = vst [vmem:[%s310 + $0xa0] sm:$0xff] %v351
                  %v353 = vld [vmem:[%s309 + $0x540] sm:$0xff]
                  %354 = vst [vmem:[%s310 + $0xa8] sm:$0xff] %v353
                  %v355 = vld [vmem:[%s309 + $0x580] sm:$0xff]
                  %356 = vst [vmem:[%s310 + $0xb0] sm:$0xff] %v355
                  %v357 = vld [vmem:[%s309 + $0x5c0] sm:$0xff]
                  %358 = vst [vmem:[%s310 + $0xb8] sm:$0xff] %v357
                  %v359 = vld [vmem:[%s309 + $0x600] sm:$0xff]
                  %360 = vst [vmem:[%s310 + $0xc0] sm:$0xff] %v359
                  %v361 = vld [vmem:[%s309 + $0x640] sm:$0xff]
                  %362 = vst [vmem:[%s310 + $0xc8] sm:$0xff] %v361
                  %v363 = vld [vmem:[%s309 + $0x680] sm:$0xff]
                  %364 = vst [vmem:[%s310 + $0xd0] sm:$0xff] %v363
                  %v365 = vld [vmem:[%s309 + $0x6c0] sm:$0xff]
                  %366 = vst [vmem:[%s310 + $0xd8] sm:$0xff] %v365
                  %v367 = vld [vmem:[%s309 + $0x700] sm:$0xff]
                  %368 = vst [vmem:[%s310 + $0xe0] sm:$0xff] %v367
                  %v369 = vld [vmem:[%s309 + $0x740] sm:$0xff]
                  %370 = vst [vmem:[%s310 + $0xe8] sm:$0xff] %v369
                  %v371 = vld [vmem:[%s309 + $0x780] sm:$0xff]
                  %372 = vst [vmem:[%s310 + $0xf0] sm:$0xff] %v371
                  %v373 = vld [vmem:[%s309 + $0x7c0] sm:$0xff]
                  %374 = vst [vmem:[%s310 + $0xf8] sm:$0xff] %v373
                  %v375 = vld [vmem:[%s309 + $0x800] sm:$0xff]
                  %376 = vst [vmem:[%s310 + $0x100] sm:$0xff] %v375
                  %v377 = vld [vmem:[%s309 + $0x840] sm:$0xff]
                  %378 = vst [vmem:[%s310 + $0x108] sm:$0xff] %v377
                  %v379 = vld [vmem:[%s309 + $0x880] sm:$0xff]
                  %380 = vst [vmem:[%s310 + $0x110] sm:$0xff] %v379
                  %v381 = vld [vmem:[%s309 + $0x8c0] sm:$0xff]
                  %382 = vst [vmem:[%s310 + $0x118] sm:$0xff] %v381
                  %v383 = vld [vmem:[%s309 + $0x900] sm:$0xff]
                  %384 = vst [vmem:[%s310 + $0x120] sm:$0xff] %v383
                  %v385 = vld [vmem:[%s309 + $0x940] sm:$0xff]
                  %386 = vst [vmem:[%s310 + $0x128] sm:$0xff] %v385
                  %v387 = vld [vmem:[%s309 + $0x980] sm:$0xff]
                  %388 = vst [vmem:[%s310 + $0x130] sm:$0xff] %v387
                  %v389 = vld [vmem:[%s309 + $0x9c0] sm:$0xff]
                  %390 = vst [vmem:[%s310 + $0x138] sm:$0xff] %v389
                  %v391 = vld [vmem:[%s309 + $0xa00] sm:$0xff]
                  %392 = vst [vmem:[%s310 + $0x140] sm:$0xff] %v391
                  %v393 = vld [vmem:[%s309 + $0xa40] sm:$0xff]
                  %394 = vst [vmem:[%s310 + $0x148] sm:$0xff] %v393
                  %v395 = vld [vmem:[%s309 + $0xa80] sm:$0xff]
                  %396 = vst [vmem:[%s310 + $0x150] sm:$0xff] %v395
                  %v397 = vld [vmem:[%s309 + $0xac0] sm:$0xff]
                  %398 = vst [vmem:[%s310 + $0x158] sm:$0xff] %v397
                  %v399 = vld [vmem:[%s309 + $0xb00] sm:$0xff]
                  %400 = vst [vmem:[%s310 + $0x160] sm:$0xff] %v399
                  %v401 = vld [vmem:[%s309 + $0xb40] sm:$0xff]
                  %402 = vst [vmem:[%s310 + $0x168] sm:$0xff] %v401
                  %v403 = vld [vmem:[%s309 + $0xb80] sm:$0xff]
                  %404 = vst [vmem:[%s310 + $0x170] sm:$0xff] %v403
                  %v405 = vld [vmem:[%s309 + $0xbc0] sm:$0xff]
                  %406 = vst [vmem:[%s310 + $0x178] sm:$0xff] %v405
                  %v407 = vld [vmem:[%s309 + $0xc00] sm:$0xff]
                  %408 = vst [vmem:[%s310 + $0x180] sm:$0xff] %v407
                  %v409 = vld [vmem:[%s309 + $0xc40] sm:$0xff]
                  %410 = vst [vmem:[%s310 + $0x188] sm:$0xff] %v409
                  %v411 = vld [vmem:[%s309 + $0xc80] sm:$0xff]
                  %412 = vst [vmem:[%s310 + $0x190] sm:$0xff] %v411
                  %v413 = vld [vmem:[%s309 + $0xcc0] sm:$0xff]
                  %414 = vst [vmem:[%s310 + $0x198] sm:$0xff] %v413
                  %v415 = vld [vmem:[%s309 + $0xd00] sm:$0xff]
                  %416 = vst [vmem:[%s310 + $0x1a0] sm:$0xff] %v415
                  %v417 = vld [vmem:[%s309 + $0xd40] sm:$0xff]
                  %418 = vst [vmem:[%s310 + $0x1a8] sm:$0xff] %v417
                  %v419 = vld [vmem:[%s309 + $0xd80] sm:$0xff]
                  %420 = vst [vmem:[%s310 + $0x1b0] sm:$0xff] %v419
                  %v421 = vld [vmem:[%s309 + $0xdc0] sm:$0xff]
                  %422 = vst [vmem:[%s310 + $0x1b8] sm:$0xff] %v421
                  %v423 = vld [vmem:[%s309 + $0xe00] sm:$0xff]
                  %424 = vst [vmem:[%s310 + $0x1c0] sm:$0xff] %v423
                  %v425 = vld [vmem:[%s309 + $0xe40] sm:$0xff]
                  %426 = vst [vmem:[%s310 + $0x1c8] sm:$0xff] %v425
                  %v427 = vld [vmem:[%s309 + $0xe80] sm:$0xff]
                  %428 = vst [vmem:[%s310 + $0x1d0] sm:$0xff] %v427
                  %v429 = vld [vmem:[%s309 + $0xec0] sm:$0xff]
                  %430 = vst [vmem:[%s310 + $0x1d8] sm:$0xff] %v429
                  %v431 = vld [vmem:[%s309 + $0xf00] sm:$0xff]
                  %432 = vst [vmem:[%s310 + $0x1e0] sm:$0xff] %v431
                  %v433 = vld [vmem:[%s309 + $0xf40] sm:$0xff]
                  %434 = vst [vmem:[%s310 + $0x1e8] sm:$0xff] %v433
                  %v435 = vld [vmem:[%s309 + $0xf80] sm:$0xff]
                  %436 = vst [vmem:[%s310 + $0x1f0] sm:$0xff] %v435
                  %v437 = vld [vmem:[%s309 + $0xfc0] sm:$0xff]
                  %438 = vst [vmem:[%s310 + $0x1f8] sm:$0xff] %v437
                $region52: #{a_call__.20} parent=46 // loop_footer
                  %s308 = sadd.s32 1, %s304
                $region53: #{a_call__.20} parent=46 // loop_footer_branch
                  %303 = sbr.rel target = $region49
                $region54: #{a_call__.20} parent=46 // loop_exit
                  _
              $region47: #{a_call__.20} parent=31 // pred_fallthru
                _
              // Predicated region
              $region55: #{a_call__.20} parent=31 // pred_check
                _
              $region56: #{a_call__.20} parent=31 // pred_check_branch
                %440 = sbr.rel target = $region58
              $region57: #{a_call__.20} parent=31 // pred_region
                _
              $region58: #{a_call__.20} parent=31 // pred_fallthru
                _
            $region32: #{a_call__.20} parent=27 // pred_fallthru
              _
            // Predicated region
            $region33: #{a_call__.20} parent=27 // pred_check
              _
            $region34: #{a_call__.20} parent=27 // pred_check_branch
              %163 = sbr.rel target = $region36
            $region35: #{a_call__.20} parent=27 // pred_region
              loop: start=0, step=1, limit=1
              $region37: #{a_call__.20} parent=35 // loop_pre_header
                _
              $region38: #{a_call__.20} parent=35 // loop_header
                %s166 = sphi 0, %s170
                %p167 = scmp.ge.s32.totalorder %s166, 1
                %s171 = sphi %s157, %s157
                %s172 = sphi %s151, %s151
              $region39: #{a_call__.20} parent=35 // loop_header_branch
                %169 = sbr.rel (%p167) target = $region43
              $region40: #{a_call__.20} parent=35 // loop_body
                %v173 = vld [vmem:[%s171] sm:$0xff]
                %174 = vst [vmem:[%s172] sm:$0xff] %v173
                %v175 = vld [vmem:[%s171 + $0x40] sm:$0xff]
                %176 = vst [vmem:[%s172 + $0x8] sm:$0xff] %v175
                %v177 = vld [vmem:[%s171 + $0x80] sm:$0xff]
                %178 = vst [vmem:[%s172 + $0x10] sm:$0xff] %v177
                %v179 = vld [vmem:[%s171 + $0xc0] sm:$0xff]
                %180 = vst [vmem:[%s172 + $0x18] sm:$0xff] %v179
                %v181 = vld [vmem:[%s171 + $0x100] sm:$0xff]
                %182 = vst [vmem:[%s172 + $0x20] sm:$0xff] %v181
                %v183 = vld [vmem:[%s171 + $0x140] sm:$0xff]
                %184 = vst [vmem:[%s172 + $0x28] sm:$0xff] %v183
                %v185 = vld [vmem:[%s171 + $0x180] sm:$0xff]
                %186 = vst [vmem:[%s172 + $0x30] sm:$0xff] %v185
                %v187 = vld [vmem:[%s171 + $0x1c0] sm:$0xff]
                %188 = vst [vmem:[%s172 + $0x38] sm:$0xff] %v187
                %v189 = vld [vmem:[%s171 + $0x200] sm:$0xff]
                %190 = vst [vmem:[%s172 + $0x40] sm:$0xff] %v189
                %v191 = vld [vmem:[%s171 + $0x240] sm:$0xff]
                %192 = vst [vmem:[%s172 + $0x48] sm:$0xff] %v191
                %v193 = vld [vmem:[%s171 + $0x280] sm:$0xff]
                %194 = vst [vmem:[%s172 + $0x50] sm:$0xff] %v193
                %v195 = vld [vmem:[%s171 + $0x2c0] sm:$0xff]
                %196 = vst [vmem:[%s172 + $0x58] sm:$0xff] %v195
                %v197 = vld [vmem:[%s171 + $0x300] sm:$0xff]
                %198 = vst [vmem:[%s172 + $0x60] sm:$0xff] %v197
                %v199 = vld [vmem:[%s171 + $0x340] sm:$0xff]
                %200 = vst [vmem:[%s172 + $0x68] sm:$0xff] %v199
                %v201 = vld [vmem:[%s171 + $0x380] sm:$0xff]
                %202 = vst [vmem:[%s172 + $0x70] sm:$0xff] %v201
                %v203 = vld [vmem:[%s171 + $0x3c0] sm:$0xff]
                %204 = vst [vmem:[%s172 + $0x78] sm:$0xff] %v203
                %v205 = vld [vmem:[%s171 + $0x400] sm:$0xff]
                %206 = vst [vmem:[%s172 + $0x80] sm:$0xff] %v205
                %v207 = vld [vmem:[%s171 + $0x440] sm:$0xff]
                %208 = vst [vmem:[%s172 + $0x88] sm:$0xff] %v207
                %v209 = vld [vmem:[%s171 + $0x480] sm:$0xff]
                %210 = vst [vmem:[%s172 + $0x90] sm:$0xff] %v209
                %v211 = vld [vmem:[%s171 + $0x4c0] sm:$0xff]
                %212 = vst [vmem:[%s172 + $0x98] sm:$0xff] %v211
                %v213 = vld [vmem:[%s171 + $0x500] sm:$0xff]
                %214 = vst [vmem:[%s172 + $0xa0] sm:$0xff] %v213
                %v215 = vld [vmem:[%s171 + $0x540] sm:$0xff]
                %216 = vst [vmem:[%s172 + $0xa8] sm:$0xff] %v215
                %v217 = vld [vmem:[%s171 + $0x580] sm:$0xff]
                %218 = vst [vmem:[%s172 + $0xb0] sm:$0xff] %v217
                %v219 = vld [vmem:[%s171 + $0x5c0] sm:$0xff]
                %220 = vst [vmem:[%s172 + $0xb8] sm:$0xff] %v219
                %v221 = vld [vmem:[%s171 + $0x600] sm:$0xff]
                %222 = vst [vmem:[%s172 + $0xc0] sm:$0xff] %v221
                %v223 = vld [vmem:[%s171 + $0x640] sm:$0xff]
                %224 = vst [vmem:[%s172 + $0xc8] sm:$0xff] %v223
                %v225 = vld [vmem:[%s171 + $0x680] sm:$0xff]
                %226 = vst [vmem:[%s172 + $0xd0] sm:$0xff] %v225
                %v227 = vld [vmem:[%s171 + $0x6c0] sm:$0xff]
                %228 = vst [vmem:[%s172 + $0xd8] sm:$0xff] %v227
                %v229 = vld [vmem:[%s171 + $0x700] sm:$0xff]
                %230 = vst [vmem:[%s172 + $0xe0] sm:$0xff] %v229
                %v231 = vld [vmem:[%s171 + $0x740] sm:$0xff]
                %232 = vst [vmem:[%s172 + $0xe8] sm:$0xff] %v231
                %v233 = vld [vmem:[%s171 + $0x780] sm:$0xff]
                %234 = vst [vmem:[%s172 + $0xf0] sm:$0xff] %v233
                %v235 = vld [vmem:[%s171 + $0x7c0] sm:$0xff]
                %236 = vst [vmem:[%s172 + $0xf8] sm:$0xff] %v235
                %v237 = vld [vmem:[%s171 + $0x800] sm:$0xff]
                %238 = vst [vmem:[%s172 + $0x100] sm:$0xff] %v237
                %v239 = vld [vmem:[%s171 + $0x840] sm:$0xff]
                %240 = vst [vmem:[%s172 + $0x108] sm:$0xff] %v239
                %v241 = vld [vmem:[%s171 + $0x880] sm:$0xff]
                %242 = vst [vmem:[%s172 + $0x110] sm:$0xff] %v241
                %v243 = vld [vmem:[%s171 + $0x8c0] sm:$0xff]
                %244 = vst [vmem:[%s172 + $0x118] sm:$0xff] %v243
                %v245 = vld [vmem:[%s171 + $0x900] sm:$0xff]
                %246 = vst [vmem:[%s172 + $0x120] sm:$0xff] %v245
                %v247 = vld [vmem:[%s171 + $0x940] sm:$0xff]
                %248 = vst [vmem:[%s172 + $0x128] sm:$0xff] %v247
                %v249 = vld [vmem:[%s171 + $0x980] sm:$0xff]
                %250 = vst [vmem:[%s172 + $0x130] sm:$0xff] %v249
                %v251 = vld [vmem:[%s171 + $0x9c0] sm:$0xff]
                %252 = vst [vmem:[%s172 + $0x138] sm:$0xff] %v251
                %v253 = vld [vmem:[%s171 + $0xa00] sm:$0xff]
                %254 = vst [vmem:[%s172 + $0x140] sm:$0xff] %v253
                %v255 = vld [vmem:[%s171 + $0xa40] sm:$0xff]
                %256 = vst [vmem:[%s172 + $0x148] sm:$0xff] %v255
                %v257 = vld [vmem:[%s171 + $0xa80] sm:$0xff]
                %258 = vst [vmem:[%s172 + $0x150] sm:$0xff] %v257
                %v259 = vld [vmem:[%s171 + $0xac0] sm:$0xff]
                %260 = vst [vmem:[%s172 + $0x158] sm:$0xff] %v259
                %v261 = vld [vmem:[%s171 + $0xb00] sm:$0xff]
                %262 = vst [vmem:[%s172 + $0x160] sm:$0xff] %v261
                %v263 = vld [vmem:[%s171 + $0xb40] sm:$0xff]
                %264 = vst [vmem:[%s172 + $0x168] sm:$0xff] %v263
                %v265 = vld [vmem:[%s171 + $0xb80] sm:$0xff]
                %266 = vst [vmem:[%s172 + $0x170] sm:$0xff] %v265
                %v267 = vld [vmem:[%s171 + $0xbc0] sm:$0xff]
                %268 = vst [vmem:[%s172 + $0x178] sm:$0xff] %v267
                %v269 = vld [vmem:[%s171 + $0xc00] sm:$0xff]
                %270 = vst [vmem:[%s172 + $0x180] sm:$0xff] %v269
                %v271 = vld [vmem:[%s171 + $0xc40] sm:$0xff]
                %272 = vst [vmem:[%s172 + $0x188] sm:$0xff] %v271
                %v273 = vld [vmem:[%s171 + $0xc80] sm:$0xff]
                %274 = vst [vmem:[%s172 + $0x190] sm:$0xff] %v273
                %v275 = vld [vmem:[%s171 + $0xcc0] sm:$0xff]
                %276 = vst [vmem:[%s172 + $0x198] sm:$0xff] %v275
                %v277 = vld [vmem:[%s171 + $0xd00] sm:$0xff]
                %278 = vst [vmem:[%s172 + $0x1a0] sm:$0xff] %v277
                %v279 = vld [vmem:[%s171 + $0xd40] sm:$0xff]
                %280 = vst [vmem:[%s172 + $0x1a8] sm:$0xff] %v279
                %v281 = vld [vmem:[%s171 + $0xd80] sm:$0xff]
                %282 = vst [vmem:[%s172 + $0x1b0] sm:$0xff] %v281
                %v283 = vld [vmem:[%s171 + $0xdc0] sm:$0xff]
                %284 = vst [vmem:[%s172 + $0x1b8] sm:$0xff] %v283
                %v285 = vld [vmem:[%s171 + $0xe00] sm:$0xff]
                %286 = vst [vmem:[%s172 + $0x1c0] sm:$0xff] %v285
                %v287 = vld [vmem:[%s171 + $0xe40] sm:$0xff]
                %288 = vst [vmem:[%s172 + $0x1c8] sm:$0xff] %v287
                %v289 = vld [vmem:[%s171 + $0xe80] sm:$0xff]
                %290 = vst [vmem:[%s172 + $0x1d0] sm:$0xff] %v289
                %v291 = vld [vmem:[%s171 + $0xec0] sm:$0xff]
                %292 = vst [vmem:[%s172 + $0x1d8] sm:$0xff] %v291
                %v293 = vld [vmem:[%s171 + $0xf00] sm:$0xff]
                %294 = vst [vmem:[%s172 + $0x1e0] sm:$0xff] %v293
                %v295 = vld [vmem:[%s171 + $0xf40] sm:$0xff]
                %296 = vst [vmem:[%s172 + $0x1e8] sm:$0xff] %v295
                %v297 = vld [vmem:[%s171 + $0xf80] sm:$0xff]
                %298 = vst [vmem:[%s172 + $0x1f0] sm:$0xff] %v297
                %v299 = vld [vmem:[%s171 + $0xfc0] sm:$0xff]
                %300 = vst [vmem:[%s172 + $0x1f8] sm:$0xff] %v299
              $region41: #{a_call__.20} parent=35 // loop_footer
                %s170 = sadd.s32 1, %s166
              $region42: #{a_call__.20} parent=35 // loop_footer_branch
                %165 = sbr.rel target = $region38
              $region43: #{a_call__.20} parent=35 // loop_exit
                _
            $region36: #{a_call__.20} parent=27 // pred_fallthru
              _
          $region28: #{a_call__.20} parent=23 // pred_fallthru
            _
          %441 = vnop
        $region24: #{a_call__.20} parent=19 // pred_fallthru
          _
      $region20: #{a_call__.20} parent=5 // pred_fallthru
        _
      %p442 = scmp.le.s32.totalorder 1, %s8
      %p443 = scmp.lt.s32.totalorder %s8, 9
      %p444 = pnand %p442, %p443
      %p445 = pneg %p444
      // Predicated region
      $region59: #{a_call__.20} parent=5 // pred_check
        _
      $region60: #{a_call__.20} parent=5 // pred_check_branch
        %447 = sbr.rel (%p444) target = $region62
      $region61: #{a_call__.20} parent=5 // pred_region
        %s448 = ssub.s32 %s8, 1
        %s449 = sand.u32 %s70, 1
        %s450 = sand.u32 %s70, 1
        %s451 = smul.addr %s450, 512
        %s452 = scalar_lea.vmem [#allocation3], %s451
        // Predicated region
        $region63: #{a_call__.20} parent=61 // pred_check
          %p453 = pneg %p83
        $region64: #{a_call__.20} parent=61 // pred_check_branch
          %455 = sbr.rel (%p453) target = $region66
        $region65: #{a_call__.20} parent=61 // pred_region
          _
        $region66: #{a_call__.20} parent=61 // pred_fallthru
          _
        %s456 = smul.u32 2, %s18
        %s457 = smul.u32 4, %s20
        %p458 = scmp.lt.s32.totalorder %s456, 1
        %s459 = scalar_select %p458, %s456, 1
        %p460 = scmp.lt.s32.totalorder %s457, 3
        %s461 = scalar_select %p460, %s457, 3
        %s462 = smul.addr %s459, 4
        %s463 = sadd.s32 %s461, %s462
        %s464 = smul.addr %s463, 4
        %s465 = scalar_lea.vmem %s0, %s464
        %p466 = pneg %p55
        %p467 = pneg %p52
        %s468 = sand.u32 %s70, 1
        %s469 = sand.u32 %s70, 1
        %s470 = smul.addr %s469, 512
        %s471 = scalar_lea.vmem [#allocation3], %s470
        %p472 = pneg %p83
        %p473 = pneg %p80
        %p474 = pneg %p111
        %p475 = pneg %p108
        %s476 = sand.u32 %s98, 1
        %s477 = sand.u32 %s98, 1
        %s478 = smul.addr %s477, 16
        %s479 = scalar_lea.vmem [#allocation4], %s478
        %s480 = smul.u32 2, %s18
        %s481 = smul.u32 4, %s20
        %p482 = scmp.lt.s32.totalorder %s480, 1
        %s483 = scalar_select %p482, %s480, 1
        %p484 = scmp.lt.s32.totalorder %s481, 3
        %s485 = scalar_select %p484, %s481, 3
        %s486 = smul.addr %s483, 4
        %s487 = sadd.s32 %s485, %s486
        %s488 = smul.addr %s487, 4
        %s489 = scalar_lea.vmem %s0, %s488
        %s490 = smul.u32 2, %s18
        %s491 = smul.u32 4, %s20
        %s492 = smul.u32 64, %s20
        %s493 = smul.u32 2, %s19
        %s494 = smul.u32 2, %s18
        %s495 = smul.u32 2, %s19
        %p496 = scmp.eq.s32.totalorder %s20, 0
        // Predicated region
        $region67: #{a_call__.20} parent=61 // pred_check
          %p497 = pneg %p496
        $region68: #{a_call__.20} parent=61 // pred_check_branch
          %499 = sbr.rel (%p497) target = $region70
        $region69: #{a_call__.20} parent=61 // pred_region
          %500 = vst [vmem:[#allocation2] sm:$0xff] 0.0
          %501 = vst [vmem:[#allocation2 + $0x8] sm:$0xff] 0.0
          %502 = vst [vmem:[#allocation2 + $0x10] sm:$0xff] 0.0
          %503 = vst [vmem:[#allocation2 + $0x18] sm:$0xff] 0.0
        $region70: #{a_call__.20} parent=61 // pred_fallthru
          _
        %v504 = vld [vmem:[#allocation2] sm:$0xff]
        %v505 = vld [vmem:[#allocation2 + $0x8] sm:$0xff]
        %v506 = vld [vmem:[#allocation2 + $0x10] sm:$0xff]
        %v507 = vld [vmem:[#allocation2 + $0x18] sm:$0xff]
        %v508 = vld [vmem:[%s489] sm:$0xff]
        %v509 = vld [vmem:[%s489 + $0x8] sm:$0xff]
        %v510 = vld [vmem:[%s489 + $0x10] sm:$0xff]
        %v511 = vld [vmem:[%s489 + $0x18] sm:$0xff]
        %v512 = vld [vmem:[%s452] sm:$0xff]
        %v513 = vld [vmem:[%s452 + $0x8] sm:$0xff]
        %v514 = vld [vmem:[%s452 + $0x10] sm:$0xff]
        %v515 = vld [vmem:[%s452 + $0x18] sm:$0xff]
        %v516 = vld [vmem:[%s452 + $0x20] sm:$0xff]
        %v517 = vld [vmem:[%s452 + $0x28] sm:$0xff]
        %v518 = vld [vmem:[%s452 + $0x30] sm:$0xff]
        %v519 = vld [vmem:[%s452 + $0x38] sm:$0xff]
        %v520 = vld [vmem:[%s452 + $0x40] sm:$0xff]
        %v521 = vld [vmem:[%s452 + $0x48] sm:$0xff]
        %v522 = vld [vmem:[%s452 + $0x50] sm:$0xff]
        %v523 = vld [vmem:[%s452 + $0x58] sm:$0xff]
        %v524 = vld [vmem:[%s452 + $0x60] sm:$0xff]
        %v525 = vld [vmem:[%s452 + $0x68] sm:$0xff]
        %v526 = vld [vmem:[%s452 + $0x70] sm:$0xff]
        %v527 = vld [vmem:[%s452 + $0x78] sm:$0xff]
        %v528 = vld [vmem:[%s452 + $0x80] sm:$0xff]
        %v529 = vld [vmem:[%s452 + $0x88] sm:$0xff]
        %v530 = vld [vmem:[%s452 + $0x90] sm:$0xff]
        %v531 = vld [vmem:[%s452 + $0x98] sm:$0xff]
        %v532 = vld [vmem:[%s452 + $0xa0] sm:$0xff]
        %v533 = vld [vmem:[%s452 + $0xa8] sm:$0xff]
        %v534 = vld [vmem:[%s452 + $0xb0] sm:$0xff]
        %v535 = vld [vmem:[%s452 + $0xb8] sm:$0xff]
        %v536 = vld [vmem:[%s452 + $0xc0] sm:$0xff]
        %v537 = vld [vmem:[%s452 + $0xc8] sm:$0xff]
        %v538 = vld [vmem:[%s452 + $0xd0] sm:$0xff]
        %v539 = vld [vmem:[%s452 + $0xd8] sm:$0xff]
        %v540 = vld [vmem:[%s452 + $0xe0] sm:$0xff]
        %v541 = vld [vmem:[%s452 + $0xe8] sm:$0xff]
        %v542 = vld [vmem:[%s452 + $0xf0] sm:$0xff]
        %v543 = vld [vmem:[%s452 + $0xf8] sm:$0xff]
        %v544 = vld [vmem:[%s452 + $0x100] sm:$0xff]
        %v545 = vld [vmem:[%s452 + $0x108] sm:$0xff]
        %v546 = vld [vmem:[%s452 + $0x110] sm:$0xff]
        %v547 = vld [vmem:[%s452 + $0x118] sm:$0xff]
        %v548 = vld [vmem:[%s452 + $0x120] sm:$0xff]
        %v549 = vld [vmem:[%s452 + $0x128] sm:$0xff]
        %v550 = vld [vmem:[%s452 + $0x130] sm:$0xff]
        %v551 = vld [vmem:[%s452 + $0x138] sm:$0xff]
        %v552 = vld [vmem:[%s452 + $0x140] sm:$0xff]
        %v553 = vld [vmem:[%s452 + $0x148] sm:$0xff]
        %v554 = vld [vmem:[%s452 + $0x150] sm:$0xff]
        %v555 = vld [vmem:[%s452 + $0x158] sm:$0xff]
        %v556 = vld [vmem:[%s452 + $0x160] sm:$0xff]
        %v557 = vld [vmem:[%s452 + $0x168] sm:$0xff]
        %v558 = vld [vmem:[%s452 + $0x170] sm:$0xff]
        %v559 = vld [vmem:[%s452 + $0x178] sm:$0xff]
        %v560 = vld [vmem:[%s452 + $0x180] sm:$0xff]
        %v561 = vld [vmem:[%s452 + $0x188] sm:$0xff]
        %v562 = vld [vmem:[%s452 + $0x190] sm:$0xff]
        %v563 = vld [vmem:[%s452 + $0x198] sm:$0xff]
        %v564 = vld [vmem:[%s452 + $0x1a0] sm:$0xff]
        %v565 = vld [vmem:[%s452 + $0x1a8] sm:$0xff]
        %v566 = vld [vmem:[%s452 + $0x1b0] sm:$0xff]
        %v567 = vld [vmem:[%s452 + $0x1b8] sm:$0xff]
        %v568 = vld [vmem:[%s452 + $0x1c0] sm:$0xff]
        %v569 = vld [vmem:[%s452 + $0x1c8] sm:$0xff]
        %v570 = vld [vmem:[%s452 + $0x1d0] sm:$0xff]
        %v571 = vld [vmem:[%s452 + $0x1d8] sm:$0xff]
        %v572 = vld [vmem:[%s452 + $0x1e0] sm:$0xff]
        %v573 = vld [vmem:[%s452 + $0x1e8] sm:$0xff]
        %v574 = vld [vmem:[%s452 + $0x1f0] sm:$0xff]
        %v575 = vld [vmem:[%s452 + $0x1f8] sm:$0xff]
        %v580 = vunpack.c.l.b16 %v508
        %v581 = vunpack.c.h.b16 %v508
        %v582 = vunpack.c.l.b16 %v509
        %v583 = vunpack.c.h.b16 %v509
        %v584 = vunpack.c.l.b16 %v510
        %v585 = vunpack.c.h.b16 %v510
        %v586 = vunpack.c.l.b16 %v511
        %v587 = vunpack.c.h.b16 %v511
        %v588 = vpack.c.b16 %v584, %v580
        %v589 = vpack.c.b16 %v585, %v581
        %v590 = vpack.c.b16 %v586, %v582
        %v591 = vpack.c.b16 %v587, %v583
        %v660 = vunpack.c.l.b16 %v512
        %v661 = vunpack.c.h.b16 %v512
        %v662 = vunpack.c.l.b16 %v513
        %v663 = vunpack.c.h.b16 %v513
        %v664 = vunpack.c.l.b16 %v514
        %v665 = vunpack.c.h.b16 %v514
        %v666 = vunpack.c.l.b16 %v515
        %v667 = vunpack.c.h.b16 %v515
        %v668 = vunpack.c.l.b16 %v516
        %v669 = vunpack.c.h.b16 %v516
        %v670 = vunpack.c.l.b16 %v517
        %v671 = vunpack.c.h.b16 %v517
        %v672 = vunpack.c.l.b16 %v518
        %v673 = vunpack.c.h.b16 %v518
        %v674 = vunpack.c.l.b16 %v519
        %v675 = vunpack.c.h.b16 %v519
        %v676 = vunpack.c.l.b16 %v520
        %v677 = vunpack.c.h.b16 %v520
        %v678 = vunpack.c.l.b16 %v521
        %v679 = vunpack.c.h.b16 %v521
        %v680 = vunpack.c.l.b16 %v522
        %v681 = vunpack.c.h.b16 %v522
        %v682 = vunpack.c.l.b16 %v523
        %v683 = vunpack.c.h.b16 %v523
        %v684 = vunpack.c.l.b16 %v524
        %v685 = vunpack.c.h.b16 %v524
        %v686 = vunpack.c.l.b16 %v525
        %v687 = vunpack.c.h.b16 %v525
        %v688 = vunpack.c.l.b16 %v526
        %v689 = vunpack.c.h.b16 %v526
        %v690 = vunpack.c.l.b16 %v527
        %v691 = vunpack.c.h.b16 %v527
        %v692 = vunpack.c.l.b16 %v528
        %v693 = vunpack.c.h.b16 %v528
        %v694 = vunpack.c.l.b16 %v529
        %v695 = vunpack.c.h.b16 %v529
        %v696 = vunpack.c.l.b16 %v530
        %v697 = vunpack.c.h.b16 %v530
        %v698 = vunpack.c.l.b16 %v531
        %v699 = vunpack.c.h.b16 %v531
        %v700 = vunpack.c.l.b16 %v532
        %v701 = vunpack.c.h.b16 %v532
        %v702 = vunpack.c.l.b16 %v533
        %v703 = vunpack.c.h.b16 %v533
        %v704 = vunpack.c.l.b16 %v534
        %v705 = vunpack.c.h.b16 %v534
        %v706 = vunpack.c.l.b16 %v535
        %v707 = vunpack.c.h.b16 %v535
        %v708 = vunpack.c.l.b16 %v536
        %v709 = vunpack.c.h.b16 %v536
        %v710 = vunpack.c.l.b16 %v537
        %v711 = vunpack.c.h.b16 %v537
        %v712 = vunpack.c.l.b16 %v538
        %v713 = vunpack.c.h.b16 %v538
        %v714 = vunpack.c.l.b16 %v539
        %v715 = vunpack.c.h.b16 %v539
        %v716 = vunpack.c.l.b16 %v540
        %v717 = vunpack.c.h.b16 %v540
        %v718 = vunpack.c.l.b16 %v541
        %v719 = vunpack.c.h.b16 %v541
        %v720 = vunpack.c.l.b16 %v542
        %v721 = vunpack.c.h.b16 %v542
        %v722 = vunpack.c.l.b16 %v543
        %v723 = vunpack.c.h.b16 %v543
        %v724 = vunpack.c.l.b16 %v544
        %v725 = vunpack.c.h.b16 %v544
        %v726 = vunpack.c.l.b16 %v545
        %v727 = vunpack.c.h.b16 %v545
        %v728 = vunpack.c.l.b16 %v546
        %v729 = vunpack.c.h.b16 %v546
        %v730 = vunpack.c.l.b16 %v547
        %v731 = vunpack.c.h.b16 %v547
        %v732 = vunpack.c.l.b16 %v548
        %v733 = vunpack.c.h.b16 %v548
        %v734 = vunpack.c.l.b16 %v549
        %v735 = vunpack.c.h.b16 %v549
        %v736 = vunpack.c.l.b16 %v550
        %v737 = vunpack.c.h.b16 %v550
        %v738 = vunpack.c.l.b16 %v551
        %v739 = vunpack.c.h.b16 %v551
        %v740 = vunpack.c.l.b16 %v552
        %v741 = vunpack.c.h.b16 %v552
        %v742 = vunpack.c.l.b16 %v553
        %v743 = vunpack.c.h.b16 %v553
        %v744 = vunpack.c.l.b16 %v554
        %v745 = vunpack.c.h.b16 %v554
        %v746 = vunpack.c.l.b16 %v555
        %v747 = vunpack.c.h.b16 %v555
        %v748 = vunpack.c.l.b16 %v556
        %v749 = vunpack.c.h.b16 %v556
        %v750 = vunpack.c.l.b16 %v557
        %v751 = vunpack.c.h.b16 %v557
        %v752 = vunpack.c.l.b16 %v558
        %v753 = vunpack.c.h.b16 %v558
        %v754 = vunpack.c.l.b16 %v559
        %v755 = vunpack.c.h.b16 %v559
        %v756 = vunpack.c.l.b16 %v560
        %v757 = vunpack.c.h.b16 %v560
        %v758 = vunpack.c.l.b16 %v561
        %v759 = vunpack.c.h.b16 %v561
        %v760 = vunpack.c.l.b16 %v562
        %v761 = vunpack.c.h.b16 %v562
        %v762 = vunpack.c.l.b16 %v563
        %v763 = vunpack.c.h.b16 %v563
        %v764 = vunpack.c.l.b16 %v564
        %v765 = vunpack.c.h.b16 %v564
        %v766 = vunpack.c.l.b16 %v565
        %v767 = vunpack.c.h.b16 %v565
        %v768 = vunpack.c.l.b16 %v566
        %v769 = vunpack.c.h.b16 %v566
        %v770 = vunpack.c.l.b16 %v567
        %v771 = vunpack.c.h.b16 %v567
        %v772 = vunpack.c.l.b16 %v568
        %v773 = vunpack.c.h.b16 %v568
        %v774 = vunpack.c.l.b16 %v569
        %v775 = vunpack.c.h.b16 %v569
        %v776 = vunpack.c.l.b16 %v570
        %v777 = vunpack.c.h.b16 %v570
        %v778 = vunpack.c.l.b16 %v571
        %v779 = vunpack.c.h.b16 %v571
        %v780 = vunpack.c.l.b16 %v572
        %v781 = vunpack.c.h.b16 %v572
        %v782 = vunpack.c.l.b16 %v573
        %v783 = vunpack.c.h.b16 %v573
        %v784 = vunpack.c.l.b16 %v574
        %v785 = vunpack.c.h.b16 %v574
        %v786 = vunpack.c.l.b16 %v575
        %v787 = vunpack.c.h.b16 %v575
        %v788 = vpack.c.b16 %v662, %v660
        %v789 = vpack.c.b16 %v663, %v661
        %v790 = vpack.c.b16 %v666, %v664
        %v791 = vpack.c.b16 %v667, %v665
        %v792 = vpack.c.b16 %v670, %v668
        %v793 = vpack.c.b16 %v671, %v669
        %v794 = vpack.c.b16 %v674, %v672
        %v795 = vpack.c.b16 %v675, %v673
        %v796 = vpack.c.b16 %v678, %v676
        %v797 = vpack.c.b16 %v679, %v677
        %v798 = vpack.c.b16 %v682, %v680
        %v799 = vpack.c.b16 %v683, %v681
        %v800 = vpack.c.b16 %v686, %v684
        %v801 = vpack.c.b16 %v687, %v685
        %v802 = vpack.c.b16 %v690, %v688
        %v803 = vpack.c.b16 %v691, %v689
        %v804 = vpack.c.b16 %v694, %v692
        %v805 = vpack.c.b16 %v695, %v693
        %v806 = vpack.c.b16 %v698, %v696
        %v807 = vpack.c.b16 %v699, %v697
        %v808 = vpack.c.b16 %v702, %v700
        %v809 = vpack.c.b16 %v703, %v701
        %v810 = vpack.c.b16 %v706, %v704
        %v811 = vpack.c.b16 %v707, %v705
        %v812 = vpack.c.b16 %v710, %v708
        %v813 = vpack.c.b16 %v711, %v709
        %v814 = vpack.c.b16 %v714, %v712
        %v815 = vpack.c.b16 %v715, %v713
        %v816 = vpack.c.b16 %v718, %v716
        %v817 = vpack.c.b16 %v719, %v717
        %v818 = vpack.c.b16 %v722, %v720
        %v819 = vpack.c.b16 %v723, %v721
        %v820 = vpack.c.b16 %v726, %v724
        %v821 = vpack.c.b16 %v727, %v725
        %v822 = vpack.c.b16 %v730, %v728
        %v823 = vpack.c.b16 %v731, %v729
        %v824 = vpack.c.b16 %v734, %v732
        %v825 = vpack.c.b16 %v735, %v733
        %v826 = vpack.c.b16 %v738, %v736
        %v827 = vpack.c.b16 %v739, %v737
        %v828 = vpack.c.b16 %v742, %v740
        %v829 = vpack.c.b16 %v743, %v741
        %v830 = vpack.c.b16 %v746, %v744
        %v831 = vpack.c.b16 %v747, %v745
        %v832 = vpack.c.b16 %v750, %v748
        %v833 = vpack.c.b16 %v751, %v749
        %v834 = vpack.c.b16 %v754, %v752
        %v835 = vpack.c.b16 %v755, %v753
        %v836 = vpack.c.b16 %v758, %v756
        %v837 = vpack.c.b16 %v759, %v757
        %v838 = vpack.c.b16 %v762, %v760
        %v839 = vpack.c.b16 %v763, %v761
        %v840 = vpack.c.b16 %v766, %v764
        %v841 = vpack.c.b16 %v767, %v765
        %v842 = vpack.c.b16 %v770, %v768
        %v843 = vpack.c.b16 %v771, %v769
        %v844 = vpack.c.b16 %v774, %v772
        %v845 = vpack.c.b16 %v775, %v773
        %v846 = vpack.c.b16 %v778, %v776
        %v847 = vpack.c.b16 %v779, %v777
        %v848 = vpack.c.b16 %v782, %v780
        %v849 = vpack.c.b16 %v783, %v781
        %v850 = vpack.c.b16 %v786, %v784
        %v851 = vpack.c.b16 %v787, %v785
        %916 = vmatprep.subr.bf16.mxu0 %v789
        %917 = vmatpush1.bf16.msra.mxu0 %v788
        %918 = vmatprep.subr.bf16.mxu0 %v791
        %919 = vmatpush1.bf16.msra.mxu0 %v790
        %920 = vmatprep.subr.bf16.mxu0 %v793
        %921 = vmatpush1.bf16.msra.mxu0 %v792
        %922 = vmatprep.subr.bf16.mxu0 %v795
        %923 = vmatpush1.bf16.msra.mxu0 %v794
        %924 = vmatprep.subr.bf16.mxu0 %v797
        %925 = vmatpush1.bf16.msra.mxu0 %v796
        %926 = vmatprep.subr.bf16.mxu0 %v799
        %927 = vmatpush1.bf16.msra.mxu0 %v798
        %928 = vmatprep.subr.bf16.mxu0 %v801
        %929 = vmatpush1.bf16.msra.mxu0 %v800
        %930 = vmatprep.subr.bf16.mxu0 %v803
        %931 = vmatpush1.bf16.msra.mxu0 %v802
        %932 = vmatprep.subr.bf16.mxu0 %v805
        %933 = vmatpush1.bf16.msra.mxu0 %v804
        %934 = vmatprep.subr.bf16.mxu0 %v807
        %935 = vmatpush1.bf16.msra.mxu0 %v806
        %936 = vmatprep.subr.bf16.mxu0 %v809
        %937 = vmatpush1.bf16.msra.mxu0 %v808
        %938 = vmatprep.subr.bf16.mxu0 %v811
        %939 = vmatpush1.bf16.msra.mxu0 %v810
        %940 = vmatprep.subr.bf16.mxu0 %v813
        %941 = vmatpush1.bf16.msra.mxu0 %v812
        %942 = vmatprep.subr.bf16.mxu0 %v815
        %943 = vmatpush1.bf16.msra.mxu0 %v814
        %944 = vmatprep.subr.bf16.mxu0 %v817
        %945 = vmatpush1.bf16.msra.mxu0 %v816
        %946 = vmatprep.subr.bf16.mxu0 %v819
        %947 = vmatpush1.bf16.msra.mxu0 %v818
        %948 = vmatprep.mubr.bf16.mxu0 %v589
        %949 = vmatmul.mubr.bf16.gmra.mrb[0].mxu0 %v588
        %v950 = vpop.f32.mrb[0].mxu0
        %v951 = vadd.f32 0.0, %v950
        %v952 = vpop.f32.mrb[0].mxu0
        %v953 = vadd.f32 0.0, %v952
        %v954 = vpop.f32.mrb[0].mxu0
        %v955 = vadd.f32 0.0, %v954
        %v956 = vpop.f32.mrb[0].mxu0
        %v957 = vadd.f32 0.0, %v956
        %958 = vdwg.mxu0
        %959 = vmatprep.subr.bf16.mxu0 %v821
        %960 = vmatpush1.bf16.msra.mxu0 %v820
        %961 = vmatprep.subr.bf16.mxu0 %v823
        %962 = vmatpush1.bf16.msra.mxu0 %v822
        %963 = vmatprep.subr.bf16.mxu0 %v825
        %964 = vmatpush1.bf16.msra.mxu0 %v824
        %965 = vmatprep.subr.bf16.mxu0 %v827
        %966 = vmatpush1.bf16.msra.mxu0 %v826
        %967 = vmatprep.subr.bf16.mxu0 %v829
        %968 = vmatpush1.bf16.msra.mxu0 %v828
        %969 = vmatprep.subr.bf16.mxu0 %v831
        %970 = vmatpush1.bf16.msra.mxu0 %v830
        %971 = vmatprep.subr.bf16.mxu0 %v833
        %972 = vmatpush1.bf16.msra.mxu0 %v832
        %973 = vmatprep.subr.bf16.mxu0 %v835
        %974 = vmatpush1.bf16.msra.mxu0 %v834
        %975 = vmatprep.subr.bf16.mxu0 %v837
        %976 = vmatpush1.bf16.msra.mxu0 %v836
        %977 = vmatprep.subr.bf16.mxu0 %v839
        %978 = vmatpush1.bf16.msra.mxu0 %v838
        %979 = vmatprep.subr.bf16.mxu0 %v841
        %980 = vmatpush1.bf16.msra.mxu0 %v840
        %981 = vmatprep.subr.bf16.mxu0 %v843
        %982 = vmatpush1.bf16.msra.mxu0 %v842
        %983 = vmatprep.subr.bf16.mxu0 %v845
        %984 = vmatpush1.bf16.msra.mxu0 %v844
        %985 = vmatprep.subr.bf16.mxu0 %v847
        %986 = vmatpush1.bf16.msra.mxu0 %v846
        %987 = vmatprep.subr.bf16.mxu0 %v849
        %988 = vmatpush1.bf16.msra.mxu0 %v848
        %989 = vmatprep.subr.bf16.mxu0 %v851
        %990 = vmatpush1.bf16.msra.mxu0 %v850
        %991 = vmatprep.mubr.bf16.mxu0 %v591
        %992 = vmatmul.mubr.bf16.gmra.mrb[0].mxu0 %v590
        %v993 = vpop.f32.mrb[0].mxu0
        %v994 = vadd.f32 %v951, %v993
        %v995 = vpop.f32.mrb[0].mxu0
        %v996 = vadd.f32 %v953, %v995
        %v997 = vpop.f32.mrb[0].mxu0
        %v998 = vadd.f32 %v955, %v997
        %v999 = vpop.f32.mrb[0].mxu0
        %v1000 = vadd.f32 %v957, %v999
        %1001 = vdwg.mxu0
        %v1002 = vadd.f32 %v504, %v994
        %v1003 = vadd.f32 %v505, %v996
        %v1004 = vadd.f32 %v506, %v998
        %v1005 = vadd.f32 %v507, %v1000
        %1006 = vst [vmem:[#allocation2] sm:$0xff] %v1002
        %1007 = vst [vmem:[#allocation2 + $0x8] sm:$0xff] %v1003
        %1008 = vst [vmem:[#allocation2 + $0x10] sm:$0xff] %v1004
        %1009 = vst [vmem:[#allocation2 + $0x18] sm:$0xff] %v1005
        // Predicated region
        $region71: #{a_call__.20} parent=61 // pred_check
          %p1010 = pneg %p496
        $region72: #{a_call__.20} parent=61 // pred_check_branch
          %1012 = sbr.rel (%p1010) target = $region74
        $region73: #{a_call__.20} parent=61 // pred_region
          %v1013 = vld [vmem:[#allocation2] sm:$0xff]
          %v1014 = vld [vmem:[#allocation2 + $0x8] sm:$0xff]
          %v1015 = vld [vmem:[#allocation2 + $0x10] sm:$0xff]
          %v1016 = vld [vmem:[#allocation2 + $0x18] sm:$0xff]
          %v1017 = vpack.c.bf16 %v1015, %v1013
          %v1018 = vpack.c.bf16 %v1016, %v1014
          %v1021 = vunpack.c.l.b16 %v1017
          %v1022 = vunpack.c.l.b16 %v1018
          %v1023 = vunpack.c.h.b16 %v1017
          %v1024 = vunpack.c.h.b16 %v1018
          %v1025 = vpack.c.b16 %v1022, %v1021
          %v1026 = vpack.c.b16 %v1024, %v1023
          %1029 = vst [vmem:[%s479] sm:$0xff] %v1025
          %1030 = vst [vmem:[%s479 + $0x8] sm:$0xff] %v1026
        $region74: #{a_call__.20} parent=61 // pred_fallthru
          _
        %s1031 = sand.u32 %s98, 1
        %s1032 = sand.u32 %s98, 1
        %s1033 = smul.addr %s1032, 16
        %s1034 = scalar_lea.vmem [#allocation4], %s1033
        // Predicated region
        $region75: #{a_call__.20} parent=61 // pred_check
          %p1035 = pneg %p108
        $region76: #{a_call__.20} parent=61 // pred_check_branch
          %1037 = sbr.rel (%p1035) target = $region78
        $region77: #{a_call__.20} parent=61 // pred_region
          %s1038 = smul.u32 2, %s18
          %s1039 = smul.u32 2, %s19
          %s1040 = smul.addr %s1038, 16
          %s1041 = sadd.s32 %s1039, %s1040
          %s1042 = smul.addr %s1041, 4
          %s1043 = scalar_lea.vmem %s2, %s1042
          // Predicated region
          $region79: #{a_call__.20} parent=77 // pred_check
            _
          $region80: #{a_call__.20} parent=77 // pred_check_branch
            %1045 = sbr.rel (0) target = $region82
          $region81: #{a_call__.20} parent=77 // pred_region
            // Predicated region
            $region83: #{a_call__.20} parent=81 // pred_check
              _
            $region84: #{a_call__.20} parent=81 // pred_check_branch
              %1047 = sbr.rel (0) target = $region86
            $region85: #{a_call__.20} parent=81 // pred_region
              // Predicated region
              $region98: #{a_call__.20} parent=85 // pred_check
                _
              $region99: #{a_call__.20} parent=85 // pred_check_branch
                %1064 = sbr.rel (0) target = $region101
              $region100: #{a_call__.20} parent=85 // pred_region
                loop: start=0, step=1, limit=1
                $region102: #{a_call__.20} parent=100 // loop_pre_header
                  _
                $region103: #{a_call__.20} parent=100 // loop_header
                  %s1066 = sphi 0, %s1070
                  %p1067 = scmp.ge.s32.totalorder %s1066, 1
                  %s1071 = sphi %s1034, %s1034
                  %s1072 = sphi %s1043, %s1043
                $region104: #{a_call__.20} parent=100 // loop_header_branch
                  %1069 = sbr.rel (%p1067) target = $region108
                $region105: #{a_call__.20} parent=100 // loop_body
                  %v1073 = vld [vmem:[%s1071] sm:$0xff]
                  %1074 = vst [vmem:[%s1072] sm:$0xff] %v1073
                  %v1075 = vld [vmem:[%s1071 + $0x8] sm:$0xff]
                  %1076 = vst [vmem:[%s1072 + $0x40] sm:$0xff] %v1075
                $region106: #{a_call__.20} parent=100 // loop_footer
                  %s1070 = sadd.s32 1, %s1066
                $region107: #{a_call__.20} parent=100 // loop_footer_branch
                  %1065 = sbr.rel target = $region103
                $region108: #{a_call__.20} parent=100 // loop_exit
                  _
              $region101: #{a_call__.20} parent=85 // pred_fallthru
                _
              // Predicated region
              $region109: #{a_call__.20} parent=85 // pred_check
                _
              $region110: #{a_call__.20} parent=85 // pred_check_branch
                %1078 = sbr.rel target = $region112
              $region111: #{a_call__.20} parent=85 // pred_region
                _
              $region112: #{a_call__.20} parent=85 // pred_fallthru
                _
            $region86: #{a_call__.20} parent=81 // pred_fallthru
              _
            // Predicated region
            $region87: #{a_call__.20} parent=81 // pred_check
              _
            $region88: #{a_call__.20} parent=81 // pred_check_branch
              %1049 = sbr.rel target = $region90
            $region89: #{a_call__.20} parent=81 // pred_region
              loop: start=0, step=1, limit=1
              $region91: #{a_call__.20} parent=89 // loop_pre_header
                _
              $region92: #{a_call__.20} parent=89 // loop_header
                %s1052 = sphi 0, %s1056
                %p1053 = scmp.ge.s32.totalorder %s1052, 1
                %s1057 = sphi %s1034, %s1034
                %s1058 = sphi %s1043, %s1043
              $region93: #{a_call__.20} parent=89 // loop_header_branch
                %1055 = sbr.rel (%p1053) target = $region97
              $region94: #{a_call__.20} parent=89 // loop_body
                %v1059 = vld [vmem:[%s1057] sm:$0xff]
                %1060 = vst [vmem:[%s1058] sm:$0xff] %v1059
                %v1061 = vld [vmem:[%s1057 + $0x8] sm:$0xff]
                %1062 = vst [vmem:[%s1058 + $0x40] sm:$0xff] %v1061
              $region95: #{a_call__.20} parent=89 // loop_footer
                %s1056 = sadd.s32 1, %s1052
              $region96: #{a_call__.20} parent=89 // loop_footer_branch
                %1051 = sbr.rel target = $region92
              $region97: #{a_call__.20} parent=89 // loop_exit
                _
            $region90: #{a_call__.20} parent=81 // pred_fallthru
              _
          $region82: #{a_call__.20} parent=77 // pred_fallthru
            _
          %1079 = vnop
        $region78: #{a_call__.20} parent=61 // pred_fallthru
          _
      $region62: #{a_call__.20} parent=5 // pred_fallthru
        _
      %p1080 = scmp.le.s32.totalorder 2, %s8
      // Predicated region
      $region113: #{a_call__.20} parent=5 // pred_check
        %p1081 = pneg %p1080
      $region114: #{a_call__.20} parent=5 // pred_check_branch
        %1083 = sbr.rel (%p1081) target = $region116
      $region115: #{a_call__.20} parent=5 // pred_region
        %s1084 = ssub.s32 %s8, 2
        // Predicated region
        $region117: #{a_call__.20} parent=115 // pred_check
          %p1085 = pneg %p114
        $region118: #{a_call__.20} parent=115 // pred_check_branch
          %1087 = sbr.rel (%p1085) target = $region120
        $region119: #{a_call__.20} parent=115 // pred_region
          %s1088 = sand.u32 %s99, 1
          %s1089 = sand.u32 %s99, 1
          %s1090 = smul.addr %s1089, 16
          %s1091 = scalar_lea.vmem [#allocation4], %s1090
        $region120: #{a_call__.20} parent=115 // pred_fallthru
          _
      $region116: #{a_call__.20} parent=5 // pred_fallthru
        _
    $region6: #{a_call__.20} parent=1 // loop_footer
      %s12 = sadd.s32 1, %s8
    $region7: #{a_call__.20} parent=1 // loop_footer_branch
      %7 = sbr.rel target = $region3
    $region8: #{a_call__.20} parent=1 // loop_exit
      _

// kernel: a_call__.21
$region0: #{a_call__.21}
  #allocation0 [shape = 'u32[]', space=smem, size = 0x4, offset = 0x4, fixed_abs, tag = 'smem constant byte address 0x4 - core index']
  #allocation1 [shape = 'u32[144,128]{1,0:T(1,128)}', space=vmem, size = 0x12000, scoped, tag = 'internal scratch']
  #allocation2 [shape = 'f32[16,256]{1,0:T(8,128)}', space=vmem, size = 0x4000, scoped, tag = 'scratch operand']
  %s0 = inlined_call_operand.vmem [shape: bf16[16,2048], index: 0, kind: input, shape index: {}, may-alias: {0,1}]
  %s1 = inlined_call_operand.vmem [shape: bf16[16,2048], index: 1, kind: input, shape index: {}, may-alias: {0,1}]
  %s2 = inlined_call_operand.vmem [shape: bf16[1024,512], index: 2, kind: input, shape index: {}]
  %s3 = inlined_call_operand.vmem [shape: bf16[16,512], index: 3, kind: output, shape index: {}]
  %s4 = sld [smem:[#allocation0]]
  $region171: #{a_call__.21} parent=0
    _
  %s6 = ssub.s32 1, %s4
  %s7 = scalar_select 0, %s6, %s4
  $region1: #{a_call__.21} parent=0
    #allocation3 [shape = 'u8[32768]{0}', space=vmem, size = 0x8000, scoped, tag = 'input window, operand 0']
    #allocation4 [shape = 'u8[32768]{0}', space=vmem, size = 0x8000, scoped, tag = 'input window, operand 1']
    #allocation5 [shape = 'u8[524288]{0}', space=vmem, size = 0x80000, scoped, tag = 'input window, operand 2']
    #allocation6 [shape = 'u8[16384]{0}', space=vmem, size = 0x4000, scoped, tag = 'output window, operand 0']
    loop: start=0, step=1, limit=6
    $region2: #{a_call__.21} parent=1 // loop_pre_header
      _
    $region3: #{a_call__.21} parent=1 // loop_header
      %s9 = sphi 0, %s13
      %p10 = scmp.ge.s32.totalorder %s9, 6
      %s16 = sphi 0, %s35
      %s17 = sphi 0, %s31
      %s18 = sphi 0, %s27
      %s19 = sphi 0, %s16
      %s20 = sphi 0, %s17
      %s21 = sphi 0, %s18
      %s22 = sphi 0, %s19
      %s23 = sphi 0, %s20
      %s24 = sphi 0, %s21
      %s40 = sphi 0, %s42
      %s43 = sphi 0, %s40
      %s44 = sphi 0, %s43
      %s60 = sphi 0, %s44
      %s70 = sphi 0, %s72
      %s73 = sphi 0, %s70
      %s74 = sphi 0, %s73
      %s90 = sphi 0, %s74
      %s98 = sphi 0, %s100
      %s101 = sphi 0, %s98
      %s102 = sphi 0, %s101
      %s118 = sphi 0, %s102
      %s126 = sphi 0, %s128
      %s129 = sphi 0, %s126
      %s130 = sphi 0, %s129
      %s146 = sphi 0, %s130
    $region4: #{a_call__.21} parent=1 // loop_header_branch
      %12 = sbr.rel (%p10) target = $region8
    $region5: #{a_call__.21} parent=1 // loop_body
      %s14 = ssub.s32 %s9, 1
      %s15 = ssub.s32 %s9, 2
      %s25 = sadd.s32 1, %s18
      %p26 = scmp.ge.s32.totalorder %s25, 2
      %s27 = scalar_select %p26, 0, %s25
      %s28 = sadd.s32 1, %s17
      %s29 = scalar_select %p26, %s28, %s17
      %p30 = scmp.ge.s32.totalorder %s29, 2
      %s31 = scalar_select %p30, 0, %s29
      %s32 = sadd.s32 1, %s16
      %s33 = scalar_select %p30, %s32, %s16
      %p34 = scmp.ge.s32.totalorder %s33, 1
      %s35 = scalar_select %p34, 0, %s33
      %s36 = ssub.s32 %s16, %s35
      %s37 = ssub.s32 %s18, %s27
      %s38 = sor.u32 %s36, %s37
      %p39 = scmp.eq.s32.totalorder %s38, 0
      %s41 = sadd.s32 %s40, 1
      %s42 = scalar_select %p39, %s40, %s41
      %p45 = pneg %p39
      %p46 = scmp.eq.s32.totalorder %s9, 3
      %p47 = por %p45, %p46
      %p48 = scmp.ne.s32.totalorder %s40, %s43
      %p49 = scmp.eq.s32.totalorder %s9, 0
      %p50 = por %p48, %p49
      %p51 = scmp.ne.s32.totalorder %s40, %s43
      %p52 = scmp.eq.s32.totalorder %s14, 3
      %p53 = por %p51, %p52
      %p54 = scmp.ne.s32.totalorder %s43, %s44
      %p55 = scmp.eq.s32.totalorder %s14, 0
      %p56 = por %p54, %p55
      %p57 = scmp.ne.s32.totalorder %s43, %s44
      %p58 = scmp.eq.s32.totalorder %s15, 3
      %p59 = por %p57, %p58
      %p61 = scmp.ne.s32.totalorder %s44, %s60
      %p62 = scmp.eq.s32.totalorder %s15, 0
      %p63 = por %p61, %p62
      %s64 = sadd.s32 %s18, 2
      %s65 = sadd.s32 %s27, 2
      %s66 = ssub.s32 %s16, %s35
      %s67 = ssub.s32 %s64, %s65
      %s68 = sor.u32 %s66, %s67
      %p69 = scmp.eq.s32.totalorder %s68, 0
      %s71 = sadd.s32 %s70, 1
      %s72 = scalar_select %p69, %s70, %s71
      %p75 = pneg %p69
      %p76 = scmp.eq.s32.totalorder %s9, 3
      %p77 = por %p75, %p76
      %p78 = scmp.ne.s32.totalorder %s70, %s73
      %p79 = scmp.eq.s32.totalorder %s9, 0
      %p80 = por %p78, %p79
      %p81 = scmp.ne.s32.totalorder %s70, %s73
      %p82 = scmp.eq.s32.totalorder %s14, 3
      %p83 = por %p81, %p82
      %p84 = scmp.ne.s32.totalorder %s73, %s74
      %p85 = scmp.eq.s32.totalorder %s14, 0
      %p86 = por %p84, %p85
      %p87 = scmp.ne.s32.totalorder %s73, %s74
      %p88 = scmp.eq.s32.totalorder %s15, 3
      %p89 = por %p87, %p88
      %p91 = scmp.ne.s32.totalorder %s74, %s90
      %p92 = scmp.eq.s32.totalorder %s15, 0
      %p93 = por %p91, %p92
      %s94 = ssub.s32 %s18, %s27
      %s95 = ssub.s32 %s17, %s31
      %s96 = sor.u32 %s94, %s95
      %p97 = scmp.eq.s32.totalorder %s96, 0
      %s99 = sadd.s32 %s98, 1
      %s100 = scalar_select %p97, %s98, %s99
      %p103 = pneg %p97
      %p104 = scmp.eq.s32.totalorder %s9, 3
      %p105 = por %p103, %p104
      %p106 = scmp.ne.s32.totalorder %s98, %s101
      %p107 = scmp.eq.s32.totalorder %s9, 0
      %p108 = por %p106, %p107
      %p109 = scmp.ne.s32.totalorder %s98, %s101
      %p110 = scmp.eq.s32.totalorder %s14, 3
      %p111 = por %p109, %p110
      %p112 = scmp.ne.s32.totalorder %s101, %s102
      %p113 = scmp.eq.s32.totalorder %s14, 0
      %p114 = por %p112, %p113
      %p115 = scmp.ne.s32.totalorder %s101, %s102
      %p116 = scmp.eq.s32.totalorder %s15, 3
      %p117 = por %p115, %p116
      %p119 = scmp.ne.s32.totalorder %s102, %s118
      %p120 = scmp.eq.s32.totalorder %s15, 0
      %p121 = por %p119, %p120
      %s122 = ssub.s32 %s16, %s35
      %s123 = ssub.s32 %s17, %s31
      %s124 = sor.u32 %s122, %s123
      %p125 = scmp.eq.s32.totalorder %s124, 0
      %s127 = sadd.s32 %s126, 1
      %s128 = scalar_select %p125, %s126, %s127
      %p131 = pneg %p125
      %p132 = scmp.eq.s32.totalorder %s9, 3
      %p133 = por %p131, %p132
      %p134 = scmp.ne.s32.totalorder %s126, %s129
      %p135 = scmp.eq.s32.totalorder %s9, 0
      %p136 = por %p134, %p135
      %p137 = scmp.ne.s32.totalorder %s126, %s129
      %p138 = scmp.eq.s32.totalorder %s14, 3
      %p139 = por %p137, %p138
      %p140 = scmp.ne.s32.totalorder %s129, %s130
      %p141 = scmp.eq.s32.totalorder %s14, 0
      %p142 = por %p140, %p141
      %p143 = scmp.ne.s32.totalorder %s129, %s130
      %p144 = scmp.eq.s32.totalorder %s15, 3
      %p145 = por %p143, %p144
      %p147 = scmp.ne.s32.totalorder %s130, %s146
      %p148 = scmp.eq.s32.totalorder %s15, 0
      %p149 = por %p147, %p148
      %p150 = scmp.le.s32.totalorder 1, %s9
      %p151 = scmp.lt.s32.totalorder %s9, 5
      %p152 = pnand %p150, %p151
      %p153 = pneg %p152
      // Predicated region
      $region9: #{a_call__.21} parent=5 // pred_check
        _
      $region10: #{a_call__.21} parent=5 // pred_check_branch
        %155 = sbr.rel (%p152) target = $region12
      $region11: #{a_call__.21} parent=5 // pred_region
        %s156 = ssub.s32 %s9, 1
      $region12: #{a_call__.21} parent=5 // pred_fallthru
        _
      %p157 = scmp.lt.s32.totalorder %s9, 4
      // Predicated region
      $region13: #{a_call__.21} parent=5 // pred_check
        %p158 = pneg %p157
      $region14: #{a_call__.21} parent=5 // pred_check_branch
        %160 = sbr.rel (%p158) target = $region16
      $region15: #{a_call__.21} parent=5 // pred_region
        // Predicated region
        $region17: #{a_call__.21} parent=15 // pred_check
          %p161 = pneg %p50
        $region18: #{a_call__.21} parent=15 // pred_check_branch
          %163 = sbr.rel (%p161) target = $region20
        $region19: #{a_call__.21} parent=15 // pred_region
          %s164 = sand.u32 %s40, 1
          %s165 = sand.u32 %s40, 1
          %s166 = smul.addr %s165, 32
          %s167 = scalar_lea.vmem [#allocation3], %s166
          %s168 = smul.u32 2, %s16
          %s169 = smul.u32 4, %s18
          %s170 = smul.addr %s168, 16
          %s171 = sadd.s32 %s169, %s170
          %s172 = smul.addr %s171, 4
          %s173 = scalar_lea.vmem %s0, %s172
          // Predicated region
          $region21: #{a_call__.21} parent=19 // pred_check
            _
          $region22: #{a_call__.21} parent=19 // pred_check_branch
            %175 = sbr.rel (0) target = $region24
          $region23: #{a_call__.21} parent=19 // pred_region
            // Predicated region
            $region25: #{a_call__.21} parent=23 // pred_check
              _
            $region26: #{a_call__.21} parent=23 // pred_check_branch
              %177 = sbr.rel (0) target = $region28
            $region27: #{a_call__.21} parent=23 // pred_region
              loop: start=0, step=1, limit=1
              $region29: #{a_call__.21} parent=27 // loop_pre_header
                _
              $region30: #{a_call__.21} parent=27 // loop_header
                %s179 = sphi 0, %s183
                %p180 = scmp.ge.s32.totalorder %s179, 1
                %s184 = sphi %s173, %s173
                %s185 = sphi %s167, %s167
              $region31: #{a_call__.21} parent=27 // loop_header_branch
                %182 = sbr.rel (%p180) target = $region35
              $region32: #{a_call__.21} parent=27 // loop_body
                %v186 = vld [vmem:[%s184] sm:$0xff]
                %187 = vst [vmem:[%s185] sm:$0xff] %v186
                %v188 = vld [vmem:[%s184 + $0x8] sm:$0xff]
                %189 = vst [vmem:[%s185 + $0x8] sm:$0xff] %v188
                %v190 = vld [vmem:[%s184 + $0x40] sm:$0xff]
                %191 = vst [vmem:[%s185 + $0x10] sm:$0xff] %v190
                %v192 = vld [vmem:[%s184 + $0x48] sm:$0xff]
                %193 = vst [vmem:[%s185 + $0x18] sm:$0xff] %v192
              $region33: #{a_call__.21} parent=27 // loop_footer
                %s183 = sadd.s32 1, %s179
              $region34: #{a_call__.21} parent=27 // loop_footer_branch
                %178 = sbr.rel target = $region30
              $region35: #{a_call__.21} parent=27 // loop_exit
                _
            $region28: #{a_call__.21} parent=23 // pred_fallthru
              _
            // Predicated region
            $region36: #{a_call__.21} parent=23 // pred_check
              _
            $region37: #{a_call__.21} parent=23 // pred_check_branch
              %195 = sbr.rel target = $region39
            $region38: #{a_call__.21} parent=23 // pred_region
              _
            $region39: #{a_call__.21} parent=23 // pred_fallthru
              _
          $region24: #{a_call__.21} parent=19 // pred_fallthru
            _
          %196 = vnop
        $region20: #{a_call__.21} parent=15 // pred_fallthru
          _
        // Predicated region
        $region40: #{a_call__.21} parent=15 // pred_check
          %p197 = pneg %p80
        $region41: #{a_call__.21} parent=15 // pred_check_branch
          %199 = sbr.rel (%p197) target = $region43
        $region42: #{a_call__.21} parent=15 // pred_region
          %s200 = sand.u32 %s70, 1
          %s201 = sand.u32 %s70, 1
          %s202 = smul.addr %s201, 32
          %s203 = scalar_lea.vmem [#allocation4], %s202
          %s204 = sadd.s32 %s18, 2
          %s205 = smul.u32 2, %s16
          %s206 = smul.u32 4, %s204
          %s207 = smul.addr %s205, 16
          %s208 = sadd.s32 %s206, %s207
          %s209 = smul.addr %s208, 4
          %s210 = scalar_lea.vmem %s1, %s209
          // Predicated region
          $region44: #{a_call__.21} parent=42 // pred_check
            _
          $region45: #{a_call__.21} parent=42 // pred_check_branch
            %212 = sbr.rel (0) target = $region47
          $region46: #{a_call__.21} parent=42 // pred_region
            // Predicated region
            $region48: #{a_call__.21} parent=46 // pred_check
              _
            $region49: #{a_call__.21} parent=46 // pred_check_branch
              %214 = sbr.rel (0) target = $region51
            $region50: #{a_call__.21} parent=46 // pred_region
              loop: start=0, step=1, limit=1
              $region52: #{a_call__.21} parent=50 // loop_pre_header
                _
              $region53: #{a_call__.21} parent=50 // loop_header
                %s216 = sphi 0, %s220
                %p217 = scmp.ge.s32.totalorder %s216, 1
                %s221 = sphi %s210, %s210
                %s222 = sphi %s203, %s203
              $region54: #{a_call__.21} parent=50 // loop_header_branch
                %219 = sbr.rel (%p217) target = $region58
              $region55: #{a_call__.21} parent=50 // loop_body
                %v223 = vld [vmem:[%s221] sm:$0xff]
                %224 = vst [vmem:[%s222] sm:$0xff] %v223
                %v225 = vld [vmem:[%s221 + $0x8] sm:$0xff]
                %226 = vst [vmem:[%s222 + $0x8] sm:$0xff] %v225
                %v227 = vld [vmem:[%s221 + $0x40] sm:$0xff]
                %228 = vst [vmem:[%s222 + $0x10] sm:$0xff] %v227
                %v229 = vld [vmem:[%s221 + $0x48] sm:$0xff]
                %230 = vst [vmem:[%s222 + $0x18] sm:$0xff] %v229
              $region56: #{a_call__.21} parent=50 // loop_footer
                %s220 = sadd.s32 1, %s216
              $region57: #{a_call__.21} parent=50 // loop_footer_branch
                %215 = sbr.rel target = $region53
              $region58: #{a_call__.21} parent=50 // loop_exit
                _
            $region51: #{a_call__.21} parent=46 // pred_fallthru
              _
            // Predicated region
            $region59: #{a_call__.21} parent=46 // pred_check
              _
            $region60: #{a_call__.21} parent=46 // pred_check_branch
              %232 = sbr.rel target = $region62
            $region61: #{a_call__.21} parent=46 // pred_region
              _
            $region62: #{a_call__.21} parent=46 // pred_fallthru
              _
          $region47: #{a_call__.21} parent=42 // pred_fallthru
            _
          %233 = vnop
        $region43: #{a_call__.21} parent=15 // pred_fallthru
          _
        // Predicated region
        $region63: #{a_call__.21} parent=15 // pred_check
          %p234 = pneg %p108
        $region64: #{a_call__.21} parent=15 // pred_check_branch
          %236 = sbr.rel (%p234) target = $region66
        $region65: #{a_call__.21} parent=15 // pred_region
          %s237 = sand.u32 %s98, 1
          %s238 = sand.u32 %s98, 1
          %s239 = smul.addr %s238, 512
          %s240 = scalar_lea.vmem [#allocation5], %s239
          %s241 = smul.u32 64, %s18
          %s242 = smul.u32 2, %s17
          %s243 = smul.addr %s241, 4
          %s244 = sadd.s32 %s242, %s243
          %s245 = smul.addr %s244, 4
          %s246 = scalar_lea.vmem %s2, %s245
          // Predicated region
          $region67: #{a_call__.21} parent=65 // pred_check
            _
          $region68: #{a_call__.21} parent=65 // pred_check_branch
            %248 = sbr.rel (0) target = $region70
          $region69: #{a_call__.21} parent=65 // pred_region
            // Predicated region
            $region71: #{a_call__.21} parent=69 // pred_check
              _
            $region72: #{a_call__.21} parent=69 // pred_check_branch
              %250 = sbr.rel (0) target = $region74
            $region73: #{a_call__.21} parent=69 // pred_region
              // Predicated region
              $region86: #{a_call__.21} parent=73 // pred_check
                _
              $region87: #{a_call__.21} parent=73 // pred_check_branch
                %391 = sbr.rel (0) target = $region89
              $region88: #{a_call__.21} parent=73 // pred_region
                loop: start=0, step=1, limit=1
                $region90: #{a_call__.21} parent=88 // loop_pre_header
                  _
                $region91: #{a_call__.21} parent=88 // loop_header
                  %s393 = sphi 0, %s397
                  %p394 = scmp.ge.s32.totalorder %s393, 1
                  %s398 = sphi %s246, %s246
                  %s399 = sphi %s240, %s240
                $region92: #{a_call__.21} parent=88 // loop_header_branch
                  %396 = sbr.rel (%p394) target = $region96
                $region93: #{a_call__.21} parent=88 // loop_body
                  %v400 = vld [vmem:[%s398] sm:$0xff]
                  %401 = vst [vmem:[%s399] sm:$0xff] %v400
                  %v402 = vld [vmem:[%s398 + $0x10] sm:$0xff]
                  %403 = vst [vmem:[%s399 + $0x8] sm:$0xff] %v402
                  %v404 = vld [vmem:[%s398 + $0x20] sm:$0xff]
                  %405 = vst [vmem:[%s399 + $0x10] sm:$0xff] %v404
                  %v406 = vld [vmem:[%s398 + $0x30] sm:$0xff]
                  %407 = vst [vmem:[%s399 + $0x18] sm:$0xff] %v406
                  %v408 = vld [vmem:[%s398 + $0x40] sm:$0xff]
                  %409 = vst [vmem:[%s399 + $0x20] sm:$0xff] %v408
                  %v410 = vld [vmem:[%s398 + $0x50] sm:$0xff]
                  %411 = vst [vmem:[%s399 + $0x28] sm:$0xff] %v410
                  %v412 = vld [vmem:[%s398 + $0x60] sm:$0xff]
                  %413 = vst [vmem:[%s399 + $0x30] sm:$0xff] %v412
                  %v414 = vld [vmem:[%s398 + $0x70] sm:$0xff]
                  %415 = vst [vmem:[%s399 + $0x38] sm:$0xff] %v414
                  %v416 = vld [vmem:[%s398 + $0x80] sm:$0xff]
                  %417 = vst [vmem:[%s399 + $0x40] sm:$0xff] %v416
                  %v418 = vld [vmem:[%s398 + $0x90] sm:$0xff]
                  %419 = vst [vmem:[%s399 + $0x48] sm:$0xff] %v418
                  %v420 = vld [vmem:[%s398 + $0xa0] sm:$0xff]
                  %421 = vst [vmem:[%s399 + $0x50] sm:$0xff] %v420
                  %v422 = vld [vmem:[%s398 + $0xb0] sm:$0xff]
                  %423 = vst [vmem:[%s399 + $0x58] sm:$0xff] %v422
                  %v424 = vld [vmem:[%s398 + $0xc0] sm:$0xff]
                  %425 = vst [vmem:[%s399 + $0x60] sm:$0xff] %v424
                  %v426 = vld [vmem:[%s398 + $0xd0] sm:$0xff]
                  %427 = vst [vmem:[%s399 + $0x68] sm:$0xff] %v426
                  %v428 = vld [vmem:[%s398 + $0xe0] sm:$0xff]
                  %429 = vst [vmem:[%s399 + $0x70] sm:$0xff] %v428
                  %v430 = vld [vmem:[%s398 + $0xf0] sm:$0xff]
                  %431 = vst [vmem:[%s399 + $0x78] sm:$0xff] %v430
                  %v432 = vld [vmem:[%s398 + $0x100] sm:$0xff]
                  %433 = vst [vmem:[%s399 + $0x80] sm:$0xff] %v432
                  %v434 = vld [vmem:[%s398 + $0x110] sm:$0xff]
                  %435 = vst [vmem:[%s399 + $0x88] sm:$0xff] %v434
                  %v436 = vld [vmem:[%s398 + $0x120] sm:$0xff]
                  %437 = vst [vmem:[%s399 + $0x90] sm:$0xff] %v436
                  %v438 = vld [vmem:[%s398 + $0x130] sm:$0xff]
                  %439 = vst [vmem:[%s399 + $0x98] sm:$0xff] %v438
                  %v440 = vld [vmem:[%s398 + $0x140] sm:$0xff]
                  %441 = vst [vmem:[%s399 + $0xa0] sm:$0xff] %v440
                  %v442 = vld [vmem:[%s398 + $0x150] sm:$0xff]
                  %443 = vst [vmem:[%s399 + $0xa8] sm:$0xff] %v442
                  %v444 = vld [vmem:[%s398 + $0x160] sm:$0xff]
                  %445 = vst [vmem:[%s399 + $0xb0] sm:$0xff] %v444
                  %v446 = vld [vmem:[%s398 + $0x170] sm:$0xff]
                  %447 = vst [vmem:[%s399 + $0xb8] sm:$0xff] %v446
                  %v448 = vld [vmem:[%s398 + $0x180] sm:$0xff]
                  %449 = vst [vmem:[%s399 + $0xc0] sm:$0xff] %v448
                  %v450 = vld [vmem:[%s398 + $0x190] sm:$0xff]
                  %451 = vst [vmem:[%s399 + $0xc8] sm:$0xff] %v450
                  %v452 = vld [vmem:[%s398 + $0x1a0] sm:$0xff]
                  %453 = vst [vmem:[%s399 + $0xd0] sm:$0xff] %v452
                  %v454 = vld [vmem:[%s398 + $0x1b0] sm:$0xff]
                  %455 = vst [vmem:[%s399 + $0xd8] sm:$0xff] %v454
                  %v456 = vld [vmem:[%s398 + $0x1c0] sm:$0xff]
                  %457 = vst [vmem:[%s399 + $0xe0] sm:$0xff] %v456
                  %v458 = vld [vmem:[%s398 + $0x1d0] sm:$0xff]
                  %459 = vst [vmem:[%s399 + $0xe8] sm:$0xff] %v458
                  %v460 = vld [vmem:[%s398 + $0x1e0] sm:$0xff]
                  %461 = vst [vmem:[%s399 + $0xf0] sm:$0xff] %v460
                  %v462 = vld [vmem:[%s398 + $0x1f0] sm:$0xff]
                  %463 = vst [vmem:[%s399 + $0xf8] sm:$0xff] %v462
                  %v464 = vld [vmem:[%s398 + $0x200] sm:$0xff]
                  %465 = vst [vmem:[%s399 + $0x100] sm:$0xff] %v464
                  %v466 = vld [vmem:[%s398 + $0x210] sm:$0xff]
                  %467 = vst [vmem:[%s399 + $0x108] sm:$0xff] %v466
                  %v468 = vld [vmem:[%s398 + $0x220] sm:$0xff]
                  %469 = vst [vmem:[%s399 + $0x110] sm:$0xff] %v468
                  %v470 = vld [vmem:[%s398 + $0x230] sm:$0xff]
                  %471 = vst [vmem:[%s399 + $0x118] sm:$0xff] %v470
                  %v472 = vld [vmem:[%s398 + $0x240] sm:$0xff]
                  %473 = vst [vmem:[%s399 + $0x120] sm:$0xff] %v472
                  %v474 = vld [vmem:[%s398 + $0x250] sm:$0xff]
                  %475 = vst [vmem:[%s399 + $0x128] sm:$0xff] %v474
                  %v476 = vld [vmem:[%s398 + $0x260] sm:$0xff]
                  %477 = vst [vmem:[%s399 + $0x130] sm:$0xff] %v476
                  %v478 = vld [vmem:[%s398 + $0x270] sm:$0xff]
                  %479 = vst [vmem:[%s399 + $0x138] sm:$0xff] %v478
                  %v480 = vld [vmem:[%s398 + $0x280] sm:$0xff]
                  %481 = vst [vmem:[%s399 + $0x140] sm:$0xff] %v480
                  %v482 = vld [vmem:[%s398 + $0x290] sm:$0xff]
                  %483 = vst [vmem:[%s399 + $0x148] sm:$0xff] %v482
                  %v484 = vld [vmem:[%s398 + $0x2a0] sm:$0xff]
                  %485 = vst [vmem:[%s399 + $0x150] sm:$0xff] %v484
                  %v486 = vld [vmem:[%s398 + $0x2b0] sm:$0xff]
                  %487 = vst [vmem:[%s399 + $0x158] sm:$0xff] %v486
                  %v488 = vld [vmem:[%s398 + $0x2c0] sm:$0xff]
                  %489 = vst [vmem:[%s399 + $0x160] sm:$0xff] %v488
                  %v490 = vld [vmem:[%s398 + $0x2d0] sm:$0xff]
                  %491 = vst [vmem:[%s399 + $0x168] sm:$0xff] %v490
                  %v492 = vld [vmem:[%s398 + $0x2e0] sm:$0xff]
                  %493 = vst [vmem:[%s399 + $0x170] sm:$0xff] %v492
                  %v494 = vld [vmem:[%s398 + $0x2f0] sm:$0xff]
                  %495 = vst [vmem:[%s399 + $0x178] sm:$0xff] %v494
                  %v496 = vld [vmem:[%s398 + $0x300] sm:$0xff]
                  %497 = vst [vmem:[%s399 + $0x180] sm:$0xff] %v496
                  %v498 = vld [vmem:[%s398 + $0x310] sm:$0xff]
                  %499 = vst [vmem:[%s399 + $0x188] sm:$0xff] %v498
                  %v500 = vld [vmem:[%s398 + $0x320] sm:$0xff]
                  %501 = vst [vmem:[%s399 + $0x190] sm:$0xff] %v500
                  %v502 = vld [vmem:[%s398 + $0x330] sm:$0xff]
                  %503 = vst [vmem:[%s399 + $0x198] sm:$0xff] %v502
                  %v504 = vld [vmem:[%s398 + $0x340] sm:$0xff]
                  %505 = vst [vmem:[%s399 + $0x1a0] sm:$0xff] %v504
                  %v506 = vld [vmem:[%s398 + $0x350] sm:$0xff]
                  %507 = vst [vmem:[%s399 + $0x1a8] sm:$0xff] %v506
                  %v508 = vld [vmem:[%s398 + $0x360] sm:$0xff]
                  %509 = vst [vmem:[%s399 + $0x1b0] sm:$0xff] %v508
                  %v510 = vld [vmem:[%s398 + $0x370] sm:$0xff]
                  %511 = vst [vmem:[%s399 + $0x1b8] sm:$0xff] %v510
                  %v512 = vld [vmem:[%s398 + $0x380] sm:$0xff]
                  %513 = vst [vmem:[%s399 + $0x1c0] sm:$0xff] %v512
                  %v514 = vld [vmem:[%s398 + $0x390] sm:$0xff]
                  %515 = vst [vmem:[%s399 + $0x1c8] sm:$0xff] %v514
                  %v516 = vld [vmem:[%s398 + $0x3a0] sm:$0xff]
                  %517 = vst [vmem:[%s399 + $0x1d0] sm:$0xff] %v516
                  %v518 = vld [vmem:[%s398 + $0x3b0] sm:$0xff]
                  %519 = vst [vmem:[%s399 + $0x1d8] sm:$0xff] %v518
                  %v520 = vld [vmem:[%s398 + $0x3c0] sm:$0xff]
                  %521 = vst [vmem:[%s399 + $0x1e0] sm:$0xff] %v520
                  %v522 = vld [vmem:[%s398 + $0x3d0] sm:$0xff]
                  %523 = vst [vmem:[%s399 + $0x1e8] sm:$0xff] %v522
                  %v524 = vld [vmem:[%s398 + $0x3e0] sm:$0xff]
                  %525 = vst [vmem:[%s399 + $0x1f0] sm:$0xff] %v524
                  %v526 = vld [vmem:[%s398 + $0x3f0] sm:$0xff]
                  %527 = vst [vmem:[%s399 + $0x1f8] sm:$0xff] %v526
                $region94: #{a_call__.21} parent=88 // loop_footer
                  %s397 = sadd.s32 1, %s393
                $region95: #{a_call__.21} parent=88 // loop_footer_branch
                  %392 = sbr.rel target = $region91
                $region96: #{a_call__.21} parent=88 // loop_exit
                  _
              $region89: #{a_call__.21} parent=73 // pred_fallthru
                _
              // Predicated region
              $region97: #{a_call__.21} parent=73 // pred_check
                _
              $region98: #{a_call__.21} parent=73 // pred_check_branch
                %529 = sbr.rel target = $region100
              $region99: #{a_call__.21} parent=73 // pred_region
                _
              $region100: #{a_call__.21} parent=73 // pred_fallthru
                _
            $region74: #{a_call__.21} parent=69 // pred_fallthru
              _
            // Predicated region
            $region75: #{a_call__.21} parent=69 // pred_check
              _
            $region76: #{a_call__.21} parent=69 // pred_check_branch
              %252 = sbr.rel target = $region78
            $region77: #{a_call__.21} parent=69 // pred_region
              loop: start=0, step=1, limit=1
              $region79: #{a_call__.21} parent=77 // loop_pre_header
                _
              $region80: #{a_call__.21} parent=77 // loop_header
                %s255 = sphi 0, %s259
                %p256 = scmp.ge.s32.totalorder %s255, 1
                %s260 = sphi %s246, %s246
                %s261 = sphi %s240, %s240
              $region81: #{a_call__.21} parent=77 // loop_header_branch
                %258 = sbr.rel (%p256) target = $region85
              $region82: #{a_call__.21} parent=77 // loop_body
                %v262 = vld [vmem:[%s260] sm:$0xff]
                %263 = vst [vmem:[%s261] sm:$0xff] %v262
                %v264 = vld [vmem:[%s260 + $0x10] sm:$0xff]
                %265 = vst [vmem:[%s261 + $0x8] sm:$0xff] %v264
                %v266 = vld [vmem:[%s260 + $0x20] sm:$0xff]
                %267 = vst [vmem:[%s261 + $0x10] sm:$0xff] %v266
                %v268 = vld [vmem:[%s260 + $0x30] sm:$0xff]
                %269 = vst [vmem:[%s261 + $0x18] sm:$0xff] %v268
                %v270 = vld [vmem:[%s260 + $0x40] sm:$0xff]
                %271 = vst [vmem:[%s261 + $0x20] sm:$0xff] %v270
                %v272 = vld [vmem:[%s260 + $0x50] sm:$0xff]
                %273 = vst [vmem:[%s261 + $0x28] sm:$0xff] %v272
                %v274 = vld [vmem:[%s260 + $0x60] sm:$0xff]
                %275 = vst [vmem:[%s261 + $0x30] sm:$0xff] %v274
                %v276 = vld [vmem:[%s260 + $0x70] sm:$0xff]
                %277 = vst [vmem:[%s261 + $0x38] sm:$0xff] %v276
                %v278 = vld [vmem:[%s260 + $0x80] sm:$0xff]
                %279 = vst [vmem:[%s261 + $0x40] sm:$0xff] %v278
                %v280 = vld [vmem:[%s260 + $0x90] sm:$0xff]
                %281 = vst [vmem:[%s261 + $0x48] sm:$0xff] %v280
                %v282 = vld [vmem:[%s260 + $0xa0] sm:$0xff]
                %283 = vst [vmem:[%s261 + $0x50] sm:$0xff] %v282
                %v284 = vld [vmem:[%s260 + $0xb0] sm:$0xff]
                %285 = vst [vmem:[%s261 + $0x58] sm:$0xff] %v284
                %v286 = vld [vmem:[%s260 + $0xc0] sm:$0xff]
                %287 = vst [vmem:[%s261 + $0x60] sm:$0xff] %v286
                %v288 = vld [vmem:[%s260 + $0xd0] sm:$0xff]
                %289 = vst [vmem:[%s261 + $0x68] sm:$0xff] %v288
                %v290 = vld [vmem:[%s260 + $0xe0] sm:$0xff]
                %291 = vst [vmem:[%s261 + $0x70] sm:$0xff] %v290
                %v292 = vld [vmem:[%s260 + $0xf0] sm:$0xff]
                %293 = vst [vmem:[%s261 + $0x78] sm:$0xff] %v292
                %v294 = vld [vmem:[%s260 + $0x100] sm:$0xff]
                %295 = vst [vmem:[%s261 + $0x80] sm:$0xff] %v294
                %v296 = vld [vmem:[%s260 + $0x110] sm:$0xff]
                %297 = vst [vmem:[%s261 + $0x88] sm:$0xff] %v296
                %v298 = vld [vmem:[%s260 + $0x120] sm:$0xff]
                %299 = vst [vmem:[%s261 + $0x90] sm:$0xff] %v298
                %v300 = vld [vmem:[%s260 + $0x130] sm:$0xff]
                %301 = vst [vmem:[%s261 + $0x98] sm:$0xff] %v300
                %v302 = vld [vmem:[%s260 + $0x140] sm:$0xff]
                %303 = vst [vmem:[%s261 + $0xa0] sm:$0xff] %v302
                %v304 = vld [vmem:[%s260 + $0x150] sm:$0xff]
                %305 = vst [vmem:[%s261 + $0xa8] sm:$0xff] %v304
                %v306 = vld [vmem:[%s260 + $0x160] sm:$0xff]
                %307 = vst [vmem:[%s261 + $0xb0] sm:$0xff] %v306
                %v308 = vld [vmem:[%s260 + $0x170] sm:$0xff]
                %309 = vst [vmem:[%s261 + $0xb8] sm:$0xff] %v308
                %v310 = vld [vmem:[%s260 + $0x180] sm:$0xff]
                %311 = vst [vmem:[%s261 + $0xc0] sm:$0xff] %v310
                %v312 = vld [vmem:[%s260 + $0x190] sm:$0xff]
                %313 = vst [vmem:[%s261 + $0xc8] sm:$0xff] %v312
                %v314 = vld [vmem:[%s260 + $0x1a0] sm:$0xff]
                %315 = vst [vmem:[%s261 + $0xd0] sm:$0xff] %v314
                %v316 = vld [vmem:[%s260 + $0x1b0] sm:$0xff]
                %317 = vst [vmem:[%s261 + $0xd8] sm:$0xff] %v316
                %v318 = vld [vmem:[%s260 + $0x1c0] sm:$0xff]
                %319 = vst [vmem:[%s261 + $0xe0] sm:$0xff] %v318
                %v320 = vld [vmem:[%s260 + $0x1d0] sm:$0xff]
                %321 = vst [vmem:[%s261 + $0xe8] sm:$0xff] %v320
                %v322 = vld [vmem:[%s260 + $0x1e0] sm:$0xff]
                %323 = vst [vmem:[%s261 + $0xf0] sm:$0xff] %v322
                %v324 = vld [vmem:[%s260 + $0x1f0] sm:$0xff]
                %325 = vst [vmem:[%s261 + $0xf8] sm:$0xff] %v324
                %v326 = vld [vmem:[%s260 + $0x200] sm:$0xff]
                %327 = vst [vmem:[%s261 + $0x100] sm:$0xff] %v326
                %v328 = vld [vmem:[%s260 + $0x210] sm:$0xff]
                %329 = vst [vmem:[%s261 + $0x108] sm:$0xff] %v328
                %v330 = vld [vmem:[%s260 + $0x220] sm:$0xff]
                %331 = vst [vmem:[%s261 + $0x110] sm:$0xff] %v330
                %v332 = vld [vmem:[%s260 + $0x230] sm:$0xff]
                %333 = vst [vmem:[%s261 + $0x118] sm:$0xff] %v332
                %v334 = vld [vmem:[%s260 + $0x240] sm:$0xff]
                %335 = vst [vmem:[%s261 + $0x120] sm:$0xff] %v334
                %v336 = vld [vmem:[%s260 + $0x250] sm:$0xff]
                %337 = vst [vmem:[%s261 + $0x128] sm:$0xff] %v336
                %v338 = vld [vmem:[%s260 + $0x260] sm:$0xff]
                %339 = vst [vmem:[%s261 + $0x130] sm:$0xff] %v338
                %v340 = vld [vmem:[%s260 + $0x270] sm:$0xff]
                %341 = vst [vmem:[%s261 + $0x138] sm:$0xff] %v340
                %v342 = vld [vmem:[%s260 + $0x280] sm:$0xff]
                %343 = vst [vmem:[%s261 + $0x140] sm:$0xff] %v342
                %v344 = vld [vmem:[%s260 + $0x290] sm:$0xff]
                %345 = vst [vmem:[%s261 + $0x148] sm:$0xff] %v344
                %v346 = vld [vmem:[%s260 + $0x2a0] sm:$0xff]
                %347 = vst [vmem:[%s261 + $0x150] sm:$0xff] %v346
                %v348 = vld [vmem:[%s260 + $0x2b0] sm:$0xff]
                %349 = vst [vmem:[%s261 + $0x158] sm:$0xff] %v348
                %v350 = vld [vmem:[%s260 + $0x2c0] sm:$0xff]
                %351 = vst [vmem:[%s261 + $0x160] sm:$0xff] %v350
                %v352 = vld [vmem:[%s260 + $0x2d0] sm:$0xff]
                %353 = vst [vmem:[%s261 + $0x168] sm:$0xff] %v352
                %v354 = vld [vmem:[%s260 + $0x2e0] sm:$0xff]
                %355 = vst [vmem:[%s261 + $0x170] sm:$0xff] %v354
                %v356 = vld [vmem:[%s260 + $0x2f0] sm:$0xff]
                %357 = vst [vmem:[%s261 + $0x178] sm:$0xff] %v356
                %v358 = vld [vmem:[%s260 + $0x300] sm:$0xff]
                %359 = vst [vmem:[%s261 + $0x180] sm:$0xff] %v358
                %v360 = vld [vmem:[%s260 + $0x310] sm:$0xff]
                %361 = vst [vmem:[%s261 + $0x188] sm:$0xff] %v360
                %v362 = vld [vmem:[%s260 + $0x320] sm:$0xff]
                %363 = vst [vmem:[%s261 + $0x190] sm:$0xff] %v362
                %v364 = vld [vmem:[%s260 + $0x330] sm:$0xff]
                %365 = vst [vmem:[%s261 + $0x198] sm:$0xff] %v364
                %v366 = vld [vmem:[%s260 + $0x340] sm:$0xff]
                %367 = vst [vmem:[%s261 + $0x1a0] sm:$0xff] %v366
                %v368 = vld [vmem:[%s260 + $0x350] sm:$0xff]
                %369 = vst [vmem:[%s261 + $0x1a8] sm:$0xff] %v368
                %v370 = vld [vmem:[%s260 + $0x360] sm:$0xff]
                %371 = vst [vmem:[%s261 + $0x1b0] sm:$0xff] %v370
                %v372 = vld [vmem:[%s260 + $0x370] sm:$0xff]
                %373 = vst [vmem:[%s261 + $0x1b8] sm:$0xff] %v372
                %v374 = vld [vmem:[%s260 + $0x380] sm:$0xff]
                %375 = vst [vmem:[%s261 + $0x1c0] sm:$0xff] %v374
                %v376 = vld [vmem:[%s260 + $0x390] sm:$0xff]
                %377 = vst [vmem:[%s261 + $0x1c8] sm:$0xff] %v376
                %v378 = vld [vmem:[%s260 + $0x3a0] sm:$0xff]
                %379 = vst [vmem:[%s261 + $0x1d0] sm:$0xff] %v378
                %v380 = vld [vmem:[%s260 + $0x3b0] sm:$0xff]
                %381 = vst [vmem:[%s261 + $0x1d8] sm:$0xff] %v380
                %v382 = vld [vmem:[%s260 + $0x3c0] sm:$0xff]
                %383 = vst [vmem:[%s261 + $0x1e0] sm:$0xff] %v382
                %v384 = vld [vmem:[%s260 + $0x3d0] sm:$0xff]
                %385 = vst [vmem:[%s261 + $0x1e8] sm:$0xff] %v384
                %v386 = vld [vmem:[%s260 + $0x3e0] sm:$0xff]
                %387 = vst [vmem:[%s261 + $0x1f0] sm:$0xff] %v386
                %v388 = vld [vmem:[%s260 + $0x3f0] sm:$0xff]
                %389 = vst [vmem:[%s261 + $0x1f8] sm:$0xff] %v388
              $region83: #{a_call__.21} parent=77 // loop_footer
                %s259 = sadd.s32 1, %s255
              $region84: #{a_call__.21} parent=77 // loop_footer_branch
                %254 = sbr.rel target = $region80
              $region85: #{a_call__.21} parent=77 // loop_exit
                _
            $region78: #{a_call__.21} parent=69 // pred_fallthru
              _
          $region70: #{a_call__.21} parent=65 // pred_fallthru
            _
          %530 = vnop
        $region66: #{a_call__.21} parent=15 // pred_fallthru
          _
      $region16: #{a_call__.21} parent=5 // pred_fallthru
        _
      %p531 = scmp.le.s32.totalorder 1, %s9
      %p532 = scmp.lt.s32.totalorder %s9, 5
      %p533 = pnand %p531, %p532
      %p534 = pneg %p533
      // Predicated region
      $region101: #{a_call__.21} parent=5 // pred_check
        _
      $region102: #{a_call__.21} parent=5 // pred_check_branch
        %536 = sbr.rel (%p533) target = $region104
      $region103: #{a_call__.21} parent=5 // pred_region
        %s537 = ssub.s32 %s9, 1
        %s538 = sand.u32 %s43, 1
        %s539 = sand.u32 %s43, 1
        %s540 = smul.addr %s539, 32
        %s541 = scalar_lea.vmem [#allocation3], %s540
        // Predicated region
        $region105: #{a_call__.21} parent=103 // pred_check
          %p542 = pneg %p56
        $region106: #{a_call__.21} parent=103 // pred_check_branch
          %544 = sbr.rel (%p542) target = $region108
        $region107: #{a_call__.21} parent=103 // pred_region
          _
        $region108: #{a_call__.21} parent=103 // pred_fallthru
          _
        %s545 = sand.u32 %s73, 1
        %s546 = sand.u32 %s73, 1
        %s547 = smul.addr %s546, 32
        %s548 = scalar_lea.vmem [#allocation4], %s547
        // Predicated region
        $region109: #{a_call__.21} parent=103 // pred_check
          %p549 = pneg %p86
        $region110: #{a_call__.21} parent=103 // pred_check_branch
          %551 = sbr.rel (%p549) target = $region112
        $region111: #{a_call__.21} parent=103 // pred_region
          _
        $region112: #{a_call__.21} parent=103 // pred_fallthru
          _
        %s552 = sand.u32 %s101, 1
        %s553 = sand.u32 %s101, 1
        %s554 = smul.addr %s553, 512
        %s555 = scalar_lea.vmem [#allocation5], %s554
        // Predicated region
        $region113: #{a_call__.21} parent=103 // pred_check
          %p556 = pneg %p114
        $region114: #{a_call__.21} parent=103 // pred_check_branch
          %558 = sbr.rel (%p556) target = $region116
        $region115: #{a_call__.21} parent=103 // pred_region
          _
        $region116: #{a_call__.21} parent=103 // pred_fallthru
          _
        %s559 = sand.u32 %s43, 1
        %s560 = sand.u32 %s43, 1
        %s561 = smul.addr %s560, 32
        %s562 = scalar_lea.vmem [#allocation3], %s561
        %p563 = pneg %p56
        %p564 = pneg %p53
        %s565 = sand.u32 %s73, 1
        %s566 = sand.u32 %s73, 1
        %s567 = smul.addr %s566, 32
        %s568 = scalar_lea.vmem [#allocation4], %s567
        %p569 = pneg %p86
        %p570 = pneg %p83
        %s571 = sand.u32 %s101, 1
        %s572 = sand.u32 %s101, 1
        %s573 = smul.addr %s572, 512
        %s574 = scalar_lea.vmem [#allocation5], %s573
        %p575 = pneg %p114
        %p576 = pneg %p111
        %p577 = pneg %p142
        %p578 = pneg %p139
        %s579 = sand.u32 %s129, 1
        %s580 = sand.u32 %s129, 1
        %s581 = smul.addr %s580, 16
        %s582 = scalar_lea.vmem [#allocation6], %s581
        %s583 = smul.u32 2, %s19
        %s584 = smul.u32 4, %s21
        %s585 = sadd.s32 %s21, 2
        %s586 = smul.u32 2, %s19
        %s587 = smul.u32 4, %s585
        %s588 = smul.u32 64, %s21
        %s589 = smul.u32 2, %s20
        %s590 = smul.u32 2, %s19
        %s591 = smul.u32 2, %s20
        %p592 = scmp.eq.s32.totalorder %s21, 0
        // Predicated region
        $region117: #{a_call__.21} parent=103 // pred_check
          %p593 = pneg %p592
        $region118: #{a_call__.21} parent=103 // pred_check_branch
          %595 = sbr.rel (%p593) target = $region120
        $region119: #{a_call__.21} parent=103 // pred_region
          %596 = vst [vmem:[#allocation2] sm:$0xff] 0.0
          %597 = vst [vmem:[#allocation2 + $0x8] sm:$0xff] 0.0
          %598 = vst [vmem:[#allocation2 + $0x10] sm:$0xff] 0.0
          %599 = vst [vmem:[#allocation2 + $0x18] sm:$0xff] 0.0
        $region120: #{a_call__.21} parent=103 // pred_fallthru
          _
        %v600 = vld [vmem:[%s541] sm:$0xff]
        %v601 = vld [vmem:[%s541 + $0x8] sm:$0xff]
        %v602 = vld [vmem:[%s541 + $0x10] sm:$0xff]
        %v603 = vld [vmem:[%s541 + $0x18] sm:$0xff]
        %v604 = vunpack.c.l.bf16 %v600
        %v605 = vunpack.c.h.bf16 %v600
        %v606 = vunpack.c.l.bf16 %v601
        %v607 = vunpack.c.h.bf16 %v601
        %v608 = vunpack.c.l.bf16 %v602
        %v609 = vunpack.c.h.bf16 %v602
        %v610 = vunpack.c.l.bf16 %v603
        %v611 = vunpack.c.h.bf16 %v603
        %v612 = vld [vmem:[%s548] sm:$0xff]
        %v613 = vld [vmem:[%s548 + $0x8] sm:$0xff]
        %v614 = vld [vmem:[%s548 + $0x10] sm:$0xff]
        %v615 = vld [vmem:[%s548 + $0x18] sm:$0xff]
        %v616 = vunpack.c.l.bf16 %v612
        %v617 = vunpack.c.h.bf16 %v612
        %v618 = vunpack.c.l.bf16 %v613
        %v619 = vunpack.c.h.bf16 %v613
        %v620 = vunpack.c.l.bf16 %v614
        %v621 = vunpack.c.h.bf16 %v614
        %v622 = vunpack.c.l.bf16 %v615
        %v623 = vunpack.c.h.bf16 %v615
        %v624 = vsub.f32 0.0, %v604
        %v625 = vsub.f32 0.0, %v605
        %v626 = vsub.f32 0.0, %v606
        %v627 = vsub.f32 0.0, %v607
        %v628 = vsub.f32 0.0, %v608
        %v629 = vsub.f32 0.0, %v609
        %v630 = vsub.f32 0.0, %v610
        %v631 = vsub.f32 0.0, %v611
        %v632 = vmul.f32 %v624, 1.442695
        %v633 = vpow.pop %v632
        %v634 = vmul.f32 %v625, 1.442695
        %v635 = vpow.pop %v634
        %v636 = vmul.f32 %v626, 1.442695
        %v637 = vpow.pop %v636
        %v638 = vmul.f32 %v627, 1.442695
        %v639 = vpow.pop %v638
        %v640 = vmul.f32 %v628, 1.442695
        %v641 = vpow.pop %v640
        %v642 = vmul.f32 %v629, 1.442695
        %v643 = vpow.pop %v642
        %v644 = vmul.f32 %v630, 1.442695
        %v645 = vpow.pop %v644
        %v646 = vmul.f32 %v631, 1.442695
        %v647 = vpow.pop %v646
        %v648 = vadd.f32 %v633, 1.0
        %v649 = vadd.f32 %v635, 1.0
        %v650 = vadd.f32 %v637, 1.0
        %v651 = vadd.f32 %v639, 1.0
        %v652 = vadd.f32 %v641, 1.0
        %v653 = vadd.f32 %v643, 1.0
        %v654 = vadd.f32 %v645, 1.0
        %v655 = vadd.f32 %v647, 1.0
        %v656 = vrcp.pop %v648
        %v657 = vmul.f32 1.0, %v656
        %v658 = vrcp.pop %v649
        %v659 = vmul.f32 1.0, %v658
        %v660 = vrcp.pop %v650
        %v661 = vmul.f32 1.0, %v660
        %v662 = vrcp.pop %v651
        %v663 = vmul.f32 1.0, %v662
        %v664 = vrcp.pop %v652
        %v665 = vmul.f32 1.0, %v664
        %v666 = vrcp.pop %v653
        %v667 = vmul.f32 1.0, %v666
        %v668 = vrcp.pop %v654
        %v669 = vmul.f32 1.0, %v668
        %v670 = vrcp.pop %v655
        %v671 = vmul.f32 1.0, %v670
        %v672 = vmul.f32 %v604, %v657
        %v673 = vmul.f32 %v605, %v659
        %v674 = vmul.f32 %v606, %v661
        %v675 = vmul.f32 %v607, %v663
        %v676 = vmul.f32 %v608, %v665
        %v677 = vmul.f32 %v609, %v667
        %v678 = vmul.f32 %v610, %v669
        %v679 = vmul.f32 %v611, %v671
        %v680 = vmul.f32 %v672, %v616
        %v681 = vmul.f32 %v673, %v617
        %v682 = vmul.f32 %v674, %v618
        %v683 = vmul.f32 %v675, %v619
        %v684 = vmul.f32 %v676, %v620
        %v685 = vmul.f32 %v677, %v621
        %v686 = vmul.f32 %v678, %v622
        %v687 = vmul.f32 %v679, %v623
        %v688 = vpack.c.bf16 %v684, %v680
        %v689 = vpack.c.bf16 %v685, %v681
        %v690 = vpack.c.bf16 %v686, %v682
        %v691 = vpack.c.bf16 %v687, %v683
        %v692 = vld [vmem:[#allocation2] sm:$0xff]
        %v693 = vld [vmem:[#allocation2 + $0x8] sm:$0xff]
        %v694 = vld [vmem:[#allocation2 + $0x10] sm:$0xff]
        %v695 = vld [vmem:[#allocation2 + $0x18] sm:$0xff]
        %v696 = vld [vmem:[%s555] sm:$0xff]
        %v697 = vld [vmem:[%s555 + $0x8] sm:$0xff]
        %v698 = vld [vmem:[%s555 + $0x10] sm:$0xff]
        %v699 = vld [vmem:[%s555 + $0x18] sm:$0xff]
        %v700 = vld [vmem:[%s555 + $0x20] sm:$0xff]
        %v701 = vld [vmem:[%s555 + $0x28] sm:$0xff]
        %v702 = vld [vmem:[%s555 + $0x30] sm:$0xff]
        %v703 = vld [vmem:[%s555 + $0x38] sm:$0xff]
        %v704 = vld [vmem:[%s555 + $0x40] sm:$0xff]
        %v705 = vld [vmem:[%s555 + $0x48] sm:$0xff]
        %v706 = vld [vmem:[%s555 + $0x50] sm:$0xff]
        %v707 = vld [vmem:[%s555 + $0x58] sm:$0xff]
        %v708 = vld [vmem:[%s555 + $0x60] sm:$0xff]
        %v709 = vld [vmem:[%s555 + $0x68] sm:$0xff]
        %v710 = vld [vmem:[%s555 + $0x70] sm:$0xff]
        %v711 = vld [vmem:[%s555 + $0x78] sm:$0xff]
        %v712 = vld [vmem:[%s555 + $0x80] sm:$0xff]
        %v713 = vld [vmem:[%s555 + $0x88] sm:$0xff]
        %v714 = vld [vmem:[%s555 + $0x90] sm:$0xff]
        %v715 = vld [vmem:[%s555 + $0x98] sm:$0xff]
        %v716 = vld [vmem:[%s555 + $0xa0] sm:$0xff]
        %v717 = vld [vmem:[%s555 + $0xa8] sm:$0xff]
        %v718 = vld [vmem:[%s555 + $0xb0] sm:$0xff]
        %v719 = vld [vmem:[%s555 + $0xb8] sm:$0xff]
        %v720 = vld [vmem:[%s555 + $0xc0] sm:$0xff]
        %v721 = vld [vmem:[%s555 + $0xc8] sm:$0xff]
        %v722 = vld [vmem:[%s555 + $0xd0] sm:$0xff]
        %v723 = vld [vmem:[%s555 + $0xd8] sm:$0xff]
        %v724 = vld [vmem:[%s555 + $0xe0] sm:$0xff]
        %v725 = vld [vmem:[%s555 + $0xe8] sm:$0xff]
        %v726 = vld [vmem:[%s555 + $0xf0] sm:$0xff]
        %v727 = vld [vmem:[%s555 + $0xf8] sm:$0xff]
        %v728 = vld [vmem:[%s555 + $0x100] sm:$0xff]
        %v729 = vld [vmem:[%s555 + $0x108] sm:$0xff]
        %v730 = vld [vmem:[%s555 + $0x110] sm:$0xff]
        %v731 = vld [vmem:[%s555 + $0x118] sm:$0xff]
        %v732 = vld [vmem:[%s555 + $0x120] sm:$0xff]
        %v733 = vld [vmem:[%s555 + $0x128] sm:$0xff]
        %v734 = vld [vmem:[%s555 + $0x130] sm:$0xff]
        %v735 = vld [vmem:[%s555 + $0x138] sm:$0xff]
        %v736 = vld [vmem:[%s555 + $0x140] sm:$0xff]
        %v737 = vld [vmem:[%s555 + $0x148] sm:$0xff]
        %v738 = vld [vmem:[%s555 + $0x150] sm:$0xff]
        %v739 = vld [vmem:[%s555 + $0x158] sm:$0xff]
        %v740 = vld [vmem:[%s555 + $0x160] sm:$0xff]
        %v741 = vld [vmem:[%s555 + $0x168] sm:$0xff]
        %v742 = vld [vmem:[%s555 + $0x170] sm:$0xff]
        %v743 = vld [vmem:[%s555 + $0x178] sm:$0xff]
        %v744 = vld [vmem:[%s555 + $0x180] sm:$0xff]
        %v745 = vld [vmem:[%s555 + $0x188] sm:$0xff]
        %v746 = vld [vmem:[%s555 + $0x190] sm:$0xff]
        %v747 = vld [vmem:[%s555 + $0x198] sm:$0xff]
        %v748 = vld [vmem:[%s555 + $0x1a0] sm:$0xff]
        %v749 = vld [vmem:[%s555 + $0x1a8] sm:$0xff]
        %v750 = vld [vmem:[%s555 + $0x1b0] sm:$0xff]
        %v751 = vld [vmem:[%s555 + $0x1b8] sm:$0xff]
        %v752 = vld [vmem:[%s555 + $0x1c0] sm:$0xff]
        %v753 = vld [vmem:[%s555 + $0x1c8] sm:$0xff]
        %v754 = vld [vmem:[%s555 + $0x1d0] sm:$0xff]
        %v755 = vld [vmem:[%s555 + $0x1d8] sm:$0xff]
        %v756 = vld [vmem:[%s555 + $0x1e0] sm:$0xff]
        %v757 = vld [vmem:[%s555 + $0x1e8] sm:$0xff]
        %v758 = vld [vmem:[%s555 + $0x1f0] sm:$0xff]
        %v759 = vld [vmem:[%s555 + $0x1f8] sm:$0xff]
        %v824 = vunpack.c.l.b16 %v696
        %v825 = vunpack.c.h.b16 %v696
        %v826 = vunpack.c.l.b16 %v697
        %v827 = vunpack.c.h.b16 %v697
        %v828 = vunpack.c.l.b16 %v698
        %v829 = vunpack.c.h.b16 %v698
        %v830 = vunpack.c.l.b16 %v699
        %v831 = vunpack.c.h.b16 %v699
        %v832 = vunpack.c.l.b16 %v700
        %v833 = vunpack.c.h.b16 %v700
        %v834 = vunpack.c.l.b16 %v701
        %v835 = vunpack.c.h.b16 %v701
        %v836 = vunpack.c.l.b16 %v702
        %v837 = vunpack.c.h.b16 %v702
        %v838 = vunpack.c.l.b16 %v703
        %v839 = vunpack.c.h.b16 %v703
        %v840 = vunpack.c.l.b16 %v704
        %v841 = vunpack.c.h.b16 %v704
        %v842 = vunpack.c.l.b16 %v705
        %v843 = vunpack.c.h.b16 %v705
        %v844 = vunpack.c.l.b16 %v706
        %v845 = vunpack.c.h.b16 %v706
        %v846 = vunpack.c.l.b16 %v707
        %v847 = vunpack.c.h.b16 %v707
        %v848 = vunpack.c.l.b16 %v708
        %v849 = vunpack.c.h.b16 %v708
        %v850 = vunpack.c.l.b16 %v709
        %v851 = vunpack.c.h.b16 %v709
        %v852 = vunpack.c.l.b16 %v710
        %v853 = vunpack.c.h.b16 %v710
        %v854 = vunpack.c.l.b16 %v711
        %v855 = vunpack.c.h.b16 %v711
        %v856 = vunpack.c.l.b16 %v712
        %v857 = vunpack.c.h.b16 %v712
        %v858 = vunpack.c.l.b16 %v713
        %v859 = vunpack.c.h.b16 %v713
        %v860 = vunpack.c.l.b16 %v714
        %v861 = vunpack.c.h.b16 %v714
        %v862 = vunpack.c.l.b16 %v715
        %v863 = vunpack.c.h.b16 %v715
        %v864 = vunpack.c.l.b16 %v716
        %v865 = vunpack.c.h.b16 %v716
        %v866 = vunpack.c.l.b16 %v717
        %v867 = vunpack.c.h.b16 %v717
        %v868 = vunpack.c.l.b16 %v718
        %v869 = vunpack.c.h.b16 %v718
        %v870 = vunpack.c.l.b16 %v719
        %v871 = vunpack.c.h.b16 %v719
        %v872 = vunpack.c.l.b16 %v720
        %v873 = vunpack.c.h.b16 %v720
        %v874 = vunpack.c.l.b16 %v721
        %v875 = vunpack.c.h.b16 %v721
        %v876 = vunpack.c.l.b16 %v722
        %v877 = vunpack.c.h.b16 %v722
        %v878 = vunpack.c.l.b16 %v723
        %v879 = vunpack.c.h.b16 %v723
        %v880 = vunpack.c.l.b16 %v724
        %v881 = vunpack.c.h.b16 %v724
        %v882 = vunpack.c.l.b16 %v725
        %v883 = vunpack.c.h.b16 %v725
        %v884 = vunpack.c.l.b16 %v726
        %v885 = vunpack.c.h.b16 %v726
        %v886 = vunpack.c.l.b16 %v727
        %v887 = vunpack.c.h.b16 %v727
        %v888 = vunpack.c.l.b16 %v728
        %v889 = vunpack.c.h.b16 %v728
        %v890 = vunpack.c.l.b16 %v729
        %v891 = vunpack.c.h.b16 %v729
        %v892 = vunpack.c.l.b16 %v730
        %v893 = vunpack.c.h.b16 %v730
        %v894 = vunpack.c.l.b16 %v731
        %v895 = vunpack.c.h.b16 %v731
        %v896 = vunpack.c.l.b16 %v732
        %v897 = vunpack.c.h.b16 %v732
        %v898 = vunpack.c.l.b16 %v733
        %v899 = vunpack.c.h.b16 %v733
        %v900 = vunpack.c.l.b16 %v734
        %v901 = vunpack.c.h.b16 %v734
        %v902 = vunpack.c.l.b16 %v735
        %v903 = vunpack.c.h.b16 %v735
        %v904 = vunpack.c.l.b16 %v736
        %v905 = vunpack.c.h.b16 %v736
        %v906 = vunpack.c.l.b16 %v737
        %v907 = vunpack.c.h.b16 %v737
        %v908 = vunpack.c.l.b16 %v738
        %v909 = vunpack.c.h.b16 %v738
        %v910 = vunpack.c.l.b16 %v739
        %v911 = vunpack.c.h.b16 %v739
        %v912 = vunpack.c.l.b16 %v740
        %v913 = vunpack.c.h.b16 %v740
        %v914 = vunpack.c.l.b16 %v741
        %v915 = vunpack.c.h.b16 %v741
        %v916 = vunpack.c.l.b16 %v742
        %v917 = vunpack.c.h.b16 %v742
        %v918 = vunpack.c.l.b16 %v743
        %v919 = vunpack.c.h.b16 %v743
        %v920 = vunpack.c.l.b16 %v744
        %v921 = vunpack.c.h.b16 %v744
        %v922 = vunpack.c.l.b16 %v745
        %v923 = vunpack.c.h.b16 %v745
        %v924 = vunpack.c.l.b16 %v746
        %v925 = vunpack.c.h.b16 %v746
        %v926 = vunpack.c.l.b16 %v747
        %v927 = vunpack.c.h.b16 %v747
        %v928 = vunpack.c.l.b16 %v748
        %v929 = vunpack.c.h.b16 %v748
        %v930 = vunpack.c.l.b16 %v749
        %v931 = vunpack.c.h.b16 %v749
        %v932 = vunpack.c.l.b16 %v750
        %v933 = vunpack.c.h.b16 %v750
        %v934 = vunpack.c.l.b16 %v751
        %v935 = vunpack.c.h.b16 %v751
        %v936 = vunpack.c.l.b16 %v752
        %v937 = vunpack.c.h.b16 %v752
        %v938 = vunpack.c.l.b16 %v753
        %v939 = vunpack.c.h.b16 %v753
        %v940 = vunpack.c.l.b16 %v754
        %v941 = vunpack.c.h.b16 %v754
        %v942 = vunpack.c.l.b16 %v755
        %v943 = vunpack.c.h.b16 %v755
        %v944 = vunpack.c.l.b16 %v756
        %v945 = vunpack.c.h.b16 %v756
        %v946 = vunpack.c.l.b16 %v757
        %v947 = vunpack.c.h.b16 %v757
        %v948 = vunpack.c.l.b16 %v758
        %v949 = vunpack.c.h.b16 %v758
        %v950 = vunpack.c.l.b16 %v759
        %v951 = vunpack.c.h.b16 %v759
        %v952 = vpack.c.b16 %v826, %v824
        %v953 = vpack.c.b16 %v827, %v825
        %v954 = vpack.c.b16 %v830, %v828
        %v955 = vpack.c.b16 %v831, %v829
        %v956 = vpack.c.b16 %v834, %v832
        %v957 = vpack.c.b16 %v835, %v833
        %v958 = vpack.c.b16 %v838, %v836
        %v959 = vpack.c.b16 %v839, %v837
        %v960 = vpack.c.b16 %v842, %v840
        %v961 = vpack.c.b16 %v843, %v841
        %v962 = vpack.c.b16 %v846, %v844
        %v963 = vpack.c.b16 %v847, %v845
        %v964 = vpack.c.b16 %v850, %v848
        %v965 = vpack.c.b16 %v851, %v849
        %v966 = vpack.c.b16 %v854, %v852
        %v967 = vpack.c.b16 %v855, %v853
        %v968 = vpack.c.b16 %v858, %v856
        %v969 = vpack.c.b16 %v859, %v857
        %v970 = vpack.c.b16 %v862, %v860
        %v971 = vpack.c.b16 %v863, %v861
        %v972 = vpack.c.b16 %v866, %v864
        %v973 = vpack.c.b16 %v867, %v865
        %v974 = vpack.c.b16 %v870, %v868
        %v975 = vpack.c.b16 %v871, %v869
        %v976 = vpack.c.b16 %v874, %v872
        %v977 = vpack.c.b16 %v875, %v873
        %v978 = vpack.c.b16 %v878, %v876
        %v979 = vpack.c.b16 %v879, %v877
        %v980 = vpack.c.b16 %v882, %v880
        %v981 = vpack.c.b16 %v883, %v881
        %v982 = vpack.c.b16 %v886, %v884
        %v983 = vpack.c.b16 %v887, %v885
        %v984 = vpack.c.b16 %v890, %v888
        %v985 = vpack.c.b16 %v891, %v889
        %v986 = vpack.c.b16 %v894, %v892
        %v987 = vpack.c.b16 %v895, %v893
        %v988 = vpack.c.b16 %v898, %v896
        %v989 = vpack.c.b16 %v899, %v897
        %v990 = vpack.c.b16 %v902, %v900
        %v991 = vpack.c.b16 %v903, %v901
        %v992 = vpack.c.b16 %v906, %v904
        %v993 = vpack.c.b16 %v907, %v905
        %v994 = vpack.c.b16 %v910, %v908
        %v995 = vpack.c.b16 %v911, %v909
        %v996 = vpack.c.b16 %v914, %v912
        %v997 = vpack.c.b16 %v915, %v913
        %v998 = vpack.c.b16 %v918, %v916
        %v999 = vpack.c.b16 %v919, %v917
        %v1000 = vpack.c.b16 %v922, %v920
        %v1001 = vpack.c.b16 %v923, %v921
        %v1002 = vpack.c.b16 %v926, %v924
        %v1003 = vpack.c.b16 %v927, %v925
        %v1004 = vpack.c.b16 %v930, %v928
        %v1005 = vpack.c.b16 %v931, %v929
        %v1006 = vpack.c.b16 %v934, %v932
        %v1007 = vpack.c.b16 %v935, %v933
        %v1008 = vpack.c.b16 %v938, %v936
        %v1009 = vpack.c.b16 %v939, %v937
        %v1010 = vpack.c.b16 %v942, %v940
        %v1011 = vpack.c.b16 %v943, %v941
        %v1012 = vpack.c.b16 %v946, %v944
        %v1013 = vpack.c.b16 %v947, %v945
        %v1014 = vpack.c.b16 %v950, %v948
        %v1015 = vpack.c.b16 %v951, %v949
        %1080 = vmatprep.subr.bf16.mxu0 %v953
        %1081 = vmatpush1.bf16.msra.mxu0 %v952
        %1082 = vmatprep.subr.bf16.mxu0 %v955
        %1083 = vmatpush1.bf16.msra.mxu0 %v954
        %1084 = vmatprep.subr.bf16.mxu0 %v957
        %1085 = vmatpush1.bf16.msra.mxu0 %v956
        %1086 = vmatprep.subr.bf16.mxu0 %v959
        %1087 = vmatpush1.bf16.msra.mxu0 %v958
        %1088 = vmatprep.subr.bf16.mxu0 %v961
        %1089 = vmatpush1.bf16.msra.mxu0 %v960
        %1090 = vmatprep.subr.bf16.mxu0 %v963
        %1091 = vmatpush1.bf16.msra.mxu0 %v962
        %1092 = vmatprep.subr.bf16.mxu0 %v965
        %1093 = vmatpush1.bf16.msra.mxu0 %v964
        %1094 = vmatprep.subr.bf16.mxu0 %v967
        %1095 = vmatpush1.bf16.msra.mxu0 %v966
        %1096 = vmatprep.subr.bf16.mxu0 %v969
        %1097 = vmatpush1.bf16.msra.mxu0 %v968
        %1098 = vmatprep.subr.bf16.mxu0 %v971
        %1099 = vmatpush1.bf16.msra.mxu0 %v970
        %1100 = vmatprep.subr.bf16.mxu0 %v973
        %1101 = vmatpush1.bf16.msra.mxu0 %v972
        %1102 = vmatprep.subr.bf16.mxu0 %v975
        %1103 = vmatpush1.bf16.msra.mxu0 %v974
        %1104 = vmatprep.subr.bf16.mxu0 %v977
        %1105 = vmatpush1.bf16.msra.mxu0 %v976
        %1106 = vmatprep.subr.bf16.mxu0 %v979
        %1107 = vmatpush1.bf16.msra.mxu0 %v978
        %1108 = vmatprep.subr.bf16.mxu0 %v981
        %1109 = vmatpush1.bf16.msra.mxu0 %v980
        %1110 = vmatprep.subr.bf16.mxu0 %v983
        %1111 = vmatpush1.bf16.msra.mxu0 %v982
        %1112 = vmatprep.mubr.bf16.mxu0 %v689
        %1113 = vmatmul.mubr.bf16.gmra.mrb[0].mxu0 %v688
        %v1114 = vpop.f32.mrb[0].mxu0
        %v1115 = vadd.f32 0.0, %v1114
        %v1116 = vpop.f32.mrb[0].mxu0
        %v1117 = vadd.f32 0.0, %v1116
        %v1118 = vpop.f32.mrb[0].mxu0
        %v1119 = vadd.f32 0.0, %v1118
        %v1120 = vpop.f32.mrb[0].mxu0
        %v1121 = vadd.f32 0.0, %v1120
        %1122 = vdwg.mxu0
        %1123 = vmatprep.subr.bf16.mxu0 %v985
        %1124 = vmatpush1.bf16.msra.mxu0 %v984
        %1125 = vmatprep.subr.bf16.mxu0 %v987
        %1126 = vmatpush1.bf16.msra.mxu0 %v986
        %1127 = vmatprep.subr.bf16.mxu0 %v989
        %1128 = vmatpush1.bf16.msra.mxu0 %v988
        %1129 = vmatprep.subr.bf16.mxu0 %v991
        %1130 = vmatpush1.bf16.msra.mxu0 %v990
        %1131 = vmatprep.subr.bf16.mxu0 %v993
        %1132 = vmatpush1.bf16.msra.mxu0 %v992
        %1133 = vmatprep.subr.bf16.mxu0 %v995
        %1134 = vmatpush1.bf16.msra.mxu0 %v994
        %1135 = vmatprep.subr.bf16.mxu0 %v997
        %1136 = vmatpush1.bf16.msra.mxu0 %v996
        %1137 = vmatprep.subr.bf16.mxu0 %v999
        %1138 = vmatpush1.bf16.msra.mxu0 %v998
        %1139 = vmatprep.subr.bf16.mxu0 %v1001
        %1140 = vmatpush1.bf16.msra.mxu0 %v1000
        %1141 = vmatprep.subr.bf16.mxu0 %v1003
        %1142 = vmatpush1.bf16.msra.mxu0 %v1002
        %1143 = vmatprep.subr.bf16.mxu0 %v1005
        %1144 = vmatpush1.bf16.msra.mxu0 %v1004
        %1145 = vmatprep.subr.bf16.mxu0 %v1007
        %1146 = vmatpush1.bf16.msra.mxu0 %v1006
        %1147 = vmatprep.subr.bf16.mxu0 %v1009
        %1148 = vmatpush1.bf16.msra.mxu0 %v1008
        %1149 = vmatprep.subr.bf16.mxu0 %v1011
        %1150 = vmatpush1.bf16.msra.mxu0 %v1010
        %1151 = vmatprep.subr.bf16.mxu0 %v1013
        %1152 = vmatpush1.bf16.msra.mxu0 %v1012
        %1153 = vmatprep.subr.bf16.mxu0 %v1015
        %1154 = vmatpush1.bf16.msra.mxu0 %v1014
        %1155 = vmatprep.mubr.bf16.mxu0 %v691
        %1156 = vmatmul.mubr.bf16.gmra.mrb[0].mxu0 %v690
        %v1157 = vpop.f32.mrb[0].mxu0
        %v1158 = vadd.f32 %v1115, %v1157
        %v1159 = vpop.f32.mrb[0].mxu0
        %v1160 = vadd.f32 %v1117, %v1159
        %v1161 = vpop.f32.mrb[0].mxu0
        %v1162 = vadd.f32 %v1119, %v1161
        %v1163 = vpop.f32.mrb[0].mxu0
        %v1164 = vadd.f32 %v1121, %v1163
        %1165 = vdwg.mxu0
        %v1166 = vadd.f32 %v692, %v1158
        %v1167 = vadd.f32 %v693, %v1160
        %v1168 = vadd.f32 %v694, %v1162
        %v1169 = vadd.f32 %v695, %v1164
        %1170 = vst [vmem:[#allocation2] sm:$0xff] %v1166
        %1171 = vst [vmem:[#allocation2 + $0x8] sm:$0xff] %v1167
        %1172 = vst [vmem:[#allocation2 + $0x10] sm:$0xff] %v1168
        %1173 = vst [vmem:[#allocation2 + $0x18] sm:$0xff] %v1169
        %p1174 = scmp.eq.s32.totalorder %s21, 1
        // Predicated region
        $region121: #{a_call__.21} parent=103 // pred_check
          %p1175 = pneg %p1174
        $region122: #{a_call__.21} parent=103 // pred_check_branch
          %1177 = sbr.rel (%p1175) target = $region124
        $region123: #{a_call__.21} parent=103 // pred_region
          %v1178 = vld [vmem:[#allocation2] sm:$0xff]
          %v1179 = vld [vmem:[#allocation2 + $0x8] sm:$0xff]
          %v1180 = vld [vmem:[#allocation2 + $0x10] sm:$0xff]
          %v1181 = vld [vmem:[#allocation2 + $0x18] sm:$0xff]
          %v1182 = vpack.c.bf16 %v1180, %v1178
          %v1183 = vpack.c.bf16 %v1181, %v1179
          %v1186 = vunpack.c.l.b16 %v1182
          %v1187 = vunpack.c.l.b16 %v1183
          %v1188 = vunpack.c.h.b16 %v1182
          %v1189 = vunpack.c.h.b16 %v1183
          %v1190 = vpack.c.b16 %v1187, %v1186
          %v1191 = vpack.c.b16 %v1189, %v1188
          %1194 = vst [vmem:[%s582] sm:$0xff] %v1190
          %1195 = vst [vmem:[%s582 + $0x8] sm:$0xff] %v1191
        $region124: #{a_call__.21} parent=103 // pred_fallthru
          _
        %s1196 = sand.u32 %s129, 1
        %s1197 = sand.u32 %s129, 1
        %s1198 = smul.addr %s1197, 16
        %s1199 = scalar_lea.vmem [#allocation6], %s1198
        // Predicated region
        $region125: #{a_call__.21} parent=103 // pred_check
          %p1200 = pneg %p139
        $region126: #{a_call__.21} parent=103 // pred_check_branch
          %1202 = sbr.rel (%p1200) target = $region128
        $region127: #{a_call__.21} parent=103 // pred_region
          %s1203 = smul.u32 2, %s19
          %s1204 = smul.u32 2, %s20
          %s1205 = smul.addr %s1203, 4
          %s1206 = sadd.s32 %s1204, %s1205
          %s1207 = smul.addr %s1206, 4
          %s1208 = scalar_lea.vmem %s3, %s1207
          // Predicated region
          $region129: #{a_call__.21} parent=127 // pred_check
            _
          $region130: #{a_call__.21} parent=127 // pred_check_branch
            %1210 = sbr.rel (0) target = $region132
          $region131: #{a_call__.21} parent=127 // pred_region
            // Predicated region
            $region133: #{a_call__.21} parent=131 // pred_check
              _
            $region134: #{a_call__.21} parent=131 // pred_check_branch
              %1212 = sbr.rel (0) target = $region136
            $region135: #{a_call__.21} parent=131 // pred_region
              // Predicated region
              $region148: #{a_call__.21} parent=135 // pred_check
                _
              $region149: #{a_call__.21} parent=135 // pred_check_branch
                %1229 = sbr.rel (0) target = $region151
              $region150: #{a_call__.21} parent=135 // pred_region
                loop: start=0, step=1, limit=1
                $region152: #{a_call__.21} parent=150 // loop_pre_header
                  _
                $region153: #{a_call__.21} parent=150 // loop_header
                  %s1231 = sphi 0, %s1235
                  %p1232 = scmp.ge.s32.totalorder %s1231, 1
                  %s1236 = sphi %s1199, %s1199
                  %s1237 = sphi %s1208, %s1208
                $region154: #{a_call__.21} parent=150 // loop_header_branch
                  %1234 = sbr.rel (%p1232) target = $region158
                $region155: #{a_call__.21} parent=150 // loop_body
                  %v1238 = vld [vmem:[%s1236] sm:$0xff]
                  %1239 = vst [vmem:[%s1237] sm:$0xff] %v1238
                  %v1240 = vld [vmem:[%s1236 + $0x8] sm:$0xff]
                  %1241 = vst [vmem:[%s1237 + $0x10] sm:$0xff] %v1240
                $region156: #{a_call__.21} parent=150 // loop_footer
                  %s1235 = sadd.s32 1, %s1231
                $region157: #{a_call__.21} parent=150 // loop_footer_branch
                  %1230 = sbr.rel target = $region153
                $region158: #{a_call__.21} parent=150 // loop_exit
                  _
              $region151: #{a_call__.21} parent=135 // pred_fallthru
                _
              // Predicated region
              $region159: #{a_call__.21} parent=135 // pred_check
                _
              $region160: #{a_call__.21} parent=135 // pred_check_branch
                %1243 = sbr.rel target = $region162
              $region161: #{a_call__.21} parent=135 // pred_region
                _
              $region162: #{a_call__.21} parent=135 // pred_fallthru
                _
            $region136: #{a_call__.21} parent=131 // pred_fallthru
              _
            // Predicated region
            $region137: #{a_call__.21} parent=131 // pred_check
              _
            $region138: #{a_call__.21} parent=131 // pred_check_branch
              %1214 = sbr.rel target = $region140
            $region139: #{a_call__.21} parent=131 // pred_region
              loop: start=0, step=1, limit=1
              $region141: #{a_call__.21} parent=139 // loop_pre_header
                _
              $region142: #{a_call__.21} parent=139 // loop_header
                %s1217 = sphi 0, %s1221
                %p1218 = scmp.ge.s32.totalorder %s1217, 1
                %s1222 = sphi %s1199, %s1199
                %s1223 = sphi %s1208, %s1208
              $region143: #{a_call__.21} parent=139 // loop_header_branch
                %1220 = sbr.rel (%p1218) target = $region147
              $region144: #{a_call__.21} parent=139 // loop_body
                %v1224 = vld [vmem:[%s1222] sm:$0xff]
                %1225 = vst [vmem:[%s1223] sm:$0xff] %v1224
                %v1226 = vld [vmem:[%s1222 + $0x8] sm:$0xff]
                %1227 = vst [vmem:[%s1223 + $0x10] sm:$0xff] %v1226
              $region145: #{a_call__.21} parent=139 // loop_footer
                %s1221 = sadd.s32 1, %s1217
              $region146: #{a_call__.21} parent=139 // loop_footer_branch
                %1216 = sbr.rel target = $region142
              $region147: #{a_call__.21} parent=139 // loop_exit
                _
            $region140: #{a_call__.21} parent=131 // pred_fallthru
              _
          $region132: #{a_call__.21} parent=127 // pred_fallthru
            _
          %1244 = vnop
        $region128: #{a_call__.21} parent=103 // pred_fallthru
          _
      $region104: #{a_call__.21} parent=5 // pred_fallthru
        _
      %p1245 = scmp.le.s32.totalorder 2, %s9
      // Predicated region
      $region163: #{a_call__.21} parent=5 // pred_check
        %p1246 = pneg %p1245
      $region164: #{a_call__.21} parent=5 // pred_check_branch
        %1248 = sbr.rel (%p1246) target = $region166
      $region165: #{a_call__.21} parent=5 // pred_region
        %s1249 = ssub.s32 %s9, 2
        // Predicated region
        $region167: #{a_call__.21} parent=165 // pred_check
          %p1250 = pneg %p145
        $region168: #{a_call__.21} parent=165 // pred_check_branch
          %1252 = sbr.rel (%p1250) target = $region170
        $region169: #{a_call__.21} parent=165 // pred_region
          %s1253 = sand.u32 %s130, 1
          %s1254 = sand.u32 %s130, 1
          %s1255 = smul.addr %s1254, 16
          %s1256 = scalar_lea.vmem [#allocation6], %s1255
        $region170: #{a_call__.21} parent=165 // pred_fallthru
          _
      $region166: #{a_call__.21} parent=5 // pred_fallthru
        _
    $region6: #{a_call__.21} parent=1 // loop_footer
      %s13 = sadd.s32 1, %s9
    $region7: #{a_call__.21} parent=1 // loop_footer_branch
      %8 = sbr.rel target = $region3
    $region8: #{a_call__.21} parent=1 // loop_exit
      _

// kernel: a_call__.29
$region0: #{a_call__.29}
  #allocation0 [shape = 'u32[]', space=smem, size = 0x4, offset = 0x4, fixed_abs, tag = 'smem constant byte address 0x4 - core index']
  #allocation1 [shape = 'u32[144,128]{1,0:T(1,128)}', space=vmem, size = 0x12000, scoped, tag = 'internal scratch']
  %s0 = inlined_call_operand.vmem [shape: bf16[16,512], index: 0, kind: input, shape index: {}]
  %s1 = inlined_call_operand.vmem [shape: bf16[16,512], index: 1, kind: input, shape index: {}]
  %s2 = inlined_call_operand.vmem [shape: bf16[1,512], index: 2, kind: input, shape index: {}]
  %s3 = inlined_call_operand.hbm [shape: bf16[16,512], index: 3, kind: output, shape index: {0}]
  %s4 = inlined_call_operand.hbm [shape: bf16[16,512], index: 4, kind: output, shape index: {1}]
  %5 = xla_tuple %s3, %s4
  %s6 = sld [smem:[#allocation0]]
  $region30: #{a_call__.29} parent=0
    _
  %s8 = ssub.s32 1, %s6
  %s9 = scalar_select 0, %s8, %s6
  $region1: #{a_call__.29} parent=0
    #allocation2 [shape = 'u8[16384]{0}', space=vmem, size = 0x4000, scoped, tag = 'output window, operand 0, single buffered']
    #allocation3 [shape = 's32[1]{0}', space=sflag, size = 0x4, scoped, tag = 'scoped memory for a_call__.29']
    #allocation4 [shape = 'u8[16384]{0}', space=vmem, size = 0x4000, scoped, tag = 'output window, operand 1, single buffered']
    #allocation5 [shape = 's32[1]{0}', space=sflag, size = 0x4, scoped, tag = 'scoped memory for a_call__.29']
    %10 = vsyncpa [#allocation3], 0
    %11 = vsyncpa [#allocation5], 0
    // Predicated region
    $region2: #{a_call__.29} parent=1 // pred_check
      _
    $region3: #{a_call__.29} parent=1 // pred_check_branch
      %13 = sbr.rel (0) target = $region5
    $region4: #{a_call__.29} parent=1 // pred_region
      _
    $region5: #{a_call__.29} parent=1 // pred_fallthru
      _
    // Predicated region
    $region6: #{a_call__.29} parent=1 // pred_check
      _
    $region7: #{a_call__.29} parent=1 // pred_check_branch
      %15 = sbr.rel (0) target = $region9
    $region8: #{a_call__.29} parent=1 // pred_region
      _
    $region9: #{a_call__.29} parent=1 // pred_fallthru
      _
    // Predicated region
    $region10: #{a_call__.29} parent=1 // pred_check
      _
    $region11: #{a_call__.29} parent=1 // pred_check_branch
      %17 = sbr.rel (0) target = $region13
    $region12: #{a_call__.29} parent=1 // pred_region
      _
    $region13: #{a_call__.29} parent=1 // pred_fallthru
      _
    %v18 = vld [vmem:[%s0] sm:$0xff]
    %v19 = vld [vmem:[%s0 + $0x8] sm:$0xff]
    %v20 = vld [vmem:[%s0 + $0x10] sm:$0xff]
    %v21 = vld [vmem:[%s0 + $0x18] sm:$0xff]
    %v22 = vunpack.c.l.bf16 %v18
    %v23 = vunpack.c.h.bf16 %v18
    %v24 = vunpack.c.l.bf16 %v19
    %v25 = vunpack.c.h.bf16 %v19
    %v26 = vunpack.c.l.bf16 %v20
    %v27 = vunpack.c.h.bf16 %v20
    %v28 = vunpack.c.l.bf16 %v21
    %v29 = vunpack.c.h.bf16 %v21
    %v30 = vld [vmem:[%s1] sm:$0xff]
    %v31 = vld [vmem:[%s1 + $0x8] sm:$0xff]
    %v32 = vld [vmem:[%s1 + $0x10] sm:$0xff]
    %v33 = vld [vmem:[%s1 + $0x18] sm:$0xff]
    %v34 = vunpack.c.l.bf16 %v30
    %v35 = vunpack.c.h.bf16 %v30
    %v36 = vunpack.c.l.bf16 %v31
    %v37 = vunpack.c.h.bf16 %v31
    %v38 = vunpack.c.l.bf16 %v32
    %v39 = vunpack.c.h.bf16 %v32
    %v40 = vunpack.c.l.bf16 %v33
    %v41 = vunpack.c.h.bf16 %v33
    %v42 = vadd.f32 %v22, %v34
    %v43 = vadd.f32 %v23, %v35
    %v44 = vadd.f32 %v24, %v36
    %v45 = vadd.f32 %v25, %v37
    %v46 = vadd.f32 %v26, %v38
    %v47 = vadd.f32 %v27, %v39
    %v48 = vadd.f32 %v28, %v40
    %v49 = vadd.f32 %v29, %v41
    %v50 = vpack.c.bf16 %v46, %v42
    %v51 = vpack.c.bf16 %v47, %v43
    %v52 = vpack.c.bf16 %v48, %v44
    %v53 = vpack.c.bf16 %v49, %v45
    %v58 = vunpack.c.l.b16 %v50
    %v59 = vunpack.c.l.b16 %v51
    %v60 = vunpack.c.l.b16 %v52
    %v61 = vunpack.c.l.b16 %v53
    %v62 = vunpack.c.h.b16 %v50
    %v63 = vunpack.c.h.b16 %v51
    %v64 = vunpack.c.h.b16 %v52
    %v65 = vunpack.c.h.b16 %v53
    %v66 = vpack.c.b16 %v59, %v58
    %v67 = vpack.c.b16 %v61, %v60
    %v68 = vpack.c.b16 %v63, %v62
    %v69 = vpack.c.b16 %v65, %v64
    %74 = vst [vmem:[#allocation4] sm:$0xff] %v66
    %75 = vst [vmem:[#allocation4 + $0x8] sm:$0xff] %v67
    %76 = vst [vmem:[#allocation4 + $0x10] sm:$0xff] %v68
    %77 = vst [vmem:[#allocation4 + $0x18] sm:$0xff] %v69
    %v78 = vmul.f32 %v42, %v42
    %v79 = vmul.f32 %v43, %v43
    %v80 = vmul.f32 %v44, %v44
    %v81 = vmul.f32 %v45, %v45
    %v82 = vmul.f32 %v46, %v46
    %v83 = vmul.f32 %v47, %v47
    %v84 = vmul.f32 %v48, %v48
    %v85 = vmul.f32 %v49, %v49
    %v86 = vadd.f32 %v78, %v79
    %v87 = vadd.f32 %v86, %v80
    %v88 = vadd.f32 %v87, %v81
    %89 = vadd.xlane.f32.xlu0 %v88
    %v90 = vpop.xlane.xlu0 %89
    %v91 = vadd.f32 %v82, %v83
    %v92 = vadd.f32 %v91, %v84
    %v93 = vadd.f32 %v92, %v85
    %94 = vadd.xlane.f32.xlu0 %v93
    %v95 = vpop.xlane.xlu0 %94
    %v96 = vrcp.pop 512.0
    %v97 = vmul.f32 %v90, %v96
    %v98 = vmul.f32 %v95, %v96
    %v99 = vadd.f32 %v97, 1e-06
    %v100 = vadd.f32 %v98, 1e-06
    %v101 = vrsqrt.pop %v99
    %v102 = vrsqrt.pop %v100
    %v103 = vmul.f32 %v42, %v101
    %v104 = vmul.f32 %v43, %v101
    %v105 = vmul.f32 %v44, %v101
    %v106 = vmul.f32 %v45, %v101
    %v107 = vmul.f32 %v46, %v102
    %v108 = vmul.f32 %v47, %v102
    %v109 = vmul.f32 %v48, %v102
    %v110 = vmul.f32 %v49, %v102
    %v111 = vld [vmem:[%s2] sm:$0xf]
    %v112 = vunpack.c.l.bf16 %v111
    %v114 = vlaneseq
    %v115 = vshrl.u32 %v114, 7
    %v116 = vsub.s32 0, %v115
    %v117 = vrot.slane %v112, %v116
    %v118 = vlaneseq
    %v119 = vshrl.u32 %v118, 7
    %v120 = vsub.s32 2, %v119
    %v121 = vrot.slane %v112, %v120
    %v122 = vlaneseq
    %v123 = vshrl.u32 %v122, 7
    %v124 = vsub.s32 4, %v123
    %v125 = vrot.slane %v112, %v124
    %v126 = vlaneseq
    %v127 = vshrl.u32 %v126, 7
    %v128 = vsub.s32 6, %v127
    %v129 = vrot.slane %v112, %v128
    %v134 = vlaneseq
    %v135 = vshrl.u32 %v134, 7
    %v136 = vsub.s32 0, %v135
    %v137 = vrot.slane %v117, %v136
    %v138 = vlaneseq
    %v139 = vshrl.u32 %v138, 7
    %v140 = vsub.s32 0, %v139
    %v141 = vrot.slane %v121, %v140
    %v142 = vlaneseq
    %v143 = vshrl.u32 %v142, 7
    %v144 = vsub.s32 0, %v143
    %v145 = vrot.slane %v125, %v144
    %v146 = vlaneseq
    %v147 = vshrl.u32 %v146, 7
    %v148 = vsub.s32 0, %v147
    %v149 = vrot.slane %v129, %v148
    %v150 = vmul.f32 %v103, %v137
    %v151 = vmul.f32 %v104, %v141
    %v152 = vmul.f32 %v105, %v145
    %v153 = vmul.f32 %v106, %v149
    %v154 = vmul.f32 %v107, %v137
    %v155 = vmul.f32 %v108, %v141
    %v156 = vmul.f32 %v109, %v145
    %v157 = vmul.f32 %v110, %v149
    %v158 = vpack.c.bf16 %v154, %v150
    %v159 = vpack.c.bf16 %v155, %v151
    %v160 = vpack.c.bf16 %v156, %v152
    %v161 = vpack.c.bf16 %v157, %v153
    %v166 = vunpack.c.l.b16 %v158
    %v167 = vunpack.c.l.b16 %v159
    %v168 = vunpack.c.l.b16 %v160
    %v169 = vunpack.c.l.b16 %v161
    %v170 = vunpack.c.h.b16 %v158
    %v171 = vunpack.c.h.b16 %v159
    %v172 = vunpack.c.h.b16 %v160
    %v173 = vunpack.c.h.b16 %v161
    %v174 = vpack.c.b16 %v167, %v166
    %v175 = vpack.c.b16 %v169, %v168
    %v176 = vpack.c.b16 %v171, %v170
    %v177 = vpack.c.b16 %v173, %v172
    %182 = vst [vmem:[#allocation2] sm:$0xff] %v174
    %183 = vst [vmem:[#allocation2 + $0x8] sm:$0xff] %v175
    %184 = vst [vmem:[#allocation2 + $0x10] sm:$0xff] %v176
    %185 = vst [vmem:[#allocation2 + $0x18] sm:$0xff] %v177
    // Predicated region
    $region14: #{a_call__.29} parent=1 // pred_check
      _
    $region15: #{a_call__.29} parent=1 // pred_check_branch
      %187 = sbr.rel (0) target = $region17
    $region16: #{a_call__.29} parent=1 // pred_region
      %s189 = ssub.s32 512, 512
      %190 = vsyncadd [#allocation3], %s189
      %s191 = sshll.u32 [#allocation2], 4
      %s192 = int_to_ptr.vmem [resolvable:$true] %s191
      %197 = dma.vmem_to_hbm [thread:$0]  %s192, 512, %s3, [#allocation3], 256, 256, 16
    $region17: #{a_call__.29} parent=1 // pred_fallthru
      _
    // Predicated region
    $region18: #{a_call__.29} parent=1 // pred_check
      _
    $region19: #{a_call__.29} parent=1 // pred_check_branch
      %199 = sbr.rel (0) target = $region21
    $region20: #{a_call__.29} parent=1 // pred_region
      %s201 = ssub.s32 512, 512
      %202 = vsyncadd [#allocation5], %s201
      %s203 = sshll.u32 [#allocation4], 4
      %s204 = int_to_ptr.vmem [resolvable:$true] %s203
      %209 = dma.vmem_to_hbm [thread:$0]  %s204, 512, %s4, [#allocation5], 256, 256, 16
    $region21: #{a_call__.29} parent=1 // pred_fallthru
      _
    // Predicated region
    $region22: #{a_call__.29} parent=1 // pred_check
      _
    $region23: #{a_call__.29} parent=1 // pred_check_branch
      %211 = sbr.rel (0) target = $region25
    $region24: #{a_call__.29} parent=1 // pred_region
      %212 = dma.done [#allocation3], 512
    $region25: #{a_call__.29} parent=1 // pred_fallthru
      _
    // Predicated region
    $region26: #{a_call__.29} parent=1 // pred_check
      _
    $region27: #{a_call__.29} parent=1 // pred_check_branch
      %214 = sbr.rel (0) target = $region29
    $region28: #{a_call__.29} parent=1 // pred_region
      %215 = dma.done [#allocation5], 512
    $region29: #{a_call__.29} parent=1 // pred_fallthru
      _
    %216 = vsyncpa [#allocation3], 1
    %217 = vsyncpa [#allocation5], 1

</llo_original>
